<compile_context>
chip_gen: v5e
topology: v5e:2x2
jax: 0.10.0
libtpu: 0.0.40
codegen_flags: <defaults>
</compile_context>

<pallas_src>
import functools
import math

import jax
import jax.numpy as jnp
from jax import lax
from jax.experimental import pallas as pl
from jax.experimental.pallas import tpu as pltpu

# ---------------------------------------------------------------------------
# Small synthetic configuration (PyTorch defaults in comments)
# ---------------------------------------------------------------------------
INNER_DIM = 64            # torch default 2688
NUM_ATTN_HEADS = 4        # torch default 42
NUM_LAYERS = 2            # torch default 4
R_DIM = 64                # resampler dim       (torch default 1280)
R_DEPTH = 2               # resampler depth     (torch default 4)
R_DIM_HEAD = 16           # torch default 64
R_HEADS = 4               # torch default 20
NUM_QUERIES = 8           # torch default 1024
EMBEDDING_DIM = INNER_DIM # resampler embedding_dim equals stream channels here
OUTPUT_DIM = 32           # torch default 4096
FF_MULT = 4
TIMESTEP_IN_DIM = 32      # torch default 320

MATMUL_DTYPE = jnp.bfloat16    # MXU operand / inter-kernel activation dtype
LN_EPS = 1e-5


def _round_up(x, m):
    return (x + m - 1) // m * m


# ---------------------------------------------------------------------------
# Per-generation configuration (VMEM limit, tile widths)
# ---------------------------------------------------------------------------
def _detect_vmem_capacity():
    try:
        info = pltpu.get_tpu_info()
        cap = getattr(info, "vmem_capacity_bytes", None)
        if cap:
            return int(cap)
    except Exception:
        pass
    return None   # unknown -> assume the small (v7x-class) budget, safe everywhere


_VMEM_CAP = _detect_vmem_capacity()
_TPU_BIG_VMEM = (_VMEM_CAP or 0) >= (100 << 20)       # v5e / v6e: 128 MiB physical
VMEM_LIMIT = (100 << 20) if _TPU_BIG_VMEM else (48 << 20)

MAX_TM = 1536                        # row tile: covers the whole padded M at real sizes
MAX_TN = 1024 if _TPU_BIG_VMEM else 512   # output-feature tile
MAX_TK = 2048                        # K tiling only beyond this (no-LN matmuls)
MAX_TKV = 512                        # flash-attention KV tile


# ---------------------------------------------------------------------------
# Fused [LayerNorm] + matmul (+K-tiled accumulation) + bias + activation
# (+ residual) kernel
# ---------------------------------------------------------------------------
def _fused_linear_kernel(*refs, has_ln, has_bias, has_residual, activation, num_k):
    idx = 0
    x_ref = refs[idx]; idx += 1
    g_ref = beta_ref = b_ref = r_ref = None
    if has_ln:
        g_ref, beta_ref = refs[idx], refs[idx + 1]; idx += 2
    w_ref = refs[idx]; idx += 1
    if has_bias:
        b_ref = refs[idx]; idx += 1
    if has_residual:
        r_ref = refs[idx]; idx += 1
    o_ref = refs[idx]; idx += 1
    acc_ref = None
    if num_k > 1:
        acc_ref = refs[idx]; idx += 1
    xn_ref = refs[idx] if has_ln else None

    j = pl.program_id(1)          # N-tile index
    k = pl.program_id(2)          # K-tile index

    if has_ln:
        # K is never tiled when LN is present (num_k == 1).  Normalize once per row
        # tile (j == 0) into a bf16 scratch and reuse it for all output-feature tiles.
        @pl.when(j == 0)
        def _():
            xf = x_ref[...].astype(jnp.float32)
            mean = jnp.mean(xf, axis=-1, keepdims=True)
            cen = xf - mean
            var = jnp.mean(cen * cen, axis=-1, keepdims=True)
            xn = (cen * lax.rsqrt(var + LN_EPS)) * g_ref[...] + beta_ref[...]
            xn_ref[...] = xn.astype(xn_ref.dtype)
        x_mat = xn_ref[...]
    else:
        x_mat = x_ref[...].astype(w_ref.dtype)

    def _finalize(y):
        if has_bias:
            y = y + b_ref[...]
        if activation == "silu":
            y = y * jax.nn.sigmoid(y)
        elif activation == "gelu":
            # tanh-approx GELU; tanh goes to the EUP slot (nearly free).
            # TODO(synk): exact erf GELU parity with nn.GELU() (~1e-3 deviation).
            y = 0.5 * y * (1.0 + jnp.tanh(0.7978845608028654
                                          * (y + 0.044715 * y * y * y)))
        if has_residual:
            y = y + r_ref[...].astype(jnp.float32)
        o_ref[...] = y.astype(o_ref.dtype)

    if num_k == 1:
        _finalize(jnp.dot(x_mat, w_ref[...], preferred_element_type=jnp.float32))
    else:
        @pl.when(k == 0)
        def _():
            acc_ref[...] = jnp.zeros_like(acc_ref)

        acc_ref[...] += jnp.dot(x_mat, w_ref[...],
                                preferred_element_type=jnp.float32)

        @pl.when(k == num_k - 1)
        def _():
            _finalize(acc_ref[...])


def fused_linear(x, w, b=None, *, ln=None, activation=None, residual=None,
                 out_dtype=jnp.float32):
    """y = [LayerNorm](x) @ w (+ b) (+ GELU/SiLU) (+ residual).

    w is (in_features, out_features) bf16; ln is an optional (gamma, beta) pair (f32);
    residual has the output's shape (f32).  LN statistics / bias / activation /
    residual math run in f32; MXU operands are bf16.
    """
    *lead, K = x.shape
    M = math.prod(lead) if lead else 1
    N = w.shape[1]
    x2 = x.reshape(M, K)

    has_ln = ln is not None
    has_bias = b is not None
    has_residual = residual is not None

    # --- row tiling -------------------------------------------------------
    if M <= MAX_TM:
        TM = _round_up(M, 8)
        M_pad = TM
    else:
        TM = MAX_TM
        M_pad = _round_up(M, TM)

    # --- K tiling (no-LayerNorm matmuls only; LN needs the full row) -------
    if has_ln or K <= MAX_TK:
        TK, K_pad = K, K
    else:
        nk = -(-K // MAX_TK)
        TK = _round_up(-(-K // nk), 128)
        K_pad = nk * TK

    # --- output-feature tiling ---------------------------------------------
    if N <= MAX_TN:
        TN, N_pad = N, N
    else:
        nn_t = -(-N // MAX_TN)
        TN = _round_up(-(-N // nn_t), 128)
        N_pad = nn_t * TN

    # TODO(synk): handle the ragged last row tile with a masked store instead of a
    # wrapper-side jnp.pad copy (pads never trigger at the shapes used here).
    if M_pad != M or K_pad != K:
        x2 = jnp.pad(x2, ((0, M_pad - M), (0, K_pad - K)))
    w2 = w.astype(MATMUL_DTYPE)
    if K_pad != K or N_pad != N:
        w2 = jnp.pad(w2, ((0, K_pad - K), (0, N_pad - N)))

    grid = (M_pad // TM, N_pad // TN, K_pad // TK)
    num_k = grid[2]

    inputs = [x2]
    in_specs = [pl.BlockSpec((TM, TK), lambda i, j, k: (i, k))]
    if has_ln:
        gamma, beta = ln
        inputs.append(gamma.astype(jnp.float32).reshape(1, K))
        in_specs.append(pl.BlockSpec((1, K), lambda i, j, k: (0, 0)))
        inputs.append(beta.astype(jnp.float32).reshape(1, K))
        in_specs.append(pl.BlockSpec((1, K), lambda i, j, k: (0, 0)))

    inputs.append(w2)
    if _TPU_BIG_VMEM and num_k > 2:
        # deeper weight buffering on 128-MiB parts to hide DMA behind the MXU
        in_specs.append(pl.BlockSpec((TK, TN), lambda i, j, k: (k, j),
                                     pipeline_mode=pl.Buffered(3)))
    else:
        in_specs.append(pl.BlockSpec((TK, TN), lambda i, j, k: (k, j)))

    if has_bias:
        b2 = b.astype(jnp.float32).reshape(1, N)
        if N_pad != N:
            b2 = jnp.pad(b2, ((0, 0), (0, N_pad - N)))
        inputs.append(b2)
        in_specs.append(pl.BlockSpec((1, TN), lambda i, j, k: (0, j)))
    if has_residual:
        r2 = residual.reshape(M, N)
        if M_pad != M or N_pad != N:
            r2 = jnp.pad(r2, ((0, M_pad - M), (0, N_pad - N)))
        inputs.append(r2)
        in_specs.append(pl.BlockSpec((TM, TN), lambda i, j, k: (i, j)))

    scratch = []
    if num_k > 1:
        scratch.append(pltpu.VMEM((TM, TN), jnp.float32))      # f32 accumulator
    if has_ln:
        scratch.append(pltpu.VMEM((TM, K), MATMUL_DTYPE))       # hoisted LN(x)

    out = pl.pallas_call(
        functools.partial(_fused_linear_kernel, has_ln=has_ln, has_bias=has_bias,
                          has_residual=has_residual, activation=activation,
                          num_k=num_k),
        out_shape=jax.ShapeDtypeStruct((M_pad, N_pad), out_dtype),
        grid=grid,
        in_specs=in_specs,
        out_specs=pl.BlockSpec((TM, TN), lambda i, j, k: (i, j)),
        scratch_shapes=scratch,
        compiler_params=pltpu.CompilerParams(
            dimension_semantics=("parallel", "arbitrary", "arbitrary"),
            vmem_limit_bytes=VMEM_LIMIT),
    )(*inputs)

    if M_pad != M or N_pad != N:
        out = out[:M, :N]
    return out.reshape(*lead, N)


# ---------------------------------------------------------------------------
# Flash-style attention: grid = (batch, head-group, KV tile), running softmax
# statistics in VMEM scratch, lane-dense merged-head output store.
# ---------------------------------------------------------------------------
def _head_grouping(heads, dim_head):
    gw = min(heads, max(1, 128 // dim_head))
    while heads % gw:
        gw -= 1
    gwd = gw * dim_head
    if gwd % 128 != 0 and gwd != heads * dim_head:
        gw, gwd = heads, heads * dim_head          # fall back to one full group
    return gw, gwd


def _flash_attention_kernel(q_ref, k_ref, v_ref, o_ref, m_sc, l_sc, acc_sc,
                            *, gw, dh, kv_len, tkv):
    t = pl.program_id(2)
    nt = pl.num_programs(2)

    @pl.when(t == 0)
    def _():
        m_sc[...] = jnp.full_like(m_sc, -1e30)
        l_sc[...] = jnp.zeros_like(l_sc)
        acc_sc[...] = jnp.zeros_like(acc_sc)

    need_mask = (kv_len % tkv) != 0
    if need_mask:
        col = t * tkv + lax.broadcasted_iota(jnp.int32, (1, tkv), 1)
        mask_add = jnp.where(col < kv_len, 0.0, -1e30).astype(jnp.float32)

    for g in range(gw):                       # static unroll over heads in the group
        lo = g * dh
        q_g = q_ref[0, :, lo:lo + dh]                         # (Lq, dh) bf16
        k_g = k_ref[0, :, lo:lo + dh]                         # (tkv, dh) bf16
        s = lax.dot_general(q_g, k_g, (((1,), (1,)), ((), ())),
                            preferred_element_type=jnp.float32)   # (Lq, tkv) f32
        if need_mask:
            s = s + mask_add
        m_prev = m_sc[:, g:g + 1]
        m_new = jnp.maximum(m_prev, s.max(axis=-1, keepdims=True))
        alpha = jnp.exp(m_prev - m_new)
        p = jnp.exp(s - m_new)
        l_sc[:, lo:lo + dh] = (alpha * l_sc[:, lo:lo + dh]
                               + jnp.sum(p, axis=-1, keepdims=True))
        acc_sc[:, lo:lo + dh] = (alpha * acc_sc[:, lo:lo + dh]
                                 + jnp.dot(p.astype(v_ref.dtype),
                                           v_ref[0, :, lo:lo + dh],
                                           preferred_element_type=jnp.float32))
        m_sc[:, g:g + 1] = m_new

    @pl.when(t == nt - 1)
    def _():
        out = acc_sc[...] * pl.reciprocal(l_sc[...], approx=True)   # EUP
        o_ref[0] = out.astype(o_ref.dtype)     # single lane-dense head-group store


def attention(q, k, v, heads, dim_head, out_dtype=MATMUL_DTYPE):
    """q: (B, Lq, heads*dh); k, v: (B, Lk, heads*dh).

    The softmax scaling must already be folded into the projections producing q / k.
    """
    B, Lq, inner = q.shape
    Lk = k.shape[1]
    gw, gwd = _head_grouping(heads, dim_head)
    hg = inner // gwd

    Lq_pad = _round_up(Lq, 8)
    if Lq_pad != Lq:
        q = jnp.pad(q, ((0, 0), (0, Lq_pad - Lq), (0, 0)))

    if Lk <= MAX_TKV:
        tkv = _round_up(Lk, 8)
        Lk_pad = tkv
    else:
        tkv = MAX_TKV
        Lk_pad = _round_up(Lk, tkv)
    if Lk_pad != Lk:
        k = jnp.pad(k, ((0, 0), (0, Lk_pad - Lk), (0, 0)))
        v = jnp.pad(v, ((0, 0), (0, Lk_pad - Lk), (0, 0)))

    out = pl.pallas_call(
        functools.partial(_flash_attention_kernel, gw=gw, dh=dim_head,
                          kv_len=Lk, tkv=tkv),
        out_shape=jax.ShapeDtypeStruct((B, Lq_pad, inner), out_dtype),
        grid=(B, hg, Lk_pad // tkv),
        in_specs=[
            pl.BlockSpec((1, Lq_pad, gwd), lambda b, h, t: (b, 0, h)),
            pl.BlockSpec((1, tkv, gwd), lambda b, h, t: (b, t, h)),
            pl.BlockSpec((1, tkv, gwd), lambda b, h, t: (b, t, h)),
        ],
        out_specs=pl.BlockSpec((1, Lq_pad, gwd), lambda b, h, t: (b, 0, h)),
        scratch_shapes=[
            pltpu.VMEM((Lq_pad, gw), jnp.float32),    # running max (per head)
            pltpu.VMEM((Lq_pad, gwd), jnp.float32),   # running denom (replicated)
            pltpu.VMEM((Lq_pad, gwd), jnp.float32),   # output accumulator
        ],
        compiler_params=pltpu.CompilerParams(
            dimension_semantics=("parallel", "parallel", "arbitrary"),
            vmem_limit_bytes=VMEM_LIMIT),
    )(q, k, v)

    if Lq_pad != Lq:
        out = out[:, :Lq, :]
    return out


# ---------------------------------------------------------------------------
# Module building blocks
# ---------------------------------------------------------------------------
def simple_transformer_block(x, enc, p, heads):
    """x = x + MHA(norm1(x), norm1(enc), norm1(enc)); x = x + MLP(norm2(x))."""
    E = x.shape[-1]
    dh = E // heads
    # LN fused into the projections; 1/sqrt(dh) folded into wq/bq offline;
    # K and V projections fused into a single (E, 2E) matmul.
    q = fused_linear(x, p["wq"], p["bq"], ln=(p["n1_g"], p["n1_b"]),
                     out_dtype=MATMUL_DTYPE)
    kv = fused_linear(enc, p["wkv"], p["bkv"], ln=(p["n1_g"], p["n1_b"]),
                      out_dtype=MATMUL_DTYPE)
    k, v = kv[..., :E], kv[..., E:]
    o = attention(q, k, v, heads, dh)
    x = fused_linear(o, p["wo"], p["bo"], residual=x)                 # f32 stream
    h = fused_linear(x, p["mlp_w1"], p["mlp_b1"], ln=(p["n2_g"], p["n2_b"]),
                     activation="gelu", out_dtype=MATMUL_DTYPE)       # GELU fused
    return fused_linear(h, p["mlp_w2"], p["mlp_b2"], residual=x)


def simple_mlp(x, p, residual=None):
    h = fused_linear(x, p["w1"], p["b1"], activation="gelu", out_dtype=MATMUL_DTYPE)
    return fused_linear(h, p["w2"], p["b2"], residual=residual)


def perceiver_block(x, latents, p, heads, dim_head):
    """latents = PerceiverAttention(x, latents) + latents; latents = FF(latents) + latents.

    (shift=emb, scale=None) -> the timestep-modulation branch is skipped, as in the
    PyTorch forward."""
    a = p["attn"]
    inner = heads * dim_head
    q = fused_linear(latents, a["wq"], ln=(a["n2_g"], a["n2_b"]),
                     out_dtype=MATMUL_DTYPE)
    # kv input is cat([norm1(x), norm2(latents)], seq); project each piece with its
    # own fused LN, then concatenate along the sequence axis for the flash kernel.
    # TODO(synk): multi-segment KV grid would avoid this small HBM concat.
    kv_x = fused_linear(x, a["wkv"], ln=(a["n1_g"], a["n1_b"]), out_dtype=MATMUL_DTYPE)
    kv_l = fused_linear(latents, a["wkv"], ln=(a["n2_g"], a["n2_b"]),
                        out_dtype=MATMUL_DTYPE)
    k = jnp.concatenate([kv_x[..., :inner], kv_l[..., :inner]], axis=1)
    v = jnp.concatenate([kv_x[..., inner:], kv_l[..., inner:]], axis=1)
    o = attention(q, k, v, heads, dim_head)
    latents = fused_linear(o, a["wo"], residual=latents)              # no bias
    f = p["ff"]
    h = fused_linear(latents, f["w1"], ln=(f["ln_g"], f["ln_b"]),
                     activation="gelu", out_dtype=MATMUL_DTYPE)       # no bias
    return fused_linear(h, f["w2"], residual=latents)                 # no bias


def embedding_time(timesteps, p):
    # Custom fallback sinusoidal embedding + Linear/SiLU/Linear.
    t = timesteps.astype(jnp.float32) / 1000.0
    half = TIMESTEP_IN_DIM // 2
    freqs = jnp.exp(jnp.arange(half, dtype=jnp.float32)
                    * (-math.log(10000.0) / (half - 1)))
    emb = t[:, None] * freqs[None, :]
    emb = jnp.concatenate([jnp.sin(emb), jnp.cos(emb)], axis=1)   # (b, TIMESTEP_IN_DIM)
    h = fused_linear(emb, p["w1"], p["b1"], activation="silu")    # SiLU fused in-kernel
    return fused_linear(h, p["w2"], p["b2"])


def time_resampler(x, timesteps, p):
    x = fused_linear(x, p["proj_in_w"], p["proj_in_b"])
    b = x.shape[0]
    latents = jnp.tile(p["latents"], (b, 1, 1))
    emb = embedding_time(timesteps, p["time"])
    for blk in p["blocks"]:
        latents = perceiver_block(x, latents, blk, R_HEADS, R_DIM_HEAD)
    latents = fused_linear(latents, p["out_w"], p["out_b"],
                           ln=(p["out_ln_g"], p["out_ln_b"]))     # LN + proj_out fused
    return latents, emb


def cross_layer_cross_scale_projector(low_res_shallow, low_res_deep, high_res_deep,
                                      timesteps, params):
    clh = low_res_deep
    for blk in params["cross_layer_blocks"]:
        clh = simple_transformer_block(clh, low_res_shallow, blk, NUM_ATTN_HEADS)
    clh = simple_mlp(clh, params["proj_cross_layer"])

    csh = low_res_deep
    for blk in params["cross_scale_blocks"]:
        csh = simple_transformer_block(csh, high_res_deep, blk, NUM_ATTN_HEADS)
    csh = simple_mlp(csh, params["proj_cross_scale"])

    hidden = simple_mlp(low_res_deep, params["proj"], residual=csh)  # proj(x)+csh fused
    hidden = jnp.concatenate([hidden, clh], axis=1)                  # seq concat in JAX
    return time_resampler(hidden, timesteps, params["resampler"])


# ---------------------------------------------------------------------------
# Deterministic parameter initialisation + offline kernel-layout preparation
# ---------------------------------------------------------------------------
class KeyGen:
    def __init__(self, seed):
        self.key = jax.random.PRNGKey(seed)

    def __call__(self):
        self.key, sub = jax.random.split(self.key)
        return sub


def _w(kg, shape, scale=0.02):
    return scale * jax.random.normal(kg(), shape, dtype=jnp.float32)


def init_raw_params(seed=0):
    kg = KeyGen(seed)

    def simple_block():
        dim, mlp_dim = INNER_DIM, INNER_DIM * 4
        return dict(
            n1_g=jnp.ones((dim,), jnp.float32), n1_b=jnp.zeros((dim,), jnp.float32),
            n2_g=jnp.ones((dim,), jnp.float32), n2_b=jnp.zeros((dim,), jnp.float32),
            wq=_w(kg, (dim, dim)), bq=_w(kg, (dim,), 0.01),
            wk=_w(kg, (dim, dim)), bk=_w(kg, (dim,), 0.01),
            wv=_w(kg, (dim, dim)), bv=_w(kg, (dim,), 0.01),
            wo=_w(kg, (dim, dim)), bo=_w(kg, (dim,), 0.01),
            mlp_w1=_w(kg, (dim, mlp_dim)), mlp_b1=_w(kg, (mlp_dim,), 0.01),
            mlp_w2=_w(kg, (mlp_dim, dim)), mlp_b2=_w(kg, (dim,), 0.01))

    def mlp():
        dim, hid = INNER_DIM, INNER_DIM * 2
        return dict(w1=_w(kg, (dim, hid)), b1=_w(kg, (hid,), 0.01),
                    w2=_w(kg, (hid, dim)), b2=_w(kg, (dim,), 0.01))

    def perceiver_attn():
        inner = R_HEADS * R_DIM_HEAD
        return dict(
            n1_g=jnp.ones((R_DIM,), jnp.float32), n1_b=jnp.zeros((R_DIM,), jnp.float32),
            n2_g=jnp.ones((R_DIM,), jnp.float32), n2_b=jnp.zeros((R_DIM,), jnp.float32),
            wq=_w(kg, (R_DIM, inner)), wkv=_w(kg, (R_DIM, 2 * inner)),
            wo=_w(kg, (inner, R_DIM)))

    def ff():
        inner = R_DIM * FF_MULT
        return dict(ln_g=jnp.ones((R_DIM,), jnp.float32),
                    ln_b=jnp.zeros((R_DIM,), jnp.float32),
                    w1=_w(kg, (R_DIM, inner)), w2=_w(kg, (inner, R_DIM)))

    return dict(
        cross_layer_blocks=[simple_block() for _ in range(NUM_LAYERS)],
        cross_scale_blocks=[simple_block() for _ in range(NUM_LAYERS)],
        proj=mlp(), proj_cross_layer=mlp(), proj_cross_scale=mlp(),
        resampler=dict(
            latents=jax.random.normal(kg(), (1, NUM_QUERIES, R_DIM), jnp.float32)
                    / math.sqrt(R_DIM),
            proj_in_w=_w(kg, (EMBEDDING_DIM, R_DIM)), proj_in_b=_w(kg, (R_DIM,), 0.01),
            time=dict(w1=_w(kg, (TIMESTEP_IN_DIM, R_DIM)), b1=_w(kg, (R_DIM,), 0.01),
                      w2=_w(kg, (R_DIM, R_DIM)), b2=_w(kg, (R_DIM,), 0.01)),
            blocks=[dict(attn=perceiver_attn(), ff=ff()) for _ in range(R_DEPTH)],
            out_ln_g=jnp.ones((R_DIM,), jnp.float32),
            out_ln_b=jnp.zeros((R_DIM,), jnp.float32),
            out_w=_w(kg, (R_DIM, OUTPUT_DIM)), out_b=_w(kg, (OUTPUT_DIM,), 0.01)))


def prepare_params(raw):
    """Offline weight preparation: fuse K|V projections, fold attention softmax
    scales into the Q (and Perceiver K) projection weights, cast matmul weights to
    MATMUL_DTYPE.  Biases / LayerNorm params / latents stay f32."""
    def cast(w):
        return w.astype(MATMUL_DTYPE)

    def simple_block(p):
        dh = INNER_DIM // NUM_ATTN_HEADS
        s = 1.0 / math.sqrt(dh)                       # MHA q-scaling folded into Wq/bq
        return dict(
            n1_g=p["n1_g"], n1_b=p["n1_b"], n2_g=p["n2_g"], n2_b=p["n2_b"],
            wq=cast(p["wq"] * s), bq=p["bq"] * s,
            wkv=cast(jnp.concatenate([p["wk"], p["wv"]], axis=1)),
            bkv=jnp.concatenate([p["bk"], p["bv"]], axis=0),
            wo=cast(p["wo"]), bo=p["bo"],
            mlp_w1=cast(p["mlp_w1"]), mlp_b1=p["mlp_b1"],
            mlp_w2=cast(p["mlp_w2"]), mlp_b2=p["mlp_b2"])

    def mlp(p):
        return dict(w1=cast(p["w1"]), b1=p["b1"], w2=cast(p["w2"]), b2=p["b2"])

    def perceiver_attn(p):
        inner = R_HEADS * R_DIM_HEAD
        s = R_DIM_HEAD ** (-0.25)                     # applied to both q and k
        wkv = jnp.concatenate([p["wkv"][:, :inner] * s, p["wkv"][:, inner:]], axis=1)
        return dict(n1_g=p["n1_g"], n1_b=p["n1_b"], n2_g=p["n2_g"], n2_b=p["n2_b"],
                    wq=cast(p["wq"] * s), wkv=cast(wkv), wo=cast(p["wo"]))

    def ff(p):
        return dict(ln_g=p["ln_g"], ln_b=p["ln_b"], w1=cast(p["w1"]), w2=cast(p["w2"]))

    r = raw["resampler"]
    return dict(
        cross_layer_blocks=[simple_block(p) for p in raw["cross_layer_blocks"]],
        cross_scale_blocks=[simple_block(p) for p in raw["cross_scale_blocks"]],
        proj=mlp(raw["proj"]),
        proj_cross_layer=mlp(raw["proj_cross_layer"]),
        proj_cross_scale=mlp(raw["proj_cross_scale"]),
        resampler=dict(
            latents=r["latents"],
            proj_in_w=cast(r["proj_in_w"]), proj_in_b=r["proj_in_b"],
            time=dict(w1=cast(r["time"]["w1"]), b1=r["time"]["b1"],
                      w2=cast(r["time"]["w2"]), b2=r["time"]["b2"]),
            blocks=[dict(attn=perceiver_attn(b["attn"]), ff=ff(b["ff"]))
                    for b in r["blocks"]],
            out_ln_g=r["out_ln_g"], out_ln_b=r["out_ln_b"],
            out_w=cast(r["out_w"]), out_b=r["out_b"]))


# ---------------------------------------------------------------------------
if __name__ == "__main__":
    b = 2
    n_deep, n_shallow, n_high = 16, 32, 32   # real model: 729, 729*l, 729*4

    key = jax.random.PRNGKey(0)
    k1, k2, k3 = jax.random.split(key, 3)
    low_res_shallow = jax.random.normal(k1, (b, n_shallow, INNER_DIM), jnp.float32)
    low_res_deep = jax.random.normal(k2, (b, n_deep, INNER_DIM), jnp.float32)
    high_res_deep = jax.random.normal(k3, (b, n_high, INNER_DIM), jnp.float32)
    timesteps = jnp.array([42, 999], dtype=jnp.int32)

    params = prepare_params(init_raw_params(seed=0))

    fwd = jax.jit(cross_layer_cross_scale_projector)
    hidden, temb = fwd(low_res_shallow, low_res_deep, high_res_deep, timesteps, params)
    jax.block_until_ready((hidden, temb))

    assert hidden.shape == (b, NUM_QUERIES, OUTPUT_DIM), hidden.shape
    assert temb.shape == (b, R_DIM), temb.shape
    assert bool(jnp.all(jnp.isfinite(hidden))) and bool(jnp.all(jnp.isfinite(temb)))
    print("KERNEL_OK")
</pallas_src>

<mosaic_0001>
module attributes {stable_mosaic.version = 11 : i64} {
  func.func @_fused_linear_kernel(%arg0: i32, %arg1: i32, %arg2: i32, %arg3: memref<64x64xf32, #tpu.memory_space<vmem>>, %arg4: memref<1x64xf32, #tpu.memory_space<vmem>>, %arg5: memref<1x64xf32, #tpu.memory_space<vmem>>, %arg6: memref<64x128xbf16, #tpu.memory_space<vmem>>, %arg7: memref<1x128xf32, #tpu.memory_space<vmem>>, %arg8: memref<64x128xbf16, #tpu.memory_space<vmem>>, %arg9: memref<64x64xbf16, #tpu.memory_space<vmem>>) attributes {dimension_semantics = [#tpu.dimension_semantics<parallel>, #tpu.dimension_semantics<arbitrary>, #tpu.dimension_semantics<arbitrary>], iteration_bounds = array<i64: 1, 1, 1>, scalar_prefetch = 0 : i64, scratch_operands = 1 : i64, tpu.core_type = #tpu.core_type<tc>, window_params = [{transform_indices = @transform_0, window_bounds = array<i64: 64, 64>}, {pipeline_mode = #tpu.pipeline_mode<synchronous>, transform_indices = @transform_1, window_bounds = array<i64: 1, 64>}, {pipeline_mode = #tpu.pipeline_mode<synchronous>, transform_indices = @transform_2, window_bounds = array<i64: 1, 64>}, {transform_indices = @transform_3, window_bounds = array<i64: 64, 128>}, {transform_indices = @transform_4, window_bounds = array<i64: 1, 128>}, {transform_indices = @transform_5, window_bounds = array<i64: 64, 128>}]} {
    %c0_i32 = arith.constant 0 : i32
    %0 = arith.cmpi eq, %arg1, %c0_i32 : i32
    %1 = arith.extui %0 : i1 to i32
    %c0_i32_0 = arith.constant 0 : i32
    %2 = arith.cmpi ne, %1, %c0_i32_0 : i32
    scf.if %2 {
      %c0_8 = arith.constant 0 : index
      %c0_9 = arith.constant 0 : index
      %11 = vector.load %arg3[%c0_8, %c0_9] : memref<64x64xf32, #tpu.memory_space<vmem>>, vector<64x64xf32>
      %cst_10 = arith.constant dense<0.000000e+00> : vector<64xf32>
      %12 = vector.multi_reduction <add>, %11, %cst_10 [1] : vector<64x64xf32> to vector<64xf32>
      %13 = vector.shape_cast %12 : vector<64xf32> to vector<64x1xf32>
      %cst_11 = arith.constant 6.400000e+01 : f32
      %14 = vector.broadcast %cst_11 : f32 to vector<64x1xf32>
      %15 = arith.divf %13, %14 : vector<64x1xf32>
      %16 = vector.broadcast %15 : vector<64x1xf32> to vector<64x64xf32>
      %17 = arith.subf %11, %16 : vector<64x64xf32>
      %18 = arith.mulf %17, %17 : vector<64x64xf32>
      %cst_12 = arith.constant dense<0.000000e+00> : vector<64xf32>
      %19 = vector.multi_reduction <add>, %18, %cst_12 [1] : vector<64x64xf32> to vector<64xf32>
      %20 = vector.shape_cast %19 : vector<64xf32> to vector<64x1xf32>
      %cst_13 = arith.constant 6.400000e+01 : f32
      %21 = vector.broadcast %cst_13 : f32 to vector<64x1xf32>
      %22 = arith.divf %20, %21 : vector<64x1xf32>
      %cst_14 = arith.constant 9.99999974E-6 : f32
      %23 = vector.broadcast %cst_14 : f32 to vector<64x1xf32>
      %24 = arith.addf %22, %23 : vector<64x1xf32>
      %25 = math.rsqrt %24 : vector<64x1xf32>
      %26 = vector.broadcast %25 : vector<64x1xf32> to vector<64x64xf32>
      %27 = arith.mulf %17, %26 : vector<64x64xf32>
      %c0_15 = arith.constant 0 : index
      %c0_16 = arith.constant 0 : index
      %28 = vector.load %arg4[%c0_15, %c0_16] : memref<1x64xf32, #tpu.memory_space<vmem>>, vector<1x64xf32>
      %29 = vector.broadcast %28 : vector<1x64xf32> to vector<64x64xf32>
      %30 = arith.mulf %27, %29 : vector<64x64xf32>
      %c0_17 = arith.constant 0 : index
      %c0_18 = arith.constant 0 : index
      %31 = vector.load %arg5[%c0_17, %c0_18] : memref<1x64xf32, #tpu.memory_space<vmem>>, vector<1x64xf32>
      %32 = vector.broadcast %31 : vector<1x64xf32> to vector<64x64xf32>
      %33 = arith.addf %30, %32 : vector<64x64xf32>
      %34 = arith.truncf %33 : vector<64x64xf32> to vector<64x64xbf16>
      %c0_19 = arith.constant 0 : index
      %c0_20 = arith.constant 0 : index
      %35 = vector.load %arg9[%c0_19, %c0_20] : memref<64x64xbf16, #tpu.memory_space<vmem>>, vector<64x64xbf16>
      tpu.vector_store %arg9[%c0_19, %c0_20], %34 {strides = array<i32>} : memref<64x64xbf16, #tpu.memory_space<vmem>>, vector<64x64xbf16>,
    } else {
    }
    %c0 = arith.constant 0 : index
    %c0_1 = arith.constant 0 : index
    %3 = vector.load %arg9[%c0, %c0_1] : memref<64x64xbf16, #tpu.memory_space<vmem>>, vector<64x64xbf16>
    %c0_2 = arith.constant 0 : index
    %c0_3 = arith.constant 0 : index
    %4 = vector.load %arg6[%c0_2, %c0_3] : memref<64x128xbf16, #tpu.memory_space<vmem>>, vector<64x128xbf16>
    %cst = arith.constant dense<0.000000e+00> : vector<64x128xf32>
    %5 = tpu.matmul %3, %4, %cst {dimension_numbers = #tpu.dot_dimension_numbers<[1], [0], [0], [1], [0, 0, 1, 1], [], []>} : vector<64x64xbf16>, vector<64x128xbf16>, vector<64x128xf32> -> vector<64x128xf32>
    %c0_4 = arith.constant 0 : index
    %c0_5 = arith.constant 0 : index
    %6 = vector.load %arg7[%c0_4, %c0_5] : memref<1x128xf32, #tpu.memory_space<vmem>>, vector<1x128xf32>
    %7 = vector.broadcast %6 : vector<1x128xf32> to vector<64x128xf32>
    %8 = arith.addf %5, %7 : vector<64x128xf32>
    %9 = arith.truncf %8 : vector<64x128xf32> to vector<64x128xbf16>
    %c0_6 = arith.constant 0 : index
    %c0_7 = arith.constant 0 : index
    %10 = vector.load %arg8[%c0_6, %c0_7] : memref<64x128xbf16, #tpu.memory_space<vmem>>, vector<64x128xbf16>
    tpu.vector_store %arg8[%c0_6, %c0_7], %9 {strides = array<i32>} : memref<64x128xbf16, #tpu.memory_space<vmem>>, vector<64x128xbf16>,
    return
  }
  func.func @transform_0(%arg0: i32, %arg1: i32, %arg2: i32) -> (i32, i32) {
    %c0_i32 = arith.constant 0 : i32
    return %arg0, %arg2 : i32, i32
  }
  func.func @transform_1(%arg0: i32, %arg1: i32, %arg2: i32) -> (i32, i32) {
    %c0_i32 = arith.constant 0 : i32
    %c0_i32_0 = arith.constant 0 : i32
    %c0_i32_1 = arith.constant 0 : i32
    return %c0_i32, %c0_i32_0 : i32, i32
  }
  func.func @transform_2(%arg0: i32, %arg1: i32, %arg2: i32) -> (i32, i32) {
    %c0_i32 = arith.constant 0 : i32
    %c0_i32_0 = arith.constant 0 : i32
    %c0_i32_1 = arith.constant 0 : i32
    return %c0_i32, %c0_i32_0 : i32, i32
  }
  func.func @transform_3(%arg0: i32, %arg1: i32, %arg2: i32) -> (i32, i32) {
    %c0_i32 = arith.constant 0 : i32
    return %arg2, %arg1 : i32, i32
  }
  func.func @transform_4(%arg0: i32, %arg1: i32, %arg2: i32) -> (i32, i32) {
    %c0_i32 = arith.constant 0 : i32
    %c0_i32_0 = arith.constant 0 : i32
    return %c0_i32, %arg1 : i32, i32
  }
  func.func @transform_5(%arg0: i32, %arg1: i32, %arg2: i32) -> (i32, i32) {
    %c0_i32 = arith.constant 0 : i32
    return %arg0, %arg1 : i32, i32
  }
}

module attributes {stable_mosaic.version = 11 : i64} {
  func.func @_fused_linear_kernel(%arg0: i32, %arg1: i32, %arg2: i32, %arg3: memref<32x64xf32, #tpu.memory_space<vmem>>, %arg4: memref<1x64xf32, #tpu.memory_space<vmem>>, %arg5: memref<1x64xf32, #tpu.memory_space<vmem>>, %arg6: memref<64x64xbf16, #tpu.memory_space<vmem>>, %arg7: memref<1x64xf32, #tpu.memory_space<vmem>>, %arg8: memref<32x64xbf16, #tpu.memory_space<vmem>>, %arg9: memref<32x64xbf16, #tpu.memory_space<vmem>>) attributes {dimension_semantics = [#tpu.dimension_semantics<parallel>, #tpu.dimension_semantics<arbitrary>, #tpu.dimension_semantics<arbitrary>], iteration_bounds = array<i64: 1, 1, 1>, scalar_prefetch = 0 : i64, scratch_operands = 1 : i64, tpu.core_type = #tpu.core_type<tc>, window_params = [{transform_indices = @transform_0, window_bounds = array<i64: 32, 64>}, {pipeline_mode = #tpu.pipeline_mode<synchronous>, transform_indices = @transform_1, window_bounds = array<i64: 1, 64>}, {pipeline_mode = #tpu.pipeline_mode<synchronous>, transform_indices = @transform_2, window_bounds = array<i64: 1, 64>}, {transform_indices = @transform_3, window_bounds = array<i64: 64, 64>}, {transform_indices = @transform_4, window_bounds = array<i64: 1, 64>}, {transform_indices = @transform_5, window_bounds = array<i64: 32, 64>}]} {
    %c0_i32 = arith.constant 0 : i32
    %0 = arith.cmpi eq, %arg1, %c0_i32 : i32
    %1 = arith.extui %0 : i1 to i32
    %c0_i32_0 = arith.constant 0 : i32
    %2 = arith.cmpi ne, %1, %c0_i32_0 : i32
    scf.if %2 {
      %c0_8 = arith.constant 0 : index
      %c0_9 = arith.constant 0 : index
      %11 = vector.load %arg3[%c0_8, %c0_9] : memref<32x64xf32, #tpu.memory_space<vmem>>, vector<32x64xf32>
      %cst_10 = arith.constant dense<0.000000e+00> : vector<32xf32>
      %12 = vector.multi_reduction <add>, %11, %cst_10 [1] : vector<32x64xf32> to vector<32xf32>
      %13 = vector.shape_cast %12 : vector<32xf32> to vector<32x1xf32>
      %cst_11 = arith.constant 6.400000e+01 : f32
      %14 = vector.broadcast %cst_11 : f32 to vector<32x1xf32>
      %15 = arith.divf %13, %14 : vector<32x1xf32>
      %16 = vector.broadcast %15 : vector<32x1xf32> to vector<32x64xf32>
      %17 = arith.subf %11, %16 : vector<32x64xf32>
      %18 = arith.mulf %17, %17 : vector<32x64xf32>
      %cst_12 = arith.constant dense<0.000000e+00> : vector<32xf32>
      %19 = vector.multi_reduction <add>, %18, %cst_12 [1] : vector<32x64xf32> to vector<32xf32>
      %20 = vector.shape_cast %19 : vector<32xf32> to vector<32x1xf32>
      %cst_13 = arith.constant 6.400000e+01 : f32
      %21 = vector.broadcast %cst_13 : f32 to vector<32x1xf32>
      %22 = arith.divf %20, %21 : vector<32x1xf32>
      %cst_14 = arith.constant 9.99999974E-6 : f32
      %23 = vector.broadcast %cst_14 : f32 to vector<32x1xf32>
      %24 = arith.addf %22, %23 : vector<32x1xf32>
      %25 = math.rsqrt %24 : vector<32x1xf32>
      %26 = vector.broadcast %25 : vector<32x1xf32> to vector<32x64xf32>
      %27 = arith.mulf %17, %26 : vector<32x64xf32>
      %c0_15 = arith.constant 0 : index
      %c0_16 = arith.constant 0 : index
      %28 = vector.load %arg4[%c0_15, %c0_16] : memref<1x64xf32, #tpu.memory_space<vmem>>, vector<1x64xf32>
      %29 = vector.broadcast %28 : vector<1x64xf32> to vector<32x64xf32>
      %30 = arith.mulf %27, %29 : vector<32x64xf32>
      %c0_17 = arith.constant 0 : index
      %c0_18 = arith.constant 0 : index
      %31 = vector.load %arg5[%c0_17, %c0_18] : memref<1x64xf32, #tpu.memory_space<vmem>>, vector<1x64xf32>
      %32 = vector.broadcast %31 : vector<1x64xf32> to vector<32x64xf32>
      %33 = arith.addf %30, %32 : vector<32x64xf32>
      %34 = arith.truncf %33 : vector<32x64xf32> to vector<32x64xbf16>
      %c0_19 = arith.constant 0 : index
      %c0_20 = arith.constant 0 : index
      %35 = vector.load %arg9[%c0_19, %c0_20] : memref<32x64xbf16, #tpu.memory_space<vmem>>, vector<32x64xbf16>
      tpu.vector_store %arg9[%c0_19, %c0_20], %34 {strides = array<i32>} : memref<32x64xbf16, #tpu.memory_space<vmem>>, vector<32x64xbf16>,
    } else {
    }
    %c0 = arith.constant 0 : index
    %c0_1 = arith.constant 0 : index
    %3 = vector.load %arg9[%c0, %c0_1] : memref<32x64xbf16, #tpu.memory_space<vmem>>, vector<32x64xbf16>
    %c0_2 = arith.constant 0 : index
    %c0_3 = arith.constant 0 : index
    %4 = vector.load %arg6[%c0_2, %c0_3] : memref<64x64xbf16, #tpu.memory_space<vmem>>, vector<64x64xbf16>
    %cst = arith.constant dense<0.000000e+00> : vector<32x64xf32>
    %5 = tpu.matmul %3, %4, %cst {dimension_numbers = #tpu.dot_dimension_numbers<[1], [0], [0], [1], [0, 0, 1, 1], [], []>} : vector<32x64xbf16>, vector<64x64xbf16>, vector<32x64xf32> -> vector<32x64xf32>
    %c0_4 = arith.constant 0 : index
    %c0_5 = arith.constant 0 : index
    %6 = vector.load %arg7[%c0_4, %c0_5] : memref<1x64xf32, #tpu.memory_space<vmem>>, vector<1x64xf32>
    %7 = vector.broadcast %6 : vector<1x64xf32> to vector<32x64xf32>
    %8 = arith.addf %5, %7 : vector<32x64xf32>
    %9 = arith.truncf %8 : vector<32x64xf32> to vector<32x64xbf16>
    %c0_6 = arith.constant 0 : index
    %c0_7 = arith.constant 0 : index
    %10 = vector.load %arg8[%c0_6, %c0_7] : memref<32x64xbf16, #tpu.memory_space<vmem>>, vector<32x64xbf16>
    tpu.vector_store %arg8[%c0_6, %c0_7], %9 {strides = array<i32>} : memref<32x64xbf16, #tpu.memory_space<vmem>>, vector<32x64xbf16>,
    return
  }
  func.func @transform_0(%arg0: i32, %arg1: i32, %arg2: i32) -> (i32, i32) {
    %c0_i32 = arith.constant 0 : i32
    return %arg0, %arg2 : i32, i32
  }
  func.func @transform_1(%arg0: i32, %arg1: i32, %arg2: i32) -> (i32, i32) {
    %c0_i32 = arith.constant 0 : i32
    %c0_i32_0 = arith.constant 0 : i32
    %c0_i32_1 = arith.constant 0 : i32
    return %c0_i32, %c0_i32_0 : i32, i32
  }
  func.func @transform_2(%arg0: i32, %arg1: i32, %arg2: i32) -> (i32, i32) {
    %c0_i32 = arith.constant 0 : i32
    %c0_i32_0 = arith.constant 0 : i32
    %c0_i32_1 = arith.constant 0 : i32
    return %c0_i32, %c0_i32_0 : i32, i32
  }
  func.func @transform_3(%arg0: i32, %arg1: i32, %arg2: i32) -> (i32, i32) {
    %c0_i32 = arith.constant 0 : i32
    return %arg2, %arg1 : i32, i32
  }
  func.func @transform_4(%arg0: i32, %arg1: i32, %arg2: i32) -> (i32, i32) {
    %c0_i32 = arith.constant 0 : i32
    %c0_i32_0 = arith.constant 0 : i32
    return %c0_i32, %arg1 : i32, i32
  }
  func.func @transform_5(%arg0: i32, %arg1: i32, %arg2: i32) -> (i32, i32) {
    %c0_i32 = arith.constant 0 : i32
    return %arg0, %arg1 : i32, i32
  }
}

module attributes {stable_mosaic.version = 11 : i64} {
  func.func @_flash_attention_kernel(%arg0: i32, %arg1: i32, %arg2: i32, %arg3: memref<1x16x64xbf16, #tpu.memory_space<vmem>>, %arg4: memref<1x32x64xbf16, #tpu.memory_space<vmem>>, %arg5: memref<1x32x64xbf16, #tpu.memory_space<vmem>>, %arg6: memref<1x16x64xbf16, #tpu.memory_space<vmem>>, %arg7: memref<16x4xf32, #tpu.memory_space<vmem>>, %arg8: memref<16x64xf32, #tpu.memory_space<vmem>>, %arg9: memref<16x64xf32, #tpu.memory_space<vmem>>) attributes {dimension_semantics = [#tpu.dimension_semantics<parallel>, #tpu.dimension_semantics<parallel>, #tpu.dimension_semantics<arbitrary>], iteration_bounds = array<i64: 2, 1, 1>, scalar_prefetch = 0 : i64, scratch_operands = 3 : i64, tpu.core_type = #tpu.core_type<tc>, window_params = [{transform_indices = @transform_0, window_bounds = array<i64: 1, 16, 64>}, {transform_indices = @transform_1, window_bounds = array<i64: 1, 32, 64>}, {transform_indices = @transform_2, window_bounds = array<i64: 1, 32, 64>}, {transform_indices = @transform_3, window_bounds = array<i64: 1, 16, 64>}]} {
    %c0_i32 = arith.constant 0 : i32
    %0 = arith.cmpi eq, %arg2, %c0_i32 : i32
    %1 = arith.extui %0 : i1 to i32
    %c0_i32_0 = arith.constant 0 : i32
    %2 = arith.cmpi ne, %1, %c0_i32_0 : i32
    scf.if %2 {
      %cst_95 = arith.constant -1.000000e+30 : f32
      %134 = vector.broadcast %cst_95 : f32 to vector<16x4xf32>
      %c0_96 = arith.constant 0 : index
      %c0_97 = arith.constant 0 : index
      %135 = vector.load %arg7[%c0_96, %c0_97] : memref<16x4xf32, #tpu.memory_space<vmem>>, vector<16x4xf32>
      tpu.vector_store %arg7[%c0_96, %c0_97], %134 {strides = array<i32>} : memref<16x4xf32, #tpu.memory_space<vmem>>, vector<16x4xf32>,
      %cst_98 = arith.constant 0.000000e+00 : f32
      %136 = vector.broadcast %cst_98 : f32 to vector<16x64xf32>
      %c0_99 = arith.constant 0 : index
      %c0_100 = arith.constant 0 : index
      %137 = vector.load %arg8[%c0_99, %c0_100] : memref<16x64xf32, #tpu.memory_space<vmem>>, vector<16x64xf32>
      tpu.vector_store %arg8[%c0_99, %c0_100], %136 {strides = array<i32>} : memref<16x64xf32, #tpu.memory_space<vmem>>, vector<16x64xf32>,
      %cst_101 = arith.constant 0.000000e+00 : f32
      %138 = vector.broadcast %cst_101 : f32 to vector<16x64xf32>
      %c0_102 = arith.constant 0 : index
      %c0_103 = arith.constant 0 : index
      %139 = vector.load %arg9[%c0_102, %c0_103] : memref<16x64xf32, #tpu.memory_space<vmem>>, vector<16x64xf32>
      tpu.vector_store %arg9[%c0_102, %c0_103], %138 {strides = array<i32>} : memref<16x64xf32, #tpu.memory_space<vmem>>, vector<16x64xf32>,
    } else {
    }
    %c0 = arith.constant 0 : index
    %c0_1 = arith.constant 0 : index
    %c0_2 = arith.constant 0 : index
    %3 = vector.load %arg3[%c0, %c0_1, %c0_2] : memref<1x16x64xbf16, #tpu.memory_space<vmem>>, vector<1x16x16xbf16>
    %4 = vector.shape_cast %3 : vector<1x16x16xbf16> to vector<16x16xbf16>
    %c0_3 = arith.constant 0 : index
    %c0_4 = arith.constant 0 : index
    %c0_5 = arith.constant 0 : index
    %5 = vector.load %arg4[%c0_3, %c0_4, %c0_5] : memref<1x32x64xbf16, #tpu.memory_space<vmem>>, vector<1x32x16xbf16>
    %6 = vector.shape_cast %5 : vector<1x32x16xbf16> to vector<32x16xbf16>
    %cst = arith.constant dense<0.000000e+00> : vector<16x32xf32>
    %7 = tpu.matmul %4, %6, %cst {dimension_numbers = #tpu.dot_dimension_numbers<[1], [1], [0], [0], [0, 0, 1, 0], [], []>} : vector<16x16xbf16>, vector<32x16xbf16>, vector<16x32xf32> -> vector<16x32xf32>
    %c0_6 = arith.constant 0 : index
    %c0_7 = arith.constant 0 : index
    %8 = vector.load %arg7[%c0_6, %c0_7] : memref<16x4xf32, #tpu.memory_space<vmem>>, vector<16x1xf32>
    %cst_8 = arith.constant dense<0xFF800000> : vector<16xf32>
    %9 = vector.multi_reduction <maximumf>, %7, %cst_8 [1] : vector<16x32xf32> to vector<16xf32>
    %10 = vector.shape_cast %9 : vector<16xf32> to vector<16x1xf32>
    %11 = arith.maximumf %8, %10 : vector<16x1xf32>
    %12 = arith.subf %8, %11 : vector<16x1xf32>
    %13 = math.exp %12 : vector<16x1xf32>
    %14 = vector.broadcast %11 : vector<16x1xf32> to vector<16x32xf32>
    %15 = arith.subf %7, %14 : vector<16x32xf32>
    %16 = math.exp %15 : vector<16x32xf32>
    %c0_9 = arith.constant 0 : index
    %c0_10 = arith.constant 0 : index
    %17 = vector.load %arg8[%c0_9, %c0_10] : memref<16x64xf32, #tpu.memory_space<vmem>>, vector<16x16xf32>
    %18 = vector.broadcast %13 : vector<16x1xf32> to vector<16x16xf32>
    %19 = arith.mulf %18, %17 : vector<16x16xf32>
    %cst_11 = arith.constant dense<0.000000e+00> : vector<16xf32>
    %20 = vector.multi_reduction <add>, %16, %cst_11 [1] : vector<16x32xf32> to vector<16xf32>
    %21 = vector.shape_cast %20 : vector<16xf32> to vector<16x1xf32>
    %22 = vector.broadcast %21 : vector<16x1xf32> to vector<16x16xf32>
    %23 = arith.addf %19, %22 : vector<16x16xf32>
    %c0_12 = arith.constant 0 : index
    %c0_13 = arith.constant 0 : index
    %24 = vector.load %arg8[%c0_12, %c0_13] : memref<16x64xf32, #tpu.memory_space<vmem>>, vector<16x16xf32>
    tpu.vector_store %arg8[%c0_12, %c0_13], %23 {strides = array<i32>} : memref<16x64xf32, #tpu.memory_space<vmem>>, vector<16x16xf32>,
    %c0_14 = arith.constant 0 : index
    %c0_15 = arith.constant 0 : index
    %25 = vector.load %arg9[%c0_14, %c0_15] : memref<16x64xf32, #tpu.memory_space<vmem>>, vector<16x16xf32>
    %26 = vector.broadcast %13 : vector<16x1xf32> to vector<16x16xf32>
    %27 = arith.mulf %26, %25 : vector<16x16xf32>
    %28 = arith.truncf %16 : vector<16x32xf32> to vector<16x32xbf16>
    %c0_16 = arith.constant 0 : index
    %c0_17 = arith.constant 0 : index
    %c0_18 = arith.constant 0 : index
    %29 = vector.load %arg5[%c0_16, %c0_17, %c0_18] : memref<1x32x64xbf16, #tpu.memory_space<vmem>>, vector<1x32x16xbf16>
    %30 = vector.shape_cast %29 : vector<1x32x16xbf16> to vector<32x16xbf16>
    %cst_19 = arith.constant dense<0.000000e+00> : vector<16x16xf32>
    %31 = tpu.matmul %28, %30, %cst_19 {dimension_numbers = #tpu.dot_dimension_numbers<[1], [0], [0], [1], [0, 0, 1, 1], [], []>} : vector<16x32xbf16>, vector<32x16xbf16>, vector<16x16xf32> -> vector<16x16xf32>
    %32 = arith.addf %27, %31 : vector<16x16xf32>
    %c0_20 = arith.constant 0 : index
    %c0_21 = arith.constant 0 : index
    %33 = vector.load %arg9[%c0_20, %c0_21] : memref<16x64xf32, #tpu.memory_space<vmem>>, vector<16x16xf32>
    tpu.vector_store %arg9[%c0_20, %c0_21], %32 {strides = array<i32>} : memref<16x64xf32, #tpu.memory_space<vmem>>, vector<16x16xf32>,
    %c0_22 = arith.constant 0 : index
    %c0_23 = arith.constant 0 : index
    %34 = vector.load %arg7[%c0_22, %c0_23] : memref<16x4xf32, #tpu.memory_space<vmem>>, vector<16x1xf32>
    tpu.vector_store %arg7[%c0_22, %c0_23], %11 {strides = array<i32>} : memref<16x4xf32, #tpu.memory_space<vmem>>, vector<16x1xf32>,
    %c0_24 = arith.constant 0 : index
    %c0_25 = arith.constant 0 : index
    %c16 = arith.constant 16 : index
    %35 = vector.load %arg3[%c0_24, %c0_25, %c16] : memref<1x16x64xbf16, #tpu.memory_space<vmem>>, vector<1x16x16xbf16>
    %36 = vector.shape_cast %35 : vector<1x16x16xbf16> to vector<16x16xbf16>
    %c0_26 = arith.constant 0 : index
    %c0_27 = arith.constant 0 : index
    %c16_28 = arith.constant 16 : index
    %37 = vector.load %arg4[%c0_26, %c0_27, %c16_28] : memref<1x32x64xbf16, #tpu.memory_space<vmem>>, vector<1x32x16xbf16>
    %38 = vector.shape_cast %37 : vector<1x32x16xbf16> to vector<32x16xbf16>
    %cst_29 = arith.constant dense<0.000000e+00> : vector<16x32xf32>
    %39 = tpu.matmul %36, %38, %cst_29 {dimension_numbers = #tpu.dot_dimension_numbers<[1], [1], [0], [0], [0, 0, 1, 0], [], []>} : vector<16x16xbf16>, vector<32x16xbf16>, vector<16x32xf32> -> vector<16x32xf32>
    %c0_30 = arith.constant 0 : index
    %c1 = arith.constant 1 : index
    %40 = vector.load %arg7[%c0_30, %c1] : memref<16x4xf32, #tpu.memory_space<vmem>>, vector<16x1xf32>
    %cst_31 = arith.constant dense<0xFF800000> : vector<16xf32>
    %41 = vector.multi_reduction <maximumf>, %39, %cst_31 [1] : vector<16x32xf32> to vector<16xf32>
    %42 = vector.shape_cast %41 : vector<16xf32> to vector<16x1xf32>
    %43 = arith.maximumf %40, %42 : vector<16x1xf32>
    %44 = arith.subf %40, %43 : vector<16x1xf32>
    %45 = math.exp %44 : vector<16x1xf32>
    %46 = vector.broadcast %43 : vector<16x1xf32> to vector<16x32xf32>
    %47 = arith.subf %39, %46 : vector<16x32xf32>
    %48 = math.exp %47 : vector<16x32xf32>
    %c0_32 = arith.constant 0 : index
    %c16_33 = arith.constant 16 : index
    %49 = vector.load %arg8[%c0_32, %c16_33] : memref<16x64xf32, #tpu.memory_space<vmem>>, vector<16x16xf32>
    %50 = vector.broadcast %45 : vector<16x1xf32> to vector<16x16xf32>
    %51 = arith.mulf %50, %49 : vector<16x16xf32>
    %cst_34 = arith.constant dense<0.000000e+00> : vector<16xf32>
    %52 = vector.multi_reduction <add>, %48, %cst_34 [1] : vector<16x32xf32> to vector<16xf32>
    %53 = vector.shape_cast %52 : vector<16xf32> to vector<16x1xf32>
    %54 = vector.broadcast %53 : vector<16x1xf32> to vector<16x16xf32>
    %55 = arith.addf %51, %54 : vector<16x16xf32>
    %c0_35 = arith.constant 0 : index
    %c16_36 = arith.constant 16 : index
    %56 = vector.load %arg8[%c0_35, %c16_36] : memref<16x64xf32, #tpu.memory_space<vmem>>, vector<16x16xf32>
    tpu.vector_store %arg8[%c0_35, %c16_36], %55 {strides = array<i32>} : memref<16x64xf32, #tpu.memory_space<vmem>>, vector<16x16xf32>,
    %c0_37 = arith.constant 0 : index
    %c16_38 = arith.constant 16 : index
    %57 = vector.load %arg9[%c0_37, %c16_38] : memref<16x64xf32, #tpu.memory_space<vmem>>, vector<16x16xf32>
    %58 = vector.broadcast %45 : vector<16x1xf32> to vector<16x16xf32>
    %59 = arith.mulf %58, %57 : vector<16x16xf32>
    %60 = arith.truncf %48 : vector<16x32xf32> to vector<16x32xbf16>
    %c0_39 = arith.constant 0 : index
    %c0_40 = arith.constant 0 : index
    %c16_41 = arith.constant 16 : index
    %61 = vector.load %arg5[%c0_39, %c0_40, %c16_41] : memref<1x32x64xbf16, #tpu.memory_space<vmem>>, vector<1x32x16xbf16>
    %62 = vector.shape_cast %61 : vector<1x32x16xbf16> to vector<32x16xbf16>
    %cst_42 = arith.constant dense<0.000000e+00> : vector<16x16xf32>
    %63 = tpu.matmul %60, %62, %cst_42 {dimension_numbers = #tpu.dot_dimension_numbers<[1], [0], [0], [1], [0, 0, 1, 1], [], []>} : vector<16x32xbf16>, vector<32x16xbf16>, vector<16x16xf32> -> vector<16x16xf32>
    %64 = arith.addf %59, %63 : vector<16x16xf32>
    %c0_43 = arith.constant 0 : index
    %c16_44 = arith.constant 16 : index
    %65 = vector.load %arg9[%c0_43, %c16_44] : memref<16x64xf32, #tpu.memory_space<vmem>>, vector<16x16xf32>
    tpu.vector_store %arg9[%c0_43, %c16_44], %64 {strides = array<i32>} : memref<16x64xf32, #tpu.memory_space<vmem>>, vector<16x16xf32>,
    %c0_45 = arith.constant 0 : index
    %c1_46 = arith.constant 1 : index
    %66 = vector.load %arg7[%c0_45, %c1_46] : memref<16x4xf32, #tpu.memory_space<vmem>>, vector<16x1xf32>
    tpu.vector_store %arg7[%c0_45, %c1_46], %43 {strides = array<i32>} : memref<16x4xf32, #tpu.memory_space<vmem>>, vector<16x1xf32>,
    %c0_47 = arith.constant 0 : index
    %c0_48 = arith.constant 0 : index
    %c32 = arith.constant 32 : index
    %67 = vector.load %arg3[%c0_47, %c0_48, %c32] : memref<1x16x64xbf16, #tpu.memory_space<vmem>>, vector<1x16x16xbf16>
    %68 = vector.shape_cast %67 : vector<1x16x16xbf16> to vector<16x16xbf16>
    %c0_49 = arith.constant 0 : index
    %c0_50 = arith.constant 0 : index
    %c32_51 = arith.constant 32 : index
    %69 = vector.load %arg4[%c0_49, %c0_50, %c32_51] : memref<1x32x64xbf16, #tpu.memory_space<vmem>>, vector<1x32x16xbf16>
    %70 = vector.shape_cast %69 : vector<1x32x16xbf16> to vector<32x16xbf16>
    %cst_52 = arith.constant dense<0.000000e+00> : vector<16x32xf32>
    %71 = tpu.matmul %68, %70, %cst_52 {dimension_numbers = #tpu.dot_dimension_numbers<[1], [1], [0], [0], [0, 0, 1, 0], [], []>} : vector<16x16xbf16>, vector<32x16xbf16>, vector<16x32xf32> -> vector<16x32xf32>
    %c0_53 = arith.constant 0 : index
    %c2 = arith.constant 2 : index
    %72 = vector.load %arg7[%c0_53, %c2] : memref<16x4xf32, #tpu.memory_space<vmem>>, vector<16x1xf32>
    %cst_54 = arith.constant dense<0xFF800000> : vector<16xf32>
    %73 = vector.multi_reduction <maximumf>, %71, %cst_54 [1] : vector<16x32xf32> to vector<16xf32>
    %74 = vector.shape_cast %73 : vector<16xf32> to vector<16x1xf32>
    %75 = arith.maximumf %72, %74 : vector<16x1xf32>
    %76 = arith.subf %72, %75 : vector<16x1xf32>
    %77 = math.exp %76 : vector<16x1xf32>
    %78 = vector.broadcast %75 : vector<16x1xf32> to vector<16x32xf32>
    %79 = arith.subf %71, %78 : vector<16x32xf32>
    %80 = math.exp %79 : vector<16x32xf32>
    %c0_55 = arith.constant 0 : index
    %c32_56 = arith.constant 32 : index
    %81 = vector.load %arg8[%c0_55, %c32_56] : memref<16x64xf32, #tpu.memory_space<vmem>>, vector<16x16xf32>
    %82 = vector.broadcast %77 : vector<16x1xf32> to vector<16x16xf32>
    %83 = arith.mulf %82, %81 : vector<16x16xf32>
    %cst_57 = arith.constant dense<0.000000e+00> : vector<16xf32>
    %84 = vector.multi_reduction <add>, %80, %cst_57 [1] : vector<16x32xf32> to vector<16xf32>
    %85 = vector.shape_cast %84 : vector<16xf32> to vector<16x1xf32>
    %86 = vector.broadcast %85 : vector<16x1xf32> to vector<16x16xf32>
    %87 = arith.addf %83, %86 : vector<16x16xf32>
    %c0_58 = arith.constant 0 : index
    %c32_59 = arith.constant 32 : index
    %88 = vector.load %arg8[%c0_58, %c32_59] : memref<16x64xf32, #tpu.memory_space<vmem>>, vector<16x16xf32>
    tpu.vector_store %arg8[%c0_58, %c32_59], %87 {strides = array<i32>} : memref<16x64xf32, #tpu.memory_space<vmem>>, vector<16x16xf32>,
    %c0_60 = arith.constant 0 : index
    %c32_61 = arith.constant 32 : index
    %89 = vector.load %arg9[%c0_60, %c32_61] : memref<16x64xf32, #tpu.memory_space<vmem>>, vector<16x16xf32>
    %90 = vector.broadcast %77 : vector<16x1xf32> to vector<16x16xf32>
    %91 = arith.mulf %90, %89 : vector<16x16xf32>
    %92 = arith.truncf %80 : vector<16x32xf32> to vector<16x32xbf16>
    %c0_62 = arith.constant 0 : index
    %c0_63 = arith.constant 0 : index
    %c32_64 = arith.constant 32 : index
    %93 = vector.load %arg5[%c0_62, %c0_63, %c32_64] : memref<1x32x64xbf16, #tpu.memory_space<vmem>>, vector<1x32x16xbf16>
    %94 = vector.shape_cast %93 : vector<1x32x16xbf16> to vector<32x16xbf16>
    %cst_65 = arith.constant dense<0.000000e+00> : vector<16x16xf32>
    %95 = tpu.matmul %92, %94, %cst_65 {dimension_numbers = #tpu.dot_dimension_numbers<[1], [0], [0], [1], [0, 0, 1, 1], [], []>} : vector<16x32xbf16>, vector<32x16xbf16>, vector<16x16xf32> -> vector<16x16xf32>
    %96 = arith.addf %91, %95 : vector<16x16xf32>
    %c0_66 = arith.constant 0 : index
    %c32_67 = arith.constant 32 : index
    %97 = vector.load %arg9[%c0_66, %c32_67] : memref<16x64xf32, #tpu.memory_space<vmem>>, vector<16x16xf32>
    tpu.vector_store %arg9[%c0_66, %c32_67], %96 {strides = array<i32>} : memref<16x64xf32, #tpu.memory_space<vmem>>, vector<16x16xf32>,
    %c0_68 = arith.constant 0 : index
    %c2_69 = arith.constant 2 : index
    %98 = vector.load %arg7[%c0_68, %c2_69] : memref<16x4xf32, #tpu.memory_space<vmem>>, vector<16x1xf32>
    tpu.vector_store %arg7[%c0_68, %c2_69], %75 {strides = array<i32>} : memref<16x4xf32, #tpu.memory_space<vmem>>, vector<16x1xf32>,
    %c0_70 = arith.constant 0 : index
    %c0_71 = arith.constant 0 : index
    %c48 = arith.constant 48 : index
    %99 = vector.load %arg3[%c0_70, %c0_71, %c48] : memref<1x16x64xbf16, #tpu.memory_space<vmem>>, vector<1x16x16xbf16>
    %100 = vector.shape_cast %99 : vector<1x16x16xbf16> to vector<16x16xbf16>
    %c0_72 = arith.constant 0 : index
    %c0_73 = arith.constant 0 : index
    %c48_74 = arith.constant 48 : index
    %101 = vector.load %arg4[%c0_72, %c0_73, %c48_74] : memref<1x32x64xbf16, #tpu.memory_space<vmem>>, vector<1x32x16xbf16>
    %102 = vector.shape_cast %101 : vector<1x32x16xbf16> to vector<32x16xbf16>
    %cst_75 = arith.constant dense<0.000000e+00> : vector<16x32xf32>
    %103 = tpu.matmul %100, %102, %cst_75 {dimension_numbers = #tpu.dot_dimension_numbers<[1], [1], [0], [0], [0, 0, 1, 0], [], []>} : vector<16x16xbf16>, vector<32x16xbf16>, vector<16x32xf32> -> vector<16x32xf32>
    %c0_76 = arith.constant 0 : index
    %c3 = arith.constant 3 : index
    %104 = vector.load %arg7[%c0_76, %c3] : memref<16x4xf32, #tpu.memory_space<vmem>>, vector<16x1xf32>
    %cst_77 = arith.constant dense<0xFF800000> : vector<16xf32>
    %105 = vector.multi_reduction <maximumf>, %103, %cst_77 [1] : vector<16x32xf32> to vector<16xf32>
    %106 = vector.shape_cast %105 : vector<16xf32> to vector<16x1xf32>
    %107 = arith.maximumf %104, %106 : vector<16x1xf32>
    %108 = arith.subf %104, %107 : vector<16x1xf32>
    %109 = math.exp %108 : vector<16x1xf32>
    %110 = vector.broadcast %107 : vector<16x1xf32> to vector<16x32xf32>
    %111 = arith.subf %103, %110 : vector<16x32xf32>
    %112 = math.exp %111 : vector<16x32xf32>
    %c0_78 = arith.constant 0 : index
    %c48_79 = arith.constant 48 : index
    %113 = vector.load %arg8[%c0_78, %c48_79] : memref<16x64xf32, #tpu.memory_space<vmem>>, vector<16x16xf32>
    %114 = vector.broadcast %109 : vector<16x1xf32> to vector<16x16xf32>
    %115 = arith.mulf %114, %113 : vector<16x16xf32>
    %cst_80 = arith.constant dense<0.000000e+00> : vector<16xf32>
    %116 = vector.multi_reduction <add>, %112, %cst_80 [1] : vector<16x32xf32> to vector<16xf32>
    %117 = vector.shape_cast %116 : vector<16xf32> to vector<16x1xf32>
    %118 = vector.broadcast %117 : vector<16x1xf32> to vector<16x16xf32>
    %119 = arith.addf %115, %118 : vector<16x16xf32>
    %c0_81 = arith.constant 0 : index
    %c48_82 = arith.constant 48 : index
    %120 = vector.load %arg8[%c0_81, %c48_82] : memref<16x64xf32, #tpu.memory_space<vmem>>, vector<16x16xf32>
    tpu.vector_store %arg8[%c0_81, %c48_82], %119 {strides = array<i32>} : memref<16x64xf32, #tpu.memory_space<vmem>>, vector<16x16xf32>,
    %c0_83 = arith.constant 0 : index
    %c48_84 = arith.constant 48 : index
    %121 = vector.load %arg9[%c0_83, %c48_84] : memref<16x64xf32, #tpu.memory_space<vmem>>, vector<16x16xf32>
    %122 = vector.broadcast %109 : vector<16x1xf32> to vector<16x16xf32>
    %123 = arith.mulf %122, %121 : vector<16x16xf32>
    %124 = arith.truncf %112 : vector<16x32xf32> to vector<16x32xbf16>
    %c0_85 = arith.constant 0 : index
    %c0_86 = arith.constant 0 : index
    %c48_87 = arith.constant 48 : index
    %125 = vector.load %arg5[%c0_85, %c0_86, %c48_87] : memref<1x32x64xbf16, #tpu.memory_space<vmem>>, vector<1x32x16xbf16>
    %126 = vector.shape_cast %125 : vector<1x32x16xbf16> to vector<32x16xbf16>
    %cst_88 = arith.constant dense<0.000000e+00> : vector<16x16xf32>
    %127 = tpu.matmul %124, %126, %cst_88 {dimension_numbers = #tpu.dot_dimension_numbers<[1], [0], [0], [1], [0, 0, 1, 1], [], []>} : vector<16x32xbf16>, vector<32x16xbf16>, vector<16x16xf32> -> vector<16x16xf32>
    %128 = arith.addf %123, %127 : vector<16x16xf32>
    %c0_89 = arith.constant 0 : index
    %c48_90 = arith.constant 48 : index
    %129 = vector.load %arg9[%c0_89, %c48_90] : memref<16x64xf32, #tpu.memory_space<vmem>>, vector<16x16xf32>
    tpu.vector_store %arg9[%c0_89, %c48_90], %128 {strides = array<i32>} : memref<16x64xf32, #tpu.memory_space<vmem>>, vector<16x16xf32>,
    %c0_91 = arith.constant 0 : index
    %c3_92 = arith.constant 3 : index
    %130 = vector.load %arg7[%c0_91, %c3_92] : memref<16x4xf32, #tpu.memory_space<vmem>>, vector<16x1xf32>
    tpu.vector_store %arg7[%c0_91, %c3_92], %107 {strides = array<i32>} : memref<16x4xf32, #tpu.memory_space<vmem>>, vector<16x1xf32>,
    %c0_i32_93 = arith.constant 0 : i32
    %131 = arith.cmpi eq, %arg2, %c0_i32_93 : i32
    %132 = arith.extui %131 : i1 to i32
    %c0_i32_94 = arith.constant 0 : i32
    %133 = arith.cmpi ne, %132, %c0_i32_94 : i32
    scf.if %133 {
      %c0_95 = arith.constant 0 : index
      %c0_96 = arith.constant 0 : index
      %134 = vector.load %arg9[%c0_95, %c0_96] : memref<16x64xf32, #tpu.memory_space<vmem>>, vector<16x64xf32>
      %c0_97 = arith.constant 0 : index
      %c0_98 = arith.constant 0 : index
      %135 = vector.load %arg8[%c0_97, %c0_98] : memref<16x64xf32, #tpu.memory_space<vmem>>, vector<16x64xf32>
      %136 = tpu.reciprocal %135 {approx = true} : vector<16x64xf32> -> vector<16x64xf32>
      %137 = arith.mulf %134, %136 : vector<16x64xf32>
      %138 = arith.truncf %137 : vector<16x64xf32> to vector<16x64xbf16>
      %c0_99 = arith.constant 0 : index
      %c0_100 = arith.constant 0 : index
      %c0_101 = arith.constant 0 : index
      %139 = vector.load %arg6[%c0_99, %c0_100, %c0_101] : memref<1x16x64xbf16, #tpu.memory_space<vmem>>, vector<1x16x64xbf16>
      %140 = vector.shape_cast %139 : vector<1x16x64xbf16> to vector<16x64xbf16>
      %141 = vector.shape_cast %138 : vector<16x64xbf16> to vector<1x16x64xbf16>
      tpu.vector_store %arg6[%c0_99, %c0_100, %c0_101], %141 {strides = array<i32>} : memref<1x16x64xbf16, #tpu.memory_space<vmem>>, vector<1x16x64xbf16>,
    } else {
    }
    return
  }
  func.func @transform_0(%arg0: i32, %arg1: i32, %arg2: i32) -> (i32, i32, i32) {
    %c0_i32 = arith.constant 0 : i32
    %c0_i32_0 = arith.constant 0 : i32
    return %arg0, %c0_i32, %arg1 : i32, i32, i32
  }
  func.func @transform_1(%arg0: i32, %arg1: i32, %arg2: i32) -> (i32, i32, i32) {
    %c0_i32 = arith.constant 0 : i32
    return %arg0, %arg2, %arg1 : i32, i32, i32
  }
  func.func @transform_2(%arg0: i32, %arg1: i32, %arg2: i32) -> (i32, i32, i32) {
    %c0_i32 = arith.constant 0 : i32
    return %arg0, %arg2, %arg1 : i32, i32, i32
  }
  func.func @transform_3(%arg0: i32, %arg1: i32, %arg2: i32) -> (i32, i32, i32) {
    %c0_i32 = arith.constant 0 : i32
    %c0_i32_0 = arith.constant 0 : i32
    return %arg0, %c0_i32, %arg1 : i32, i32, i32
  }
}

module attributes {stable_mosaic.version = 11 : i64} {
  func.func @_fused_linear_kernel(%arg0: i32, %arg1: i32, %arg2: i32, %arg3: memref<32x64xbf16, #tpu.memory_space<vmem>>, %arg4: memref<64x64xbf16, #tpu.memory_space<vmem>>, %arg5: memref<1x64xf32, #tpu.memory_space<vmem>>, %arg6: memref<32x64xf32, #tpu.memory_space<vmem>>, %arg7: memref<32x64xf32, #tpu.memory_space<vmem>>) attributes {dimension_semantics = [#tpu.dimension_semantics<parallel>, #tpu.dimension_semantics<arbitrary>, #tpu.dimension_semantics<arbitrary>], iteration_bounds = array<i64: 1, 1, 1>, scalar_prefetch = 0 : i64, scratch_operands = 0 : i64, tpu.core_type = #tpu.core_type<tc>, window_params = [{transform_indices = @transform_0, window_bounds = array<i64: 32, 64>}, {transform_indices = @transform_1, window_bounds = array<i64: 64, 64>}, {transform_indices = @transform_2, window_bounds = array<i64: 1, 64>}, {transform_indices = @transform_3, window_bounds = array<i64: 32, 64>}, {transform_indices = @transform_4, window_bounds = array<i64: 32, 64>}]} {
    %c0 = arith.constant 0 : index
    %c0_0 = arith.constant 0 : index
    %0 = vector.load %arg3[%c0, %c0_0] : memref<32x64xbf16, #tpu.memory_space<vmem>>, vector<32x64xbf16>
    %c0_1 = arith.constant 0 : index
    %c0_2 = arith.constant 0 : index
    %1 = vector.load %arg4[%c0_1, %c0_2] : memref<64x64xbf16, #tpu.memory_space<vmem>>, vector<64x64xbf16>
    %cst = arith.constant dense<0.000000e+00> : vector<32x64xf32>
    %2 = tpu.matmul %0, %1, %cst {dimension_numbers = #tpu.dot_dimension_numbers<[1], [0], [0], [1], [0, 0, 1, 1], [], []>} : vector<32x64xbf16>, vector<64x64xbf16>, vector<32x64xf32> -> vector<32x64xf32>
    %c0_3 = arith.constant 0 : index
    %c0_4 = arith.constant 0 : index
    %3 = vector.load %arg5[%c0_3, %c0_4] : memref<1x64xf32, #tpu.memory_space<vmem>>, vector<1x64xf32>
    %4 = vector.broadcast %3 : vector<1x64xf32> to vector<32x64xf32>
    %5 = arith.addf %2, %4 : vector<32x64xf32>
    %c0_5 = arith.constant 0 : index
    %c0_6 = arith.constant 0 : index
    %6 = vector.load %arg6[%c0_5, %c0_6] : memref<32x64xf32, #tpu.memory_space<vmem>>, vector<32x64xf32>
    %7 = arith.addf %5, %6 : vector<32x64xf32>
    %c0_7 = arith.constant 0 : index
    %c0_8 = arith.constant 0 : index
    %8 = vector.load %arg7[%c0_7, %c0_8] : memref<32x64xf32, #tpu.memory_space<vmem>>, vector<32x64xf32>
    tpu.vector_store %arg7[%c0_7, %c0_8], %7 {strides = array<i32>} : memref<32x64xf32, #tpu.memory_space<vmem>>, vector<32x64xf32>,
    return
  }
  func.func @transform_0(%arg0: i32, %arg1: i32, %arg2: i32) -> (i32, i32) {
    %c0_i32 = arith.constant 0 : i32
    return %arg0, %arg2 : i32, i32
  }
  func.func @transform_1(%arg0: i32, %arg1: i32, %arg2: i32) -> (i32, i32) {
    %c0_i32 = arith.constant 0 : i32
    return %arg2, %arg1 : i32, i32
  }
  func.func @transform_2(%arg0: i32, %arg1: i32, %arg2: i32) -> (i32, i32) {
    %c0_i32 = arith.constant 0 : i32
    %c0_i32_0 = arith.constant 0 : i32
    return %c0_i32, %arg1 : i32, i32
  }
  func.func @transform_3(%arg0: i32, %arg1: i32, %arg2: i32) -> (i32, i32) {
    %c0_i32 = arith.constant 0 : i32
    return %arg0, %arg1 : i32, i32
  }
  func.func @transform_4(%arg0: i32, %arg1: i32, %arg2: i32) -> (i32, i32) {
    %c0_i32 = arith.constant 0 : i32
    return %arg0, %arg1 : i32, i32
  }
}

module attributes {stable_mosaic.version = 11 : i64} {
  func.func @_fused_linear_kernel(%arg0: i32, %arg1: i32, %arg2: i32, %arg3: memref<32x64xf32, #tpu.memory_space<vmem>>, %arg4: memref<1x64xf32, #tpu.memory_space<vmem>>, %arg5: memref<1x64xf32, #tpu.memory_space<vmem>>, %arg6: memref<64x256xbf16, #tpu.memory_space<vmem>>, %arg7: memref<1x256xf32, #tpu.memory_space<vmem>>, %arg8: memref<32x256xbf16, #tpu.memory_space<vmem>>, %arg9: memref<32x64xbf16, #tpu.memory_space<vmem>>) attributes {dimension_semantics = [#tpu.dimension_semantics<parallel>, #tpu.dimension_semantics<arbitrary>, #tpu.dimension_semantics<arbitrary>], iteration_bounds = array<i64: 1, 1, 1>, scalar_prefetch = 0 : i64, scratch_operands = 1 : i64, tpu.core_type = #tpu.core_type<tc>, window_params = [{transform_indices = @transform_0, window_bounds = array<i64: 32, 64>}, {pipeline_mode = #tpu.pipeline_mode<synchronous>, transform_indices = @transform_1, window_bounds = array<i64: 1, 64>}, {pipeline_mode = #tpu.pipeline_mode<synchronous>, transform_indices = @transform_2, window_bounds = array<i64: 1, 64>}, {transform_indices = @transform_3, window_bounds = array<i64: 64, 256>}, {transform_indices = @transform_4, window_bounds = array<i64: 1, 256>}, {transform_indices = @transform_5, window_bounds = array<i64: 32, 256>}]} {
    %c0_i32 = arith.constant 0 : i32
    %0 = arith.cmpi eq, %arg1, %c0_i32 : i32
    %1 = arith.extui %0 : i1 to i32
    %c0_i32_0 = arith.constant 0 : i32
    %2 = arith.cmpi ne, %1, %c0_i32_0 : i32
    scf.if %2 {
      %c0_12 = arith.constant 0 : index
      %c0_13 = arith.constant 0 : index
      %24 = vector.load %arg3[%c0_12, %c0_13] : memref<32x64xf32, #tpu.memory_space<vmem>>, vector<32x64xf32>
      %cst_14 = arith.constant dense<0.000000e+00> : vector<32xf32>
      %25 = vector.multi_reduction <add>, %24, %cst_14 [1] : vector<32x64xf32> to vector<32xf32>
      %26 = vector.shape_cast %25 : vector<32xf32> to vector<32x1xf32>
      %cst_15 = arith.constant 6.400000e+01 : f32
      %27 = vector.broadcast %cst_15 : f32 to vector<32x1xf32>
      %28 = arith.divf %26, %27 : vector<32x1xf32>
      %29 = vector.broadcast %28 : vector<32x1xf32> to vector<32x64xf32>
      %30 = arith.subf %24, %29 : vector<32x64xf32>
      %31 = arith.mulf %30, %30 : vector<32x64xf32>
      %cst_16 = arith.constant dense<0.000000e+00> : vector<32xf32>
      %32 = vector.multi_reduction <add>, %31, %cst_16 [1] : vector<32x64xf32> to vector<32xf32>
      %33 = vector.shape_cast %32 : vector<32xf32> to vector<32x1xf32>
      %cst_17 = arith.constant 6.400000e+01 : f32
      %34 = vector.broadcast %cst_17 : f32 to vector<32x1xf32>
      %35 = arith.divf %33, %34 : vector<32x1xf32>
      %cst_18 = arith.constant 9.99999974E-6 : f32
      %36 = vector.broadcast %cst_18 : f32 to vector<32x1xf32>
      %37 = arith.addf %35, %36 : vector<32x1xf32>
      %38 = math.rsqrt %37 : vector<32x1xf32>
      %39 = vector.broadcast %38 : vector<32x1xf32> to vector<32x64xf32>
      %40 = arith.mulf %30, %39 : vector<32x64xf32>
      %c0_19 = arith.constant 0 : index
      %c0_20 = arith.constant 0 : index
      %41 = vector.load %arg4[%c0_19, %c0_20] : memref<1x64xf32, #tpu.memory_space<vmem>>, vector<1x64xf32>
      %42 = vector.broadcast %41 : vector<1x64xf32> to vector<32x64xf32>
      %43 = arith.mulf %40, %42 : vector<32x64xf32>
      %c0_21 = arith.constant 0 : index
      %c0_22 = arith.constant 0 : index
      %44 = vector.load %arg5[%c0_21, %c0_22] : memref<1x64xf32, #tpu.memory_space<vmem>>, vector<1x64xf32>
      %45 = vector.broadcast %44 : vector<1x64xf32> to vector<32x64xf32>
      %46 = arith.addf %43, %45 : vector<32x64xf32>
      %47 = arith.truncf %46 : vector<32x64xf32> to vector<32x64xbf16>
      %c0_23 = arith.constant 0 : index
      %c0_24 = arith.constant 0 : index
      %48 = vector.load %arg9[%c0_23, %c0_24] : memref<32x64xbf16, #tpu.memory_space<vmem>>, vector<32x64xbf16>
      tpu.vector_store %arg9[%c0_23, %c0_24], %47 {strides = array<i32>} : memref<32x64xbf16, #tpu.memory_space<vmem>>, vector<32x64xbf16>,
    } else {
    }
    %c0 = arith.constant 0 : index
    %c0_1 = arith.constant 0 : index
    %3 = vector.load %arg9[%c0, %c0_1] : memref<32x64xbf16, #tpu.memory_space<vmem>>, vector<32x64xbf16>
    %c0_2 = arith.constant 0 : index
    %c0_3 = arith.constant 0 : index
    %4 = vector.load %arg6[%c0_2, %c0_3] : memref<64x256xbf16, #tpu.memory_space<vmem>>, vector<64x256xbf16>
    %cst = arith.constant dense<0.000000e+00> : vector<32x256xf32>
    %5 = tpu.matmul %3, %4, %cst {dimension_numbers = #tpu.dot_dimension_numbers<[1], [0], [0], [1], [0, 0, 1, 1], [], []>} : vector<32x64xbf16>, vector<64x256xbf16>, vector<32x256xf32> -> vector<32x256xf32>
    %c0_4 = arith.constant 0 : index
    %c0_5 = arith.constant 0 : index
    %6 = vector.load %arg7[%c0_4, %c0_5] : memref<1x256xf32, #tpu.memory_space<vmem>>, vector<1x256xf32>
    %7 = vector.broadcast %6 : vector<1x256xf32> to vector<32x256xf32>
    %8 = arith.addf %5, %7 : vector<32x256xf32>
    %cst_6 = arith.constant 5.000000e-01 : f32
    %9 = vector.broadcast %cst_6 : f32 to vector<32x256xf32>
    %10 = arith.mulf %9, %8 : vector<32x256xf32>
    %cst_7 = arith.constant 4.471500e-02 : f32
    %11 = vector.broadcast %cst_7 : f32 to vector<32x256xf32>
    %12 = arith.mulf %11, %8 : vector<32x256xf32>
    %13 = arith.mulf %12, %8 : vector<32x256xf32>
    %14 = arith.mulf %13, %8 : vector<32x256xf32>
    %15 = arith.addf %8, %14 : vector<32x256xf32>
    %cst_8 = arith.constant 0.797884583 : f32
    %16 = vector.broadcast %cst_8 : f32 to vector<32x256xf32>
    %17 = arith.mulf %16, %15 : vector<32x256xf32>
    %18 = math.tanh %17 : vector<32x256xf32>
    %cst_9 = arith.constant 1.000000e+00 : f32
    %19 = vector.broadcast %cst_9 : f32 to vector<32x256xf32>
    %20 = arith.addf %19, %18 : vector<32x256xf32>
    %21 = arith.mulf %10, %20 : vector<32x256xf32>
    %22 = arith.truncf %21 : vector<32x256xf32> to vector<32x256xbf16>
    %c0_10 = arith.constant 0 : index
    %c0_11 = arith.constant 0 : index
    %23 = vector.load %arg8[%c0_10, %c0_11] : memref<32x256xbf16, #tpu.memory_space<vmem>>, vector<32x256xbf16>
    tpu.vector_store %arg8[%c0_10, %c0_11], %22 {strides = array<i32>} : memref<32x256xbf16, #tpu.memory_space<vmem>>, vector<32x256xbf16>,
    return
  }
  func.func @transform_0(%arg0: i32, %arg1: i32, %arg2: i32) -> (i32, i32) {
    %c0_i32 = arith.constant 0 : i32
    return %arg0, %arg2 : i32, i32
  }
  func.func @transform_1(%arg0: i32, %arg1: i32, %arg2: i32) -> (i32, i32) {
    %c0_i32 = arith.constant 0 : i32
    %c0_i32_0 = arith.constant 0 : i32
    %c0_i32_1 = arith.constant 0 : i32
    return %c0_i32, %c0_i32_0 : i32, i32
  }
  func.func @transform_2(%arg0: i32, %arg1: i32, %arg2: i32) -> (i32, i32) {
    %c0_i32 = arith.constant 0 : i32
    %c0_i32_0 = arith.constant 0 : i32
    %c0_i32_1 = arith.constant 0 : i32
    return %c0_i32, %c0_i32_0 : i32, i32
  }
  func.func @transform_3(%arg0: i32, %arg1: i32, %arg2: i32) -> (i32, i32) {
    %c0_i32 = arith.constant 0 : i32
    return %arg2, %arg1 : i32, i32
  }
  func.func @transform_4(%arg0: i32, %arg1: i32, %arg2: i32) -> (i32, i32) {
    %c0_i32 = arith.constant 0 : i32
    %c0_i32_0 = arith.constant 0 : i32
    return %c0_i32, %arg1 : i32, i32
  }
  func.func @transform_5(%arg0: i32, %arg1: i32, %arg2: i32) -> (i32, i32) {
    %c0_i32 = arith.constant 0 : i32
    return %arg0, %arg1 : i32, i32
  }
}

module attributes {stable_mosaic.version = 11 : i64} {
  func.func @_fused_linear_kernel(%arg0: i32, %arg1: i32, %arg2: i32, %arg3: memref<32x256xbf16, #tpu.memory_space<vmem>>, %arg4: memref<256x64xbf16, #tpu.memory_space<vmem>>, %arg5: memref<1x64xf32, #tpu.memory_space<vmem>>, %arg6: memref<32x64xf32, #tpu.memory_space<vmem>>, %arg7: memref<32x64xf32, #tpu.memory_space<vmem>>) attributes {dimension_semantics = [#tpu.dimension_semantics<parallel>, #tpu.dimension_semantics<arbitrary>, #tpu.dimension_semantics<arbitrary>], iteration_bounds = array<i64: 1, 1, 1>, scalar_prefetch = 0 : i64, scratch_operands = 0 : i64, tpu.core_type = #tpu.core_type<tc>, window_params = [{transform_indices = @transform_0, window_bounds = array<i64: 32, 256>}, {transform_indices = @transform_1, window_bounds = array<i64: 256, 64>}, {transform_indices = @transform_2, window_bounds = array<i64: 1, 64>}, {transform_indices = @transform_3, window_bounds = array<i64: 32, 64>}, {transform_indices = @transform_4, window_bounds = array<i64: 32, 64>}]} {
    %c0 = arith.constant 0 : index
    %c0_0 = arith.constant 0 : index
    %0 = vector.load %arg3[%c0, %c0_0] : memref<32x256xbf16, #tpu.memory_space<vmem>>, vector<32x256xbf16>
    %c0_1 = arith.constant 0 : index
    %c0_2 = arith.constant 0 : index
    %1 = vector.load %arg4[%c0_1, %c0_2] : memref<256x64xbf16, #tpu.memory_space<vmem>>, vector<256x64xbf16>
    %cst = arith.constant dense<0.000000e+00> : vector<32x64xf32>
    %2 = tpu.matmul %0, %1, %cst {dimension_numbers = #tpu.dot_dimension_numbers<[1], [0], [0], [1], [0, 0, 1, 1], [], []>} : vector<32x256xbf16>, vector<256x64xbf16>, vector<32x64xf32> -> vector<32x64xf32>
    %c0_3 = arith.constant 0 : index
    %c0_4 = arith.constant 0 : index
    %3 = vector.load %arg5[%c0_3, %c0_4] : memref<1x64xf32, #tpu.memory_space<vmem>>, vector<1x64xf32>
    %4 = vector.broadcast %3 : vector<1x64xf32> to vector<32x64xf32>
    %5 = arith.addf %2, %4 : vector<32x64xf32>
    %c0_5 = arith.constant 0 : index
    %c0_6 = arith.constant 0 : index
    %6 = vector.load %arg6[%c0_5, %c0_6] : memref<32x64xf32, #tpu.memory_space<vmem>>, vector<32x64xf32>
    %7 = arith.addf %5, %6 : vector<32x64xf32>
    %c0_7 = arith.constant 0 : index
    %c0_8 = arith.constant 0 : index
    %8 = vector.load %arg7[%c0_7, %c0_8] : memref<32x64xf32, #tpu.memory_space<vmem>>, vector<32x64xf32>
    tpu.vector_store %arg7[%c0_7, %c0_8], %7 {strides = array<i32>} : memref<32x64xf32, #tpu.memory_space<vmem>>, vector<32x64xf32>,
    return
  }
  func.func @transform_0(%arg0: i32, %arg1: i32, %arg2: i32) -> (i32, i32) {
    %c0_i32 = arith.constant 0 : i32
    return %arg0, %arg2 : i32, i32
  }
  func.func @transform_1(%arg0: i32, %arg1: i32, %arg2: i32) -> (i32, i32) {
    %c0_i32 = arith.constant 0 : i32
    return %arg2, %arg1 : i32, i32
  }
  func.func @transform_2(%arg0: i32, %arg1: i32, %arg2: i32) -> (i32, i32) {
    %c0_i32 = arith.constant 0 : i32
    %c0_i32_0 = arith.constant 0 : i32
    return %c0_i32, %arg1 : i32, i32
  }
  func.func @transform_3(%arg0: i32, %arg1: i32, %arg2: i32) -> (i32, i32) {
    %c0_i32 = arith.constant 0 : i32
    return %arg0, %arg1 : i32, i32
  }
  func.func @transform_4(%arg0: i32, %arg1: i32, %arg2: i32) -> (i32, i32) {
    %c0_i32 = arith.constant 0 : i32
    return %arg0, %arg1 : i32, i32
  }
}

module attributes {stable_mosaic.version = 11 : i64} {
  func.func @_fused_linear_kernel(%arg0: i32, %arg1: i32, %arg2: i32, %arg3: memref<32x64xf32, #tpu.memory_space<vmem>>, %arg4: memref<1x64xf32, #tpu.memory_space<vmem>>, %arg5: memref<1x64xf32, #tpu.memory_space<vmem>>, %arg6: memref<64x64xbf16, #tpu.memory_space<vmem>>, %arg7: memref<1x64xf32, #tpu.memory_space<vmem>>, %arg8: memref<32x64xbf16, #tpu.memory_space<vmem>>, %arg9: memref<32x64xbf16, #tpu.memory_space<vmem>>) attributes {dimension_semantics = [#tpu.dimension_semantics<parallel>, #tpu.dimension_semantics<arbitrary>, #tpu.dimension_semantics<arbitrary>], iteration_bounds = array<i64: 1, 1, 1>, scalar_prefetch = 0 : i64, scratch_operands = 1 : i64, tpu.core_type = #tpu.core_type<tc>, window_params = [{transform_indices = @transform_0, window_bounds = array<i64: 32, 64>}, {pipeline_mode = #tpu.pipeline_mode<synchronous>, transform_indices = @transform_1, window_bounds = array<i64: 1, 64>}, {pipeline_mode = #tpu.pipeline_mode<synchronous>, transform_indices = @transform_2, window_bounds = array<i64: 1, 64>}, {transform_indices = @transform_3, window_bounds = array<i64: 64, 64>}, {transform_indices = @transform_4, window_bounds = array<i64: 1, 64>}, {transform_indices = @transform_5, window_bounds = array<i64: 32, 64>}]} {
    %c0_i32 = arith.constant 0 : i32
    %0 = arith.cmpi eq, %arg1, %c0_i32 : i32
    %1 = arith.extui %0 : i1 to i32
    %c0_i32_0 = arith.constant 0 : i32
    %2 = arith.cmpi ne, %1, %c0_i32_0 : i32
    scf.if %2 {
      %c0_8 = arith.constant 0 : index
      %c0_9 = arith.constant 0 : index
      %11 = vector.load %arg3[%c0_8, %c0_9] : memref<32x64xf32, #tpu.memory_space<vmem>>, vector<32x64xf32>
      %cst_10 = arith.constant dense<0.000000e+00> : vector<32xf32>
      %12 = vector.multi_reduction <add>, %11, %cst_10 [1] : vector<32x64xf32> to vector<32xf32>
      %13 = vector.shape_cast %12 : vector<32xf32> to vector<32x1xf32>
      %cst_11 = arith.constant 6.400000e+01 : f32
      %14 = vector.broadcast %cst_11 : f32 to vector<32x1xf32>
      %15 = arith.divf %13, %14 : vector<32x1xf32>
      %16 = vector.broadcast %15 : vector<32x1xf32> to vector<32x64xf32>
      %17 = arith.subf %11, %16 : vector<32x64xf32>
      %18 = arith.mulf %17, %17 : vector<32x64xf32>
      %cst_12 = arith.constant dense<0.000000e+00> : vector<32xf32>
      %19 = vector.multi_reduction <add>, %18, %cst_12 [1] : vector<32x64xf32> to vector<32xf32>
      %20 = vector.shape_cast %19 : vector<32xf32> to vector<32x1xf32>
      %cst_13 = arith.constant 6.400000e+01 : f32
      %21 = vector.broadcast %cst_13 : f32 to vector<32x1xf32>
      %22 = arith.divf %20, %21 : vector<32x1xf32>
      %cst_14 = arith.constant 9.99999974E-6 : f32
      %23 = vector.broadcast %cst_14 : f32 to vector<32x1xf32>
      %24 = arith.addf %22, %23 : vector<32x1xf32>
      %25 = math.rsqrt %24 : vector<32x1xf32>
      %26 = vector.broadcast %25 : vector<32x1xf32> to vector<32x64xf32>
      %27 = arith.mulf %17, %26 : vector<32x64xf32>
      %c0_15 = arith.constant 0 : index
      %c0_16 = arith.constant 0 : index
      %28 = vector.load %arg4[%c0_15, %c0_16] : memref<1x64xf32, #tpu.memory_space<vmem>>, vector<1x64xf32>
      %29 = vector.broadcast %28 : vector<1x64xf32> to vector<32x64xf32>
      %30 = arith.mulf %27, %29 : vector<32x64xf32>
      %c0_17 = arith.constant 0 : index
      %c0_18 = arith.constant 0 : index
      %31 = vector.load %arg5[%c0_17, %c0_18] : memref<1x64xf32, #tpu.memory_space<vmem>>, vector<1x64xf32>
      %32 = vector.broadcast %31 : vector<1x64xf32> to vector<32x64xf32>
      %33 = arith.addf %30, %32 : vector<32x64xf32>
      %34 = arith.truncf %33 : vector<32x64xf32> to vector<32x64xbf16>
      %c0_19 = arith.constant 0 : index
      %c0_20 = arith.constant 0 : index
      %35 = vector.load %arg9[%c0_19, %c0_20] : memref<32x64xbf16, #tpu.memory_space<vmem>>, vector<32x64xbf16>
      tpu.vector_store %arg9[%c0_19, %c0_20], %34 {strides = array<i32>} : memref<32x64xbf16, #tpu.memory_space<vmem>>, vector<32x64xbf16>,
    } else {
    }
    %c0 = arith.constant 0 : index
    %c0_1 = arith.constant 0 : index
    %3 = vector.load %arg9[%c0, %c0_1] : memref<32x64xbf16, #tpu.memory_space<vmem>>, vector<32x64xbf16>
    %c0_2 = arith.constant 0 : index
    %c0_3 = arith.constant 0 : index
    %4 = vector.load %arg6[%c0_2, %c0_3] : memref<64x64xbf16, #tpu.memory_space<vmem>>, vector<64x64xbf16>
    %cst = arith.constant dense<0.000000e+00> : vector<32x64xf32>
    %5 = tpu.matmul %3, %4, %cst {dimension_numbers = #tpu.dot_dimension_numbers<[1], [0], [0], [1], [0, 0, 1, 1], [], []>} : vector<32x64xbf16>, vector<64x64xbf16>, vector<32x64xf32> -> vector<32x64xf32>
    %c0_4 = arith.constant 0 : index
    %c0_5 = arith.constant 0 : index
    %6 = vector.load %arg7[%c0_4, %c0_5] : memref<1x64xf32, #tpu.memory_space<vmem>>, vector<1x64xf32>
    %7 = vector.broadcast %6 : vector<1x64xf32> to vector<32x64xf32>
    %8 = arith.addf %5, %7 : vector<32x64xf32>
    %9 = arith.truncf %8 : vector<32x64xf32> to vector<32x64xbf16>
    %c0_6 = arith.constant 0 : index
    %c0_7 = arith.constant 0 : index
    %10 = vector.load %arg8[%c0_6, %c0_7] : memref<32x64xbf16, #tpu.memory_space<vmem>>, vector<32x64xbf16>
    tpu.vector_store %arg8[%c0_6, %c0_7], %9 {strides = array<i32>} : memref<32x64xbf16, #tpu.memory_space<vmem>>, vector<32x64xbf16>,
    return
  }
  func.func @transform_0(%arg0: i32, %arg1: i32, %arg2: i32) -> (i32, i32) {
    %c0_i32 = arith.constant 0 : i32
    return %arg0, %arg2 : i32, i32
  }
  func.func @transform_1(%arg0: i32, %arg1: i32, %arg2: i32) -> (i32, i32) {
    %c0_i32 = arith.constant 0 : i32
    %c0_i32_0 = arith.constant 0 : i32
    %c0_i32_1 = arith.constant 0 : i32
    return %c0_i32, %c0_i32_0 : i32, i32
  }
  func.func @transform_2(%arg0: i32, %arg1: i32, %arg2: i32) -> (i32, i32) {
    %c0_i32 = arith.constant 0 : i32
    %c0_i32_0 = arith.constant 0 : i32
    %c0_i32_1 = arith.constant 0 : i32
    return %c0_i32, %c0_i32_0 : i32, i32
  }
  func.func @transform_3(%arg0: i32, %arg1: i32, %arg2: i32) -> (i32, i32) {
    %c0_i32 = arith.constant 0 : i32
    return %arg2, %arg1 : i32, i32
  }
  func.func @transform_4(%arg0: i32, %arg1: i32, %arg2: i32) -> (i32, i32) {
    %c0_i32 = arith.constant 0 : i32
    %c0_i32_0 = arith.constant 0 : i32
    return %c0_i32, %arg1 : i32, i32
  }
  func.func @transform_5(%arg0: i32, %arg1: i32, %arg2: i32) -> (i32, i32) {
    %c0_i32 = arith.constant 0 : i32
    return %arg0, %arg1 : i32, i32
  }
}

module attributes {stable_mosaic.version = 11 : i64} {
  func.func @_fused_linear_kernel(%arg0: i32, %arg1: i32, %arg2: i32, %arg3: memref<64x64xf32, #tpu.memory_space<vmem>>, %arg4: memref<1x64xf32, #tpu.memory_space<vmem>>, %arg5: memref<1x64xf32, #tpu.memory_space<vmem>>, %arg6: memref<64x128xbf16, #tpu.memory_space<vmem>>, %arg7: memref<1x128xf32, #tpu.memory_space<vmem>>, %arg8: memref<64x128xbf16, #tpu.memory_space<vmem>>, %arg9: memref<64x64xbf16, #tpu.memory_space<vmem>>) attributes {dimension_semantics = [#tpu.dimension_semantics<parallel>, #tpu.dimension_semantics<arbitrary>, #tpu.dimension_semantics<arbitrary>], iteration_bounds = array<i64: 1, 1, 1>, scalar_prefetch = 0 : i64, scratch_operands = 1 : i64, tpu.core_type = #tpu.core_type<tc>, window_params = [{transform_indices = @transform_0, window_bounds = array<i64: 64, 64>}, {pipeline_mode = #tpu.pipeline_mode<synchronous>, transform_indices = @transform_1, window_bounds = array<i64: 1, 64>}, {pipeline_mode = #tpu.pipeline_mode<synchronous>, transform_indices = @transform_2, window_bounds = array<i64: 1, 64>}, {transform_indices = @transform_3, window_bounds = array<i64: 64, 128>}, {transform_indices = @transform_4, window_bounds = array<i64: 1, 128>}, {transform_indices = @transform_5, window_bounds = array<i64: 64, 128>}]} {
    %c0_i32 = arith.constant 0 : i32
    %0 = arith.cmpi eq, %arg1, %c0_i32 : i32
    %1 = arith.extui %0 : i1 to i32
    %c0_i32_0 = arith.constant 0 : i32
    %2 = arith.cmpi ne, %1, %c0_i32_0 : i32
    scf.if %2 {
      %c0_8 = arith.constant 0 : index
      %c0_9 = arith.constant 0 : index
      %11 = vector.load %arg3[%c0_8, %c0_9] : memref<64x64xf32, #tpu.memory_space<vmem>>, vector<64x64xf32>
      %cst_10 = arith.constant dense<0.000000e+00> : vector<64xf32>
      %12 = vector.multi_reduction <add>, %11, %cst_10 [1] : vector<64x64xf32> to vector<64xf32>
      %13 = vector.shape_cast %12 : vector<64xf32> to vector<64x1xf32>
      %cst_11 = arith.constant 6.400000e+01 : f32
      %14 = vector.broadcast %cst_11 : f32 to vector<64x1xf32>
      %15 = arith.divf %13, %14 : vector<64x1xf32>
      %16 = vector.broadcast %15 : vector<64x1xf32> to vector<64x64xf32>
      %17 = arith.subf %11, %16 : vector<64x64xf32>
      %18 = arith.mulf %17, %17 : vector<64x64xf32>
      %cst_12 = arith.constant dense<0.000000e+00> : vector<64xf32>
      %19 = vector.multi_reduction <add>, %18, %cst_12 [1] : vector<64x64xf32> to vector<64xf32>
      %20 = vector.shape_cast %19 : vector<64xf32> to vector<64x1xf32>
      %cst_13 = arith.constant 6.400000e+01 : f32
      %21 = vector.broadcast %cst_13 : f32 to vector<64x1xf32>
      %22 = arith.divf %20, %21 : vector<64x1xf32>
      %cst_14 = arith.constant 9.99999974E-6 : f32
      %23 = vector.broadcast %cst_14 : f32 to vector<64x1xf32>
      %24 = arith.addf %22, %23 : vector<64x1xf32>
      %25 = math.rsqrt %24 : vector<64x1xf32>
      %26 = vector.broadcast %25 : vector<64x1xf32> to vector<64x64xf32>
      %27 = arith.mulf %17, %26 : vector<64x64xf32>
      %c0_15 = arith.constant 0 : index
      %c0_16 = arith.constant 0 : index
      %28 = vector.load %arg4[%c0_15, %c0_16] : memref<1x64xf32, #tpu.memory_space<vmem>>, vector<1x64xf32>
      %29 = vector.broadcast %28 : vector<1x64xf32> to vector<64x64xf32>
      %30 = arith.mulf %27, %29 : vector<64x64xf32>
      %c0_17 = arith.constant 0 : index
      %c0_18 = arith.constant 0 : index
      %31 = vector.load %arg5[%c0_17, %c0_18] : memref<1x64xf32, #tpu.memory_space<vmem>>, vector<1x64xf32>
      %32 = vector.broadcast %31 : vector<1x64xf32> to vector<64x64xf32>
      %33 = arith.addf %30, %32 : vector<64x64xf32>
      %34 = arith.truncf %33 : vector<64x64xf32> to vector<64x64xbf16>
      %c0_19 = arith.constant 0 : index
      %c0_20 = arith.constant 0 : index
      %35 = vector.load %arg9[%c0_19, %c0_20] : memref<64x64xbf16, #tpu.memory_space<vmem>>, vector<64x64xbf16>
      tpu.vector_store %arg9[%c0_19, %c0_20], %34 {strides = array<i32>} : memref<64x64xbf16, #tpu.memory_space<vmem>>, vector<64x64xbf16>,
    } else {
    }
    %c0 = arith.constant 0 : index
    %c0_1 = arith.constant 0 : index
    %3 = vector.load %arg9[%c0, %c0_1] : memref<64x64xbf16, #tpu.memory_space<vmem>>, vector<64x64xbf16>
    %c0_2 = arith.constant 0 : index
    %c0_3 = arith.constant 0 : index
    %4 = vector.load %arg6[%c0_2, %c0_3] : memref<64x128xbf16, #tpu.memory_space<vmem>>, vector<64x128xbf16>
    %cst = arith.constant dense<0.000000e+00> : vector<64x128xf32>
    %5 = tpu.matmul %3, %4, %cst {dimension_numbers = #tpu.dot_dimension_numbers<[1], [0], [0], [1], [0, 0, 1, 1], [], []>} : vector<64x64xbf16>, vector<64x128xbf16>, vector<64x128xf32> -> vector<64x128xf32>
    %c0_4 = arith.constant 0 : index
    %c0_5 = arith.constant 0 : index
    %6 = vector.load %arg7[%c0_4, %c0_5] : memref<1x128xf32, #tpu.memory_space<vmem>>, vector<1x128xf32>
    %7 = vector.broadcast %6 : vector<1x128xf32> to vector<64x128xf32>
    %8 = arith.addf %5, %7 : vector<64x128xf32>
    %9 = arith.truncf %8 : vector<64x128xf32> to vector<64x128xbf16>
    %c0_6 = arith.constant 0 : index
    %c0_7 = arith.constant 0 : index
    %10 = vector.load %arg8[%c0_6, %c0_7] : memref<64x128xbf16, #tpu.memory_space<vmem>>, vector<64x128xbf16>
    tpu.vector_store %arg8[%c0_6, %c0_7], %9 {strides = array<i32>} : memref<64x128xbf16, #tpu.memory_space<vmem>>, vector<64x128xbf16>,
    return
  }
  func.func @transform_0(%arg0: i32, %arg1: i32, %arg2: i32) -> (i32, i32) {
    %c0_i32 = arith.constant 0 : i32
    return %arg0, %arg2 : i32, i32
  }
  func.func @transform_1(%arg0: i32, %arg1: i32, %arg2: i32) -> (i32, i32) {
    %c0_i32 = arith.constant 0 : i32
    %c0_i32_0 = arith.constant 0 : i32
    %c0_i32_1 = arith.constant 0 : i32
    return %c0_i32, %c0_i32_0 : i32, i32
  }
  func.func @transform_2(%arg0: i32, %arg1: i32, %arg2: i32) -> (i32, i32) {
    %c0_i32 = arith.constant 0 : i32
    %c0_i32_0 = arith.constant 0 : i32
    %c0_i32_1 = arith.constant 0 : i32
    return %c0_i32, %c0_i32_0 : i32, i32
  }
  func.func @transform_3(%arg0: i32, %arg1: i32, %arg2: i32) -> (i32, i32) {
    %c0_i32 = arith.constant 0 : i32
    return %arg2, %arg1 : i32, i32
  }
  func.func @transform_4(%arg0: i32, %arg1: i32, %arg2: i32) -> (i32, i32) {
    %c0_i32 = arith.constant 0 : i32
    %c0_i32_0 = arith.constant 0 : i32
    return %c0_i32, %arg1 : i32, i32
  }
  func.func @transform_5(%arg0: i32, %arg1: i32, %arg2: i32) -> (i32, i32) {
    %c0_i32 = arith.constant 0 : i32
    return %arg0, %arg1 : i32, i32
  }
}

module attributes {stable_mosaic.version = 11 : i64} {
  func.func @_fused_linear_kernel(%arg0: i32, %arg1: i32, %arg2: i32, %arg3: memref<32x64xbf16, #tpu.memory_space<vmem>>, %arg4: memref<64x64xbf16, #tpu.memory_space<vmem>>, %arg5: memref<1x64xf32, #tpu.memory_space<vmem>>, %arg6: memref<32x64xf32, #tpu.memory_space<vmem>>, %arg7: memref<32x64xf32, #tpu.memory_space<vmem>>) attributes {dimension_semantics = [#tpu.dimension_semantics<parallel>, #tpu.dimension_semantics<arbitrary>, #tpu.dimension_semantics<arbitrary>], iteration_bounds = array<i64: 1, 1, 1>, scalar_prefetch = 0 : i64, scratch_operands = 0 : i64, tpu.core_type = #tpu.core_type<tc>, window_params = [{transform_indices = @transform_0, window_bounds = array<i64: 32, 64>}, {transform_indices = @transform_1, window_bounds = array<i64: 64, 64>}, {transform_indices = @transform_2, window_bounds = array<i64: 1, 64>}, {transform_indices = @transform_3, window_bounds = array<i64: 32, 64>}, {transform_indices = @transform_4, window_bounds = array<i64: 32, 64>}]} {
    %c0 = arith.constant 0 : index
    %c0_0 = arith.constant 0 : index
    %0 = vector.load %arg3[%c0, %c0_0] : memref<32x64xbf16, #tpu.memory_space<vmem>>, vector<32x64xbf16>
    %c0_1 = arith.constant 0 : index
    %c0_2 = arith.constant 0 : index
    %1 = vector.load %arg4[%c0_1, %c0_2] : memref<64x64xbf16, #tpu.memory_space<vmem>>, vector<64x64xbf16>
    %cst = arith.constant dense<0.000000e+00> : vector<32x64xf32>
    %2 = tpu.matmul %0, %1, %cst {dimension_numbers = #tpu.dot_dimension_numbers<[1], [0], [0], [1], [0, 0, 1, 1], [], []>} : vector<32x64xbf16>, vector<64x64xbf16>, vector<32x64xf32> -> vector<32x64xf32>
    %c0_3 = arith.constant 0 : index
    %c0_4 = arith.constant 0 : index
    %3 = vector.load %arg5[%c0_3, %c0_4] : memref<1x64xf32, #tpu.memory_space<vmem>>, vector<1x64xf32>
    %4 = vector.broadcast %3 : vector<1x64xf32> to vector<32x64xf32>
    %5 = arith.addf %2, %4 : vector<32x64xf32>
    %c0_5 = arith.constant 0 : index
    %c0_6 = arith.constant 0 : index
    %6 = vector.load %arg6[%c0_5, %c0_6] : memref<32x64xf32, #tpu.memory_space<vmem>>, vector<32x64xf32>
    %7 = arith.addf %5, %6 : vector<32x64xf32>
    %c0_7 = arith.constant 0 : index
    %c0_8 = arith.constant 0 : index
    %8 = vector.load %arg7[%c0_7, %c0_8] : memref<32x64xf32, #tpu.memory_space<vmem>>, vector<32x64xf32>
    tpu.vector_store %arg7[%c0_7, %c0_8], %7 {strides = array<i32>} : memref<32x64xf32, #tpu.memory_space<vmem>>, vector<32x64xf32>,
    return
  }
  func.func @transform_0(%arg0: i32, %arg1: i32, %arg2: i32) -> (i32, i32) {
    %c0_i32 = arith.constant 0 : i32
    return %arg0, %arg2 : i32, i32
  }
  func.func @transform_1(%arg0: i32, %arg1: i32, %arg2: i32) -> (i32, i32) {
    %c0_i32 = arith.constant 0 : i32
    return %arg2, %arg1 : i32, i32
  }
  func.func @transform_2(%arg0: i32, %arg1: i32, %arg2: i32) -> (i32, i32) {
    %c0_i32 = arith.constant 0 : i32
    %c0_i32_0 = arith.constant 0 : i32
    return %c0_i32, %arg1 : i32, i32
  }
  func.func @transform_3(%arg0: i32, %arg1: i32, %arg2: i32) -> (i32, i32) {
    %c0_i32 = arith.constant 0 : i32
    return %arg0, %arg1 : i32, i32
  }
  func.func @transform_4(%arg0: i32, %arg1: i32, %arg2: i32) -> (i32, i32) {
    %c0_i32 = arith.constant 0 : i32
    return %arg0, %arg1 : i32, i32
  }
}

module attributes {stable_mosaic.version = 11 : i64} {
  func.func @_fused_linear_kernel(%arg0: i32, %arg1: i32, %arg2: i32, %arg3: memref<32x64xf32, #tpu.memory_space<vmem>>, %arg4: memref<64x128xbf16, #tpu.memory_space<vmem>>, %arg5: memref<1x128xf32, #tpu.memory_space<vmem>>, %arg6: memref<32x128xbf16, #tpu.memory_space<vmem>>) attributes {dimension_semantics = [#tpu.dimension_semantics<parallel>, #tpu.dimension_semantics<arbitrary>, #tpu.dimension_semantics<arbitrary>], iteration_bounds = array<i64: 1, 1, 1>, scalar_prefetch = 0 : i64, scratch_operands = 0 : i64, tpu.core_type = #tpu.core_type<tc>, window_params = [{transform_indices = @transform_0, window_bounds = array<i64: 32, 64>}, {transform_indices = @transform_1, window_bounds = array<i64: 64, 128>}, {transform_indices = @transform_2, window_bounds = array<i64: 1, 128>}, {transform_indices = @transform_3, window_bounds = array<i64: 32, 128>}]} {
    %c0 = arith.constant 0 : index
    %c0_0 = arith.constant 0 : index
    %0 = vector.load %arg3[%c0, %c0_0] : memref<32x64xf32, #tpu.memory_space<vmem>>, vector<32x64xf32>
    %1 = arith.truncf %0 : vector<32x64xf32> to vector<32x64xbf16>
    %c0_1 = arith.constant 0 : index
    %c0_2 = arith.constant 0 : index
    %2 = vector.load %arg4[%c0_1, %c0_2] : memref<64x128xbf16, #tpu.memory_space<vmem>>, vector<64x128xbf16>
    %cst = arith.constant dense<0.000000e+00> : vector<32x128xf32>
    %3 = tpu.matmul %1, %2, %cst {dimension_numbers = #tpu.dot_dimension_numbers<[1], [0], [0], [1], [0, 0, 1, 1], [], []>} : vector<32x64xbf16>, vector<64x128xbf16>, vector<32x128xf32> -> vector<32x128xf32>
    %c0_3 = arith.constant 0 : index
    %c0_4 = arith.constant 0 : index
    %4 = vector.load %arg5[%c0_3, %c0_4] : memref<1x128xf32, #tpu.memory_space<vmem>>, vector<1x128xf32>
    %5 = vector.broadcast %4 : vector<1x128xf32> to vector<32x128xf32>
    %6 = arith.addf %3, %5 : vector<32x128xf32>
    %cst_5 = arith.constant 5.000000e-01 : f32
    %7 = vector.broadcast %cst_5 : f32 to vector<32x128xf32>
    %8 = arith.mulf %7, %6 : vector<32x128xf32>
    %cst_6 = arith.constant 4.471500e-02 : f32
    %9 = vector.broadcast %cst_6 : f32 to vector<32x128xf32>
    %10 = arith.mulf %9, %6 : vector<32x128xf32>
    %11 = arith.mulf %10, %6 : vector<32x128xf32>
    %12 = arith.mulf %11, %6 : vector<32x128xf32>
    %13 = arith.addf %6, %12 : vector<32x128xf32>
    %cst_7 = arith.constant 0.797884583 : f32
    %14 = vector.broadcast %cst_7 : f32 to vector<32x128xf32>
    %15 = arith.mulf %14, %13 : vector<32x128xf32>
    %16 = math.tanh %15 : vector<32x128xf32>
    %cst_8 = arith.constant 1.000000e+00 : f32
    %17 = vector.broadcast %cst_8 : f32 to vector<32x128xf32>
    %18 = arith.addf %17, %16 : vector<32x128xf32>
    %19 = arith.mulf %8, %18 : vector<32x128xf32>
    %20 = arith.truncf %19 : vector<32x128xf32> to vector<32x128xbf16>
    %c0_9 = arith.constant 0 : index
    %c0_10 = arith.constant 0 : index
    %21 = vector.load %arg6[%c0_9, %c0_10] : memref<32x128xbf16, #tpu.memory_space<vmem>>, vector<32x128xbf16>
    tpu.vector_store %arg6[%c0_9, %c0_10], %20 {strides = array<i32>} : memref<32x128xbf16, #tpu.memory_space<vmem>>, vector<32x128xbf16>,
    return
  }
  func.func @transform_0(%arg0: i32, %arg1: i32, %arg2: i32) -> (i32, i32) {
    %c0_i32 = arith.constant 0 : i32
    return %arg0, %arg2 : i32, i32
  }
  func.func @transform_1(%arg0: i32, %arg1: i32, %arg2: i32) -> (i32, i32) {
    %c0_i32 = arith.constant 0 : i32
    return %arg2, %arg1 : i32, i32
  }
  func.func @transform_2(%arg0: i32, %arg1: i32, %arg2: i32) -> (i32, i32) {
    %c0_i32 = arith.constant 0 : i32
    %c0_i32_0 = arith.constant 0 : i32
    return %c0_i32, %arg1 : i32, i32
  }
  func.func @transform_3(%arg0: i32, %arg1: i32, %arg2: i32) -> (i32, i32) {
    %c0_i32 = arith.constant 0 : i32
    return %arg0, %arg1 : i32, i32
  }
}

module attributes {stable_mosaic.version = 11 : i64} {
  func.func @_fused_linear_kernel(%arg0: i32, %arg1: i32, %arg2: i32, %arg3: memref<32x128xbf16, #tpu.memory_space<vmem>>, %arg4: memref<128x64xbf16, #tpu.memory_space<vmem>>, %arg5: memref<1x64xf32, #tpu.memory_space<vmem>>, %arg6: memref<32x64xf32, #tpu.memory_space<vmem>>) attributes {dimension_semantics = [#tpu.dimension_semantics<parallel>, #tpu.dimension_semantics<arbitrary>, #tpu.dimension_semantics<arbitrary>], iteration_bounds = array<i64: 1, 1, 1>, scalar_prefetch = 0 : i64, scratch_operands = 0 : i64, tpu.core_type = #tpu.core_type<tc>, window_params = [{transform_indices = @transform_0, window_bounds = array<i64: 32, 128>}, {transform_indices = @transform_1, window_bounds = array<i64: 128, 64>}, {transform_indices = @transform_2, window_bounds = array<i64: 1, 64>}, {transform_indices = @transform_3, window_bounds = array<i64: 32, 64>}]} {
    %c0 = arith.constant 0 : index
    %c0_0 = arith.constant 0 : index
    %0 = vector.load %arg3[%c0, %c0_0] : memref<32x128xbf16, #tpu.memory_space<vmem>>, vector<32x128xbf16>
    %c0_1 = arith.constant 0 : index
    %c0_2 = arith.constant 0 : index
    %1 = vector.load %arg4[%c0_1, %c0_2] : memref<128x64xbf16, #tpu.memory_space<vmem>>, vector<128x64xbf16>
    %cst = arith.constant dense<0.000000e+00> : vector<32x64xf32>
    %2 = tpu.matmul %0, %1, %cst {dimension_numbers = #tpu.dot_dimension_numbers<[1], [0], [0], [1], [0, 0, 1, 1], [], []>} : vector<32x128xbf16>, vector<128x64xbf16>, vector<32x64xf32> -> vector<32x64xf32>
    %c0_3 = arith.constant 0 : index
    %c0_4 = arith.constant 0 : index
    %3 = vector.load %arg5[%c0_3, %c0_4] : memref<1x64xf32, #tpu.memory_space<vmem>>, vector<1x64xf32>
    %4 = vector.broadcast %3 : vector<1x64xf32> to vector<32x64xf32>
    %5 = arith.addf %2, %4 : vector<32x64xf32>
    %c0_5 = arith.constant 0 : index
    %c0_6 = arith.constant 0 : index
    %6 = vector.load %arg6[%c0_5, %c0_6] : memref<32x64xf32, #tpu.memory_space<vmem>>, vector<32x64xf32>
    tpu.vector_store %arg6[%c0_5, %c0_6], %5 {strides = array<i32>} : memref<32x64xf32, #tpu.memory_space<vmem>>, vector<32x64xf32>,
    return
  }
  func.func @transform_0(%arg0: i32, %arg1: i32, %arg2: i32) -> (i32, i32) {
    %c0_i32 = arith.constant 0 : i32
    return %arg0, %arg2 : i32, i32
  }
  func.func @transform_1(%arg0: i32, %arg1: i32, %arg2: i32) -> (i32, i32) {
    %c0_i32 = arith.constant 0 : i32
    return %arg2, %arg1 : i32, i32
  }
  func.func @transform_2(%arg0: i32, %arg1: i32, %arg2: i32) -> (i32, i32) {
    %c0_i32 = arith.constant 0 : i32
    %c0_i32_0 = arith.constant 0 : i32
    return %c0_i32, %arg1 : i32, i32
  }
  func.func @transform_3(%arg0: i32, %arg1: i32, %arg2: i32) -> (i32, i32) {
    %c0_i32 = arith.constant 0 : i32
    return %arg0, %arg1 : i32, i32
  }
}

module attributes {stable_mosaic.version = 11 : i64} {
  func.func @_fused_linear_kernel(%arg0: i32, %arg1: i32, %arg2: i32, %arg3: memref<32x128xbf16, #tpu.memory_space<vmem>>, %arg4: memref<128x64xbf16, #tpu.memory_space<vmem>>, %arg5: memref<1x64xf32, #tpu.memory_space<vmem>>, %arg6: memref<32x64xf32, #tpu.memory_space<vmem>>, %arg7: memref<32x64xf32, #tpu.memory_space<vmem>>) attributes {dimension_semantics = [#tpu.dimension_semantics<parallel>, #tpu.dimension_semantics<arbitrary>, #tpu.dimension_semantics<arbitrary>], iteration_bounds = array<i64: 1, 1, 1>, scalar_prefetch = 0 : i64, scratch_operands = 0 : i64, tpu.core_type = #tpu.core_type<tc>, window_params = [{transform_indices = @transform_0, window_bounds = array<i64: 32, 128>}, {transform_indices = @transform_1, window_bounds = array<i64: 128, 64>}, {transform_indices = @transform_2, window_bounds = array<i64: 1, 64>}, {transform_indices = @transform_3, window_bounds = array<i64: 32, 64>}, {transform_indices = @transform_4, window_bounds = array<i64: 32, 64>}]} {
    %c0 = arith.constant 0 : index
    %c0_0 = arith.constant 0 : index
    %0 = vector.load %arg3[%c0, %c0_0] : memref<32x128xbf16, #tpu.memory_space<vmem>>, vector<32x128xbf16>
    %c0_1 = arith.constant 0 : index
    %c0_2 = arith.constant 0 : index
    %1 = vector.load %arg4[%c0_1, %c0_2] : memref<128x64xbf16, #tpu.memory_space<vmem>>, vector<128x64xbf16>
    %cst = arith.constant dense<0.000000e+00> : vector<32x64xf32>
    %2 = tpu.matmul %0, %1, %cst {dimension_numbers = #tpu.dot_dimension_numbers<[1], [0], [0], [1], [0, 0, 1, 1], [], []>} : vector<32x128xbf16>, vector<128x64xbf16>, vector<32x64xf32> -> vector<32x64xf32>
    %c0_3 = arith.constant 0 : index
    %c0_4 = arith.constant 0 : index
    %3 = vector.load %arg5[%c0_3, %c0_4] : memref<1x64xf32, #tpu.memory_space<vmem>>, vector<1x64xf32>
    %4 = vector.broadcast %3 : vector<1x64xf32> to vector<32x64xf32>
    %5 = arith.addf %2, %4 : vector<32x64xf32>
    %c0_5 = arith.constant 0 : index
    %c0_6 = arith.constant 0 : index
    %6 = vector.load %arg6[%c0_5, %c0_6] : memref<32x64xf32, #tpu.memory_space<vmem>>, vector<32x64xf32>
    %7 = arith.addf %5, %6 : vector<32x64xf32>
    %c0_7 = arith.constant 0 : index
    %c0_8 = arith.constant 0 : index
    %8 = vector.load %arg7[%c0_7, %c0_8] : memref<32x64xf32, #tpu.memory_space<vmem>>, vector<32x64xf32>
    tpu.vector_store %arg7[%c0_7, %c0_8], %7 {strides = array<i32>} : memref<32x64xf32, #tpu.memory_space<vmem>>, vector<32x64xf32>,
    return
  }
  func.func @transform_0(%arg0: i32, %arg1: i32, %arg2: i32) -> (i32, i32) {
    %c0_i32 = arith.constant 0 : i32
    return %arg0, %arg2 : i32, i32
  }
  func.func @transform_1(%arg0: i32, %arg1: i32, %arg2: i32) -> (i32, i32) {
    %c0_i32 = arith.constant 0 : i32
    return %arg2, %arg1 : i32, i32
  }
  func.func @transform_2(%arg0: i32, %arg1: i32, %arg2: i32) -> (i32, i32) {
    %c0_i32 = arith.constant 0 : i32
    %c0_i32_0 = arith.constant 0 : i32
    return %c0_i32, %arg1 : i32, i32
  }
  func.func @transform_3(%arg0: i32, %arg1: i32, %arg2: i32) -> (i32, i32) {
    %c0_i32 = arith.constant 0 : i32
    return %arg0, %arg1 : i32, i32
  }
  func.func @transform_4(%arg0: i32, %arg1: i32, %arg2: i32) -> (i32, i32) {
    %c0_i32 = arith.constant 0 : i32
    return %arg0, %arg1 : i32, i32
  }
}

module attributes {stable_mosaic.version = 11 : i64} {
  func.func @_fused_linear_kernel(%arg0: i32, %arg1: i32, %arg2: i32, %arg3: memref<64x64xf32, #tpu.memory_space<vmem>>, %arg4: memref<64x64xbf16, #tpu.memory_space<vmem>>, %arg5: memref<1x64xf32, #tpu.memory_space<vmem>>, %arg6: memref<64x64xf32, #tpu.memory_space<vmem>>) attributes {dimension_semantics = [#tpu.dimension_semantics<parallel>, #tpu.dimension_semantics<arbitrary>, #tpu.dimension_semantics<arbitrary>], iteration_bounds = array<i64: 1, 1, 1>, scalar_prefetch = 0 : i64, scratch_operands = 0 : i64, tpu.core_type = #tpu.core_type<tc>, window_params = [{transform_indices = @transform_0, window_bounds = array<i64: 64, 64>}, {transform_indices = @transform_1, window_bounds = array<i64: 64, 64>}, {transform_indices = @transform_2, window_bounds = array<i64: 1, 64>}, {transform_indices = @transform_3, window_bounds = array<i64: 64, 64>}]} {
    %c0 = arith.constant 0 : index
    %c0_0 = arith.constant 0 : index
    %0 = vector.load %arg3[%c0, %c0_0] : memref<64x64xf32, #tpu.memory_space<vmem>>, vector<64x64xf32>
    %1 = arith.truncf %0 : vector<64x64xf32> to vector<64x64xbf16>
    %c0_1 = arith.constant 0 : index
    %c0_2 = arith.constant 0 : index
    %2 = vector.load %arg4[%c0_1, %c0_2] : memref<64x64xbf16, #tpu.memory_space<vmem>>, vector<64x64xbf16>
    %cst = arith.constant dense<0.000000e+00> : vector<64x64xf32>
    %3 = tpu.matmul %1, %2, %cst {dimension_numbers = #tpu.dot_dimension_numbers<[1], [0], [0], [1], [0, 0, 1, 1], [], []>} : vector<64x64xbf16>, vector<64x64xbf16>, vector<64x64xf32> -> vector<64x64xf32>
    %c0_3 = arith.constant 0 : index
    %c0_4 = arith.constant 0 : index
    %4 = vector.load %arg5[%c0_3, %c0_4] : memref<1x64xf32, #tpu.memory_space<vmem>>, vector<1x64xf32>
    %5 = vector.broadcast %4 : vector<1x64xf32> to vector<64x64xf32>
    %6 = arith.addf %3, %5 : vector<64x64xf32>
    %c0_5 = arith.constant 0 : index
    %c0_6 = arith.constant 0 : index
    %7 = vector.load %arg6[%c0_5, %c0_6] : memref<64x64xf32, #tpu.memory_space<vmem>>, vector<64x64xf32>
    tpu.vector_store %arg6[%c0_5, %c0_6], %6 {strides = array<i32>} : memref<64x64xf32, #tpu.memory_space<vmem>>, vector<64x64xf32>,
    return
  }
  func.func @transform_0(%arg0: i32, %arg1: i32, %arg2: i32) -> (i32, i32) {
    %c0_i32 = arith.constant 0 : i32
    return %arg0, %arg2 : i32, i32
  }
  func.func @transform_1(%arg0: i32, %arg1: i32, %arg2: i32) -> (i32, i32) {
    %c0_i32 = arith.constant 0 : i32
    return %arg2, %arg1 : i32, i32
  }
  func.func @transform_2(%arg0: i32, %arg1: i32, %arg2: i32) -> (i32, i32) {
    %c0_i32 = arith.constant 0 : i32
    %c0_i32_0 = arith.constant 0 : i32
    return %c0_i32, %arg1 : i32, i32
  }
  func.func @transform_3(%arg0: i32, %arg1: i32, %arg2: i32) -> (i32, i32) {
    %c0_i32 = arith.constant 0 : i32
    return %arg0, %arg1 : i32, i32
  }
}

module attributes {stable_mosaic.version = 11 : i64} {
  func.func @_fused_linear_kernel(%arg0: i32, %arg1: i32, %arg2: i32, %arg3: memref<64x64xf32, #tpu.memory_space<vmem>>, %arg4: memref<1x64xf32, #tpu.memory_space<vmem>>, %arg5: memref<1x64xf32, #tpu.memory_space<vmem>>, %arg6: memref<64x128xbf16, #tpu.memory_space<vmem>>, %arg7: memref<64x128xbf16, #tpu.memory_space<vmem>>, %arg8: memref<64x64xbf16, #tpu.memory_space<vmem>>) attributes {dimension_semantics = [#tpu.dimension_semantics<parallel>, #tpu.dimension_semantics<arbitrary>, #tpu.dimension_semantics<arbitrary>], iteration_bounds = array<i64: 1, 1, 1>, scalar_prefetch = 0 : i64, scratch_operands = 1 : i64, tpu.core_type = #tpu.core_type<tc>, window_params = [{transform_indices = @transform_0, window_bounds = array<i64: 64, 64>}, {pipeline_mode = #tpu.pipeline_mode<synchronous>, transform_indices = @transform_1, window_bounds = array<i64: 1, 64>}, {pipeline_mode = #tpu.pipeline_mode<synchronous>, transform_indices = @transform_2, window_bounds = array<i64: 1, 64>}, {transform_indices = @transform_3, window_bounds = array<i64: 64, 128>}, {transform_indices = @transform_4, window_bounds = array<i64: 64, 128>}]} {
    %c0_i32 = arith.constant 0 : i32
    %0 = arith.cmpi eq, %arg1, %c0_i32 : i32
    %1 = arith.extui %0 : i1 to i32
    %c0_i32_0 = arith.constant 0 : i32
    %2 = arith.cmpi ne, %1, %c0_i32_0 : i32
    scf.if %2 {
      %c0_6 = arith.constant 0 : index
      %c0_7 = arith.constant 0 : index
      %8 = vector.load %arg3[%c0_6, %c0_7] : memref<64x64xf32, #tpu.memory_space<vmem>>, vector<64x64xf32>
      %cst_8 = arith.constant dense<0.000000e+00> : vector<64xf32>
      %9 = vector.multi_reduction <add>, %8, %cst_8 [1] : vector<64x64xf32> to vector<64xf32>
      %10 = vector.shape_cast %9 : vector<64xf32> to vector<64x1xf32>
      %cst_9 = arith.constant 6.400000e+01 : f32
      %11 = vector.broadcast %cst_9 : f32 to vector<64x1xf32>
      %12 = arith.divf %10, %11 : vector<64x1xf32>
      %13 = vector.broadcast %12 : vector<64x1xf32> to vector<64x64xf32>
      %14 = arith.subf %8, %13 : vector<64x64xf32>
      %15 = arith.mulf %14, %14 : vector<64x64xf32>
      %cst_10 = arith.constant dense<0.000000e+00> : vector<64xf32>
      %16 = vector.multi_reduction <add>, %15, %cst_10 [1] : vector<64x64xf32> to vector<64xf32>
      %17 = vector.shape_cast %16 : vector<64xf32> to vector<64x1xf32>
      %cst_11 = arith.constant 6.400000e+01 : f32
      %18 = vector.broadcast %cst_11 : f32 to vector<64x1xf32>
      %19 = arith.divf %17, %18 : vector<64x1xf32>
      %cst_12 = arith.constant 9.99999974E-6 : f32
      %20 = vector.broadcast %cst_12 : f32 to vector<64x1xf32>
      %21 = arith.addf %19, %20 : vector<64x1xf32>
      %22 = math.rsqrt %21 : vector<64x1xf32>
      %23 = vector.broadcast %22 : vector<64x1xf32> to vector<64x64xf32>
      %24 = arith.mulf %14, %23 : vector<64x64xf32>
      %c0_13 = arith.constant 0 : index
      %c0_14 = arith.constant 0 : index
      %25 = vector.load %arg4[%c0_13, %c0_14] : memref<1x64xf32, #tpu.memory_space<vmem>>, vector<1x64xf32>
      %26 = vector.broadcast %25 : vector<1x64xf32> to vector<64x64xf32>
      %27 = arith.mulf %24, %26 : vector<64x64xf32>
      %c0_15 = arith.constant 0 : index
      %c0_16 = arith.constant 0 : index
      %28 = vector.load %arg5[%c0_15, %c0_16] : memref<1x64xf32, #tpu.memory_space<vmem>>, vector<1x64xf32>
      %29 = vector.broadcast %28 : vector<1x64xf32> to vector<64x64xf32>
      %30 = arith.addf %27, %29 : vector<64x64xf32>
      %31 = arith.truncf %30 : vector<64x64xf32> to vector<64x64xbf16>
      %c0_17 = arith.constant 0 : index
      %c0_18 = arith.constant 0 : index
      %32 = vector.load %arg8[%c0_17, %c0_18] : memref<64x64xbf16, #tpu.memory_space<vmem>>, vector<64x64xbf16>
      tpu.vector_store %arg8[%c0_17, %c0_18], %31 {strides = array<i32>} : memref<64x64xbf16, #tpu.memory_space<vmem>>, vector<64x64xbf16>,
    } else {
    }
    %c0 = arith.constant 0 : index
    %c0_1 = arith.constant 0 : index
    %3 = vector.load %arg8[%c0, %c0_1] : memref<64x64xbf16, #tpu.memory_space<vmem>>, vector<64x64xbf16>
    %c0_2 = arith.constant 0 : index
    %c0_3 = arith.constant 0 : index
    %4 = vector.load %arg6[%c0_2, %c0_3] : memref<64x128xbf16, #tpu.memory_space<vmem>>, vector<64x128xbf16>
    %cst = arith.constant dense<0.000000e+00> : vector<64x128xf32>
    %5 = tpu.matmul %3, %4, %cst {dimension_numbers = #tpu.dot_dimension_numbers<[1], [0], [0], [1], [0, 0, 1, 1], [], []>} : vector<64x64xbf16>, vector<64x128xbf16>, vector<64x128xf32> -> vector<64x128xf32>
    %6 = arith.truncf %5 : vector<64x128xf32> to vector<64x128xbf16>
    %c0_4 = arith.constant 0 : index
    %c0_5 = arith.constant 0 : index
    %7 = vector.load %arg7[%c0_4, %c0_5] : memref<64x128xbf16, #tpu.memory_space<vmem>>, vector<64x128xbf16>
    tpu.vector_store %arg7[%c0_4, %c0_5], %6 {strides = array<i32>} : memref<64x128xbf16, #tpu.memory_space<vmem>>, vector<64x128xbf16>,
    return
  }
  func.func @transform_0(%arg0: i32, %arg1: i32, %arg2: i32) -> (i32, i32) {
    %c0_i32 = arith.constant 0 : i32
    return %arg0, %arg2 : i32, i32
  }
  func.func @transform_1(%arg0: i32, %arg1: i32, %arg2: i32) -> (i32, i32) {
    %c0_i32 = arith.constant 0 : i32
    %c0_i32_0 = arith.constant 0 : i32
    %c0_i32_1 = arith.constant 0 : i32
    return %c0_i32, %c0_i32_0 : i32, i32
  }
  func.func @transform_2(%arg0: i32, %arg1: i32, %arg2: i32) -> (i32, i32) {
    %c0_i32 = arith.constant 0 : i32
    %c0_i32_0 = arith.constant 0 : i32
    %c0_i32_1 = arith.constant 0 : i32
    return %c0_i32, %c0_i32_0 : i32, i32
  }
  func.func @transform_3(%arg0: i32, %arg1: i32, %arg2: i32) -> (i32, i32) {
    %c0_i32 = arith.constant 0 : i32
    return %arg2, %arg1 : i32, i32
  }
  func.func @transform_4(%arg0: i32, %arg1: i32, %arg2: i32) -> (i32, i32) {
    %c0_i32 = arith.constant 0 : i32
    return %arg0, %arg1 : i32, i32
  }
}

module attributes {stable_mosaic.version = 11 : i64} {
  func.func @_fused_linear_kernel(%arg0: i32, %arg1: i32, %arg2: i32, %arg3: memref<16x64xf32, #tpu.memory_space<vmem>>, %arg4: memref<1x64xf32, #tpu.memory_space<vmem>>, %arg5: memref<1x64xf32, #tpu.memory_space<vmem>>, %arg6: memref<64x128xbf16, #tpu.memory_space<vmem>>, %arg7: memref<16x128xbf16, #tpu.memory_space<vmem>>, %arg8: memref<16x64xbf16, #tpu.memory_space<vmem>>) attributes {dimension_semantics = [#tpu.dimension_semantics<parallel>, #tpu.dimension_semantics<arbitrary>, #tpu.dimension_semantics<arbitrary>], iteration_bounds = array<i64: 1, 1, 1>, scalar_prefetch = 0 : i64, scratch_operands = 1 : i64, tpu.core_type = #tpu.core_type<tc>, window_params = [{transform_indices = @transform_0, window_bounds = array<i64: 16, 64>}, {pipeline_mode = #tpu.pipeline_mode<synchronous>, transform_indices = @transform_1, window_bounds = array<i64: 1, 64>}, {pipeline_mode = #tpu.pipeline_mode<synchronous>, transform_indices = @transform_2, window_bounds = array<i64: 1, 64>}, {transform_indices = @transform_3, window_bounds = array<i64: 64, 128>}, {transform_indices = @transform_4, window_bounds = array<i64: 16, 128>}]} {
    %c0_i32 = arith.constant 0 : i32
    %0 = arith.cmpi eq, %arg1, %c0_i32 : i32
    %1 = arith.extui %0 : i1 to i32
    %c0_i32_0 = arith.constant 0 : i32
    %2 = arith.cmpi ne, %1, %c0_i32_0 : i32
    scf.if %2 {
      %c0_6 = arith.constant 0 : index
      %c0_7 = arith.constant 0 : index
      %8 = vector.load %arg3[%c0_6, %c0_7] : memref<16x64xf32, #tpu.memory_space<vmem>>, vector<16x64xf32>
      %cst_8 = arith.constant dense<0.000000e+00> : vector<16xf32>
      %9 = vector.multi_reduction <add>, %8, %cst_8 [1] : vector<16x64xf32> to vector<16xf32>
      %10 = vector.shape_cast %9 : vector<16xf32> to vector<16x1xf32>
      %cst_9 = arith.constant 6.400000e+01 : f32
      %11 = vector.broadcast %cst_9 : f32 to vector<16x1xf32>
      %12 = arith.divf %10, %11 : vector<16x1xf32>
      %13 = vector.broadcast %12 : vector<16x1xf32> to vector<16x64xf32>
      %14 = arith.subf %8, %13 : vector<16x64xf32>
      %15 = arith.mulf %14, %14 : vector<16x64xf32>
      %cst_10 = arith.constant dense<0.000000e+00> : vector<16xf32>
      %16 = vector.multi_reduction <add>, %15, %cst_10 [1] : vector<16x64xf32> to vector<16xf32>
      %17 = vector.shape_cast %16 : vector<16xf32> to vector<16x1xf32>
      %cst_11 = arith.constant 6.400000e+01 : f32
      %18 = vector.broadcast %cst_11 : f32 to vector<16x1xf32>
      %19 = arith.divf %17, %18 : vector<16x1xf32>
      %cst_12 = arith.constant 9.99999974E-6 : f32
      %20 = vector.broadcast %cst_12 : f32 to vector<16x1xf32>
      %21 = arith.addf %19, %20 : vector<16x1xf32>
      %22 = math.rsqrt %21 : vector<16x1xf32>
      %23 = vector.broadcast %22 : vector<16x1xf32> to vector<16x64xf32>
      %24 = arith.mulf %14, %23 : vector<16x64xf32>
      %c0_13 = arith.constant 0 : index
      %c0_14 = arith.constant 0 : index
      %25 = vector.load %arg4[%c0_13, %c0_14] : memref<1x64xf32, #tpu.memory_space<vmem>>, vector<1x64xf32>
      %26 = vector.broadcast %25 : vector<1x64xf32> to vector<16x64xf32>
      %27 = arith.mulf %24, %26 : vector<16x64xf32>
      %c0_15 = arith.constant 0 : index
      %c0_16 = arith.constant 0 : index
      %28 = vector.load %arg5[%c0_15, %c0_16] : memref<1x64xf32, #tpu.memory_space<vmem>>, vector<1x64xf32>
      %29 = vector.broadcast %28 : vector<1x64xf32> to vector<16x64xf32>
      %30 = arith.addf %27, %29 : vector<16x64xf32>
      %31 = arith.truncf %30 : vector<16x64xf32> to vector<16x64xbf16>
      %c0_17 = arith.constant 0 : index
      %c0_18 = arith.constant 0 : index
      %32 = vector.load %arg8[%c0_17, %c0_18] : memref<16x64xbf16, #tpu.memory_space<vmem>>, vector<16x64xbf16>
      tpu.vector_store %arg8[%c0_17, %c0_18], %31 {strides = array<i32>} : memref<16x64xbf16, #tpu.memory_space<vmem>>, vector<16x64xbf16>,
    } else {
    }
    %c0 = arith.constant 0 : index
    %c0_1 = arith.constant 0 : index
    %3 = vector.load %arg8[%c0, %c0_1] : memref<16x64xbf16, #tpu.memory_space<vmem>>, vector<16x64xbf16>
    %c0_2 = arith.constant 0 : index
    %c0_3 = arith.constant 0 : index
    %4 = vector.load %arg6[%c0_2, %c0_3] : memref<64x128xbf16, #tpu.memory_space<vmem>>, vector<64x128xbf16>
    %cst = arith.constant dense<0.000000e+00> : vector<16x128xf32>
    %5 = tpu.matmul %3, %4, %cst {dimension_numbers = #tpu.dot_dimension_numbers<[1], [0], [0], [1], [0, 0, 1, 1], [], []>} : vector<16x64xbf16>, vector<64x128xbf16>, vector<16x128xf32> -> vector<16x128xf32>
    %6 = arith.truncf %5 : vector<16x128xf32> to vector<16x128xbf16>
    %c0_4 = arith.constant 0 : index
    %c0_5 = arith.constant 0 : index
    %7 = vector.load %arg7[%c0_4, %c0_5] : memref<16x128xbf16, #tpu.memory_space<vmem>>, vector<16x128xbf16>
    tpu.vector_store %arg7[%c0_4, %c0_5], %6 {strides = array<i32>} : memref<16x128xbf16, #tpu.memory_space<vmem>>, vector<16x128xbf16>,
    return
  }
  func.func @transform_0(%arg0: i32, %arg1: i32, %arg2: i32) -> (i32, i32) {
    %c0_i32 = arith.constant 0 : i32
    return %arg0, %arg2 : i32, i32
  }
  func.func @transform_1(%arg0: i32, %arg1: i32, %arg2: i32) -> (i32, i32) {
    %c0_i32 = arith.constant 0 : i32
    %c0_i32_0 = arith.constant 0 : i32
    %c0_i32_1 = arith.constant 0 : i32
    return %c0_i32, %c0_i32_0 : i32, i32
  }
  func.func @transform_2(%arg0: i32, %arg1: i32, %arg2: i32) -> (i32, i32) {
    %c0_i32 = arith.constant 0 : i32
    %c0_i32_0 = arith.constant 0 : i32
    %c0_i32_1 = arith.constant 0 : i32
    return %c0_i32, %c0_i32_0 : i32, i32
  }
  func.func @transform_3(%arg0: i32, %arg1: i32, %arg2: i32) -> (i32, i32) {
    %c0_i32 = arith.constant 0 : i32
    return %arg2, %arg1 : i32, i32
  }
  func.func @transform_4(%arg0: i32, %arg1: i32, %arg2: i32) -> (i32, i32) {
    %c0_i32 = arith.constant 0 : i32
    return %arg0, %arg1 : i32, i32
  }
}

module attributes {stable_mosaic.version = 11 : i64} {
  func.func @_fused_linear_kernel(%arg0: i32, %arg1: i32, %arg2: i32, %arg3: memref<16x64xf32, #tpu.memory_space<vmem>>, %arg4: memref<1x64xf32, #tpu.memory_space<vmem>>, %arg5: memref<1x64xf32, #tpu.memory_space<vmem>>, %arg6: memref<64x64xbf16, #tpu.memory_space<vmem>>, %arg7: memref<16x64xbf16, #tpu.memory_space<vmem>>, %arg8: memref<16x64xbf16, #tpu.memory_space<vmem>>) attributes {dimension_semantics = [#tpu.dimension_semantics<parallel>, #tpu.dimension_semantics<arbitrary>, #tpu.dimension_semantics<arbitrary>], iteration_bounds = array<i64: 1, 1, 1>, scalar_prefetch = 0 : i64, scratch_operands = 1 : i64, tpu.core_type = #tpu.core_type<tc>, window_params = [{transform_indices = @transform_0, window_bounds = array<i64: 16, 64>}, {pipeline_mode = #tpu.pipeline_mode<synchronous>, transform_indices = @transform_1, window_bounds = array<i64: 1, 64>}, {pipeline_mode = #tpu.pipeline_mode<synchronous>, transform_indices = @transform_2, window_bounds = array<i64: 1, 64>}, {transform_indices = @transform_3, window_bounds = array<i64: 64, 64>}, {transform_indices = @transform_4, window_bounds = array<i64: 16, 64>}]} {
    %c0_i32 = arith.constant 0 : i32
    %0 = arith.cmpi eq, %arg1, %c0_i32 : i32
    %1 = arith.extui %0 : i1 to i32
    %c0_i32_0 = arith.constant 0 : i32
    %2 = arith.cmpi ne, %1, %c0_i32_0 : i32
    scf.if %2 {
      %c0_6 = arith.constant 0 : index
      %c0_7 = arith.constant 0 : index
      %8 = vector.load %arg3[%c0_6, %c0_7] : memref<16x64xf32, #tpu.memory_space<vmem>>, vector<16x64xf32>
      %cst_8 = arith.constant dense<0.000000e+00> : vector<16xf32>
      %9 = vector.multi_reduction <add>, %8, %cst_8 [1] : vector<16x64xf32> to vector<16xf32>
      %10 = vector.shape_cast %9 : vector<16xf32> to vector<16x1xf32>
      %cst_9 = arith.constant 6.400000e+01 : f32
      %11 = vector.broadcast %cst_9 : f32 to vector<16x1xf32>
      %12 = arith.divf %10, %11 : vector<16x1xf32>
      %13 = vector.broadcast %12 : vector<16x1xf32> to vector<16x64xf32>
      %14 = arith.subf %8, %13 : vector<16x64xf32>
      %15 = arith.mulf %14, %14 : vector<16x64xf32>
      %cst_10 = arith.constant dense<0.000000e+00> : vector<16xf32>
      %16 = vector.multi_reduction <add>, %15, %cst_10 [1] : vector<16x64xf32> to vector<16xf32>
      %17 = vector.shape_cast %16 : vector<16xf32> to vector<16x1xf32>
      %cst_11 = arith.constant 6.400000e+01 : f32
      %18 = vector.broadcast %cst_11 : f32 to vector<16x1xf32>
      %19 = arith.divf %17, %18 : vector<16x1xf32>
      %cst_12 = arith.constant 9.99999974E-6 : f32
      %20 = vector.broadcast %cst_12 : f32 to vector<16x1xf32>
      %21 = arith.addf %19, %20 : vector<16x1xf32>
      %22 = math.rsqrt %21 : vector<16x1xf32>
      %23 = vector.broadcast %22 : vector<16x1xf32> to vector<16x64xf32>
      %24 = arith.mulf %14, %23 : vector<16x64xf32>
      %c0_13 = arith.constant 0 : index
      %c0_14 = arith.constant 0 : index
      %25 = vector.load %arg4[%c0_13, %c0_14] : memref<1x64xf32, #tpu.memory_space<vmem>>, vector<1x64xf32>
      %26 = vector.broadcast %25 : vector<1x64xf32> to vector<16x64xf32>
      %27 = arith.mulf %24, %26 : vector<16x64xf32>
      %c0_15 = arith.constant 0 : index
      %c0_16 = arith.constant 0 : index
      %28 = vector.load %arg5[%c0_15, %c0_16] : memref<1x64xf32, #tpu.memory_space<vmem>>, vector<1x64xf32>
      %29 = vector.broadcast %28 : vector<1x64xf32> to vector<16x64xf32>
      %30 = arith.addf %27, %29 : vector<16x64xf32>
      %31 = arith.truncf %30 : vector<16x64xf32> to vector<16x64xbf16>
      %c0_17 = arith.constant 0 : index
      %c0_18 = arith.constant 0 : index
      %32 = vector.load %arg8[%c0_17, %c0_18] : memref<16x64xbf16, #tpu.memory_space<vmem>>, vector<16x64xbf16>
      tpu.vector_store %arg8[%c0_17, %c0_18], %31 {strides = array<i32>} : memref<16x64xbf16, #tpu.memory_space<vmem>>, vector<16x64xbf16>,
    } else {
    }
    %c0 = arith.constant 0 : index
    %c0_1 = arith.constant 0 : index
    %3 = vector.load %arg8[%c0, %c0_1] : memref<16x64xbf16, #tpu.memory_space<vmem>>, vector<16x64xbf16>
    %c0_2 = arith.constant 0 : index
    %c0_3 = arith.constant 0 : index
    %4 = vector.load %arg6[%c0_2, %c0_3] : memref<64x64xbf16, #tpu.memory_space<vmem>>, vector<64x64xbf16>
    %cst = arith.constant dense<0.000000e+00> : vector<16x64xf32>
    %5 = tpu.matmul %3, %4, %cst {dimension_numbers = #tpu.dot_dimension_numbers<[1], [0], [0], [1], [0, 0, 1, 1], [], []>} : vector<16x64xbf16>, vector<64x64xbf16>, vector<16x64xf32> -> vector<16x64xf32>
    %6 = arith.truncf %5 : vector<16x64xf32> to vector<16x64xbf16>
    %c0_4 = arith.constant 0 : index
    %c0_5 = arith.constant 0 : index
    %7 = vector.load %arg7[%c0_4, %c0_5] : memref<16x64xbf16, #tpu.memory_space<vmem>>, vector<16x64xbf16>
    tpu.vector_store %arg7[%c0_4, %c0_5], %6 {strides = array<i32>} : memref<16x64xbf16, #tpu.memory_space<vmem>>, vector<16x64xbf16>,
    return
  }
  func.func @transform_0(%arg0: i32, %arg1: i32, %arg2: i32) -> (i32, i32) {
    %c0_i32 = arith.constant 0 : i32
    return %arg0, %arg2 : i32, i32
  }
  func.func @transform_1(%arg0: i32, %arg1: i32, %arg2: i32) -> (i32, i32) {
    %c0_i32 = arith.constant 0 : i32
    %c0_i32_0 = arith.constant 0 : i32
    %c0_i32_1 = arith.constant 0 : i32
    return %c0_i32, %c0_i32_0 : i32, i32
  }
  func.func @transform_2(%arg0: i32, %arg1: i32, %arg2: i32) -> (i32, i32) {
    %c0_i32 = arith.constant 0 : i32
    %c0_i32_0 = arith.constant 0 : i32
    %c0_i32_1 = arith.constant 0 : i32
    return %c0_i32, %c0_i32_0 : i32, i32
  }
  func.func @transform_3(%arg0: i32, %arg1: i32, %arg2: i32) -> (i32, i32) {
    %c0_i32 = arith.constant 0 : i32
    return %arg2, %arg1 : i32, i32
  }
  func.func @transform_4(%arg0: i32, %arg1: i32, %arg2: i32) -> (i32, i32) {
    %c0_i32 = arith.constant 0 : i32
    return %arg0, %arg1 : i32, i32
  }
}

module attributes {stable_mosaic.version = 11 : i64} {
  func.func @_flash_attention_kernel(%arg0: i32, %arg1: i32, %arg2: i32, %arg3: memref<1x8x64xbf16, #tpu.memory_space<vmem>>, %arg4: memref<1x40x64xbf16, #tpu.memory_space<vmem>>, %arg5: memref<1x40x64xbf16, #tpu.memory_space<vmem>>, %arg6: memref<1x8x64xbf16, #tpu.memory_space<vmem>>, %arg7: memref<8x4xf32, #tpu.memory_space<vmem>>, %arg8: memref<8x64xf32, #tpu.memory_space<vmem>>, %arg9: memref<8x64xf32, #tpu.memory_space<vmem>>) attributes {dimension_semantics = [#tpu.dimension_semantics<parallel>, #tpu.dimension_semantics<parallel>, #tpu.dimension_semantics<arbitrary>], iteration_bounds = array<i64: 2, 1, 1>, scalar_prefetch = 0 : i64, scratch_operands = 3 : i64, tpu.core_type = #tpu.core_type<tc>, window_params = [{transform_indices = @transform_0, window_bounds = array<i64: 1, 8, 64>}, {transform_indices = @transform_1, window_bounds = array<i64: 1, 40, 64>}, {transform_indices = @transform_2, window_bounds = array<i64: 1, 40, 64>}, {transform_indices = @transform_3, window_bounds = array<i64: 1, 8, 64>}]} {
    %c0_i32 = arith.constant 0 : i32
    %0 = arith.cmpi eq, %arg2, %c0_i32 : i32
    %1 = arith.extui %0 : i1 to i32
    %c0_i32_0 = arith.constant 0 : i32
    %2 = arith.cmpi ne, %1, %c0_i32_0 : i32
    scf.if %2 {
      %cst_95 = arith.constant -1.000000e+30 : f32
      %134 = vector.broadcast %cst_95 : f32 to vector<8x4xf32>
      %c0_96 = arith.constant 0 : index
      %c0_97 = arith.constant 0 : index
      %135 = vector.load %arg7[%c0_96, %c0_97] : memref<8x4xf32, #tpu.memory_space<vmem>>, vector<8x4xf32>
      tpu.vector_store %arg7[%c0_96, %c0_97], %134 {strides = array<i32>} : memref<8x4xf32, #tpu.memory_space<vmem>>, vector<8x4xf32>,
      %cst_98 = arith.constant 0.000000e+00 : f32
      %136 = vector.broadcast %cst_98 : f32 to vector<8x64xf32>
      %c0_99 = arith.constant 0 : index
      %c0_100 = arith.constant 0 : index
      %137 = vector.load %arg8[%c0_99, %c0_100] : memref<8x64xf32, #tpu.memory_space<vmem>>, vector<8x64xf32>
      tpu.vector_store %arg8[%c0_99, %c0_100], %136 {strides = array<i32>} : memref<8x64xf32, #tpu.memory_space<vmem>>, vector<8x64xf32>,
      %cst_101 = arith.constant 0.000000e+00 : f32
      %138 = vector.broadcast %cst_101 : f32 to vector<8x64xf32>
      %c0_102 = arith.constant 0 : index
      %c0_103 = arith.constant 0 : index
      %139 = vector.load %arg9[%c0_102, %c0_103] : memref<8x64xf32, #tpu.memory_space<vmem>>, vector<8x64xf32>
      tpu.vector_store %arg9[%c0_102, %c0_103], %138 {strides = array<i32>} : memref<8x64xf32, #tpu.memory_space<vmem>>, vector<8x64xf32>,
    } else {
    }
    %c0 = arith.constant 0 : index
    %c0_1 = arith.constant 0 : index
    %c0_2 = arith.constant 0 : index
    %3 = vector.load %arg3[%c0, %c0_1, %c0_2] : memref<1x8x64xbf16, #tpu.memory_space<vmem>>, vector<1x8x16xbf16>
    %4 = vector.shape_cast %3 : vector<1x8x16xbf16> to vector<8x16xbf16>
    %c0_3 = arith.constant 0 : index
    %c0_4 = arith.constant 0 : index
    %c0_5 = arith.constant 0 : index
    %5 = vector.load %arg4[%c0_3, %c0_4, %c0_5] : memref<1x40x64xbf16, #tpu.memory_space<vmem>>, vector<1x40x16xbf16>
    %6 = vector.shape_cast %5 : vector<1x40x16xbf16> to vector<40x16xbf16>
    %cst = arith.constant dense<0.000000e+00> : vector<8x40xf32>
    %7 = tpu.matmul %4, %6, %cst {dimension_numbers = #tpu.dot_dimension_numbers<[1], [1], [0], [0], [0, 0, 1, 0], [], []>} : vector<8x16xbf16>, vector<40x16xbf16>, vector<8x40xf32> -> vector<8x40xf32>
    %c0_6 = arith.constant 0 : index
    %c0_7 = arith.constant 0 : index
    %8 = vector.load %arg7[%c0_6, %c0_7] : memref<8x4xf32, #tpu.memory_space<vmem>>, vector<8x1xf32>
    %cst_8 = arith.constant dense<0xFF800000> : vector<8xf32>
    %9 = vector.multi_reduction <maximumf>, %7, %cst_8 [1] : vector<8x40xf32> to vector<8xf32>
    %10 = vector.shape_cast %9 : vector<8xf32> to vector<8x1xf32>
    %11 = arith.maximumf %8, %10 : vector<8x1xf32>
    %12 = arith.subf %8, %11 : vector<8x1xf32>
    %13 = math.exp %12 : vector<8x1xf32>
    %14 = vector.broadcast %11 : vector<8x1xf32> to vector<8x40xf32>
    %15 = arith.subf %7, %14 : vector<8x40xf32>
    %16 = math.exp %15 : vector<8x40xf32>
    %c0_9 = arith.constant 0 : index
    %c0_10 = arith.constant 0 : index
    %17 = vector.load %arg8[%c0_9, %c0_10] : memref<8x64xf32, #tpu.memory_space<vmem>>, vector<8x16xf32>
    %18 = vector.broadcast %13 : vector<8x1xf32> to vector<8x16xf32>
    %19 = arith.mulf %18, %17 : vector<8x16xf32>
    %cst_11 = arith.constant dense<0.000000e+00> : vector<8xf32>
    %20 = vector.multi_reduction <add>, %16, %cst_11 [1] : vector<8x40xf32> to vector<8xf32>
    %21 = vector.shape_cast %20 : vector<8xf32> to vector<8x1xf32>
    %22 = vector.broadcast %21 : vector<8x1xf32> to vector<8x16xf32>
    %23 = arith.addf %19, %22 : vector<8x16xf32>
    %c0_12 = arith.constant 0 : index
    %c0_13 = arith.constant 0 : index
    %24 = vector.load %arg8[%c0_12, %c0_13] : memref<8x64xf32, #tpu.memory_space<vmem>>, vector<8x16xf32>
    tpu.vector_store %arg8[%c0_12, %c0_13], %23 {strides = array<i32>} : memref<8x64xf32, #tpu.memory_space<vmem>>, vector<8x16xf32>,
    %c0_14 = arith.constant 0 : index
    %c0_15 = arith.constant 0 : index
    %25 = vector.load %arg9[%c0_14, %c0_15] : memref<8x64xf32, #tpu.memory_space<vmem>>, vector<8x16xf32>
    %26 = vector.broadcast %13 : vector<8x1xf32> to vector<8x16xf32>
    %27 = arith.mulf %26, %25 : vector<8x16xf32>
    %28 = arith.truncf %16 : vector<8x40xf32> to vector<8x40xbf16>
    %c0_16 = arith.constant 0 : index
    %c0_17 = arith.constant 0 : index
    %c0_18 = arith.constant 0 : index
    %29 = vector.load %arg5[%c0_16, %c0_17, %c0_18] : memref<1x40x64xbf16, #tpu.memory_space<vmem>>, vector<1x40x16xbf16>
    %30 = vector.shape_cast %29 : vector<1x40x16xbf16> to vector<40x16xbf16>
    %cst_19 = arith.constant dense<0.000000e+00> : vector<8x16xf32>
    %31 = tpu.matmul %28, %30, %cst_19 {dimension_numbers = #tpu.dot_dimension_numbers<[1], [0], [0], [1], [0, 0, 1, 1], [], []>} : vector<8x40xbf16>, vector<40x16xbf16>, vector<8x16xf32> -> vector<8x16xf32>
    %32 = arith.addf %27, %31 : vector<8x16xf32>
    %c0_20 = arith.constant 0 : index
    %c0_21 = arith.constant 0 : index
    %33 = vector.load %arg9[%c0_20, %c0_21] : memref<8x64xf32, #tpu.memory_space<vmem>>, vector<8x16xf32>
    tpu.vector_store %arg9[%c0_20, %c0_21], %32 {strides = array<i32>} : memref<8x64xf32, #tpu.memory_space<vmem>>, vector<8x16xf32>,
    %c0_22 = arith.constant 0 : index
    %c0_23 = arith.constant 0 : index
    %34 = vector.load %arg7[%c0_22, %c0_23] : memref<8x4xf32, #tpu.memory_space<vmem>>, vector<8x1xf32>
    tpu.vector_store %arg7[%c0_22, %c0_23], %11 {strides = array<i32>} : memref<8x4xf32, #tpu.memory_space<vmem>>, vector<8x1xf32>,
    %c0_24 = arith.constant 0 : index
    %c0_25 = arith.constant 0 : index
    %c16 = arith.constant 16 : index
    %35 = vector.load %arg3[%c0_24, %c0_25, %c16] : memref<1x8x64xbf16, #tpu.memory_space<vmem>>, vector<1x8x16xbf16>
    %36 = vector.shape_cast %35 : vector<1x8x16xbf16> to vector<8x16xbf16>
    %c0_26 = arith.constant 0 : index
    %c0_27 = arith.constant 0 : index
    %c16_28 = arith.constant 16 : index
    %37 = vector.load %arg4[%c0_26, %c0_27, %c16_28] : memref<1x40x64xbf16, #tpu.memory_space<vmem>>, vector<1x40x16xbf16>
    %38 = vector.shape_cast %37 : vector<1x40x16xbf16> to vector<40x16xbf16>
    %cst_29 = arith.constant dense<0.000000e+00> : vector<8x40xf32>
    %39 = tpu.matmul %36, %38, %cst_29 {dimension_numbers = #tpu.dot_dimension_numbers<[1], [1], [0], [0], [0, 0, 1, 0], [], []>} : vector<8x16xbf16>, vector<40x16xbf16>, vector<8x40xf32> -> vector<8x40xf32>
    %c0_30 = arith.constant 0 : index
    %c1 = arith.constant 1 : index
    %40 = vector.load %arg7[%c0_30, %c1] : memref<8x4xf32, #tpu.memory_space<vmem>>, vector<8x1xf32>
    %cst_31 = arith.constant dense<0xFF800000> : vector<8xf32>
    %41 = vector.multi_reduction <maximumf>, %39, %cst_31 [1] : vector<8x40xf32> to vector<8xf32>
    %42 = vector.shape_cast %41 : vector<8xf32> to vector<8x1xf32>
    %43 = arith.maximumf %40, %42 : vector<8x1xf32>
    %44 = arith.subf %40, %43 : vector<8x1xf32>
    %45 = math.exp %44 : vector<8x1xf32>
    %46 = vector.broadcast %43 : vector<8x1xf32> to vector<8x40xf32>
    %47 = arith.subf %39, %46 : vector<8x40xf32>
    %48 = math.exp %47 : vector<8x40xf32>
    %c0_32 = arith.constant 0 : index
    %c16_33 = arith.constant 16 : index
    %49 = vector.load %arg8[%c0_32, %c16_33] : memref<8x64xf32, #tpu.memory_space<vmem>>, vector<8x16xf32>
    %50 = vector.broadcast %45 : vector<8x1xf32> to vector<8x16xf32>
    %51 = arith.mulf %50, %49 : vector<8x16xf32>
    %cst_34 = arith.constant dense<0.000000e+00> : vector<8xf32>
    %52 = vector.multi_reduction <add>, %48, %cst_34 [1] : vector<8x40xf32> to vector<8xf32>
    %53 = vector.shape_cast %52 : vector<8xf32> to vector<8x1xf32>
    %54 = vector.broadcast %53 : vector<8x1xf32> to vector<8x16xf32>
    %55 = arith.addf %51, %54 : vector<8x16xf32>
    %c0_35 = arith.constant 0 : index
    %c16_36 = arith.constant 16 : index
    %56 = vector.load %arg8[%c0_35, %c16_36] : memref<8x64xf32, #tpu.memory_space<vmem>>, vector<8x16xf32>
    tpu.vector_store %arg8[%c0_35, %c16_36], %55 {strides = array<i32>} : memref<8x64xf32, #tpu.memory_space<vmem>>, vector<8x16xf32>,
    %c0_37 = arith.constant 0 : index
    %c16_38 = arith.constant 16 : index
    %57 = vector.load %arg9[%c0_37, %c16_38] : memref<8x64xf32, #tpu.memory_space<vmem>>, vector<8x16xf32>
    %58 = vector.broadcast %45 : vector<8x1xf32> to vector<8x16xf32>
    %59 = arith.mulf %58, %57 : vector<8x16xf32>
    %60 = arith.truncf %48 : vector<8x40xf32> to vector<8x40xbf16>
    %c0_39 = arith.constant 0 : index
    %c0_40 = arith.constant 0 : index
    %c16_41 = arith.constant 16 : index
    %61 = vector.load %arg5[%c0_39, %c0_40, %c16_41] : memref<1x40x64xbf16, #tpu.memory_space<vmem>>, vector<1x40x16xbf16>
    %62 = vector.shape_cast %61 : vector<1x40x16xbf16> to vector<40x16xbf16>
    %cst_42 = arith.constant dense<0.000000e+00> : vector<8x16xf32>
    %63 = tpu.matmul %60, %62, %cst_42 {dimension_numbers = #tpu.dot_dimension_numbers<[1], [0], [0], [1], [0, 0, 1, 1], [], []>} : vector<8x40xbf16>, vector<40x16xbf16>, vector<8x16xf32> -> vector<8x16xf32>
    %64 = arith.addf %59, %63 : vector<8x16xf32>
    %c0_43 = arith.constant 0 : index
    %c16_44 = arith.constant 16 : index
    %65 = vector.load %arg9[%c0_43, %c16_44] : memref<8x64xf32, #tpu.memory_space<vmem>>, vector<8x16xf32>
    tpu.vector_store %arg9[%c0_43, %c16_44], %64 {strides = array<i32>} : memref<8x64xf32, #tpu.memory_space<vmem>>, vector<8x16xf32>,
    %c0_45 = arith.constant 0 : index
    %c1_46 = arith.constant 1 : index
    %66 = vector.load %arg7[%c0_45, %c1_46] : memref<8x4xf32, #tpu.memory_space<vmem>>, vector<8x1xf32>
    tpu.vector_store %arg7[%c0_45, %c1_46], %43 {strides = array<i32>} : memref<8x4xf32, #tpu.memory_space<vmem>>, vector<8x1xf32>,
    %c0_47 = arith.constant 0 : index
    %c0_48 = arith.constant 0 : index
    %c32 = arith.constant 32 : index
    %67 = vector.load %arg3[%c0_47, %c0_48, %c32] : memref<1x8x64xbf16, #tpu.memory_space<vmem>>, vector<1x8x16xbf16>
    %68 = vector.shape_cast %67 : vector<1x8x16xbf16> to vector<8x16xbf16>
    %c0_49 = arith.constant 0 : index
    %c0_50 = arith.constant 0 : index
    %c32_51 = arith.constant 32 : index
    %69 = vector.load %arg4[%c0_49, %c0_50, %c32_51] : memref<1x40x64xbf16, #tpu.memory_space<vmem>>, vector<1x40x16xbf16>
    %70 = vector.shape_cast %69 : vector<1x40x16xbf16> to vector<40x16xbf16>
    %cst_52 = arith.constant dense<0.000000e+00> : vector<8x40xf32>
    %71 = tpu.matmul %68, %70, %cst_52 {dimension_numbers = #tpu.dot_dimension_numbers<[1], [1], [0], [0], [0, 0, 1, 0], [], []>} : vector<8x16xbf16>, vector<40x16xbf16>, vector<8x40xf32> -> vector<8x40xf32>
    %c0_53 = arith.constant 0 : index
    %c2 = arith.constant 2 : index
    %72 = vector.load %arg7[%c0_53, %c2] : memref<8x4xf32, #tpu.memory_space<vmem>>, vector<8x1xf32>
    %cst_54 = arith.constant dense<0xFF800000> : vector<8xf32>
    %73 = vector.multi_reduction <maximumf>, %71, %cst_54 [1] : vector<8x40xf32> to vector<8xf32>
    %74 = vector.shape_cast %73 : vector<8xf32> to vector<8x1xf32>
    %75 = arith.maximumf %72, %74 : vector<8x1xf32>
    %76 = arith.subf %72, %75 : vector<8x1xf32>
    %77 = math.exp %76 : vector<8x1xf32>
    %78 = vector.broadcast %75 : vector<8x1xf32> to vector<8x40xf32>
    %79 = arith.subf %71, %78 : vector<8x40xf32>
    %80 = math.exp %79 : vector<8x40xf32>
    %c0_55 = arith.constant 0 : index
    %c32_56 = arith.constant 32 : index
    %81 = vector.load %arg8[%c0_55, %c32_56] : memref<8x64xf32, #tpu.memory_space<vmem>>, vector<8x16xf32>
    %82 = vector.broadcast %77 : vector<8x1xf32> to vector<8x16xf32>
    %83 = arith.mulf %82, %81 : vector<8x16xf32>
    %cst_57 = arith.constant dense<0.000000e+00> : vector<8xf32>
    %84 = vector.multi_reduction <add>, %80, %cst_57 [1] : vector<8x40xf32> to vector<8xf32>
    %85 = vector.shape_cast %84 : vector<8xf32> to vector<8x1xf32>
    %86 = vector.broadcast %85 : vector<8x1xf32> to vector<8x16xf32>
    %87 = arith.addf %83, %86 : vector<8x16xf32>
    %c0_58 = arith.constant 0 : index
    %c32_59 = arith.constant 32 : index
    %88 = vector.load %arg8[%c0_58, %c32_59] : memref<8x64xf32, #tpu.memory_space<vmem>>, vector<8x16xf32>
    tpu.vector_store %arg8[%c0_58, %c32_59], %87 {strides = array<i32>} : memref<8x64xf32, #tpu.memory_space<vmem>>, vector<8x16xf32>,
    %c0_60 = arith.constant 0 : index
    %c32_61 = arith.constant 32 : index
    %89 = vector.load %arg9[%c0_60, %c32_61] : memref<8x64xf32, #tpu.memory_space<vmem>>, vector<8x16xf32>
    %90 = vector.broadcast %77 : vector<8x1xf32> to vector<8x16xf32>
    %91 = arith.mulf %90, %89 : vector<8x16xf32>
    %92 = arith.truncf %80 : vector<8x40xf32> to vector<8x40xbf16>
    %c0_62 = arith.constant 0 : index
    %c0_63 = arith.constant 0 : index
    %c32_64 = arith.constant 32 : index
    %93 = vector.load %arg5[%c0_62, %c0_63, %c32_64] : memref<1x40x64xbf16, #tpu.memory_space<vmem>>, vector<1x40x16xbf16>
    %94 = vector.shape_cast %93 : vector<1x40x16xbf16> to vector<40x16xbf16>
    %cst_65 = arith.constant dense<0.000000e+00> : vector<8x16xf32>
    %95 = tpu.matmul %92, %94, %cst_65 {dimension_numbers = #tpu.dot_dimension_numbers<[1], [0], [0], [1], [0, 0, 1, 1], [], []>} : vector<8x40xbf16>, vector<40x16xbf16>, vector<8x16xf32> -> vector<8x16xf32>
    %96 = arith.addf %91, %95 : vector<8x16xf32>
    %c0_66 = arith.constant 0 : index
    %c32_67 = arith.constant 32 : index
    %97 = vector.load %arg9[%c0_66, %c32_67] : memref<8x64xf32, #tpu.memory_space<vmem>>, vector<8x16xf32>
    tpu.vector_store %arg9[%c0_66, %c32_67], %96 {strides = array<i32>} : memref<8x64xf32, #tpu.memory_space<vmem>>, vector<8x16xf32>,
    %c0_68 = arith.constant 0 : index
    %c2_69 = arith.constant 2 : index
    %98 = vector.load %arg7[%c0_68, %c2_69] : memref<8x4xf32, #tpu.memory_space<vmem>>, vector<8x1xf32>
    tpu.vector_store %arg7[%c0_68, %c2_69], %75 {strides = array<i32>} : memref<8x4xf32, #tpu.memory_space<vmem>>, vector<8x1xf32>,
    %c0_70 = arith.constant 0 : index
    %c0_71 = arith.constant 0 : index
    %c48 = arith.constant 48 : index
    %99 = vector.load %arg3[%c0_70, %c0_71, %c48] : memref<1x8x64xbf16, #tpu.memory_space<vmem>>, vector<1x8x16xbf16>
    %100 = vector.shape_cast %99 : vector<1x8x16xbf16> to vector<8x16xbf16>
    %c0_72 = arith.constant 0 : index
    %c0_73 = arith.constant 0 : index
    %c48_74 = arith.constant 48 : index
    %101 = vector.load %arg4[%c0_72, %c0_73, %c48_74] : memref<1x40x64xbf16, #tpu.memory_space<vmem>>, vector<1x40x16xbf16>
    %102 = vector.shape_cast %101 : vector<1x40x16xbf16> to vector<40x16xbf16>
    %cst_75 = arith.constant dense<0.000000e+00> : vector<8x40xf32>
    %103 = tpu.matmul %100, %102, %cst_75 {dimension_numbers = #tpu.dot_dimension_numbers<[1], [1], [0], [0], [0, 0, 1, 0], [], []>} : vector<8x16xbf16>, vector<40x16xbf16>, vector<8x40xf32> -> vector<8x40xf32>
    %c0_76 = arith.constant 0 : index
    %c3 = arith.constant 3 : index
    %104 = vector.load %arg7[%c0_76, %c3] : memref<8x4xf32, #tpu.memory_space<vmem>>, vector<8x1xf32>
    %cst_77 = arith.constant dense<0xFF800000> : vector<8xf32>
    %105 = vector.multi_reduction <maximumf>, %103, %cst_77 [1] : vector<8x40xf32> to vector<8xf32>
    %106 = vector.shape_cast %105 : vector<8xf32> to vector<8x1xf32>
    %107 = arith.maximumf %104, %106 : vector<8x1xf32>
    %108 = arith.subf %104, %107 : vector<8x1xf32>
    %109 = math.exp %108 : vector<8x1xf32>
    %110 = vector.broadcast %107 : vector<8x1xf32> to vector<8x40xf32>
    %111 = arith.subf %103, %110 : vector<8x40xf32>
    %112 = math.exp %111 : vector<8x40xf32>
    %c0_78 = arith.constant 0 : index
    %c48_79 = arith.constant 48 : index
    %113 = vector.load %arg8[%c0_78, %c48_79] : memref<8x64xf32, #tpu.memory_space<vmem>>, vector<8x16xf32>
    %114 = vector.broadcast %109 : vector<8x1xf32> to vector<8x16xf32>
    %115 = arith.mulf %114, %113 : vector<8x16xf32>
    %cst_80 = arith.constant dense<0.000000e+00> : vector<8xf32>
    %116 = vector.multi_reduction <add>, %112, %cst_80 [1] : vector<8x40xf32> to vector<8xf32>
    %117 = vector.shape_cast %116 : vector<8xf32> to vector<8x1xf32>
    %118 = vector.broadcast %117 : vector<8x1xf32> to vector<8x16xf32>
    %119 = arith.addf %115, %118 : vector<8x16xf32>
    %c0_81 = arith.constant 0 : index
    %c48_82 = arith.constant 48 : index
    %120 = vector.load %arg8[%c0_81, %c48_82] : memref<8x64xf32, #tpu.memory_space<vmem>>, vector<8x16xf32>
    tpu.vector_store %arg8[%c0_81, %c48_82], %119 {strides = array<i32>} : memref<8x64xf32, #tpu.memory_space<vmem>>, vector<8x16xf32>,
    %c0_83 = arith.constant 0 : index
    %c48_84 = arith.constant 48 : index
    %121 = vector.load %arg9[%c0_83, %c48_84] : memref<8x64xf32, #tpu.memory_space<vmem>>, vector<8x16xf32>
    %122 = vector.broadcast %109 : vector<8x1xf32> to vector<8x16xf32>
    %123 = arith.mulf %122, %121 : vector<8x16xf32>
    %124 = arith.truncf %112 : vector<8x40xf32> to vector<8x40xbf16>
    %c0_85 = arith.constant 0 : index
    %c0_86 = arith.constant 0 : index
    %c48_87 = arith.constant 48 : index
    %125 = vector.load %arg5[%c0_85, %c0_86, %c48_87] : memref<1x40x64xbf16, #tpu.memory_space<vmem>>, vector<1x40x16xbf16>
    %126 = vector.shape_cast %125 : vector<1x40x16xbf16> to vector<40x16xbf16>
    %cst_88 = arith.constant dense<0.000000e+00> : vector<8x16xf32>
    %127 = tpu.matmul %124, %126, %cst_88 {dimension_numbers = #tpu.dot_dimension_numbers<[1], [0], [0], [1], [0, 0, 1, 1], [], []>} : vector<8x40xbf16>, vector<40x16xbf16>, vector<8x16xf32> -> vector<8x16xf32>
    %128 = arith.addf %123, %127 : vector<8x16xf32>
    %c0_89 = arith.constant 0 : index
    %c48_90 = arith.constant 48 : index
    %129 = vector.load %arg9[%c0_89, %c48_90] : memref<8x64xf32, #tpu.memory_space<vmem>>, vector<8x16xf32>
    tpu.vector_store %arg9[%c0_89, %c48_90], %128 {strides = array<i32>} : memref<8x64xf32, #tpu.memory_space<vmem>>, vector<8x16xf32>,
    %c0_91 = arith.constant 0 : index
    %c3_92 = arith.constant 3 : index
    %130 = vector.load %arg7[%c0_91, %c3_92] : memref<8x4xf32, #tpu.memory_space<vmem>>, vector<8x1xf32>
    tpu.vector_store %arg7[%c0_91, %c3_92], %107 {strides = array<i32>} : memref<8x4xf32, #tpu.memory_space<vmem>>, vector<8x1xf32>,
    %c0_i32_93 = arith.constant 0 : i32
    %131 = arith.cmpi eq, %arg2, %c0_i32_93 : i32
    %132 = arith.extui %131 : i1 to i32
    %c0_i32_94 = arith.constant 0 : i32
    %133 = arith.cmpi ne, %132, %c0_i32_94 : i32
    scf.if %133 {
      %c0_95 = arith.constant 0 : index
      %c0_96 = arith.constant 0 : index
      %134 = vector.load %arg9[%c0_95, %c0_96] : memref<8x64xf32, #tpu.memory_space<vmem>>, vector<8x64xf32>
      %c0_97 = arith.constant 0 : index
      %c0_98 = arith.constant 0 : index
      %135 = vector.load %arg8[%c0_97, %c0_98] : memref<8x64xf32, #tpu.memory_space<vmem>>, vector<8x64xf32>
      %136 = tpu.reciprocal %135 {approx = true} : vector<8x64xf32> -> vector<8x64xf32>
      %137 = arith.mulf %134, %136 : vector<8x64xf32>
      %138 = arith.truncf %137 : vector<8x64xf32> to vector<8x64xbf16>
      %c0_99 = arith.constant 0 : index
      %c0_100 = arith.constant 0 : index
      %c0_101 = arith.constant 0 : index
      %139 = vector.load %arg6[%c0_99, %c0_100, %c0_101] : memref<1x8x64xbf16, #tpu.memory_space<vmem>>, vector<1x8x64xbf16>
      %140 = vector.shape_cast %139 : vector<1x8x64xbf16> to vector<8x64xbf16>
      %141 = vector.shape_cast %138 : vector<8x64xbf16> to vector<1x8x64xbf16>
      tpu.vector_store %arg6[%c0_99, %c0_100, %c0_101], %141 {strides = array<i32>} : memref<1x8x64xbf16, #tpu.memory_space<vmem>>, vector<1x8x64xbf16>,
    } else {
    }
    return
  }
  func.func @transform_0(%arg0: i32, %arg1: i32, %arg2: i32) -> (i32, i32, i32) {
    %c0_i32 = arith.constant 0 : i32
    %c0_i32_0 = arith.constant 0 : i32
    return %arg0, %c0_i32, %arg1 : i32, i32, i32
  }
  func.func @transform_1(%arg0: i32, %arg1: i32, %arg2: i32) -> (i32, i32, i32) {
    %c0_i32 = arith.constant 0 : i32
    return %arg0, %arg2, %arg1 : i32, i32, i32
  }
  func.func @transform_2(%arg0: i32, %arg1: i32, %arg2: i32) -> (i32, i32, i32) {
    %c0_i32 = arith.constant 0 : i32
    return %arg0, %arg2, %arg1 : i32, i32, i32
  }
  func.func @transform_3(%arg0: i32, %arg1: i32, %arg2: i32) -> (i32, i32, i32) {
    %c0_i32 = arith.constant 0 : i32
    %c0_i32_0 = arith.constant 0 : i32
    return %arg0, %c0_i32, %arg1 : i32, i32, i32
  }
}

module attributes {stable_mosaic.version = 11 : i64} {
  func.func @_fused_linear_kernel(%arg0: i32, %arg1: i32, %arg2: i32, %arg3: memref<16x64xbf16, #tpu.memory_space<vmem>>, %arg4: memref<64x64xbf16, #tpu.memory_space<vmem>>, %arg5: memref<16x64xf32, #tpu.memory_space<vmem>>, %arg6: memref<16x64xf32, #tpu.memory_space<vmem>>) attributes {dimension_semantics = [#tpu.dimension_semantics<parallel>, #tpu.dimension_semantics<arbitrary>, #tpu.dimension_semantics<arbitrary>], iteration_bounds = array<i64: 1, 1, 1>, scalar_prefetch = 0 : i64, scratch_operands = 0 : i64, tpu.core_type = #tpu.core_type<tc>, window_params = [{transform_indices = @transform_0, window_bounds = array<i64: 16, 64>}, {transform_indices = @transform_1, window_bounds = array<i64: 64, 64>}, {transform_indices = @transform_2, window_bounds = array<i64: 16, 64>}, {transform_indices = @transform_3, window_bounds = array<i64: 16, 64>}]} {
    %c0 = arith.constant 0 : index
    %c0_0 = arith.constant 0 : index
    %0 = vector.load %arg3[%c0, %c0_0] : memref<16x64xbf16, #tpu.memory_space<vmem>>, vector<16x64xbf16>
    %c0_1 = arith.constant 0 : index
    %c0_2 = arith.constant 0 : index
    %1 = vector.load %arg4[%c0_1, %c0_2] : memref<64x64xbf16, #tpu.memory_space<vmem>>, vector<64x64xbf16>
    %cst = arith.constant dense<0.000000e+00> : vector<16x64xf32>
    %2 = tpu.matmul %0, %1, %cst {dimension_numbers = #tpu.dot_dimension_numbers<[1], [0], [0], [1], [0, 0, 1, 1], [], []>} : vector<16x64xbf16>, vector<64x64xbf16>, vector<16x64xf32> -> vector<16x64xf32>
    %c0_3 = arith.constant 0 : index
    %c0_4 = arith.constant 0 : index
    %3 = vector.load %arg5[%c0_3, %c0_4] : memref<16x64xf32, #tpu.memory_space<vmem>>, vector<16x64xf32>
    %4 = arith.addf %2, %3 : vector<16x64xf32>
    %c0_5 = arith.constant 0 : index
    %c0_6 = arith.constant 0 : index
    %5 = vector.load %arg6[%c0_5, %c0_6] : memref<16x64xf32, #tpu.memory_space<vmem>>, vector<16x64xf32>
    tpu.vector_store %arg6[%c0_5, %c0_6], %4 {strides = array<i32>} : memref<16x64xf32, #tpu.memory_space<vmem>>, vector<16x64xf32>,
    return
  }
  func.func @transform_0(%arg0: i32, %arg1: i32, %arg2: i32) -> (i32, i32) {
    %c0_i32 = arith.constant 0 : i32
    return %arg0, %arg2 : i32, i32
  }
  func.func @transform_1(%arg0: i32, %arg1: i32, %arg2: i32) -> (i32, i32) {
    %c0_i32 = arith.constant 0 : i32
    return %arg2, %arg1 : i32, i32
  }
  func.func @transform_2(%arg0: i32, %arg1: i32, %arg2: i32) -> (i32, i32) {
    %c0_i32 = arith.constant 0 : i32
    return %arg0, %arg1 : i32, i32
  }
  func.func @transform_3(%arg0: i32, %arg1: i32, %arg2: i32) -> (i32, i32) {
    %c0_i32 = arith.constant 0 : i32
    return %arg0, %arg1 : i32, i32
  }
}

module attributes {stable_mosaic.version = 11 : i64} {
  func.func @_fused_linear_kernel(%arg0: i32, %arg1: i32, %arg2: i32, %arg3: memref<16x64xf32, #tpu.memory_space<vmem>>, %arg4: memref<1x64xf32, #tpu.memory_space<vmem>>, %arg5: memref<1x64xf32, #tpu.memory_space<vmem>>, %arg6: memref<64x256xbf16, #tpu.memory_space<vmem>>, %arg7: memref<16x256xbf16, #tpu.memory_space<vmem>>, %arg8: memref<16x64xbf16, #tpu.memory_space<vmem>>) attributes {dimension_semantics = [#tpu.dimension_semantics<parallel>, #tpu.dimension_semantics<arbitrary>, #tpu.dimension_semantics<arbitrary>], iteration_bounds = array<i64: 1, 1, 1>, scalar_prefetch = 0 : i64, scratch_operands = 1 : i64, tpu.core_type = #tpu.core_type<tc>, window_params = [{transform_indices = @transform_0, window_bounds = array<i64: 16, 64>}, {pipeline_mode = #tpu.pipeline_mode<synchronous>, transform_indices = @transform_1, window_bounds = array<i64: 1, 64>}, {pipeline_mode = #tpu.pipeline_mode<synchronous>, transform_indices = @transform_2, window_bounds = array<i64: 1, 64>}, {transform_indices = @transform_3, window_bounds = array<i64: 64, 256>}, {transform_indices = @transform_4, window_bounds = array<i64: 16, 256>}]} {
    %c0_i32 = arith.constant 0 : i32
    %0 = arith.cmpi eq, %arg1, %c0_i32 : i32
    %1 = arith.extui %0 : i1 to i32
    %c0_i32_0 = arith.constant 0 : i32
    %2 = arith.cmpi ne, %1, %c0_i32_0 : i32
    scf.if %2 {
      %c0_10 = arith.constant 0 : index
      %c0_11 = arith.constant 0 : index
      %21 = vector.load %arg3[%c0_10, %c0_11] : memref<16x64xf32, #tpu.memory_space<vmem>>, vector<16x64xf32>
      %cst_12 = arith.constant dense<0.000000e+00> : vector<16xf32>
      %22 = vector.multi_reduction <add>, %21, %cst_12 [1] : vector<16x64xf32> to vector<16xf32>
      %23 = vector.shape_cast %22 : vector<16xf32> to vector<16x1xf32>
      %cst_13 = arith.constant 6.400000e+01 : f32
      %24 = vector.broadcast %cst_13 : f32 to vector<16x1xf32>
      %25 = arith.divf %23, %24 : vector<16x1xf32>
      %26 = vector.broadcast %25 : vector<16x1xf32> to vector<16x64xf32>
      %27 = arith.subf %21, %26 : vector<16x64xf32>
      %28 = arith.mulf %27, %27 : vector<16x64xf32>
      %cst_14 = arith.constant dense<0.000000e+00> : vector<16xf32>
      %29 = vector.multi_reduction <add>, %28, %cst_14 [1] : vector<16x64xf32> to vector<16xf32>
      %30 = vector.shape_cast %29 : vector<16xf32> to vector<16x1xf32>
      %cst_15 = arith.constant 6.400000e+01 : f32
      %31 = vector.broadcast %cst_15 : f32 to vector<16x1xf32>
      %32 = arith.divf %30, %31 : vector<16x1xf32>
      %cst_16 = arith.constant 9.99999974E-6 : f32
      %33 = vector.broadcast %cst_16 : f32 to vector<16x1xf32>
      %34 = arith.addf %32, %33 : vector<16x1xf32>
      %35 = math.rsqrt %34 : vector<16x1xf32>
      %36 = vector.broadcast %35 : vector<16x1xf32> to vector<16x64xf32>
      %37 = arith.mulf %27, %36 : vector<16x64xf32>
      %c0_17 = arith.constant 0 : index
      %c0_18 = arith.constant 0 : index
      %38 = vector.load %arg4[%c0_17, %c0_18] : memref<1x64xf32, #tpu.memory_space<vmem>>, vector<1x64xf32>
      %39 = vector.broadcast %38 : vector<1x64xf32> to vector<16x64xf32>
      %40 = arith.mulf %37, %39 : vector<16x64xf32>
      %c0_19 = arith.constant 0 : index
      %c0_20 = arith.constant 0 : index
      %41 = vector.load %arg5[%c0_19, %c0_20] : memref<1x64xf32, #tpu.memory_space<vmem>>, vector<1x64xf32>
      %42 = vector.broadcast %41 : vector<1x64xf32> to vector<16x64xf32>
      %43 = arith.addf %40, %42 : vector<16x64xf32>
      %44 = arith.truncf %43 : vector<16x64xf32> to vector<16x64xbf16>
      %c0_21 = arith.constant 0 : index
      %c0_22 = arith.constant 0 : index
      %45 = vector.load %arg8[%c0_21, %c0_22] : memref<16x64xbf16, #tpu.memory_space<vmem>>, vector<16x64xbf16>
      tpu.vector_store %arg8[%c0_21, %c0_22], %44 {strides = array<i32>} : memref<16x64xbf16, #tpu.memory_space<vmem>>, vector<16x64xbf16>,
    } else {
    }
    %c0 = arith.constant 0 : index
    %c0_1 = arith.constant 0 : index
    %3 = vector.load %arg8[%c0, %c0_1] : memref<16x64xbf16, #tpu.memory_space<vmem>>, vector<16x64xbf16>
    %c0_2 = arith.constant 0 : index
    %c0_3 = arith.constant 0 : index
    %4 = vector.load %arg6[%c0_2, %c0_3] : memref<64x256xbf16, #tpu.memory_space<vmem>>, vector<64x256xbf16>
    %cst = arith.constant dense<0.000000e+00> : vector<16x256xf32>
    %5 = tpu.matmul %3, %4, %cst {dimension_numbers = #tpu.dot_dimension_numbers<[1], [0], [0], [1], [0, 0, 1, 1], [], []>} : vector<16x64xbf16>, vector<64x256xbf16>, vector<16x256xf32> -> vector<16x256xf32>
    %cst_4 = arith.constant 5.000000e-01 : f32
    %6 = vector.broadcast %cst_4 : f32 to vector<16x256xf32>
    %7 = arith.mulf %6, %5 : vector<16x256xf32>
    %cst_5 = arith.constant 4.471500e-02 : f32
    %8 = vector.broadcast %cst_5 : f32 to vector<16x256xf32>
    %9 = arith.mulf %8, %5 : vector<16x256xf32>
    %10 = arith.mulf %9, %5 : vector<16x256xf32>
    %11 = arith.mulf %10, %5 : vector<16x256xf32>
    %12 = arith.addf %5, %11 : vector<16x256xf32>
    %cst_6 = arith.constant 0.797884583 : f32
    %13 = vector.broadcast %cst_6 : f32 to vector<16x256xf32>
    %14 = arith.mulf %13, %12 : vector<16x256xf32>
    %15 = math.tanh %14 : vector<16x256xf32>
    %cst_7 = arith.constant 1.000000e+00 : f32
    %16 = vector.broadcast %cst_7 : f32 to vector<16x256xf32>
    %17 = arith.addf %16, %15 : vector<16x256xf32>
    %18 = arith.mulf %7, %17 : vector<16x256xf32>
    %19 = arith.truncf %18 : vector<16x256xf32> to vector<16x256xbf16>
    %c0_8 = arith.constant 0 : index
    %c0_9 = arith.constant 0 : index
    %20 = vector.load %arg7[%c0_8, %c0_9] : memref<16x256xbf16, #tpu.memory_space<vmem>>, vector<16x256xbf16>
    tpu.vector_store %arg7[%c0_8, %c0_9], %19 {strides = array<i32>} : memref<16x256xbf16, #tpu.memory_space<vmem>>, vector<16x256xbf16>,
    return
  }
  func.func @transform_0(%arg0: i32, %arg1: i32, %arg2: i32) -> (i32, i32) {
    %c0_i32 = arith.constant 0 : i32
    return %arg0, %arg2 : i32, i32
  }
  func.func @transform_1(%arg0: i32, %arg1: i32, %arg2: i32) -> (i32, i32) {
    %c0_i32 = arith.constant 0 : i32
    %c0_i32_0 = arith.constant 0 : i32
    %c0_i32_1 = arith.constant 0 : i32
    return %c0_i32, %c0_i32_0 : i32, i32
  }
  func.func @transform_2(%arg0: i32, %arg1: i32, %arg2: i32) -> (i32, i32) {
    %c0_i32 = arith.constant 0 : i32
    %c0_i32_0 = arith.constant 0 : i32
    %c0_i32_1 = arith.constant 0 : i32
    return %c0_i32, %c0_i32_0 : i32, i32
  }
  func.func @transform_3(%arg0: i32, %arg1: i32, %arg2: i32) -> (i32, i32) {
    %c0_i32 = arith.constant 0 : i32
    return %arg2, %arg1 : i32, i32
  }
  func.func @transform_4(%arg0: i32, %arg1: i32, %arg2: i32) -> (i32, i32) {
    %c0_i32 = arith.constant 0 : i32
    return %arg0, %arg1 : i32, i32
  }
}

module attributes {stable_mosaic.version = 11 : i64} {
  func.func @_fused_linear_kernel(%arg0: i32, %arg1: i32, %arg2: i32, %arg3: memref<16x256xbf16, #tpu.memory_space<vmem>>, %arg4: memref<256x64xbf16, #tpu.memory_space<vmem>>, %arg5: memref<16x64xf32, #tpu.memory_space<vmem>>, %arg6: memref<16x64xf32, #tpu.memory_space<vmem>>) attributes {dimension_semantics = [#tpu.dimension_semantics<parallel>, #tpu.dimension_semantics<arbitrary>, #tpu.dimension_semantics<arbitrary>], iteration_bounds = array<i64: 1, 1, 1>, scalar_prefetch = 0 : i64, scratch_operands = 0 : i64, tpu.core_type = #tpu.core_type<tc>, window_params = [{transform_indices = @transform_0, window_bounds = array<i64: 16, 256>}, {transform_indices = @transform_1, window_bounds = array<i64: 256, 64>}, {transform_indices = @transform_2, window_bounds = array<i64: 16, 64>}, {transform_indices = @transform_3, window_bounds = array<i64: 16, 64>}]} {
    %c0 = arith.constant 0 : index
    %c0_0 = arith.constant 0 : index
    %0 = vector.load %arg3[%c0, %c0_0] : memref<16x256xbf16, #tpu.memory_space<vmem>>, vector<16x256xbf16>
    %c0_1 = arith.constant 0 : index
    %c0_2 = arith.constant 0 : index
    %1 = vector.load %arg4[%c0_1, %c0_2] : memref<256x64xbf16, #tpu.memory_space<vmem>>, vector<256x64xbf16>
    %cst = arith.constant dense<0.000000e+00> : vector<16x64xf32>
    %2 = tpu.matmul %0, %1, %cst {dimension_numbers = #tpu.dot_dimension_numbers<[1], [0], [0], [1], [0, 0, 1, 1], [], []>} : vector<16x256xbf16>, vector<256x64xbf16>, vector<16x64xf32> -> vector<16x64xf32>
    %c0_3 = arith.constant 0 : index
    %c0_4 = arith.constant 0 : index
    %3 = vector.load %arg5[%c0_3, %c0_4] : memref<16x64xf32, #tpu.memory_space<vmem>>, vector<16x64xf32>
    %4 = arith.addf %2, %3 : vector<16x64xf32>
    %c0_5 = arith.constant 0 : index
    %c0_6 = arith.constant 0 : index
    %5 = vector.load %arg6[%c0_5, %c0_6] : memref<16x64xf32, #tpu.memory_space<vmem>>, vector<16x64xf32>
    tpu.vector_store %arg6[%c0_5, %c0_6], %4 {strides = array<i32>} : memref<16x64xf32, #tpu.memory_space<vmem>>, vector<16x64xf32>,
    return
  }
  func.func @transform_0(%arg0: i32, %arg1: i32, %arg2: i32) -> (i32, i32) {
    %c0_i32 = arith.constant 0 : i32
    return %arg0, %arg2 : i32, i32
  }
  func.func @transform_1(%arg0: i32, %arg1: i32, %arg2: i32) -> (i32, i32) {
    %c0_i32 = arith.constant 0 : i32
    return %arg2, %arg1 : i32, i32
  }
  func.func @transform_2(%arg0: i32, %arg1: i32, %arg2: i32) -> (i32, i32) {
    %c0_i32 = arith.constant 0 : i32
    return %arg0, %arg1 : i32, i32
  }
  func.func @transform_3(%arg0: i32, %arg1: i32, %arg2: i32) -> (i32, i32) {
    %c0_i32 = arith.constant 0 : i32
    return %arg0, %arg1 : i32, i32
  }
}

module attributes {stable_mosaic.version = 11 : i64} {
  func.func @_fused_linear_kernel(%arg0: i32, %arg1: i32, %arg2: i32, %arg3: memref<16x64xf32, #tpu.memory_space<vmem>>, %arg4: memref<1x64xf32, #tpu.memory_space<vmem>>, %arg5: memref<1x64xf32, #tpu.memory_space<vmem>>, %arg6: memref<64x32xbf16, #tpu.memory_space<vmem>>, %arg7: memref<1x32xf32, #tpu.memory_space<vmem>>, %arg8: memref<16x32xf32, #tpu.memory_space<vmem>>, %arg9: memref<16x64xbf16, #tpu.memory_space<vmem>>) attributes {dimension_semantics = [#tpu.dimension_semantics<parallel>, #tpu.dimension_semantics<arbitrary>, #tpu.dimension_semantics<arbitrary>], iteration_bounds = array<i64: 1, 1, 1>, scalar_prefetch = 0 : i64, scratch_operands = 1 : i64, tpu.core_type = #tpu.core_type<tc>, window_params = [{transform_indices = @transform_0, window_bounds = array<i64: 16, 64>}, {pipeline_mode = #tpu.pipeline_mode<synchronous>, transform_indices = @transform_1, window_bounds = array<i64: 1, 64>}, {pipeline_mode = #tpu.pipeline_mode<synchronous>, transform_indices = @transform_2, window_bounds = array<i64: 1, 64>}, {transform_indices = @transform_3, window_bounds = array<i64: 64, 32>}, {transform_indices = @transform_4, window_bounds = array<i64: 1, 32>}, {transform_indices = @transform_5, window_bounds = array<i64: 16, 32>}]} {
    %c0_i32 = arith.constant 0 : i32
    %0 = arith.cmpi eq, %arg1, %c0_i32 : i32
    %1 = arith.extui %0 : i1 to i32
    %c0_i32_0 = arith.constant 0 : i32
    %2 = arith.cmpi ne, %1, %c0_i32_0 : i32
    scf.if %2 {
      %c0_8 = arith.constant 0 : index
      %c0_9 = arith.constant 0 : index
      %10 = vector.load %arg3[%c0_8, %c0_9] : memref<16x64xf32, #tpu.memory_space<vmem>>, vector<16x64xf32>
      %cst_10 = arith.constant dense<0.000000e+00> : vector<16xf32>
      %11 = vector.multi_reduction <add>, %10, %cst_10 [1] : vector<16x64xf32> to vector<16xf32>
      %12 = vector.shape_cast %11 : vector<16xf32> to vector<16x1xf32>
      %cst_11 = arith.constant 6.400000e+01 : f32
      %13 = vector.broadcast %cst_11 : f32 to vector<16x1xf32>
      %14 = arith.divf %12, %13 : vector<16x1xf32>
      %15 = vector.broadcast %14 : vector<16x1xf32> to vector<16x64xf32>
      %16 = arith.subf %10, %15 : vector<16x64xf32>
      %17 = arith.mulf %16, %16 : vector<16x64xf32>
      %cst_12 = arith.constant dense<0.000000e+00> : vector<16xf32>
      %18 = vector.multi_reduction <add>, %17, %cst_12 [1] : vector<16x64xf32> to vector<16xf32>
      %19 = vector.shape_cast %18 : vector<16xf32> to vector<16x1xf32>
      %cst_13 = arith.constant 6.400000e+01 : f32
      %20 = vector.broadcast %cst_13 : f32 to vector<16x1xf32>
      %21 = arith.divf %19, %20 : vector<16x1xf32>
      %cst_14 = arith.constant 9.99999974E-6 : f32
      %22 = vector.broadcast %cst_14 : f32 to vector<16x1xf32>
      %23 = arith.addf %21, %22 : vector<16x1xf32>
      %24 = math.rsqrt %23 : vector<16x1xf32>
      %25 = vector.broadcast %24 : vector<16x1xf32> to vector<16x64xf32>
      %26 = arith.mulf %16, %25 : vector<16x64xf32>
      %c0_15 = arith.constant 0 : index
      %c0_16 = arith.constant 0 : index
      %27 = vector.load %arg4[%c0_15, %c0_16] : memref<1x64xf32, #tpu.memory_space<vmem>>, vector<1x64xf32>
      %28 = vector.broadcast %27 : vector<1x64xf32> to vector<16x64xf32>
      %29 = arith.mulf %26, %28 : vector<16x64xf32>
      %c0_17 = arith.constant 0 : index
      %c0_18 = arith.constant 0 : index
      %30 = vector.load %arg5[%c0_17, %c0_18] : memref<1x64xf32, #tpu.memory_space<vmem>>, vector<1x64xf32>
      %31 = vector.broadcast %30 : vector<1x64xf32> to vector<16x64xf32>
      %32 = arith.addf %29, %31 : vector<16x64xf32>
      %33 = arith.truncf %32 : vector<16x64xf32> to vector<16x64xbf16>
      %c0_19 = arith.constant 0 : index
      %c0_20 = arith.constant 0 : index
      %34 = vector.load %arg9[%c0_19, %c0_20] : memref<16x64xbf16, #tpu.memory_space<vmem>>, vector<16x64xbf16>
      tpu.vector_store %arg9[%c0_19, %c0_20], %33 {strides = array<i32>} : memref<16x64xbf16, #tpu.memory_space<vmem>>, vector<16x64xbf16>,
    } else {
    }
    %c0 = arith.constant 0 : index
    %c0_1 = arith.constant 0 : index
    %3 = vector.load %arg9[%c0, %c0_1] : memref<16x64xbf16, #tpu.memory_space<vmem>>, vector<16x64xbf16>
    %c0_2 = arith.constant 0 : index
    %c0_3 = arith.constant 0 : index
    %4 = vector.load %arg6[%c0_2, %c0_3] : memref<64x32xbf16, #tpu.memory_space<vmem>>, vector<64x32xbf16>
    %cst = arith.constant dense<0.000000e+00> : vector<16x32xf32>
    %5 = tpu.matmul %3, %4, %cst {dimension_numbers = #tpu.dot_dimension_numbers<[1], [0], [0], [1], [0, 0, 1, 1], [], []>} : vector<16x64xbf16>, vector<64x32xbf16>, vector<16x32xf32> -> vector<16x32xf32>
    %c0_4 = arith.constant 0 : index
    %c0_5 = arith.constant 0 : index
    %6 = vector.load %arg7[%c0_4, %c0_5] : memref<1x32xf32, #tpu.memory_space<vmem>>, vector<1x32xf32>
    %7 = vector.broadcast %6 : vector<1x32xf32> to vector<16x32xf32>
    %8 = arith.addf %5, %7 : vector<16x32xf32>
    %c0_6 = arith.constant 0 : index
    %c0_7 = arith.constant 0 : index
    %9 = vector.load %arg8[%c0_6, %c0_7] : memref<16x32xf32, #tpu.memory_space<vmem>>, vector<16x32xf32>
    tpu.vector_store %arg8[%c0_6, %c0_7], %8 {strides = array<i32>} : memref<16x32xf32, #tpu.memory_space<vmem>>, vector<16x32xf32>,
    return
  }
  func.func @transform_0(%arg0: i32, %arg1: i32, %arg2: i32) -> (i32, i32) {
    %c0_i32 = arith.constant 0 : i32
    return %arg0, %arg2 : i32, i32
  }
  func.func @transform_1(%arg0: i32, %arg1: i32, %arg2: i32) -> (i32, i32) {
    %c0_i32 = arith.constant 0 : i32
    %c0_i32_0 = arith.constant 0 : i32
    %c0_i32_1 = arith.constant 0 : i32
    return %c0_i32, %c0_i32_0 : i32, i32
  }
  func.func @transform_2(%arg0: i32, %arg1: i32, %arg2: i32) -> (i32, i32) {
    %c0_i32 = arith.constant 0 : i32
    %c0_i32_0 = arith.constant 0 : i32
    %c0_i32_1 = arith.constant 0 : i32
    return %c0_i32, %c0_i32_0 : i32, i32
  }
  func.func @transform_3(%arg0: i32, %arg1: i32, %arg2: i32) -> (i32, i32) {
    %c0_i32 = arith.constant 0 : i32
    return %arg2, %arg1 : i32, i32
  }
  func.func @transform_4(%arg0: i32, %arg1: i32, %arg2: i32) -> (i32, i32) {
    %c0_i32 = arith.constant 0 : i32
    %c0_i32_0 = arith.constant 0 : i32
    return %c0_i32, %arg1 : i32, i32
  }
  func.func @transform_5(%arg0: i32, %arg1: i32, %arg2: i32) -> (i32, i32) {
    %c0_i32 = arith.constant 0 : i32
    return %arg0, %arg1 : i32, i32
  }
}

module attributes {stable_mosaic.version = 11 : i64} {
  func.func @_fused_linear_kernel(%arg0: i32, %arg1: i32, %arg2: i32, %arg3: memref<8x32xf32, #tpu.memory_space<vmem>>, %arg4: memref<32x64xbf16, #tpu.memory_space<vmem>>, %arg5: memref<1x64xf32, #tpu.memory_space<vmem>>, %arg6: memref<8x64xf32, #tpu.memory_space<vmem>>) attributes {dimension_semantics = [#tpu.dimension_semantics<parallel>, #tpu.dimension_semantics<arbitrary>, #tpu.dimension_semantics<arbitrary>], iteration_bounds = array<i64: 1, 1, 1>, scalar_prefetch = 0 : i64, scratch_operands = 0 : i64, tpu.core_type = #tpu.core_type<tc>, window_params = [{transform_indices = @transform_0, window_bounds = array<i64: 8, 32>}, {transform_indices = @transform_1, window_bounds = array<i64: 32, 64>}, {transform_indices = @transform_2, window_bounds = array<i64: 1, 64>}, {transform_indices = @transform_3, window_bounds = array<i64: 8, 64>}]} {
    %c0 = arith.constant 0 : index
    %c0_0 = arith.constant 0 : index
    %0 = vector.load %arg3[%c0, %c0_0] : memref<8x32xf32, #tpu.memory_space<vmem>>, vector<8x32xf32>
    %1 = arith.truncf %0 : vector<8x32xf32> to vector<8x32xbf16>
    %c0_1 = arith.constant 0 : index
    %c0_2 = arith.constant 0 : index
    %2 = vector.load %arg4[%c0_1, %c0_2] : memref<32x64xbf16, #tpu.memory_space<vmem>>, vector<32x64xbf16>
    %cst = arith.constant dense<0.000000e+00> : vector<8x64xf32>
    %3 = tpu.matmul %1, %2, %cst {dimension_numbers = #tpu.dot_dimension_numbers<[1], [0], [0], [1], [0, 0, 1, 1], [], []>} : vector<8x32xbf16>, vector<32x64xbf16>, vector<8x64xf32> -> vector<8x64xf32>
    %c0_3 = arith.constant 0 : index
    %c0_4 = arith.constant 0 : index
    %4 = vector.load %arg5[%c0_3, %c0_4] : memref<1x64xf32, #tpu.memory_space<vmem>>, vector<1x64xf32>
    %5 = vector.broadcast %4 : vector<1x64xf32> to vector<8x64xf32>
    %6 = arith.addf %3, %5 : vector<8x64xf32>
    %7 = arith.negf %6 : vector<8x64xf32>
    %8 = math.exp %7 : vector<8x64xf32>
    %cst_5 = arith.constant 1.000000e+00 : f32
    %9 = vector.broadcast %cst_5 : f32 to vector<8x64xf32>
    %10 = arith.addf %9, %8 : vector<8x64xf32>
    %11 = arith.divf %9, %10 : vector<8x64xf32>
    %12 = arith.mulf %6, %11 : vector<8x64xf32>
    %c0_6 = arith.constant 0 : index
    %c0_7 = arith.constant 0 : index
    %13 = vector.load %arg6[%c0_6, %c0_7] : memref<8x64xf32, #tpu.memory_space<vmem>>, vector<8x64xf32>
    tpu.vector_store %arg6[%c0_6, %c0_7], %12 {strides = array<i32>} : memref<8x64xf32, #tpu.memory_space<vmem>>, vector<8x64xf32>,
    return
  }
  func.func @transform_0(%arg0: i32, %arg1: i32, %arg2: i32) -> (i32, i32) {
    %c0_i32 = arith.constant 0 : i32
    return %arg0, %arg2 : i32, i32
  }
  func.func @transform_1(%arg0: i32, %arg1: i32, %arg2: i32) -> (i32, i32) {
    %c0_i32 = arith.constant 0 : i32
    return %arg2, %arg1 : i32, i32
  }
  func.func @transform_2(%arg0: i32, %arg1: i32, %arg2: i32) -> (i32, i32) {
    %c0_i32 = arith.constant 0 : i32
    %c0_i32_0 = arith.constant 0 : i32
    return %c0_i32, %arg1 : i32, i32
  }
  func.func @transform_3(%arg0: i32, %arg1: i32, %arg2: i32) -> (i32, i32) {
    %c0_i32 = arith.constant 0 : i32
    return %arg0, %arg1 : i32, i32
  }
}

module attributes {stable_mosaic.version = 11 : i64} {
  func.func @_fused_linear_kernel(%arg0: i32, %arg1: i32, %arg2: i32, %arg3: memref<8x64xf32, #tpu.memory_space<vmem>>, %arg4: memref<64x64xbf16, #tpu.memory_space<vmem>>, %arg5: memref<1x64xf32, #tpu.memory_space<vmem>>, %arg6: memref<8x64xf32, #tpu.memory_space<vmem>>) attributes {dimension_semantics = [#tpu.dimension_semantics<parallel>, #tpu.dimension_semantics<arbitrary>, #tpu.dimension_semantics<arbitrary>], iteration_bounds = array<i64: 1, 1, 1>, scalar_prefetch = 0 : i64, scratch_operands = 0 : i64, tpu.core_type = #tpu.core_type<tc>, window_params = [{transform_indices = @transform_0, window_bounds = array<i64: 8, 64>}, {transform_indices = @transform_1, window_bounds = array<i64: 64, 64>}, {transform_indices = @transform_2, window_bounds = array<i64: 1, 64>}, {transform_indices = @transform_3, window_bounds = array<i64: 8, 64>}]} {
    %c0 = arith.constant 0 : index
    %c0_0 = arith.constant 0 : index
    %0 = vector.load %arg3[%c0, %c0_0] : memref<8x64xf32, #tpu.memory_space<vmem>>, vector<8x64xf32>
    %1 = arith.truncf %0 : vector<8x64xf32> to vector<8x64xbf16>
    %c0_1 = arith.constant 0 : index
    %c0_2 = arith.constant 0 : index
    %2 = vector.load %arg4[%c0_1, %c0_2] : memref<64x64xbf16, #tpu.memory_space<vmem>>, vector<64x64xbf16>
    %cst = arith.constant dense<0.000000e+00> : vector<8x64xf32>
    %3 = tpu.matmul %1, %2, %cst {dimension_numbers = #tpu.dot_dimension_numbers<[1], [0], [0], [1], [0, 0, 1, 1], [], []>} : vector<8x64xbf16>, vector<64x64xbf16>, vector<8x64xf32> -> vector<8x64xf32>
    %c0_3 = arith.constant 0 : index
    %c0_4 = arith.constant 0 : index
    %4 = vector.load %arg5[%c0_3, %c0_4] : memref<1x64xf32, #tpu.memory_space<vmem>>, vector<1x64xf32>
    %5 = vector.broadcast %4 : vector<1x64xf32> to vector<8x64xf32>
    %6 = arith.addf %3, %5 : vector<8x64xf32>
    %c0_5 = arith.constant 0 : index
    %c0_6 = arith.constant 0 : index
    %7 = vector.load %arg6[%c0_5, %c0_6] : memref<8x64xf32, #tpu.memory_space<vmem>>, vector<8x64xf32>
    tpu.vector_store %arg6[%c0_5, %c0_6], %6 {strides = array<i32>} : memref<8x64xf32, #tpu.memory_space<vmem>>, vector<8x64xf32>,
    return
  }
  func.func @transform_0(%arg0: i32, %arg1: i32, %arg2: i32) -> (i32, i32) {
    %c0_i32 = arith.constant 0 : i32
    return %arg0, %arg2 : i32, i32
  }
  func.func @transform_1(%arg0: i32, %arg1: i32, %arg2: i32) -> (i32, i32) {
    %c0_i32 = arith.constant 0 : i32
    return %arg2, %arg1 : i32, i32
  }
  func.func @transform_2(%arg0: i32, %arg1: i32, %arg2: i32) -> (i32, i32) {
    %c0_i32 = arith.constant 0 : i32
    %c0_i32_0 = arith.constant 0 : i32
    return %c0_i32, %arg1 : i32, i32
  }
  func.func @transform_3(%arg0: i32, %arg1: i32, %arg2: i32) -> (i32, i32) {
    %c0_i32 = arith.constant 0 : i32
    return %arg0, %arg1 : i32, i32
  }
}

</mosaic_0001>

<llo_original>
// kernel: cross_layer_cross_scale_projector.65
$region0: #{cross_layer_cross_scale_projector.65}
  #allocation0 [shape = 'u32[]', space=smem, size = 0x4, offset = 0x4, fixed_abs, tag = 'smem constant byte address 0x4 - core index']
  #allocation1 [shape = 'u32[72,128]{1,0:T(1,128)}', space=vmem, size = 0x9000, scoped, tag = 'internal scratch']
  %s0 = inlined_call_operand.vmem [shape: bf16[32,64], index: 0, kind: input, shape index: {}]
  %s1 = inlined_call_operand.hbm [shape: bf16[64,64], index: 1, kind: input, shape index: {}]
  %s2 = inlined_call_operand.vmem [shape: f32[1,64], index: 2, kind: input, shape index: {}]
  %s3 = inlined_call_operand.hbm [shape: f32[32,64], index: 3, kind: input, shape index: {}]
  %s4 = inlined_call_operand.vmem [shape: f32[32,64], index: 4, kind: output, shape index: {}]
  %s5 = sld [smem:[#allocation0]]
  $region34: #{cross_layer_cross_scale_projector.65} parent=0
    _
  %s7 = ssub.s32 1, %s5
  %s8 = scalar_select 0, %s7, %s5
  $region1: #{cross_layer_cross_scale_projector.65} parent=0
    #allocation2 [shape = 'u8[16384]{0}', space=vmem, size = 0x4000, scoped, tag = 'input window, operand 1, single buffered']
    #allocation3 [shape = 's32[1]{0}', space=sflag, size = 0x4, scoped, tag = 'scoped memory for cross_layer_cross_scale_projector.65']
    #allocation4 [shape = 'u8[16384]{0}', space=vmem, size = 0x4000, scoped, tag = 'input window, operand 3, single buffered']
    #allocation5 [shape = 's32[1]{0}', space=sflag, size = 0x4, scoped, tag = 'scoped memory for cross_layer_cross_scale_projector.65']
    %9 = vsyncpa [#allocation3], 0
    %10 = vsyncpa [#allocation5], 0
    // Predicated region
    $region2: #{cross_layer_cross_scale_projector.65} parent=1 // pred_check
      _
    $region3: #{cross_layer_cross_scale_projector.65} parent=1 // pred_check_branch
      %12 = sbr.rel (0) target = $region5
    $region4: #{cross_layer_cross_scale_projector.65} parent=1 // pred_region
      _
    $region5: #{cross_layer_cross_scale_projector.65} parent=1 // pred_fallthru
      _
    // Predicated region
    $region6: #{cross_layer_cross_scale_projector.65} parent=1 // pred_check
      _
    $region7: #{cross_layer_cross_scale_projector.65} parent=1 // pred_check_branch
      %14 = sbr.rel (0) target = $region9
    $region8: #{cross_layer_cross_scale_projector.65} parent=1 // pred_region
      %16 = vsyncadd [#allocation3], 0
      %s17 = sshll.u32 %s1, 4
      %s18 = int_to_ptr.hbm [resolvable:$true] %s17
      %s19 = sshll.u32 [#allocation2], 4
      %s20 = int_to_ptr.vmem [resolvable:$true] %s19
      %25 = dma.hbm_to_vmem [thread:$0]  %s18, 512, %s20, [#allocation3], 64, 64, 4
    $region9: #{cross_layer_cross_scale_projector.65} parent=1 // pred_fallthru
      _
    // Predicated region
    $region10: #{cross_layer_cross_scale_projector.65} parent=1 // pred_check
      _
    $region11: #{cross_layer_cross_scale_projector.65} parent=1 // pred_check_branch
      %27 = sbr.rel (0) target = $region13
    $region12: #{cross_layer_cross_scale_projector.65} parent=1 // pred_region
      _
    $region13: #{cross_layer_cross_scale_projector.65} parent=1 // pred_fallthru
      _
    // Predicated region
    $region14: #{cross_layer_cross_scale_projector.65} parent=1 // pred_check
      _
    $region15: #{cross_layer_cross_scale_projector.65} parent=1 // pred_check_branch
      %29 = sbr.rel (0) target = $region17
    $region16: #{cross_layer_cross_scale_projector.65} parent=1 // pred_region
      %31 = vsyncadd [#allocation5], 0
      %s32 = sshll.u32 %s3, 4
      %s33 = int_to_ptr.hbm [resolvable:$true] %s32
      %s34 = sshll.u32 [#allocation4], 4
      %s35 = int_to_ptr.vmem [resolvable:$true] %s34
      %40 = dma.hbm_to_vmem [thread:$0]  %s33, 512, %s35, [#allocation5], 128, 128, 8
    $region17: #{cross_layer_cross_scale_projector.65} parent=1 // pred_fallthru
      _
    // Predicated region
    $region18: #{cross_layer_cross_scale_projector.65} parent=1 // pred_check
      _
    $region19: #{cross_layer_cross_scale_projector.65} parent=1 // pred_check_branch
      %42 = sbr.rel (0) target = $region21
    $region20: #{cross_layer_cross_scale_projector.65} parent=1 // pred_region
      %44 = dma.done [#allocation3], 512
    $region21: #{cross_layer_cross_scale_projector.65} parent=1 // pred_fallthru
      _
    // Predicated region
    $region22: #{cross_layer_cross_scale_projector.65} parent=1 // pred_check
      _
    $region23: #{cross_layer_cross_scale_projector.65} parent=1 // pred_check_branch
      %46 = sbr.rel (0) target = $region25
    $region24: #{cross_layer_cross_scale_projector.65} parent=1 // pred_region
      %48 = dma.done [#allocation5], 512
    $region25: #{cross_layer_cross_scale_projector.65} parent=1 // pred_fallthru
      _
    %v50 = vld [vmem:[%s0] sm:$0xf]
    %v51 = vld [vmem:[%s0 + $0x4] sm:$0xf]
    %v52 = vld [vmem:[%s0 + $0x8] sm:$0xf]
    %v53 = vld [vmem:[%s0 + $0xc] sm:$0xf]
    %v54 = vld [vmem:[#allocation2] sm:$0xf]
    %v55 = vld [vmem:[#allocation2 + $0x4] sm:$0xf]
    %v56 = vld [vmem:[#allocation2 + $0x8] sm:$0xf]
    %v57 = vld [vmem:[#allocation2 + $0xc] sm:$0xf]
    %v58 = vld [vmem:[#allocation2 + $0x10] sm:$0xf]
    %v59 = vld [vmem:[#allocation2 + $0x14] sm:$0xf]
    %v60 = vld [vmem:[#allocation2 + $0x18] sm:$0xf]
    %v61 = vld [vmem:[#allocation2 + $0x1c] sm:$0xf]
    %v62 = vld [vmem:[%s2] sm:$0x1]
    %v64 = vperm.slane %v62, 0
    %v70 = vunpack.c.l.b16 %v50
    %v71 = vunpack.c.l.b16 %v51
    %v72 = vunpack.c.l.b16 %v52
    %v73 = vunpack.c.l.b16 %v53
    %v74 = vpack.c.b16 %v71, %v70
    %v75 = vpack.c.b16 %v73, %v72
    %v84 = vunpack.c.l.b16 %v54
    %v85 = vunpack.c.l.b16 %v55
    %v86 = vunpack.c.l.b16 %v56
    %v87 = vunpack.c.l.b16 %v57
    %v88 = vunpack.c.l.b16 %v58
    %v89 = vunpack.c.l.b16 %v59
    %v90 = vunpack.c.l.b16 %v60
    %v91 = vunpack.c.l.b16 %v61
    %v92 = vpack.c.b16 %v85, %v84
    %v93 = vpack.c.b16 %v87, %v86
    %v94 = vpack.c.b16 %v89, %v88
    %v95 = vpack.c.b16 %v91, %v90
    %vm100 = vcmask 523264
    %v102 = vsel %vm100, %v74, 0
    %v105 = vsel %vm100, %v75, 0
    %107 = vmatpush.bf16.msra.mxu0 0
    %108 = vmatpush.bf16.msra.mxu0 0
    %109 = vmatpush.bf16.msra.mxu0 0
    %110 = vmatpush.bf16.msra.mxu0 0
    %111 = vmatpush.bf16.msra.mxu0 %v95
    %112 = vmatpush.bf16.msra.mxu0 %v94
    %113 = vmatpush.bf16.msra.mxu0 %v93
    %114 = vmatpush.bf16.msra.mxu0 %v92
    %115 = vmatmul.bf16.gmra.mxu0 %v102
    %v116 = vpop.f32.mrf.mxu0
    %v117 = vadd.f32 %v64, %v116
    %v118 = vpop.f32.mrf.mxu0
    %v119 = vadd.f32 %v64, %v118
    %120 = vmatmul.bf16.gmra.mxu0 %v105
    %v121 = vpop.f32.mrf.mxu0
    %v122 = vadd.f32 %v64, %v121
    %v123 = vpop.f32.mrf.mxu0
    %v124 = vadd.f32 %v64, %v123
    %125 = vdwg.mxu0
    %v126 = vld [vmem:[#allocation4] sm:$0xff]
    %v127 = vld [vmem:[#allocation4 + $0x8] sm:$0xff]
    %v128 = vld [vmem:[#allocation4 + $0x10] sm:$0xff]
    %v129 = vld [vmem:[#allocation4 + $0x18] sm:$0xff]
    %v130 = vadd.f32 %v117, %v126
    %v131 = vadd.f32 %v119, %v127
    %v132 = vadd.f32 %v122, %v128
    %v133 = vadd.f32 %v124, %v129
    %134 = vst.msk [vmem:[%s4] sm:$0xff] %vm100, %v130
    %135 = vst.msk [vmem:[%s4 + $0x8] sm:$0xff] %vm100, %v131
    %136 = vst.msk [vmem:[%s4 + $0x10] sm:$0xff] %vm100, %v132
    %137 = vst.msk [vmem:[%s4 + $0x18] sm:$0xff] %vm100, %v133
    // Predicated region
    $region26: #{cross_layer_cross_scale_projector.65} parent=1 // pred_check
      _
    $region27: #{cross_layer_cross_scale_projector.65} parent=1 // pred_check_branch
      %139 = sbr.rel (0) target = $region29
    $region28: #{cross_layer_cross_scale_projector.65} parent=1 // pred_region
      _
    $region29: #{cross_layer_cross_scale_projector.65} parent=1 // pred_fallthru
      _
    // Predicated region
    $region30: #{cross_layer_cross_scale_projector.65} parent=1 // pred_check
      _
    $region31: #{cross_layer_cross_scale_projector.65} parent=1 // pred_check_branch
      %141 = sbr.rel (0) target = $region33
    $region32: #{cross_layer_cross_scale_projector.65} parent=1 // pred_region
      _
    $region33: #{cross_layer_cross_scale_projector.65} parent=1 // pred_fallthru
      _
    %142 = vsyncpa [#allocation3], 1
    %143 = vsyncpa [#allocation5], 1

// kernel: cross_layer_cross_scale_projector.63
$region0: #{cross_layer_cross_scale_projector.63}
  #allocation0 [shape = 'u32[]', space=smem, size = 0x4, offset = 0x4, fixed_abs, tag = 'smem constant byte address 0x4 - core index']
  #allocation1 [shape = 'u32[72,128]{1,0:T(1,128)}', space=vmem, size = 0x9000, scoped, tag = 'internal scratch']
  #allocation2 [shape = 'bf16[64,64]{1,0:T(8,128)(2,1)}', space=vmem, size = 0x4000, scoped, tag = 'scratch operand']
  %s0 = inlined_call_operand.vmem [shape: f32[64,64], index: 0, kind: input, shape index: {}]
  %s1 = inlined_call_operand.vmem [shape: f32[1,64], index: 1, kind: input, shape index: {}]
  %s2 = inlined_call_operand.vmem [shape: f32[1,64], index: 2, kind: input, shape index: {}]
  %s3 = inlined_call_operand.hbm [shape: bf16[64,128], index: 3, kind: input, shape index: {}]
  %s4 = inlined_call_operand.vmem [shape: f32[1,128], index: 4, kind: input, shape index: {}]
  %s5 = inlined_call_operand.vmem [shape: bf16[64,128], index: 5, kind: output, shape index: {}]
  %s6 = sld [smem:[#allocation0]]
  $region38: #{cross_layer_cross_scale_projector.63} parent=0
    _
  %s8 = ssub.s32 1, %s6
  %s9 = scalar_select 0, %s8, %s6
  $region1: #{cross_layer_cross_scale_projector.63} parent=0
    #allocation3 [shape = 'u8[16384]{0}', space=vmem, size = 0x4000, scoped, tag = 'input window, operand 3, single buffered']
    #allocation4 [shape = 's32[1]{0}', space=sflag, size = 0x4, scoped, tag = 'scoped memory for cross_layer_cross_scale_projector.63']
    %10 = vsyncpa [#allocation4], 0
    // Predicated region
    $region2: #{cross_layer_cross_scale_projector.63} parent=1 // pred_check
      _
    $region3: #{cross_layer_cross_scale_projector.63} parent=1 // pred_check_branch
      %12 = sbr.rel (0) target = $region5
    $region4: #{cross_layer_cross_scale_projector.63} parent=1 // pred_region
      _
    $region5: #{cross_layer_cross_scale_projector.63} parent=1 // pred_fallthru
      _
    // Predicated region
    $region6: #{cross_layer_cross_scale_projector.63} parent=1 // pred_check
      _
    $region7: #{cross_layer_cross_scale_projector.63} parent=1 // pred_check_branch
      %14 = sbr.rel (0) target = $region9
    $region8: #{cross_layer_cross_scale_projector.63} parent=1 // pred_region
      _
    $region9: #{cross_layer_cross_scale_projector.63} parent=1 // pred_fallthru
      _
    // Predicated region
    $region10: #{cross_layer_cross_scale_projector.63} parent=1 // pred_check
      _
    $region11: #{cross_layer_cross_scale_projector.63} parent=1 // pred_check_branch
      %16 = sbr.rel (0) target = $region13
    $region12: #{cross_layer_cross_scale_projector.63} parent=1 // pred_region
      _
    $region13: #{cross_layer_cross_scale_projector.63} parent=1 // pred_fallthru
      _
    // Predicated region
    $region14: #{cross_layer_cross_scale_projector.63} parent=1 // pred_check
      _
    $region15: #{cross_layer_cross_scale_projector.63} parent=1 // pred_check_branch
      %18 = sbr.rel (0) target = $region17
    $region16: #{cross_layer_cross_scale_projector.63} parent=1 // pred_region
      %20 = vsyncadd [#allocation4], 0
      %s21 = sshll.u32 %s3, 4
      %s22 = int_to_ptr.hbm [resolvable:$true] %s21
      %s23 = sshll.u32 [#allocation3], 4
      %s24 = int_to_ptr.vmem [resolvable:$true] %s23
      %29 = dma.hbm_to_vmem [thread:$0]  %s22, 512, %s24, [#allocation4], 64, 64, 4
    $region17: #{cross_layer_cross_scale_projector.63} parent=1 // pred_fallthru
      _
    // Predicated region
    $region18: #{cross_layer_cross_scale_projector.63} parent=1 // pred_check
      _
    $region19: #{cross_layer_cross_scale_projector.63} parent=1 // pred_check_branch
      %31 = sbr.rel (0) target = $region21
    $region20: #{cross_layer_cross_scale_projector.63} parent=1 // pred_region
      _
    $region21: #{cross_layer_cross_scale_projector.63} parent=1 // pred_fallthru
      _
    // Predicated region
    $region22: #{cross_layer_cross_scale_projector.63} parent=1 // pred_check
      _
    $region23: #{cross_layer_cross_scale_projector.63} parent=1 // pred_check_branch
      %33 = sbr.rel (0) target = $region25
    $region24: #{cross_layer_cross_scale_projector.63} parent=1 // pred_region
      %35 = dma.done [#allocation4], 512
    $region25: #{cross_layer_cross_scale_projector.63} parent=1 // pred_fallthru
      _
    %p37 = scmp.eq.s32.totalorder 0, 0
    // Predicated region
    $region26: #{cross_layer_cross_scale_projector.63} parent=1 // pred_check
      %p38 = pneg %p37
    $region27: #{cross_layer_cross_scale_projector.63} parent=1 // pred_check_branch
      %40 = sbr.rel (%p38) target = $region29
    $region28: #{cross_layer_cross_scale_projector.63} parent=1 // pred_region
      %v41 = vld [vmem:[%s0] sm:$0xff]
      %v42 = vld [vmem:[%s0 + $0x8] sm:$0xff]
      %v43 = vld [vmem:[%s0 + $0x10] sm:$0xff]
      %v44 = vld [vmem:[%s0 + $0x18] sm:$0xff]
      %v45 = vld [vmem:[%s0 + $0x20] sm:$0xff]
      %v46 = vld [vmem:[%s0 + $0x28] sm:$0xff]
      %v47 = vld [vmem:[%s0 + $0x30] sm:$0xff]
      %v48 = vld [vmem:[%s0 + $0x38] sm:$0xff]
      %vm49 = vcmask 523264
      %v50 = vsel %vm49, %v41, 0.0
      %51 = vadd.xlane.f32.xlu0 %v50
      %v52 = vpop.xlane.xlu0 %51
      %v53 = vsel %vm49, %v42, 0.0
      %54 = vadd.xlane.f32.xlu0 %v53
      %v55 = vpop.xlane.xlu0 %54
      %v56 = vsel %vm49, %v43, 0.0
      %57 = vadd.xlane.f32.xlu0 %v56
      %v58 = vpop.xlane.xlu0 %57
      %v59 = vsel %vm49, %v44, 0.0
      %60 = vadd.xlane.f32.xlu0 %v59
      %v61 = vpop.xlane.xlu0 %60
      %v62 = vsel %vm49, %v45, 0.0
      %63 = vadd.xlane.f32.xlu0 %v62
      %v64 = vpop.xlane.xlu0 %63
      %v65 = vsel %vm49, %v46, 0.0
      %66 = vadd.xlane.f32.xlu0 %v65
      %v67 = vpop.xlane.xlu0 %66
      %v68 = vsel %vm49, %v47, 0.0
      %69 = vadd.xlane.f32.xlu0 %v68
      %v70 = vpop.xlane.xlu0 %69
      %v71 = vsel %vm49, %v48, 0.0
      %72 = vadd.xlane.f32.xlu0 %v71
      %v73 = vpop.xlane.xlu0 %72
      %v74 = vrcp.pop 64.0
      %v75 = vmul.f32 64.0, %v74
      %v76 = vsub.f32 1.0, %v75
      %v77 = vmul.f32 %v74, %v76
      %v78 = vadd.f32 %v74, %v77
      %vm79 = vweird.f32 %v74
      %v80 = vsel %vm79, %v74, %v78
      %v81 = vmul.f32 %v52, %v80
      %v82 = vmul.f32 %v55, %v80
      %v83 = vmul.f32 %v58, %v80
      %v84 = vmul.f32 %v61, %v80
      %v85 = vmul.f32 %v64, %v80
      %v86 = vmul.f32 %v67, %v80
      %v87 = vmul.f32 %v70, %v80
      %v88 = vmul.f32 %v73, %v80
      %v89 = vsub.f32 %v41, %v81
      %v90 = vsub.f32 %v42, %v82
      %v91 = vsub.f32 %v43, %v83
      %v92 = vsub.f32 %v44, %v84
      %v93 = vsub.f32 %v45, %v85
      %v94 = vsub.f32 %v46, %v86
      %v95 = vsub.f32 %v47, %v87
      %v96 = vsub.f32 %v48, %v88
      %v97 = vmul.f32 %v89, %v89
      %v98 = vmul.f32 %v90, %v90
      %v99 = vmul.f32 %v91, %v91
      %v100 = vmul.f32 %v92, %v92
      %v101 = vmul.f32 %v93, %v93
      %v102 = vmul.f32 %v94, %v94
      %v103 = vmul.f32 %v95, %v95
      %v104 = vmul.f32 %v96, %v96
      %v105 = vsel %vm49, %v97, 0.0
      %106 = vadd.xlane.f32.xlu0 %v105
      %v107 = vpop.xlane.xlu0 %106
      %v108 = vsel %vm49, %v98, 0.0
      %109 = vadd.xlane.f32.xlu0 %v108
      %v110 = vpop.xlane.xlu0 %109
      %v111 = vsel %vm49, %v99, 0.0
      %112 = vadd.xlane.f32.xlu0 %v111
      %v113 = vpop.xlane.xlu0 %112
      %v114 = vsel %vm49, %v100, 0.0
      %115 = vadd.xlane.f32.xlu0 %v114
      %v116 = vpop.xlane.xlu0 %115
      %v117 = vsel %vm49, %v101, 0.0
      %118 = vadd.xlane.f32.xlu0 %v117
      %v119 = vpop.xlane.xlu0 %118
      %v120 = vsel %vm49, %v102, 0.0
      %121 = vadd.xlane.f32.xlu0 %v120
      %v122 = vpop.xlane.xlu0 %121
      %v123 = vsel %vm49, %v103, 0.0
      %124 = vadd.xlane.f32.xlu0 %v123
      %v125 = vpop.xlane.xlu0 %124
      %v126 = vsel %vm49, %v104, 0.0
      %127 = vadd.xlane.f32.xlu0 %v126
      %v128 = vpop.xlane.xlu0 %127
      %v129 = vmul.f32 %v107, %v80
      %v130 = vmul.f32 %v110, %v80
      %v131 = vmul.f32 %v113, %v80
      %v132 = vmul.f32 %v116, %v80
      %v133 = vmul.f32 %v119, %v80
      %v134 = vmul.f32 %v122, %v80
      %v135 = vmul.f32 %v125, %v80
      %v136 = vmul.f32 %v128, %v80
      %v137 = vadd.f32 %v129, 1e-05
      %v138 = vadd.f32 %v130, 1e-05
      %v139 = vadd.f32 %v131, 1e-05
      %v140 = vadd.f32 %v132, 1e-05
      %v141 = vadd.f32 %v133, 1e-05
      %v142 = vadd.f32 %v134, 1e-05
      %v143 = vadd.f32 %v135, 1e-05
      %v144 = vadd.f32 %v136, 1e-05
      %v145 = vrsqrt.pop %v137
      %v146 = vmul.f32 %v145, %v137
      %v147 = vmul.f32 %v146, %v145
      %v148 = vmul.f32 0.5, %v147
      %v149 = vsub.f32 1.5, %v148
      %v150 = vmul.f32 %v145, %v149
      %vm151 = vweird.f32 %v137
      %vm152 = vweird.f32 %v145
      %vm153 = vmor %vm151, %vm152
      %v154 = vsel %vm153, %v145, %v150
      %v155 = vrsqrt.pop %v138
      %v156 = vmul.f32 %v155, %v138
      %v157 = vmul.f32 %v156, %v155
      %v158 = vmul.f32 0.5, %v157
      %v159 = vsub.f32 1.5, %v158
      %v160 = vmul.f32 %v155, %v159
      %vm161 = vweird.f32 %v138
      %vm162 = vweird.f32 %v155
      %vm163 = vmor %vm161, %vm162
      %v164 = vsel %vm163, %v155, %v160
      %v165 = vrsqrt.pop %v139
      %v166 = vmul.f32 %v165, %v139
      %v167 = vmul.f32 %v166, %v165
      %v168 = vmul.f32 0.5, %v167
      %v169 = vsub.f32 1.5, %v168
      %v170 = vmul.f32 %v165, %v169
      %vm171 = vweird.f32 %v139
      %vm172 = vweird.f32 %v165
      %vm173 = vmor %vm171, %vm172
      %v174 = vsel %vm173, %v165, %v170
      %v175 = vrsqrt.pop %v140
      %v176 = vmul.f32 %v175, %v140
      %v177 = vmul.f32 %v176, %v175
      %v178 = vmul.f32 0.5, %v177
      %v179 = vsub.f32 1.5, %v178
      %v180 = vmul.f32 %v175, %v179
      %vm181 = vweird.f32 %v140
      %vm182 = vweird.f32 %v175
      %vm183 = vmor %vm181, %vm182
      %v184 = vsel %vm183, %v175, %v180
      %v185 = vrsqrt.pop %v141
      %v186 = vmul.f32 %v185, %v141
      %v187 = vmul.f32 %v186, %v185
      %v188 = vmul.f32 0.5, %v187
      %v189 = vsub.f32 1.5, %v188
      %v190 = vmul.f32 %v185, %v189
      %vm191 = vweird.f32 %v141
      %vm192 = vweird.f32 %v185
      %vm193 = vmor %vm191, %vm192
      %v194 = vsel %vm193, %v185, %v190
      %v195 = vrsqrt.pop %v142
      %v196 = vmul.f32 %v195, %v142
      %v197 = vmul.f32 %v196, %v195
      %v198 = vmul.f32 0.5, %v197
      %v199 = vsub.f32 1.5, %v198
      %v200 = vmul.f32 %v195, %v199
      %vm201 = vweird.f32 %v142
      %vm202 = vweird.f32 %v195
      %vm203 = vmor %vm201, %vm202
      %v204 = vsel %vm203, %v195, %v200
      %v205 = vrsqrt.pop %v143
      %v206 = vmul.f32 %v205, %v143
      %v207 = vmul.f32 %v206, %v205
      %v208 = vmul.f32 0.5, %v207
      %v209 = vsub.f32 1.5, %v208
      %v210 = vmul.f32 %v205, %v209
      %vm211 = vweird.f32 %v143
      %vm212 = vweird.f32 %v205
      %vm213 = vmor %vm211, %vm212
      %v214 = vsel %vm213, %v205, %v210
      %v215 = vrsqrt.pop %v144
      %v216 = vmul.f32 %v215, %v144
      %v217 = vmul.f32 %v216, %v215
      %v218 = vmul.f32 0.5, %v217
      %v219 = vsub.f32 1.5, %v218
      %v220 = vmul.f32 %v215, %v219
      %vm221 = vweird.f32 %v144
      %vm222 = vweird.f32 %v215
      %vm223 = vmor %vm221, %vm222
      %v224 = vsel %vm223, %v215, %v220
      %v225 = vmul.f32 %v89, %v154
      %v226 = vmul.f32 %v90, %v164
      %v227 = vmul.f32 %v91, %v174
      %v228 = vmul.f32 %v92, %v184
      %v229 = vmul.f32 %v93, %v194
      %v230 = vmul.f32 %v94, %v204
      %v231 = vmul.f32 %v95, %v214
      %v232 = vmul.f32 %v96, %v224
      %v233 = vld [vmem:[%s1] sm:$0x1]
      %v235 = vperm.slane %v233, 0
      %v237 = vmul.f32 %v225, %v235
      %v238 = vmul.f32 %v226, %v235
      %v239 = vmul.f32 %v227, %v235
      %v240 = vmul.f32 %v228, %v235
      %v241 = vmul.f32 %v229, %v235
      %v242 = vmul.f32 %v230, %v235
      %v243 = vmul.f32 %v231, %v235
      %v244 = vmul.f32 %v232, %v235
      %v245 = vld [vmem:[%s2] sm:$0x1]
      %v247 = vperm.slane %v245, 0
      %v249 = vadd.f32 %v237, %v247
      %v250 = vadd.f32 %v238, %v247
      %v251 = vadd.f32 %v239, %v247
      %v252 = vadd.f32 %v240, %v247
      %v253 = vadd.f32 %v241, %v247
      %v254 = vadd.f32 %v242, %v247
      %v255 = vadd.f32 %v243, %v247
      %v256 = vadd.f32 %v244, %v247
      %v257 = vpack.c.bf16 %v249, %v249
      %v258 = vpack.c.bf16 %v250, %v250
      %v259 = vpack.c.bf16 %v251, %v251
      %v260 = vpack.c.bf16 %v252, %v252
      %v261 = vpack.c.bf16 %v253, %v253
      %v262 = vpack.c.bf16 %v254, %v254
      %v263 = vpack.c.bf16 %v255, %v255
      %v264 = vpack.c.bf16 %v256, %v256
      %vm265 = vcmask 519168
      %266 = vst.msk [vmem:[#allocation2] sm:$0xf] %vm265, %v257
      %267 = vst.msk [vmem:[#allocation2 + $0x4] sm:$0xf] %vm265, %v258
      %268 = vst.msk [vmem:[#allocation2 + $0x8] sm:$0xf] %vm265, %v259
      %269 = vst.msk [vmem:[#allocation2 + $0xc] sm:$0xf] %vm265, %v260
      %270 = vst.msk [vmem:[#allocation2 + $0x10] sm:$0xf] %vm265, %v261
      %271 = vst.msk [vmem:[#allocation2 + $0x14] sm:$0xf] %vm265, %v262
      %272 = vst.msk [vmem:[#allocation2 + $0x18] sm:$0xf] %vm265, %v263
      %273 = vst.msk [vmem:[#allocation2 + $0x1c] sm:$0xf] %vm265, %v264
    $region29: #{cross_layer_cross_scale_projector.63} parent=1 // pred_fallthru
      _
    %v274 = vld [vmem:[#allocation2] sm:$0xf]
    %v275 = vld [vmem:[#allocation2 + $0x4] sm:$0xf]
    %v276 = vld [vmem:[#allocation2 + $0x8] sm:$0xf]
    %v277 = vld [vmem:[#allocation2 + $0xc] sm:$0xf]
    %v278 = vld [vmem:[#allocation2 + $0x10] sm:$0xf]
    %v279 = vld [vmem:[#allocation2 + $0x14] sm:$0xf]
    %v280 = vld [vmem:[#allocation2 + $0x18] sm:$0xf]
    %v281 = vld [vmem:[#allocation2 + $0x1c] sm:$0xf]
    %v282 = vld [vmem:[#allocation3] sm:$0xf]
    %v283 = vld [vmem:[#allocation3 + $0x4] sm:$0xf]
    %v284 = vld [vmem:[#allocation3 + $0x8] sm:$0xf]
    %v285 = vld [vmem:[#allocation3 + $0xc] sm:$0xf]
    %v286 = vld [vmem:[#allocation3 + $0x10] sm:$0xf]
    %v287 = vld [vmem:[#allocation3 + $0x14] sm:$0xf]
    %v288 = vld [vmem:[#allocation3 + $0x18] sm:$0xf]
    %v289 = vld [vmem:[#allocation3 + $0x1c] sm:$0xf]
    %v290 = vld [vmem:[%s4] sm:$0x1]
    %v292 = vperm.slane %v290, 0
    %v302 = vunpack.c.l.b16 %v274
    %v303 = vunpack.c.l.b16 %v275
    %v304 = vunpack.c.l.b16 %v276
    %v305 = vunpack.c.l.b16 %v277
    %v306 = vunpack.c.l.b16 %v278
    %v307 = vunpack.c.l.b16 %v279
    %v308 = vunpack.c.l.b16 %v280
    %v309 = vunpack.c.l.b16 %v281
    %v310 = vpack.c.b16 %v303, %v302
    %v311 = vpack.c.b16 %v305, %v304
    %v312 = vpack.c.b16 %v307, %v306
    %v313 = vpack.c.b16 %v309, %v308
    %v322 = vunpack.c.l.b16 %v282
    %v323 = vunpack.c.l.b16 %v283
    %v324 = vunpack.c.l.b16 %v284
    %v325 = vunpack.c.l.b16 %v285
    %v326 = vunpack.c.l.b16 %v286
    %v327 = vunpack.c.l.b16 %v287
    %v328 = vunpack.c.l.b16 %v288
    %v329 = vunpack.c.l.b16 %v289
    %v330 = vpack.c.b16 %v323, %v322
    %v331 = vpack.c.b16 %v325, %v324
    %v332 = vpack.c.b16 %v327, %v326
    %v333 = vpack.c.b16 %v329, %v328
    %vm338 = vcmask 523264
    %v340 = vsel %vm338, %v310, 0
    %v343 = vsel %vm338, %v311, 0
    %v346 = vsel %vm338, %v312, 0
    %v349 = vsel %vm338, %v313, 0
    %351 = vmatpush.bf16.msra.mxu0 0
    %352 = vmatpush.bf16.msra.mxu0 0
    %353 = vmatpush.bf16.msra.mxu0 0
    %354 = vmatpush.bf16.msra.mxu0 0
    %355 = vmatpush.bf16.msra.mxu0 %v333
    %356 = vmatpush.bf16.msra.mxu0 %v332
    %357 = vmatpush.bf16.msra.mxu0 %v331
    %358 = vmatpush.bf16.msra.mxu0 %v330
    %359 = vmatmul.bf16.gmra.mxu0 %v340
    %v360 = vpop.f32.mrf.mxu0
    %v361 = vadd.f32 %v292, %v360
    %v362 = vpop.f32.mrf.mxu0
    %v363 = vadd.f32 %v292, %v362
    %364 = vmatmul.bf16.gmra.mxu0 %v343
    %v365 = vpop.f32.mrf.mxu0
    %v366 = vadd.f32 %v292, %v365
    %v367 = vpop.f32.mrf.mxu0
    %v368 = vadd.f32 %v292, %v367
    %369 = vmatmul.bf16.gmra.mxu0 %v346
    %v370 = vpop.f32.mrf.mxu0
    %v371 = vadd.f32 %v292, %v370
    %v372 = vpop.f32.mrf.mxu0
    %v373 = vadd.f32 %v292, %v372
    %374 = vmatmul.bf16.gmra.mxu0 %v349
    %v375 = vpop.f32.mrf.mxu0
    %v376 = vadd.f32 %v292, %v375
    %v377 = vpop.f32.mrf.mxu0
    %v378 = vadd.f32 %v292, %v377
    %379 = vdwg.mxu0
    %v380 = vpack.c.bf16 %v361, %v361
    %v381 = vpack.c.bf16 %v363, %v363
    %v382 = vpack.c.bf16 %v366, %v366
    %v383 = vpack.c.bf16 %v368, %v368
    %v384 = vpack.c.bf16 %v371, %v371
    %v385 = vpack.c.bf16 %v373, %v373
    %v386 = vpack.c.bf16 %v376, %v376
    %v387 = vpack.c.bf16 %v378, %v378
    %388 = vst [vmem:[%s5] sm:$0xf] %v380
    %389 = vst [vmem:[%s5 + $0x4] sm:$0xf] %v381
    %390 = vst [vmem:[%s5 + $0x8] sm:$0xf] %v382
    %391 = vst [vmem:[%s5 + $0xc] sm:$0xf] %v383
    %392 = vst [vmem:[%s5 + $0x10] sm:$0xf] %v384
    %393 = vst [vmem:[%s5 + $0x14] sm:$0xf] %v385
    %394 = vst [vmem:[%s5 + $0x18] sm:$0xf] %v386
    %395 = vst [vmem:[%s5 + $0x1c] sm:$0xf] %v387
    // Predicated region
    $region30: #{cross_layer_cross_scale_projector.63} parent=1 // pred_check
      _
    $region31: #{cross_layer_cross_scale_projector.63} parent=1 // pred_check_branch
      %397 = sbr.rel (0) target = $region33
    $region32: #{cross_layer_cross_scale_projector.63} parent=1 // pred_region
      _
    $region33: #{cross_layer_cross_scale_projector.63} parent=1 // pred_fallthru
      _
    // Predicated region
    $region34: #{cross_layer_cross_scale_projector.63} parent=1 // pred_check
      _
    $region35: #{cross_layer_cross_scale_projector.63} parent=1 // pred_check_branch
      %399 = sbr.rel (0) target = $region37
    $region36: #{cross_layer_cross_scale_projector.63} parent=1 // pred_region
      _
    $region37: #{cross_layer_cross_scale_projector.63} parent=1 // pred_fallthru
      _
    %400 = vsyncpa [#allocation4], 1

// kernel: cross_layer_cross_scale_projector.62
$region0: #{cross_layer_cross_scale_projector.62}
  #allocation0 [shape = 'u32[]', space=smem, size = 0x4, offset = 0x4, fixed_abs, tag = 'smem constant byte address 0x4 - core index']
  #allocation1 [shape = 'u32[72,128]{1,0:T(1,128)}', space=vmem, size = 0x9000, scoped, tag = 'internal scratch']
  #allocation2 [shape = 'bf16[32,64]{1,0:T(8,128)(2,1)}', space=vmem, size = 0x2000, scoped, tag = 'scratch operand']
  %s0 = inlined_call_operand.hbm [shape: f32[32,64], index: 0, kind: input, shape index: {}]
  %s1 = inlined_call_operand.vmem [shape: f32[1,64], index: 1, kind: input, shape index: {}]
  %s2 = inlined_call_operand.vmem [shape: f32[1,64], index: 2, kind: input, shape index: {}]
  %s3 = inlined_call_operand.vmem [shape: bf16[64,64], index: 3, kind: input, shape index: {}]
  %s4 = inlined_call_operand.vmem [shape: f32[1,64], index: 4, kind: input, shape index: {}]
  %s5 = inlined_call_operand.vmem [shape: bf16[32,64], index: 5, kind: output, shape index: {}]
  %s6 = sld [smem:[#allocation0]]
  $region38: #{cross_layer_cross_scale_projector.62} parent=0
    _
  %s8 = ssub.s32 1, %s6
  %s9 = scalar_select 0, %s8, %s6
  $region1: #{cross_layer_cross_scale_projector.62} parent=0
    #allocation3 [shape = 'u8[16384]{0}', space=vmem, size = 0x4000, scoped, tag = 'input window, operand 0, single buffered']
    #allocation4 [shape = 's32[1]{0}', space=sflag, size = 0x4, scoped, tag = 'scoped memory for cross_layer_cross_scale_projector.62']
    %10 = vsyncpa [#allocation4], 0
    // Predicated region
    $region2: #{cross_layer_cross_scale_projector.62} parent=1 // pred_check
      _
    $region3: #{cross_layer_cross_scale_projector.62} parent=1 // pred_check_branch
      %12 = sbr.rel (0) target = $region5
    $region4: #{cross_layer_cross_scale_projector.62} parent=1 // pred_region
      %14 = vsyncadd [#allocation4], 0
      %s15 = sshll.u32 %s0, 4
      %s16 = int_to_ptr.hbm [resolvable:$true] %s15
      %s17 = sshll.u32 [#allocation3], 4
      %s18 = int_to_ptr.vmem [resolvable:$true] %s17
      %23 = dma.hbm_to_vmem [thread:$0]  %s16, 512, %s18, [#allocation4], 128, 128, 8
    $region5: #{cross_layer_cross_scale_projector.62} parent=1 // pred_fallthru
      _
    // Predicated region
    $region6: #{cross_layer_cross_scale_projector.62} parent=1 // pred_check
      _
    $region7: #{cross_layer_cross_scale_projector.62} parent=1 // pred_check_branch
      %25 = sbr.rel (0) target = $region9
    $region8: #{cross_layer_cross_scale_projector.62} parent=1 // pred_region
      _
    $region9: #{cross_layer_cross_scale_projector.62} parent=1 // pred_fallthru
      _
    // Predicated region
    $region10: #{cross_layer_cross_scale_projector.62} parent=1 // pred_check
      _
    $region11: #{cross_layer_cross_scale_projector.62} parent=1 // pred_check_branch
      %27 = sbr.rel (0) target = $region13
    $region12: #{cross_layer_cross_scale_projector.62} parent=1 // pred_region
      _
    $region13: #{cross_layer_cross_scale_projector.62} parent=1 // pred_fallthru
      _
    // Predicated region
    $region14: #{cross_layer_cross_scale_projector.62} parent=1 // pred_check
      _
    $region15: #{cross_layer_cross_scale_projector.62} parent=1 // pred_check_branch
      %29 = sbr.rel (0) target = $region17
    $region16: #{cross_layer_cross_scale_projector.62} parent=1 // pred_region
      _
    $region17: #{cross_layer_cross_scale_projector.62} parent=1 // pred_fallthru
      _
    // Predicated region
    $region18: #{cross_layer_cross_scale_projector.62} parent=1 // pred_check
      _
    $region19: #{cross_layer_cross_scale_projector.62} parent=1 // pred_check_branch
      %31 = sbr.rel (0) target = $region21
    $region20: #{cross_layer_cross_scale_projector.62} parent=1 // pred_region
      _
    $region21: #{cross_layer_cross_scale_projector.62} parent=1 // pred_fallthru
      _
    // Predicated region
    $region22: #{cross_layer_cross_scale_projector.62} parent=1 // pred_check
      _
    $region23: #{cross_layer_cross_scale_projector.62} parent=1 // pred_check_branch
      %33 = sbr.rel (0) target = $region25
    $region24: #{cross_layer_cross_scale_projector.62} parent=1 // pred_region
      %35 = dma.done [#allocation4], 512
    $region25: #{cross_layer_cross_scale_projector.62} parent=1 // pred_fallthru
      _
    %p37 = scmp.eq.s32.totalorder 0, 0
    // Predicated region
    $region26: #{cross_layer_cross_scale_projector.62} parent=1 // pred_check
      %p38 = pneg %p37
    $region27: #{cross_layer_cross_scale_projector.62} parent=1 // pred_check_branch
      %40 = sbr.rel (%p38) target = $region29
    $region28: #{cross_layer_cross_scale_projector.62} parent=1 // pred_region
      %v41 = vld [vmem:[#allocation3] sm:$0xff]
      %v42 = vld [vmem:[#allocation3 + $0x8] sm:$0xff]
      %v43 = vld [vmem:[#allocation3 + $0x10] sm:$0xff]
      %v44 = vld [vmem:[#allocation3 + $0x18] sm:$0xff]
      %vm45 = vcmask 523264
      %v46 = vsel %vm45, %v41, 0.0
      %47 = vadd.xlane.f32.xlu0 %v46
      %v48 = vpop.xlane.xlu0 %47
      %v49 = vsel %vm45, %v42, 0.0
      %50 = vadd.xlane.f32.xlu0 %v49
      %v51 = vpop.xlane.xlu0 %50
      %v52 = vsel %vm45, %v43, 0.0
      %53 = vadd.xlane.f32.xlu0 %v52
      %v54 = vpop.xlane.xlu0 %53
      %v55 = vsel %vm45, %v44, 0.0
      %56 = vadd.xlane.f32.xlu0 %v55
      %v57 = vpop.xlane.xlu0 %56
      %v58 = vrcp.pop 64.0
      %v59 = vmul.f32 64.0, %v58
      %v60 = vsub.f32 1.0, %v59
      %v61 = vmul.f32 %v58, %v60
      %v62 = vadd.f32 %v58, %v61
      %vm63 = vweird.f32 %v58
      %v64 = vsel %vm63, %v58, %v62
      %v65 = vmul.f32 %v48, %v64
      %v66 = vmul.f32 %v51, %v64
      %v67 = vmul.f32 %v54, %v64
      %v68 = vmul.f32 %v57, %v64
      %v69 = vsub.f32 %v41, %v65
      %v70 = vsub.f32 %v42, %v66
      %v71 = vsub.f32 %v43, %v67
      %v72 = vsub.f32 %v44, %v68
      %v73 = vmul.f32 %v69, %v69
      %v74 = vmul.f32 %v70, %v70
      %v75 = vmul.f32 %v71, %v71
      %v76 = vmul.f32 %v72, %v72
      %v77 = vsel %vm45, %v73, 0.0
      %78 = vadd.xlane.f32.xlu0 %v77
      %v79 = vpop.xlane.xlu0 %78
      %v80 = vsel %vm45, %v74, 0.0
      %81 = vadd.xlane.f32.xlu0 %v80
      %v82 = vpop.xlane.xlu0 %81
      %v83 = vsel %vm45, %v75, 0.0
      %84 = vadd.xlane.f32.xlu0 %v83
      %v85 = vpop.xlane.xlu0 %84
      %v86 = vsel %vm45, %v76, 0.0
      %87 = vadd.xlane.f32.xlu0 %v86
      %v88 = vpop.xlane.xlu0 %87
      %v89 = vmul.f32 %v79, %v64
      %v90 = vmul.f32 %v82, %v64
      %v91 = vmul.f32 %v85, %v64
      %v92 = vmul.f32 %v88, %v64
      %v93 = vadd.f32 %v89, 1e-05
      %v94 = vadd.f32 %v90, 1e-05
      %v95 = vadd.f32 %v91, 1e-05
      %v96 = vadd.f32 %v92, 1e-05
      %v97 = vrsqrt.pop %v93
      %v98 = vmul.f32 %v97, %v93
      %v99 = vmul.f32 %v98, %v97
      %v100 = vmul.f32 0.5, %v99
      %v101 = vsub.f32 1.5, %v100
      %v102 = vmul.f32 %v97, %v101
      %vm103 = vweird.f32 %v93
      %vm104 = vweird.f32 %v97
      %vm105 = vmor %vm103, %vm104
      %v106 = vsel %vm105, %v97, %v102
      %v107 = vrsqrt.pop %v94
      %v108 = vmul.f32 %v107, %v94
      %v109 = vmul.f32 %v108, %v107
      %v110 = vmul.f32 0.5, %v109
      %v111 = vsub.f32 1.5, %v110
      %v112 = vmul.f32 %v107, %v111
      %vm113 = vweird.f32 %v94
      %vm114 = vweird.f32 %v107
      %vm115 = vmor %vm113, %vm114
      %v116 = vsel %vm115, %v107, %v112
      %v117 = vrsqrt.pop %v95
      %v118 = vmul.f32 %v117, %v95
      %v119 = vmul.f32 %v118, %v117
      %v120 = vmul.f32 0.5, %v119
      %v121 = vsub.f32 1.5, %v120
      %v122 = vmul.f32 %v117, %v121
      %vm123 = vweird.f32 %v95
      %vm124 = vweird.f32 %v117
      %vm125 = vmor %vm123, %vm124
      %v126 = vsel %vm125, %v117, %v122
      %v127 = vrsqrt.pop %v96
      %v128 = vmul.f32 %v127, %v96
      %v129 = vmul.f32 %v128, %v127
      %v130 = vmul.f32 0.5, %v129
      %v131 = vsub.f32 1.5, %v130
      %v132 = vmul.f32 %v127, %v131
      %vm133 = vweird.f32 %v96
      %vm134 = vweird.f32 %v127
      %vm135 = vmor %vm133, %vm134
      %v136 = vsel %vm135, %v127, %v132
      %v137 = vmul.f32 %v69, %v106
      %v138 = vmul.f32 %v70, %v116
      %v139 = vmul.f32 %v71, %v126
      %v140 = vmul.f32 %v72, %v136
      %v141 = vld [vmem:[%s1] sm:$0x1]
      %v143 = vperm.slane %v141, 0
      %v145 = vmul.f32 %v137, %v143
      %v146 = vmul.f32 %v138, %v143
      %v147 = vmul.f32 %v139, %v143
      %v148 = vmul.f32 %v140, %v143
      %v149 = vld [vmem:[%s2] sm:$0x1]
      %v151 = vperm.slane %v149, 0
      %v153 = vadd.f32 %v145, %v151
      %v154 = vadd.f32 %v146, %v151
      %v155 = vadd.f32 %v147, %v151
      %v156 = vadd.f32 %v148, %v151
      %v157 = vpack.c.bf16 %v153, %v153
      %v158 = vpack.c.bf16 %v154, %v154
      %v159 = vpack.c.bf16 %v155, %v155
      %v160 = vpack.c.bf16 %v156, %v156
      %vm161 = vcmask 519168
      %162 = vst.msk [vmem:[#allocation2] sm:$0xf] %vm161, %v157
      %163 = vst.msk [vmem:[#allocation2 + $0x4] sm:$0xf] %vm161, %v158
      %164 = vst.msk [vmem:[#allocation2 + $0x8] sm:$0xf] %vm161, %v159
      %165 = vst.msk [vmem:[#allocation2 + $0xc] sm:$0xf] %vm161, %v160
    $region29: #{cross_layer_cross_scale_projector.62} parent=1 // pred_fallthru
      _
    %v166 = vld [vmem:[#allocation2] sm:$0xf]
    %v167 = vld [vmem:[#allocation2 + $0x4] sm:$0xf]
    %v168 = vld [vmem:[#allocation2 + $0x8] sm:$0xf]
    %v169 = vld [vmem:[#allocation2 + $0xc] sm:$0xf]
    %v170 = vld [vmem:[%s3] sm:$0xf]
    %v171 = vld [vmem:[%s3 + $0x4] sm:$0xf]
    %v172 = vld [vmem:[%s3 + $0x8] sm:$0xf]
    %v173 = vld [vmem:[%s3 + $0xc] sm:$0xf]
    %v174 = vld [vmem:[%s3 + $0x10] sm:$0xf]
    %v175 = vld [vmem:[%s3 + $0x14] sm:$0xf]
    %v176 = vld [vmem:[%s3 + $0x18] sm:$0xf]
    %v177 = vld [vmem:[%s3 + $0x1c] sm:$0xf]
    %v178 = vld [vmem:[%s4] sm:$0x1]
    %v180 = vperm.slane %v178, 0
    %v186 = vunpack.c.l.b16 %v166
    %v187 = vunpack.c.l.b16 %v167
    %v188 = vunpack.c.l.b16 %v168
    %v189 = vunpack.c.l.b16 %v169
    %v190 = vpack.c.b16 %v187, %v186
    %v191 = vpack.c.b16 %v189, %v188
    %v200 = vunpack.c.l.b16 %v170
    %v201 = vunpack.c.l.b16 %v171
    %v202 = vunpack.c.l.b16 %v172
    %v203 = vunpack.c.l.b16 %v173
    %v204 = vunpack.c.l.b16 %v174
    %v205 = vunpack.c.l.b16 %v175
    %v206 = vunpack.c.l.b16 %v176
    %v207 = vunpack.c.l.b16 %v177
    %v208 = vpack.c.b16 %v201, %v200
    %v209 = vpack.c.b16 %v203, %v202
    %v210 = vpack.c.b16 %v205, %v204
    %v211 = vpack.c.b16 %v207, %v206
    %vm216 = vcmask 523264
    %v218 = vsel %vm216, %v190, 0
    %v221 = vsel %vm216, %v191, 0
    %223 = vmatpush.bf16.msra.mxu0 0
    %224 = vmatpush.bf16.msra.mxu0 0
    %225 = vmatpush.bf16.msra.mxu0 0
    %226 = vmatpush.bf16.msra.mxu0 0
    %227 = vmatpush.bf16.msra.mxu0 %v211
    %228 = vmatpush.bf16.msra.mxu0 %v210
    %229 = vmatpush.bf16.msra.mxu0 %v209
    %230 = vmatpush.bf16.msra.mxu0 %v208
    %231 = vmatmul.bf16.gmra.mxu0 %v218
    %v232 = vpop.f32.mrf.mxu0
    %v233 = vadd.f32 %v180, %v232
    %v234 = vpop.f32.mrf.mxu0
    %v235 = vadd.f32 %v180, %v234
    %236 = vmatmul.bf16.gmra.mxu0 %v221
    %v237 = vpop.f32.mrf.mxu0
    %v238 = vadd.f32 %v180, %v237
    %v239 = vpop.f32.mrf.mxu0
    %v240 = vadd.f32 %v180, %v239
    %241 = vdwg.mxu0
    %v242 = vpack.c.bf16 %v233, %v233
    %v243 = vpack.c.bf16 %v235, %v235
    %v244 = vpack.c.bf16 %v238, %v238
    %v245 = vpack.c.bf16 %v240, %v240
    %vm246 = vcmask 519168
    %247 = vst.msk [vmem:[%s5] sm:$0xf] %vm246, %v242
    %248 = vst.msk [vmem:[%s5 + $0x4] sm:$0xf] %vm246, %v243
    %249 = vst.msk [vmem:[%s5 + $0x8] sm:$0xf] %vm246, %v244
    %250 = vst.msk [vmem:[%s5 + $0xc] sm:$0xf] %vm246, %v245
    // Predicated region
    $region30: #{cross_layer_cross_scale_projector.62} parent=1 // pred_check
      _
    $region31: #{cross_layer_cross_scale_projector.62} parent=1 // pred_check_branch
      %252 = sbr.rel (0) target = $region33
    $region32: #{cross_layer_cross_scale_projector.62} parent=1 // pred_region
      _
    $region33: #{cross_layer_cross_scale_projector.62} parent=1 // pred_fallthru
      _
    // Predicated region
    $region34: #{cross_layer_cross_scale_projector.62} parent=1 // pred_check
      _
    $region35: #{cross_layer_cross_scale_projector.62} parent=1 // pred_check_branch
      %254 = sbr.rel (0) target = $region37
    $region36: #{cross_layer_cross_scale_projector.62} parent=1 // pred_region
      _
    $region37: #{cross_layer_cross_scale_projector.62} parent=1 // pred_fallthru
      _
    %255 = vsyncpa [#allocation4], 1

// kernel: cross_layer_cross_scale_projector.64
$region0: #{cross_layer_cross_scale_projector.64}
  #allocation0 [shape = 'u32[]', space=smem, size = 0x4, offset = 0x4, fixed_abs, tag = 'smem constant byte address 0x4 - core index']
  #allocation1 [shape = 'u32[72,128]{1,0:T(1,128)}', space=vmem, size = 0x9000, scoped, tag = 'internal scratch']
  #allocation2 [shape = 'f32[16,4]{1,0:T(8,128)}', space=vmem, size = 0x2000, scoped, tag = 'scratch operand']
  #allocation3 [shape = 'f32[16,64]{1,0:T(8,128)}', space=vmem, size = 0x2000, scoped, tag = 'scratch operand']
  #allocation4 [shape = 'f32[16,64]{1,0:T(8,128)}', space=vmem, size = 0x2000, scoped, tag = 'scratch operand']
  %s0 = inlined_call_operand.vmem [shape: bf16[2,16,64], index: 0, kind: input, shape index: {}]
  %s1 = inlined_call_operand.vmem [shape: bf16[2,32,64], index: 1, kind: input, shape index: {}]
  %s2 = inlined_call_operand.vmem [shape: bf16[2,32,64], index: 2, kind: input, shape index: {}]
  %s3 = inlined_call_operand.vmem [shape: bf16[2,16,64], index: 3, kind: output, shape index: {}]
  %s4 = sld [smem:[#allocation0]]
  $region53: #{cross_layer_cross_scale_projector.64} parent=0
    _
  %s6 = ssub.s32 1, %s4
  %s7 = scalar_select 0, %s6, %s4
  loop: start=0, step=1, limit=4
  $region2: #{cross_layer_cross_scale_projector.64} parent=0 // loop_pre_header
    _
  $region3: #{cross_layer_cross_scale_projector.64} parent=0 // loop_header
    %s9 = sphi 0, %s13
    %p10 = scmp.ge.s32.totalorder %s9, 4
    %s16 = sphi 0, %s35
    %s17 = sphi 0, %s31
    %s18 = sphi 0, %s27
    %s19 = sphi 0, %s16
    %s20 = sphi 0, %s17
    %s21 = sphi 0, %s18
    %s22 = sphi 0, %s19
    %s23 = sphi 0, %s20
    %s24 = sphi 0, %s21
    %s40 = sphi 0, %s42
    %s43 = sphi 0, %s40
    %s44 = sphi 0, %s43
    %s60 = sphi 0, %s44
    %s70 = sphi 0, %s72
    %s73 = sphi 0, %s70
    %s74 = sphi 0, %s73
    %s90 = sphi 0, %s74
    %s100 = sphi 0, %s102
    %s103 = sphi 0, %s100
    %s104 = sphi 0, %s103
    %s120 = sphi 0, %s104
    %s128 = sphi 0, %s130
    %s131 = sphi 0, %s128
    %s132 = sphi 0, %s131
    %s148 = sphi 0, %s132
  $region4: #{cross_layer_cross_scale_projector.64} parent=0 // loop_header_branch
    %12 = sbr.rel (%p10) target = $region8
  $region5: #{cross_layer_cross_scale_projector.64} parent=0 // loop_body
    %s14 = ssub.s32 %s9, 1
    %s15 = ssub.s32 %s9, 2
    %s25 = sadd.s32 1, %s18
    %p26 = scmp.ge.s32.totalorder %s25, 1
    %s27 = scalar_select %p26, 0, %s25
    %s28 = sadd.s32 1, %s17
    %s29 = scalar_select %p26, %s28, %s17
    %p30 = scmp.ge.s32.totalorder %s29, 1
    %s31 = scalar_select %p30, 0, %s29
    %s32 = sadd.s32 1, %s16
    %s33 = scalar_select %p30, %s32, %s16
    %p34 = scmp.ge.s32.totalorder %s33, 2
    %s35 = scalar_select %p34, 0, %s33
    %s36 = ssub.s32 %s16, %s35
    %s37 = ssub.s32 %s17, %s31
    %s38 = sor.u32 %s36, %s37
    %p39 = scmp.eq.s32.totalorder %s38, 0
    %s41 = sadd.s32 %s40, 1
    %s42 = scalar_select %p39, %s40, %s41
    %p45 = pneg %p39
    %p46 = scmp.eq.s32.totalorder %s9, 1
    %p47 = por %p45, %p46
    %p48 = scmp.ne.s32.totalorder %s40, %s43
    %p49 = scmp.eq.s32.totalorder %s9, 0
    %p50 = por %p48, %p49
    %p51 = scmp.ne.s32.totalorder %s40, %s43
    %p52 = scmp.eq.s32.totalorder %s14, 1
    %p53 = por %p51, %p52
    %p54 = scmp.ne.s32.totalorder %s43, %s44
    %p55 = scmp.eq.s32.totalorder %s14, 0
    %p56 = por %p54, %p55
    %p57 = scmp.ne.s32.totalorder %s43, %s44
    %p58 = scmp.eq.s32.totalorder %s15, 1
    %p59 = por %p57, %p58
    %p61 = scmp.ne.s32.totalorder %s44, %s60
    %p62 = scmp.eq.s32.totalorder %s15, 0
    %p63 = por %p61, %p62
    %s64 = ssub.s32 %s16, %s35
    %s65 = ssub.s32 %s18, %s27
    %s66 = sor.u32 %s64, %s65
    %s67 = ssub.s32 %s17, %s31
    %s68 = sor.u32 %s66, %s67
    %p69 = scmp.eq.s32.totalorder %s68, 0
    %s71 = sadd.s32 %s70, 1
    %s72 = scalar_select %p69, %s70, %s71
    %p75 = pneg %p69
    %p76 = scmp.eq.s32.totalorder %s9, 1
    %p77 = por %p75, %p76
    %p78 = scmp.ne.s32.totalorder %s70, %s73
    %p79 = scmp.eq.s32.totalorder %s9, 0
    %p80 = por %p78, %p79
    %p81 = scmp.ne.s32.totalorder %s70, %s73
    %p82 = scmp.eq.s32.totalorder %s14, 1
    %p83 = por %p81, %p82
    %p84 = scmp.ne.s32.totalorder %s73, %s74
    %p85 = scmp.eq.s32.totalorder %s14, 0
    %p86 = por %p84, %p85
    %p87 = scmp.ne.s32.totalorder %s73, %s74
    %p88 = scmp.eq.s32.totalorder %s15, 1
    %p89 = por %p87, %p88
    %p91 = scmp.ne.s32.totalorder %s74, %s90
    %p92 = scmp.eq.s32.totalorder %s15, 0
    %p93 = por %p91, %p92
    %s94 = ssub.s32 %s16, %s35
    %s95 = ssub.s32 %s18, %s27
    %s96 = sor.u32 %s94, %s95
    %s97 = ssub.s32 %s17, %s31
    %s98 = sor.u32 %s96, %s97
    %p99 = scmp.eq.s32.totalorder %s98, 0
    %s101 = sadd.s32 %s100, 1
    %s102 = scalar_select %p99, %s100, %s101
    %p105 = pneg %p99
    %p106 = scmp.eq.s32.totalorder %s9, 1
    %p107 = por %p105, %p106
    %p108 = scmp.ne.s32.totalorder %s100, %s103
    %p109 = scmp.eq.s32.totalorder %s9, 0
    %p110 = por %p108, %p109
    %p111 = scmp.ne.s32.totalorder %s100, %s103
    %p112 = scmp.eq.s32.totalorder %s14, 1
    %p113 = por %p111, %p112
    %p114 = scmp.ne.s32.totalorder %s103, %s104
    %p115 = scmp.eq.s32.totalorder %s14, 0
    %p116 = por %p114, %p115
    %p117 = scmp.ne.s32.totalorder %s103, %s104
    %p118 = scmp.eq.s32.totalorder %s15, 1
    %p119 = por %p117, %p118
    %p121 = scmp.ne.s32.totalorder %s104, %s120
    %p122 = scmp.eq.s32.totalorder %s15, 0
    %p123 = por %p121, %p122
    %s124 = ssub.s32 %s16, %s35
    %s125 = ssub.s32 %s17, %s31
    %s126 = sor.u32 %s124, %s125
    %p127 = scmp.eq.s32.totalorder %s126, 0
    %s129 = sadd.s32 %s128, 1
    %s130 = scalar_select %p127, %s128, %s129
    %p133 = pneg %p127
    %p134 = scmp.eq.s32.totalorder %s9, 1
    %p135 = por %p133, %p134
    %p136 = scmp.ne.s32.totalorder %s128, %s131
    %p137 = scmp.eq.s32.totalorder %s9, 0
    %p138 = por %p136, %p137
    %p139 = scmp.ne.s32.totalorder %s128, %s131
    %p140 = scmp.eq.s32.totalorder %s14, 1
    %p141 = por %p139, %p140
    %p142 = scmp.ne.s32.totalorder %s131, %s132
    %p143 = scmp.eq.s32.totalorder %s14, 0
    %p144 = por %p142, %p143
    %p145 = scmp.ne.s32.totalorder %s131, %s132
    %p146 = scmp.eq.s32.totalorder %s15, 1
    %p147 = por %p145, %p146
    %p149 = scmp.ne.s32.totalorder %s132, %s148
    %p150 = scmp.eq.s32.totalorder %s15, 0
    %p151 = por %p149, %p150
    %p152 = scmp.le.s32.totalorder 1, %s9
    %p153 = scmp.lt.s32.totalorder %s9, 3
    %p154 = pnand %p152, %p153
    %p155 = pneg %p154
    // Predicated region
    $region9: #{cross_layer_cross_scale_projector.64} parent=5 // pred_check
      _
    $region10: #{cross_layer_cross_scale_projector.64} parent=5 // pred_check_branch
      %157 = sbr.rel (%p154) target = $region12
    $region11: #{cross_layer_cross_scale_projector.64} parent=5 // pred_region
      %s158 = ssub.s32 %s9, 1
    $region12: #{cross_layer_cross_scale_projector.64} parent=5 // pred_fallthru
      _
    %p159 = scmp.lt.s32.totalorder %s9, 2
    // Predicated region
    $region13: #{cross_layer_cross_scale_projector.64} parent=5 // pred_check
      %p160 = pneg %p159
    $region14: #{cross_layer_cross_scale_projector.64} parent=5 // pred_check_branch
      %162 = sbr.rel (%p160) target = $region16
    $region15: #{cross_layer_cross_scale_projector.64} parent=5 // pred_region
      // Predicated region
      $region17: #{cross_layer_cross_scale_projector.64} parent=15 // pred_check
        %p163 = pneg %p50
      $region18: #{cross_layer_cross_scale_projector.64} parent=15 // pred_check_branch
        %165 = sbr.rel (%p163) target = $region20
      $region19: #{cross_layer_cross_scale_projector.64} parent=15 // pred_region
        %p166 = scmp.lt.s32.totalorder %s16, 1
        %s167 = scalar_select %p166, %s16, 1
        %p168 = scmp.lt.s32.totalorder %s17, 0
        %s169 = scalar_select %p168, %s17, 0
        %s170 = smul.addr %s167, 2
        %s171 = sadd.s32 %s169, %s170
        %s172 = smul.addr %s171, 4
        %s173 = scalar_lea.vmem %s0, %s172
      $region20: #{cross_layer_cross_scale_projector.64} parent=15 // pred_fallthru
        _
      // Predicated region
      $region21: #{cross_layer_cross_scale_projector.64} parent=15 // pred_check
        %p174 = pneg %p80
      $region22: #{cross_layer_cross_scale_projector.64} parent=15 // pred_check_branch
        %176 = sbr.rel (%p174) target = $region24
      $region23: #{cross_layer_cross_scale_projector.64} parent=15 // pred_region
        %s177 = smul.u32 4, %s18
        %p178 = scmp.lt.s32.totalorder %s16, 1
        %s179 = scalar_select %p178, %s16, 1
        %p180 = scmp.lt.s32.totalorder %s177, 3
        %s181 = scalar_select %p180, %s177, 3
        %p182 = scmp.lt.s32.totalorder %s17, 0
        %s183 = scalar_select %p182, %s17, 0
        %s184 = sadd.s32 %s183, %s181
        %s185 = smul.addr %s179, 4
        %s186 = sadd.s32 %s184, %s185
        %s187 = smul.addr %s186, 4
        %s188 = scalar_lea.vmem %s1, %s187
        %s189 = smul.u32 4, %s18
      $region24: #{cross_layer_cross_scale_projector.64} parent=15 // pred_fallthru
        _
      // Predicated region
      $region25: #{cross_layer_cross_scale_projector.64} parent=15 // pred_check
        %p190 = pneg %p110
      $region26: #{cross_layer_cross_scale_projector.64} parent=15 // pred_check_branch
        %192 = sbr.rel (%p190) target = $region28
      $region27: #{cross_layer_cross_scale_projector.64} parent=15 // pred_region
        %s193 = smul.u32 4, %s18
        %p194 = scmp.lt.s32.totalorder %s16, 1
        %s195 = scalar_select %p194, %s16, 1
        %p196 = scmp.lt.s32.totalorder %s193, 3
        %s197 = scalar_select %p196, %s193, 3
        %p198 = scmp.lt.s32.totalorder %s17, 0
        %s199 = scalar_select %p198, %s17, 0
        %s200 = sadd.s32 %s199, %s197
        %s201 = smul.addr %s195, 4
        %s202 = sadd.s32 %s200, %s201
        %s203 = smul.addr %s202, 4
        %s204 = scalar_lea.vmem %s2, %s203
        %s205 = smul.u32 4, %s18
      $region28: #{cross_layer_cross_scale_projector.64} parent=15 // pred_fallthru
        _
    $region16: #{cross_layer_cross_scale_projector.64} parent=5 // pred_fallthru
      _
    %p206 = scmp.le.s32.totalorder 1, %s9
    %p207 = scmp.lt.s32.totalorder %s9, 3
    %p208 = pnand %p206, %p207
    %p209 = pneg %p208
    // Predicated region
    $region29: #{cross_layer_cross_scale_projector.64} parent=5 // pred_check
      _
    $region30: #{cross_layer_cross_scale_projector.64} parent=5 // pred_check_branch
      %211 = sbr.rel (%p208) target = $region32
    $region31: #{cross_layer_cross_scale_projector.64} parent=5 // pred_region
      %s212 = ssub.s32 %s9, 1
      %p213 = scmp.lt.s32.totalorder %s19, 1
      %s214 = scalar_select %p213, %s19, 1
      %p215 = scmp.lt.s32.totalorder %s20, 0
      %s216 = scalar_select %p215, %s20, 0
      %s217 = smul.addr %s214, 2
      %s218 = sadd.s32 %s216, %s217
      %s219 = smul.addr %s218, 4
      %s220 = scalar_lea.vmem %s0, %s219
      %p221 = pneg %p56
      %p222 = pneg %p53
      %s223 = smul.u32 4, %s21
      %p224 = scmp.lt.s32.totalorder %s19, 1
      %s225 = scalar_select %p224, %s19, 1
      %p226 = scmp.lt.s32.totalorder %s223, 3
      %s227 = scalar_select %p226, %s223, 3
      %p228 = scmp.lt.s32.totalorder %s20, 0
      %s229 = scalar_select %p228, %s20, 0
      %s230 = sadd.s32 %s229, %s227
      %s231 = smul.addr %s225, 4
      %s232 = sadd.s32 %s230, %s231
      %s233 = smul.addr %s232, 4
      %s234 = scalar_lea.vmem %s1, %s233
      %p235 = pneg %p86
      %p236 = pneg %p83
      %s237 = smul.u32 4, %s21
      %p238 = scmp.lt.s32.totalorder %s19, 1
      %s239 = scalar_select %p238, %s19, 1
      %p240 = scmp.lt.s32.totalorder %s237, 3
      %s241 = scalar_select %p240, %s237, 3
      %p242 = scmp.lt.s32.totalorder %s20, 0
      %s243 = scalar_select %p242, %s20, 0
      %s244 = sadd.s32 %s243, %s241
      %s245 = smul.addr %s239, 4
      %s246 = sadd.s32 %s244, %s245
      %s247 = smul.addr %s246, 4
      %s248 = scalar_lea.vmem %s2, %s247
      %p249 = pneg %p116
      %p250 = pneg %p113
      %p251 = pneg %p144
      %p252 = pneg %p141
      %p253 = scmp.lt.s32.totalorder %s19, 1
      %s254 = scalar_select %p253, %s19, 1
      %p255 = scmp.lt.s32.totalorder %s20, 0
      %s256 = scalar_select %p255, %s20, 0
      %s257 = smul.addr %s254, 2
      %s258 = sadd.s32 %s256, %s257
      %s259 = smul.addr %s258, 4
      %s260 = scalar_lea.vmem %s3, %s259
      %p261 = scmp.lt.s32.totalorder %s19, 1
      %s262 = scalar_select %p261, %s19, 1
      %p263 = scmp.lt.s32.totalorder %s20, 0
      %s264 = scalar_select %p263, %s20, 0
      %s265 = smul.addr %s262, 2
      %s266 = sadd.s32 %s264, %s265
      %s267 = smul.addr %s266, 4
      %s268 = scalar_lea.vmem %s0, %s267
      %s269 = smul.u32 4, %s21
      %p270 = scmp.lt.s32.totalorder %s19, 1
      %s271 = scalar_select %p270, %s19, 1
      %p272 = scmp.lt.s32.totalorder %s269, 3
      %s273 = scalar_select %p272, %s269, 3
      %p274 = scmp.lt.s32.totalorder %s20, 0
      %s275 = scalar_select %p274, %s20, 0
      %s276 = sadd.s32 %s275, %s273
      %s277 = smul.addr %s271, 4
      %s278 = sadd.s32 %s276, %s277
      %s279 = smul.addr %s278, 4
      %s280 = scalar_lea.vmem %s1, %s279
      %s281 = smul.u32 4, %s21
      %s282 = smul.u32 4, %s21
      %p283 = scmp.lt.s32.totalorder %s19, 1
      %s284 = scalar_select %p283, %s19, 1
      %p285 = scmp.lt.s32.totalorder %s282, 3
      %s286 = scalar_select %p285, %s282, 3
      %p287 = scmp.lt.s32.totalorder %s20, 0
      %s288 = scalar_select %p287, %s20, 0
      %s289 = sadd.s32 %s288, %s286
      %s290 = smul.addr %s284, 4
      %s291 = sadd.s32 %s289, %s290
      %s292 = smul.addr %s291, 4
      %s293 = scalar_lea.vmem %s2, %s292
      %s294 = smul.u32 4, %s21
      %p295 = scmp.lt.s32.totalorder %s19, 1
      %s296 = scalar_select %p295, %s19, 1
      %p297 = scmp.lt.s32.totalorder %s20, 0
      %s298 = scalar_select %p297, %s20, 0
      %s299 = smul.addr %s296, 2
      %s300 = sadd.s32 %s298, %s299
      %s301 = smul.addr %s300, 4
      %s302 = scalar_lea.vmem %s3, %s301
      %p304 = scmp.eq.s32.totalorder %s21, 0
      // Predicated region
      $region33: #{cross_layer_cross_scale_projector.64} parent=31 // pred_check
        %p305 = pneg %p304
      $region34: #{cross_layer_cross_scale_projector.64} parent=31 // pred_check_branch
        %307 = sbr.rel (%p305) target = $region36
      $region35: #{cross_layer_cross_scale_projector.64} parent=31 // pred_region
        %vm308 = vcmask 31744
        %309 = vst.msk [vmem:[#allocation2] sm:$0xff] %vm308, -1e+30
        %310 = vst.msk [vmem:[#allocation2 + $0x8] sm:$0xff] %vm308, -1e+30
        %vm311 = vcmask 523264
        %312 = vst.msk [vmem:[#allocation3] sm:$0xff] %vm311, 0.0
        %313 = vst.msk [vmem:[#allocation3 + $0x8] sm:$0xff] %vm311, 0.0
        %314 = vst.msk [vmem:[#allocation4] sm:$0xff] %vm311, 0.0
        %315 = vst.msk [vmem:[#allocation4 + $0x8] sm:$0xff] %vm311, 0.0
      $region36: #{cross_layer_cross_scale_projector.64} parent=31 // pred_fallthru
        _
      %v316 = vld [vmem:[%s268] sm:$0xf]
      %v317 = vld [vmem:[%s268 + $0x4] sm:$0xf]
      %v318 = vld [vmem:[%s280] sm:$0xf]
      %v319 = vld [vmem:[%s280 + $0x4] sm:$0xf]
      %v320 = vld [vmem:[%s280 + $0x8] sm:$0xf]
      %v321 = vld [vmem:[%s280 + $0xc] sm:$0xf]
      %v324 = vunpack.c.l.b16 %v316
      %v325 = vunpack.c.l.b16 %v317
      %v326 = vpack.c.b16 %v325, %v324
      %v331 = vunpack.c.l.b16 %v318
      %v332 = vunpack.c.l.b16 %v319
      %v333 = vunpack.c.l.b16 %v320
      %v334 = vunpack.c.l.b16 %v321
      %v335 = vpack.c.b16 %v332, %v331
      %v336 = vpack.c.b16 %v334, %v333
      %vm337 = vcmask 130048
      %v339 = vsel %vm337, %v326, 0
      %v342 = vsel %vm337, %v335, 0
      %v345 = vsel %vm337, %v336, 0
      %347 = vmatpush.bf16.xpose.msra.mxu0 0
      %348 = vmatpush.bf16.xpose.msra.mxu0 0
      %349 = vmatpush.bf16.xpose.msra.mxu0 0
      %350 = vmatpush.bf16.xpose.msra.mxu0 0
      %351 = vmatpush.bf16.xpose.msra.mxu0 0
      %352 = vmatpush.bf16.xpose.msra.mxu0 0
      %353 = vmatpush.bf16.xpose.msra.mxu0 %v345
      %354 = vmatpush.bf16.xpose.msra.mxu0 %v342
      %355 = vmatmul.bf16.gmra.mxu0 %v339
      %v356 = vpop.f32.mrf.mxu0
      %v357 = vadd.f32 0.0, %v356
      %v358 = vpop.f32.mrf.mxu0
      %v359 = vadd.f32 0.0, %v358
      %360 = vdwg.mxu0
      %v361 = vld [vmem:[#allocation2] sm:$0xff]
      %v362 = vld [vmem:[#allocation2 + $0x8] sm:$0xff]
      %vm363 = vcmask 261120
      %v364 = vsel %vm363, %v357, -inf
      %365 = vmax.xlane.f32.xlu0 %v364
      %v366 = vpop.xlane.xlu0 %365
      %v367 = vsel %vm363, %v359, -inf
      %368 = vmax.xlane.f32.xlu0 %v367
      %v369 = vpop.xlane.xlu0 %368
      %v370 = vmax.f32 %v361, %v366
      %v371 = vmax.f32 %v362, %v369
      %v372 = vsub.f32 %v361, %v370
      %v373 = vsub.f32 %v362, %v371
      %v374 = vmul.f32 %v372, 1.442695
      %v375 = vpow.pop %v374
      %v376 = vmul.f32 %v373, 1.442695
      %v377 = vpow.pop %v376
      %379 = vset.pattern.permute.xlu0 0
      %380 = vperm.xlu0 %379, %v370
      %v381 = vpop.permute.xlu0 %380
      %384 = vset.pattern.permute.xlu0 0
      %385 = vperm.xlu0 %384, %v371
      %v386 = vpop.permute.xlu0 %385
      %v388 = vsub.f32 %v357, %v381
      %v389 = vsub.f32 %v359, %v386
      %v390 = vmul.f32 %v388, 1.442695
      %v391 = vpow.pop %v390
      %v392 = vmul.f32 %v389, 1.442695
      %v393 = vpow.pop %v392
      %v394 = vld [vmem:[#allocation3] sm:$0xff]
      %v395 = vld [vmem:[#allocation3 + $0x8] sm:$0xff]
      %397 = vset.pattern.permute.xlu0 0
      %398 = vperm.xlu0 %397, %v375
      %v399 = vpop.permute.xlu0 %398
      %402 = vset.pattern.permute.xlu0 0
      %403 = vperm.xlu0 %402, %v377
      %v404 = vpop.permute.xlu0 %403
      %v406 = vmul.f32 %v399, %v394
      %v407 = vmul.f32 %v404, %v395
      %v408 = vsel %vm363, %v391, 0.0
      %409 = vadd.xlane.f32.xlu0 %v408
      %v410 = vpop.xlane.xlu0 %409
      %v411 = vsel %vm363, %v393, 0.0
      %412 = vadd.xlane.f32.xlu0 %v411
      %v413 = vpop.xlane.xlu0 %412
      %v414 = vadd.f32 %v406, %v410
      %v415 = vadd.f32 %v407, %v413
      %416 = vst.msk [vmem:[#allocation3] sm:$0xff] %vm337, %v414
      %417 = vst.msk [vmem:[#allocation3 + $0x8] sm:$0xff] %vm337, %v415
      %v418 = vld [vmem:[#allocation4] sm:$0xff]
      %v419 = vld [vmem:[#allocation4 + $0x8] sm:$0xff]
      %v420 = vmul.f32 %v399, %v418
      %v421 = vmul.f32 %v404, %v419
      %v422 = vpack.c.bf16 %v393, %v391
      %v423 = vld [vmem:[%s293] sm:$0xf]
      %v424 = vld [vmem:[%s293 + $0x4] sm:$0xf]
      %v425 = vld [vmem:[%s293 + $0x8] sm:$0xf]
      %v426 = vld [vmem:[%s293 + $0xc] sm:$0xf]
      %v431 = vunpack.c.l.b16 %v423
      %v432 = vunpack.c.l.b16 %v424
      %v433 = vunpack.c.l.b16 %v425
      %v434 = vunpack.c.l.b16 %v426
      %v435 = vpack.c.b16 %v432, %v431
      %v436 = vpack.c.b16 %v434, %v433
      %v440 = vsel %vm363, %v422, 0
      %442 = vmatpush.bf16.msra.mxu0 0
      %443 = vmatpush.bf16.msra.mxu0 0
      %444 = vmatpush.bf16.msra.mxu0 0
      %445 = vmatpush.bf16.msra.mxu0 0
      %446 = vmatpush.bf16.msra.mxu0 0
      %447 = vmatpush.bf16.msra.mxu0 0
      %448 = vmatpush.bf16.msra.mxu0 %v436
      %449 = vmatpush.bf16.msra.mxu0 %v435
      %450 = vmatmul.bf16.gmra.mxu0 %v440
      %v451 = vpop.f32.mrf.mxu0
      %v452 = vadd.f32 0.0, %v451
      %v453 = vpop.f32.mrf.mxu0
      %v454 = vadd.f32 0.0, %v453
      %455 = vdwg.mxu0
      %v456 = vadd.f32 %v420, %v452
      %v457 = vadd.f32 %v421, %v454
      %458 = vst.msk [vmem:[#allocation4] sm:$0xff] %vm337, %v456
      %459 = vst.msk [vmem:[#allocation4 + $0x8] sm:$0xff] %vm337, %v457
      %vm460 = vcmask 7168
      %461 = vst.msk [vmem:[#allocation2] sm:$0xff] %vm460, %v370
      %462 = vst.msk [vmem:[#allocation2 + $0x8] sm:$0xff] %vm460, %v371
      %v463 = vld [vmem:[%s268] sm:$0xf]
      %v464 = vld [vmem:[%s268 + $0x4] sm:$0xf]
      %v465 = vld [vmem:[%s280] sm:$0xf]
      %v466 = vld [vmem:[%s280 + $0x4] sm:$0xf]
      %v467 = vld [vmem:[%s280 + $0x8] sm:$0xf]
      %v468 = vld [vmem:[%s280 + $0xc] sm:$0xf]
      %v471 = vunpack.c.l.b16 %v463
      %v472 = vunpack.c.l.b16 %v464
      %v473 = vpack.c.b16 %v472, %v471
      %474 = vrot.lane.b32.xlu0 %v473, 112
      %v475 = vpop.permute.xlu0 %474
      %v480 = vunpack.c.l.b16 %v465
      %v481 = vunpack.c.l.b16 %v466
      %v482 = vunpack.c.l.b16 %v467
      %v483 = vunpack.c.l.b16 %v468
      %v484 = vpack.c.b16 %v481, %v480
      %v485 = vpack.c.b16 %v483, %v482
      %486 = vrot.lane.b32.xlu0 %v484, 112
      %v487 = vpop.permute.xlu0 %486
      %488 = vrot.lane.b32.xlu0 %v485, 112
      %v489 = vpop.permute.xlu0 %488
      %v491 = vsel %vm337, %v475, 0
      %v494 = vsel %vm337, %v487, 0
      %v497 = vsel %vm337, %v489, 0
      %499 = vmatpush.bf16.xpose.msra.mxu0 0
      %500 = vmatpush.bf16.xpose.msra.mxu0 0
      %501 = vmatpush.bf16.xpose.msra.mxu0 0
      %502 = vmatpush.bf16.xpose.msra.mxu0 0
      %503 = vmatpush.bf16.xpose.msra.mxu0 0
      %504 = vmatpush.bf16.xpose.msra.mxu0 0
      %505 = vmatpush.bf16.xpose.msra.mxu0 %v497
      %506 = vmatpush.bf16.xpose.msra.mxu0 %v494
      %507 = vmatmul.bf16.gmra.mxu0 %v491
      %v508 = vpop.f32.mrf.mxu0
      %v509 = vadd.f32 0.0, %v508
      %v510 = vpop.f32.mrf.mxu0
      %v511 = vadd.f32 0.0, %v510
      %512 = vdwg.mxu0
      %v513 = vld [vmem:[#allocation2] sm:$0xff]
      %v514 = vld [vmem:[#allocation2 + $0x8] sm:$0xff]
      %v515 = vsel %vm363, %v509, -inf
      %516 = vmax.xlane.f32.xlu0 %v515
      %v517 = vpop.xlane.xlu0 %516
      %v518 = vsel %vm363, %v511, -inf
      %519 = vmax.xlane.f32.xlu0 %v518
      %v520 = vpop.xlane.xlu0 %519
      %v521 = vmax.f32 %v513, %v517
      %v522 = vmax.f32 %v514, %v520
      %v523 = vsub.f32 %v513, %v521
      %v524 = vsub.f32 %v514, %v522
      %v525 = vmul.f32 %v523, 1.442695
      %v526 = vpow.pop %v525
      %v527 = vmul.f32 %v524, 1.442695
      %v528 = vpow.pop %v527
      %530 = vset.pattern.permute.xlu0 1
      %531 = vperm.xlu0 %530, %v521
      %v532 = vpop.permute.xlu0 %531
      %535 = vset.pattern.permute.xlu0 1
      %536 = vperm.xlu0 %535, %v522
      %v537 = vpop.permute.xlu0 %536
      %v539 = vsub.f32 %v509, %v532
      %v540 = vsub.f32 %v511, %v537
      %v541 = vmul.f32 %v539, 1.442695
      %v542 = vpow.pop %v541
      %v543 = vmul.f32 %v540, 1.442695
      %v544 = vpow.pop %v543
      %v545 = vld [vmem:[#allocation3] sm:$0xff]
      %v546 = vld [vmem:[#allocation3 + $0x8] sm:$0xff]
      %548 = vset.pattern.permute.xlu0 1
      %549 = vperm.xlu0 %548, %v526
      %v550 = vpop.permute.xlu0 %549
      %553 = vset.pattern.permute.xlu0 1
      %554 = vperm.xlu0 %553, %v528
      %v555 = vpop.permute.xlu0 %554
      %v557 = vmul.f32 %v550, %v545
      %v558 = vmul.f32 %v555, %v546
      %v559 = vsel %vm363, %v542, 0.0
      %560 = vadd.xlane.f32.xlu0 %v559
      %v561 = vpop.xlane.xlu0 %560
      %v562 = vsel %vm363, %v544, 0.0
      %563 = vadd.xlane.f32.xlu0 %v562
      %v564 = vpop.xlane.xlu0 %563
      %v565 = vadd.f32 %v557, %v561
      %v566 = vadd.f32 %v558, %v564
      %vm567 = vcmask 261248
      %568 = vst.msk [vmem:[#allocation3] sm:$0xff] %vm567, %v565
      %569 = vst.msk [vmem:[#allocation3 + $0x8] sm:$0xff] %vm567, %v566
      %v570 = vld [vmem:[#allocation4] sm:$0xff]
      %v571 = vld [vmem:[#allocation4 + $0x8] sm:$0xff]
      %v572 = vmul.f32 %v550, %v570
      %v573 = vmul.f32 %v555, %v571
      %v574 = vpack.c.bf16 %v544, %v542
      %v575 = vld [vmem:[%s293] sm:$0xf]
      %v576 = vld [vmem:[%s293 + $0x4] sm:$0xf]
      %v577 = vld [vmem:[%s293 + $0x8] sm:$0xf]
      %v578 = vld [vmem:[%s293 + $0xc] sm:$0xf]
      %v583 = vunpack.c.l.b16 %v575
      %v584 = vunpack.c.l.b16 %v576
      %v585 = vunpack.c.l.b16 %v577
      %v586 = vunpack.c.l.b16 %v578
      %v587 = vpack.c.b16 %v584, %v583
      %v588 = vpack.c.b16 %v586, %v585
      %589 = vrot.lane.b32.xlu0 %v587, 112
      %v590 = vpop.permute.xlu0 %589
      %591 = vrot.lane.b32.xlu0 %v588, 112
      %v592 = vpop.permute.xlu0 %591
      %v596 = vsel %vm363, %v574, 0
      %598 = vmatpush.bf16.msra.mxu0 0
      %599 = vmatpush.bf16.msra.mxu0 0
      %600 = vmatpush.bf16.msra.mxu0 0
      %601 = vmatpush.bf16.msra.mxu0 0
      %602 = vmatpush.bf16.msra.mxu0 0
      %603 = vmatpush.bf16.msra.mxu0 0
      %604 = vmatpush.bf16.msra.mxu0 %v592
      %605 = vmatpush.bf16.msra.mxu0 %v590
      %606 = vmatmul.bf16.gmra.mxu0 %v596
      %v607 = vpop.f32.mrf.mxu0
      %v608 = vadd.f32 0.0, %v607
      %v609 = vpop.f32.mrf.mxu0
      %v610 = vadd.f32 0.0, %v609
      %611 = vdwg.mxu0
      %614 = vrot.lane.b32.xlu0 %v608, 16
      %v615 = vpop.permute.xlu0 %614
      %616 = vrot.lane.b32.xlu0 %v610, 16
      %v617 = vpop.permute.xlu0 %616
      %v620 = vadd.f32 %v572, %v615
      %v621 = vadd.f32 %v573, %v617
      %622 = vst.msk [vmem:[#allocation4] sm:$0xff] %vm567, %v620
      %623 = vst.msk [vmem:[#allocation4 + $0x8] sm:$0xff] %vm567, %v621
      %vm624 = vcmask 15368
      %625 = vst.msk [vmem:[#allocation2] sm:$0xff] %vm624, %v521
      %626 = vst.msk [vmem:[#allocation2 + $0x8] sm:$0xff] %vm624, %v522
      %v627 = vld [vmem:[%s268] sm:$0xf]
      %v628 = vld [vmem:[%s268 + $0x4] sm:$0xf]
      %v629 = vld [vmem:[%s280] sm:$0xf]
      %v630 = vld [vmem:[%s280 + $0x4] sm:$0xf]
      %v631 = vld [vmem:[%s280 + $0x8] sm:$0xf]
      %v632 = vld [vmem:[%s280 + $0xc] sm:$0xf]
      %v635 = vunpack.c.l.b16 %v627
      %v636 = vunpack.c.l.b16 %v628
      %v637 = vpack.c.b16 %v636, %v635
      %638 = vrot.lane.b32.xlu0 %v637, 96
      %v639 = vpop.permute.xlu0 %638
      %v644 = vunpack.c.l.b16 %v629
      %v645 = vunpack.c.l.b16 %v630
      %v646 = vunpack.c.l.b16 %v631
      %v647 = vunpack.c.l.b16 %v632
      %v648 = vpack.c.b16 %v645, %v644
      %v649 = vpack.c.b16 %v647, %v646
      %650 = vrot.lane.b32.xlu0 %v648, 96
      %v651 = vpop.permute.xlu0 %650
      %652 = vrot.lane.b32.xlu0 %v649, 96
      %v653 = vpop.permute.xlu0 %652
      %v655 = vsel %vm337, %v639, 0
      %v658 = vsel %vm337, %v651, 0
      %v661 = vsel %vm337, %v653, 0
      %663 = vmatpush.bf16.xpose.msra.mxu0 0
      %664 = vmatpush.bf16.xpose.msra.mxu0 0
      %665 = vmatpush.bf16.xpose.msra.mxu0 0
      %666 = vmatpush.bf16.xpose.msra.mxu0 0
      %667 = vmatpush.bf16.xpose.msra.mxu0 0
      %668 = vmatpush.bf16.xpose.msra.mxu0 0
      %669 = vmatpush.bf16.xpose.msra.mxu0 %v661
      %670 = vmatpush.bf16.xpose.msra.mxu0 %v658
      %671 = vmatmul.bf16.gmra.mxu0 %v655
      %v672 = vpop.f32.mrf.mxu0
      %v673 = vadd.f32 0.0, %v672
      %v674 = vpop.f32.mrf.mxu0
      %v675 = vadd.f32 0.0, %v674
      %676 = vdwg.mxu0
      %v677 = vld [vmem:[#allocation2] sm:$0xff]
      %v678 = vld [vmem:[#allocation2 + $0x8] sm:$0xff]
      %v679 = vsel %vm363, %v673, -inf
      %680 = vmax.xlane.f32.xlu0 %v679
      %v681 = vpop.xlane.xlu0 %680
      %v682 = vsel %vm363, %v675, -inf
      %683 = vmax.xlane.f32.xlu0 %v682
      %v684 = vpop.xlane.xlu0 %683
      %v685 = vmax.f32 %v677, %v681
      %v686 = vmax.f32 %v678, %v684
      %v687 = vsub.f32 %v677, %v685
      %v688 = vsub.f32 %v678, %v686
      %v689 = vmul.f32 %v687, 1.442695
      %v690 = vpow.pop %v689
      %v691 = vmul.f32 %v688, 1.442695
      %v692 = vpow.pop %v691
      %694 = vset.pattern.permute.xlu0 2
      %695 = vperm.xlu0 %694, %v685
      %v696 = vpop.permute.xlu0 %695
      %699 = vset.pattern.permute.xlu0 2
      %700 = vperm.xlu0 %699, %v686
      %v701 = vpop.permute.xlu0 %700
      %v703 = vsub.f32 %v673, %v696
      %v704 = vsub.f32 %v675, %v701
      %v705 = vmul.f32 %v703, 1.442695
      %v706 = vpow.pop %v705
      %v707 = vmul.f32 %v704, 1.442695
      %v708 = vpow.pop %v707
      %v709 = vld [vmem:[#allocation3] sm:$0xff]
      %v710 = vld [vmem:[#allocation3 + $0x8] sm:$0xff]
      %712 = vset.pattern.permute.xlu0 2
      %713 = vperm.xlu0 %712, %v690
      %v714 = vpop.permute.xlu0 %713
      %717 = vset.pattern.permute.xlu0 2
      %718 = vperm.xlu0 %717, %v692
      %v719 = vpop.permute.xlu0 %718
      %v721 = vmul.f32 %v714, %v709
      %v722 = vmul.f32 %v719, %v710
      %v723 = vsel %vm363, %v706, 0.0
      %724 = vadd.xlane.f32.xlu0 %v723
      %v725 = vpop.xlane.xlu0 %724
      %v726 = vsel %vm363, %v708, 0.0
      %727 = vadd.xlane.f32.xlu0 %v726
      %v728 = vpop.xlane.xlu0 %727
      %v729 = vadd.f32 %v721, %v725
      %v730 = vadd.f32 %v722, %v728
      %vm731 = vcmask 392448
      %732 = vst.msk [vmem:[#allocation3] sm:$0xff] %vm731, %v729
      %733 = vst.msk [vmem:[#allocation3 + $0x8] sm:$0xff] %vm731, %v730
      %v734 = vld [vmem:[#allocation4] sm:$0xff]
      %v735 = vld [vmem:[#allocation4 + $0x8] sm:$0xff]
      %v736 = vmul.f32 %v714, %v734
      %v737 = vmul.f32 %v719, %v735
      %v738 = vpack.c.bf16 %v708, %v706
      %v739 = vld [vmem:[%s293] sm:$0xf]
      %v740 = vld [vmem:[%s293 + $0x4] sm:$0xf]
      %v741 = vld [vmem:[%s293 + $0x8] sm:$0xf]
      %v742 = vld [vmem:[%s293 + $0xc] sm:$0xf]
      %v747 = vunpack.c.l.b16 %v739
      %v748 = vunpack.c.l.b16 %v740
      %v749 = vunpack.c.l.b16 %v741
      %v750 = vunpack.c.l.b16 %v742
      %v751 = vpack.c.b16 %v748, %v747
      %v752 = vpack.c.b16 %v750, %v749
      %753 = vrot.lane.b32.xlu0 %v751, 96
      %v754 = vpop.permute.xlu0 %753
      %755 = vrot.lane.b32.xlu0 %v752, 96
      %v756 = vpop.permute.xlu0 %755
      %v760 = vsel %vm363, %v738, 0
      %762 = vmatpush.bf16.msra.mxu0 0
      %763 = vmatpush.bf16.msra.mxu0 0
      %764 = vmatpush.bf16.msra.mxu0 0
      %765 = vmatpush.bf16.msra.mxu0 0
      %766 = vmatpush.bf16.msra.mxu0 0
      %767 = vmatpush.bf16.msra.mxu0 0
      %768 = vmatpush.bf16.msra.mxu0 %v756
      %769 = vmatpush.bf16.msra.mxu0 %v754
      %770 = vmatmul.bf16.gmra.mxu0 %v760
      %v771 = vpop.f32.mrf.mxu0
      %v772 = vadd.f32 0.0, %v771
      %v773 = vpop.f32.mrf.mxu0
      %v774 = vadd.f32 0.0, %v773
      %775 = vdwg.mxu0
      %778 = vrot.lane.b32.xlu0 %v772, 32
      %v779 = vpop.permute.xlu0 %778
      %780 = vrot.lane.b32.xlu0 %v774, 32
      %v781 = vpop.permute.xlu0 %780
      %v784 = vadd.f32 %v736, %v779
      %v785 = vadd.f32 %v737, %v781
      %786 = vst.msk [vmem:[#allocation4] sm:$0xff] %vm731, %v784
      %787 = vst.msk [vmem:[#allocation4 + $0x8] sm:$0xff] %vm731, %v785
      %vm788 = vcmask 23568
      %789 = vst.msk [vmem:[#allocation2] sm:$0xff] %vm788, %v685
      %790 = vst.msk [vmem:[#allocation2 + $0x8] sm:$0xff] %vm788, %v686
      %v791 = vld [vmem:[%s268] sm:$0xf]
      %v792 = vld [vmem:[%s268 + $0x4] sm:$0xf]
      %v793 = vld [vmem:[%s280] sm:$0xf]
      %v794 = vld [vmem:[%s280 + $0x4] sm:$0xf]
      %v795 = vld [vmem:[%s280 + $0x8] sm:$0xf]
      %v796 = vld [vmem:[%s280 + $0xc] sm:$0xf]
      %v799 = vunpack.c.l.b16 %v791
      %v800 = vunpack.c.l.b16 %v792
      %v801 = vpack.c.b16 %v800, %v799
      %802 = vrot.lane.b32.xlu0 %v801, 80
      %v803 = vpop.permute.xlu0 %802
      %v808 = vunpack.c.l.b16 %v793
      %v809 = vunpack.c.l.b16 %v794
      %v810 = vunpack.c.l.b16 %v795
      %v811 = vunpack.c.l.b16 %v796
      %v812 = vpack.c.b16 %v809, %v808
      %v813 = vpack.c.b16 %v811, %v810
      %814 = vrot.lane.b32.xlu0 %v812, 80
      %v815 = vpop.permute.xlu0 %814
      %816 = vrot.lane.b32.xlu0 %v813, 80
      %v817 = vpop.permute.xlu0 %816
      %v819 = vsel %vm337, %v803, 0
      %v822 = vsel %vm337, %v815, 0
      %v825 = vsel %vm337, %v817, 0
      %827 = vmatpush.bf16.xpose.msra.mxu0 0
      %828 = vmatpush.bf16.xpose.msra.mxu0 0
      %829 = vmatpush.bf16.xpose.msra.mxu0 0
      %830 = vmatpush.bf16.xpose.msra.mxu0 0
      %831 = vmatpush.bf16.xpose.msra.mxu0 0
      %832 = vmatpush.bf16.xpose.msra.mxu0 0
      %833 = vmatpush.bf16.xpose.msra.mxu0 %v825
      %834 = vmatpush.bf16.xpose.msra.mxu0 %v822
      %835 = vmatmul.bf16.gmra.mxu0 %v819
      %v836 = vpop.f32.mrf.mxu0
      %v837 = vadd.f32 0.0, %v836
      %v838 = vpop.f32.mrf.mxu0
      %v839 = vadd.f32 0.0, %v838
      %840 = vdwg.mxu0
      %v841 = vld [vmem:[#allocation2] sm:$0xff]
      %v842 = vld [vmem:[#allocation2 + $0x8] sm:$0xff]
      %v843 = vsel %vm363, %v837, -inf
      %844 = vmax.xlane.f32.xlu0 %v843
      %v845 = vpop.xlane.xlu0 %844
      %v846 = vsel %vm363, %v839, -inf
      %847 = vmax.xlane.f32.xlu0 %v846
      %v848 = vpop.xlane.xlu0 %847
      %v849 = vmax.f32 %v841, %v845
      %v850 = vmax.f32 %v842, %v848
      %v851 = vsub.f32 %v841, %v849
      %v852 = vsub.f32 %v842, %v850
      %v853 = vmul.f32 %v851, 1.442695
      %v854 = vpow.pop %v853
      %v855 = vmul.f32 %v852, 1.442695
      %v856 = vpow.pop %v855
      %858 = vset.pattern.permute.xlu0 3
      %859 = vperm.xlu0 %858, %v849
      %v860 = vpop.permute.xlu0 %859
      %863 = vset.pattern.permute.xlu0 3
      %864 = vperm.xlu0 %863, %v850
      %v865 = vpop.permute.xlu0 %864
      %v867 = vsub.f32 %v837, %v860
      %v868 = vsub.f32 %v839, %v865
      %v869 = vmul.f32 %v867, 1.442695
      %v870 = vpow.pop %v869
      %v871 = vmul.f32 %v868, 1.442695
      %v872 = vpow.pop %v871
      %v873 = vld [vmem:[#allocation3] sm:$0xff]
      %v874 = vld [vmem:[#allocation3 + $0x8] sm:$0xff]
      %876 = vset.pattern.permute.xlu0 3
      %877 = vperm.xlu0 %876, %v854
      %v878 = vpop.permute.xlu0 %877
      %881 = vset.pattern.permute.xlu0 3
      %882 = vperm.xlu0 %881, %v856
      %v883 = vpop.permute.xlu0 %882
      %v885 = vmul.f32 %v878, %v873
      %v886 = vmul.f32 %v883, %v874
      %v887 = vsel %vm363, %v870, 0.0
      %888 = vadd.xlane.f32.xlu0 %v887
      %v889 = vpop.xlane.xlu0 %888
      %v890 = vsel %vm363, %v872, 0.0
      %891 = vadd.xlane.f32.xlu0 %v890
      %v892 = vpop.xlane.xlu0 %891
      %v893 = vadd.f32 %v885, %v889
      %v894 = vadd.f32 %v886, %v892
      %vm895 = vcmask 523648
      %896 = vst.msk [vmem:[#allocation3] sm:$0xff] %vm895, %v893
      %897 = vst.msk [vmem:[#allocation3 + $0x8] sm:$0xff] %vm895, %v894
      %v898 = vld [vmem:[#allocation4] sm:$0xff]
      %v899 = vld [vmem:[#allocation4 + $0x8] sm:$0xff]
      %v900 = vmul.f32 %v878, %v898
      %v901 = vmul.f32 %v883, %v899
      %v902 = vpack.c.bf16 %v872, %v870
      %v903 = vld [vmem:[%s293] sm:$0xf]
      %v904 = vld [vmem:[%s293 + $0x4] sm:$0xf]
      %v905 = vld [vmem:[%s293 + $0x8] sm:$0xf]
      %v906 = vld [vmem:[%s293 + $0xc] sm:$0xf]
      %v911 = vunpack.c.l.b16 %v903
      %v912 = vunpack.c.l.b16 %v904
      %v913 = vunpack.c.l.b16 %v905
      %v914 = vunpack.c.l.b16 %v906
      %v915 = vpack.c.b16 %v912, %v911
      %v916 = vpack.c.b16 %v914, %v913
      %917 = vrot.lane.b32.xlu0 %v915, 80
      %v918 = vpop.permute.xlu0 %917
      %919 = vrot.lane.b32.xlu0 %v916, 80
      %v920 = vpop.permute.xlu0 %919
      %v924 = vsel %vm363, %v902, 0
      %926 = vmatpush.bf16.msra.mxu0 0
      %927 = vmatpush.bf16.msra.mxu0 0
      %928 = vmatpush.bf16.msra.mxu0 0
      %929 = vmatpush.bf16.msra.mxu0 0
      %930 = vmatpush.bf16.msra.mxu0 0
      %931 = vmatpush.bf16.msra.mxu0 0
      %932 = vmatpush.bf16.msra.mxu0 %v920
      %933 = vmatpush.bf16.msra.mxu0 %v918
      %934 = vmatmul.bf16.gmra.mxu0 %v924
      %v935 = vpop.f32.mrf.mxu0
      %v936 = vadd.f32 0.0, %v935
      %v937 = vpop.f32.mrf.mxu0
      %v938 = vadd.f32 0.0, %v937
      %939 = vdwg.mxu0
      %942 = vrot.lane.b32.xlu0 %v936, 48
      %v943 = vpop.permute.xlu0 %942
      %944 = vrot.lane.b32.xlu0 %v938, 48
      %v945 = vpop.permute.xlu0 %944
      %v948 = vadd.f32 %v900, %v943
      %v949 = vadd.f32 %v901, %v945
      %950 = vst.msk [vmem:[#allocation4] sm:$0xff] %vm895, %v948
      %951 = vst.msk [vmem:[#allocation4 + $0x8] sm:$0xff] %vm895, %v949
      %vm952 = vcmask 31768
      %953 = vst.msk [vmem:[#allocation2] sm:$0xff] %vm952, %v849
      %954 = vst.msk [vmem:[#allocation2 + $0x8] sm:$0xff] %vm952, %v850
      // Predicated region
      $region37: #{cross_layer_cross_scale_projector.64} parent=31 // pred_check
        %p955 = pneg %p304
      $region38: #{cross_layer_cross_scale_projector.64} parent=31 // pred_check_branch
        %957 = sbr.rel (%p955) target = $region40
      $region39: #{cross_layer_cross_scale_projector.64} parent=31 // pred_region
        %v958 = vld [vmem:[#allocation4] sm:$0xff]
        %v959 = vld [vmem:[#allocation4 + $0x8] sm:$0xff]
        %v960 = vld [vmem:[#allocation3] sm:$0xff]
        %v961 = vld [vmem:[#allocation3 + $0x8] sm:$0xff]
        %v962 = vrcp.pop %v960
        %v963 = vrcp.pop %v961
        %v964 = vmul.f32 %v958, %v962
        %v965 = vmul.f32 %v959, %v963
        %v966 = vpack.c.bf16 %v964, %v964
        %v967 = vpack.c.bf16 %v965, %v965
        %vm968 = vcmask 519168
        %969 = vst.msk [vmem:[%s302] sm:$0xf] %vm968, %v966
        %970 = vst.msk [vmem:[%s302 + $0x4] sm:$0xf] %vm968, %v967
      $region40: #{cross_layer_cross_scale_projector.64} parent=31 // pred_fallthru
        _
      %p971 = scmp.lt.s32.totalorder %s19, 1
      %s972 = scalar_select %p971, %s19, 1
      %p973 = scmp.lt.s32.totalorder %s20, 0
      %s974 = scalar_select %p973, %s20, 0
      %s975 = smul.addr %s972, 2
      %s976 = sadd.s32 %s974, %s975
      %s977 = smul.addr %s976, 4
      %s978 = scalar_lea.vmem %s3, %s977
      // Predicated region
      $region41: #{cross_layer_cross_scale_projector.64} parent=31 // pred_check
        %p979 = pneg %p141
      $region42: #{cross_layer_cross_scale_projector.64} parent=31 // pred_check_branch
        %981 = sbr.rel (%p979) target = $region44
      $region43: #{cross_layer_cross_scale_projector.64} parent=31 // pred_region
        _
      $region44: #{cross_layer_cross_scale_projector.64} parent=31 // pred_fallthru
        _
    $region32: #{cross_layer_cross_scale_projector.64} parent=5 // pred_fallthru
      _
    %p982 = scmp.le.s32.totalorder 2, %s9
    // Predicated region
    $region45: #{cross_layer_cross_scale_projector.64} parent=5 // pred_check
      %p983 = pneg %p982
    $region46: #{cross_layer_cross_scale_projector.64} parent=5 // pred_check_branch
      %985 = sbr.rel (%p983) target = $region48
    $region47: #{cross_layer_cross_scale_projector.64} parent=5 // pred_region
      %s986 = ssub.s32 %s9, 2
      // Predicated region
      $region49: #{cross_layer_cross_scale_projector.64} parent=47 // pred_check
        %p987 = pneg %p147
      $region50: #{cross_layer_cross_scale_projector.64} parent=47 // pred_check_branch
        %989 = sbr.rel (%p987) target = $region52
      $region51: #{cross_layer_cross_scale_projector.64} parent=47 // pred_region
        %p990 = scmp.lt.s32.totalorder %s22, 1
        %s991 = scalar_select %p990, %s22, 1
        %p992 = scmp.lt.s32.totalorder %s23, 0
        %s993 = scalar_select %p992, %s23, 0
        %s994 = smul.addr %s991, 2
        %s995 = sadd.s32 %s993, %s994
        %s996 = smul.addr %s995, 4
        %s997 = scalar_lea.vmem %s3, %s996
      $region52: #{cross_layer_cross_scale_projector.64} parent=47 // pred_fallthru
        _
    $region48: #{cross_layer_cross_scale_projector.64} parent=5 // pred_fallthru
      _
  $region6: #{cross_layer_cross_scale_projector.64} parent=0 // loop_footer
    %s13 = sadd.s32 1, %s9
  $region7: #{cross_layer_cross_scale_projector.64} parent=0 // loop_footer_branch
    %8 = sbr.rel target = $region3
  $region8: #{cross_layer_cross_scale_projector.64} parent=0 // loop_exit
    _

// kernel: cross_layer_cross_scale_projector.67
$region0: #{cross_layer_cross_scale_projector.67}
  #allocation0 [shape = 'u32[]', space=smem, size = 0x4, offset = 0x4, fixed_abs, tag = 'smem constant byte address 0x4 - core index']
  #allocation1 [shape = 'u32[72,128]{1,0:T(1,128)}', space=vmem, size = 0x9000, scoped, tag = 'internal scratch']
  %s0 = inlined_call_operand.vmem [shape: bf16[32,256], index: 0, kind: input, shape index: {}]
  %s1 = inlined_call_operand.vmem [shape: bf16[256,64], index: 1, kind: input, shape index: {}]
  %s2 = inlined_call_operand.vmem [shape: f32[1,64], index: 2, kind: input, shape index: {}]
  %s3 = inlined_call_operand.vmem [shape: f32[32,64], index: 3, kind: input, shape index: {}]
  %s4 = inlined_call_operand.vmem [shape: f32[32,64], index: 4, kind: output, shape index: {}]
  %s5 = sld [smem:[#allocation0]]
  $region26: #{cross_layer_cross_scale_projector.67} parent=0
    _
  %s7 = ssub.s32 1, %s5
  %s8 = scalar_select 0, %s7, %s5
  // Predicated region
  $region2: #{cross_layer_cross_scale_projector.67} parent=0 // pred_check
    _
  $region3: #{cross_layer_cross_scale_projector.67} parent=0 // pred_check_branch
    %10 = sbr.rel (0) target = $region5
  $region4: #{cross_layer_cross_scale_projector.67} parent=0 // pred_region
    _
  $region5: #{cross_layer_cross_scale_projector.67} parent=0 // pred_fallthru
    _
  // Predicated region
  $region6: #{cross_layer_cross_scale_projector.67} parent=0 // pred_check
    _
  $region7: #{cross_layer_cross_scale_projector.67} parent=0 // pred_check_branch
    %12 = sbr.rel (0) target = $region9
  $region8: #{cross_layer_cross_scale_projector.67} parent=0 // pred_region
    _
  $region9: #{cross_layer_cross_scale_projector.67} parent=0 // pred_fallthru
    _
  // Predicated region
  $region10: #{cross_layer_cross_scale_projector.67} parent=0 // pred_check
    _
  $region11: #{cross_layer_cross_scale_projector.67} parent=0 // pred_check_branch
    %14 = sbr.rel (0) target = $region13
  $region12: #{cross_layer_cross_scale_projector.67} parent=0 // pred_region
    _
  $region13: #{cross_layer_cross_scale_projector.67} parent=0 // pred_fallthru
    _
  // Predicated region
  $region14: #{cross_layer_cross_scale_projector.67} parent=0 // pred_check
    _
  $region15: #{cross_layer_cross_scale_projector.67} parent=0 // pred_check_branch
    %16 = sbr.rel (0) target = $region17
  $region16: #{cross_layer_cross_scale_projector.67} parent=0 // pred_region
    _
  $region17: #{cross_layer_cross_scale_projector.67} parent=0 // pred_fallthru
    _
  %v17 = vld [vmem:[%s0] sm:$0xff]
  %v18 = vld [vmem:[%s0 + $0x8] sm:$0xff]
  %v19 = vld [vmem:[%s0 + $0x10] sm:$0xff]
  %v20 = vld [vmem:[%s0 + $0x18] sm:$0xff]
  %v21 = vld [vmem:[%s1] sm:$0xf]
  %v22 = vld [vmem:[%s1 + $0x4] sm:$0xf]
  %v23 = vld [vmem:[%s1 + $0x8] sm:$0xf]
  %v24 = vld [vmem:[%s1 + $0xc] sm:$0xf]
  %v25 = vld [vmem:[%s1 + $0x10] sm:$0xf]
  %v26 = vld [vmem:[%s1 + $0x14] sm:$0xf]
  %v27 = vld [vmem:[%s1 + $0x18] sm:$0xf]
  %v28 = vld [vmem:[%s1 + $0x1c] sm:$0xf]
  %v29 = vld [vmem:[%s1 + $0x20] sm:$0xf]
  %v30 = vld [vmem:[%s1 + $0x24] sm:$0xf]
  %v31 = vld [vmem:[%s1 + $0x28] sm:$0xf]
  %v32 = vld [vmem:[%s1 + $0x2c] sm:$0xf]
  %v33 = vld [vmem:[%s1 + $0x30] sm:$0xf]
  %v34 = vld [vmem:[%s1 + $0x34] sm:$0xf]
  %v35 = vld [vmem:[%s1 + $0x38] sm:$0xf]
  %v36 = vld [vmem:[%s1 + $0x3c] sm:$0xf]
  %v37 = vld [vmem:[%s1 + $0x40] sm:$0xf]
  %v38 = vld [vmem:[%s1 + $0x44] sm:$0xf]
  %v39 = vld [vmem:[%s1 + $0x48] sm:$0xf]
  %v40 = vld [vmem:[%s1 + $0x4c] sm:$0xf]
  %v41 = vld [vmem:[%s1 + $0x50] sm:$0xf]
  %v42 = vld [vmem:[%s1 + $0x54] sm:$0xf]
  %v43 = vld [vmem:[%s1 + $0x58] sm:$0xf]
  %v44 = vld [vmem:[%s1 + $0x5c] sm:$0xf]
  %v45 = vld [vmem:[%s1 + $0x60] sm:$0xf]
  %v46 = vld [vmem:[%s1 + $0x64] sm:$0xf]
  %v47 = vld [vmem:[%s1 + $0x68] sm:$0xf]
  %v48 = vld [vmem:[%s1 + $0x6c] sm:$0xf]
  %v49 = vld [vmem:[%s1 + $0x70] sm:$0xf]
  %v50 = vld [vmem:[%s1 + $0x74] sm:$0xf]
  %v51 = vld [vmem:[%s1 + $0x78] sm:$0xf]
  %v52 = vld [vmem:[%s1 + $0x7c] sm:$0xf]
  %v53 = vld [vmem:[%s2] sm:$0x1]
  %v55 = vperm.slane %v53, 0
  %v61 = vunpack.c.l.b16 %v17
  %v62 = vunpack.c.h.b16 %v17
  %v63 = vunpack.c.l.b16 %v18
  %v64 = vunpack.c.h.b16 %v18
  %v65 = vunpack.c.l.b16 %v19
  %v66 = vunpack.c.h.b16 %v19
  %v67 = vunpack.c.l.b16 %v20
  %v68 = vunpack.c.h.b16 %v20
  %v69 = vpack.c.b16 %v63, %v61
  %v70 = vpack.c.b16 %v64, %v62
  %v71 = vpack.c.b16 %v67, %v65
  %v72 = vpack.c.b16 %v68, %v66
  %v109 = vunpack.c.l.b16 %v21
  %v110 = vunpack.c.l.b16 %v22
  %v111 = vunpack.c.l.b16 %v23
  %v112 = vunpack.c.l.b16 %v24
  %v113 = vunpack.c.l.b16 %v25
  %v114 = vunpack.c.l.b16 %v26
  %v115 = vunpack.c.l.b16 %v27
  %v116 = vunpack.c.l.b16 %v28
  %v117 = vunpack.c.l.b16 %v29
  %v118 = vunpack.c.l.b16 %v30
  %v119 = vunpack.c.l.b16 %v31
  %v120 = vunpack.c.l.b16 %v32
  %v121 = vunpack.c.l.b16 %v33
  %v122 = vunpack.c.l.b16 %v34
  %v123 = vunpack.c.l.b16 %v35
  %v124 = vunpack.c.l.b16 %v36
  %v125 = vunpack.c.l.b16 %v37
  %v126 = vunpack.c.l.b16 %v38
  %v127 = vunpack.c.l.b16 %v39
  %v128 = vunpack.c.l.b16 %v40
  %v129 = vunpack.c.l.b16 %v41
  %v130 = vunpack.c.l.b16 %v42
  %v131 = vunpack.c.l.b16 %v43
  %v132 = vunpack.c.l.b16 %v44
  %v133 = vunpack.c.l.b16 %v45
  %v134 = vunpack.c.l.b16 %v46
  %v135 = vunpack.c.l.b16 %v47
  %v136 = vunpack.c.l.b16 %v48
  %v137 = vunpack.c.l.b16 %v49
  %v138 = vunpack.c.l.b16 %v50
  %v139 = vunpack.c.l.b16 %v51
  %v140 = vunpack.c.l.b16 %v52
  %v141 = vpack.c.b16 %v110, %v109
  %v142 = vpack.c.b16 %v112, %v111
  %v143 = vpack.c.b16 %v114, %v113
  %v144 = vpack.c.b16 %v116, %v115
  %v145 = vpack.c.b16 %v118, %v117
  %v146 = vpack.c.b16 %v120, %v119
  %v147 = vpack.c.b16 %v122, %v121
  %v148 = vpack.c.b16 %v124, %v123
  %v149 = vpack.c.b16 %v126, %v125
  %v150 = vpack.c.b16 %v128, %v127
  %v151 = vpack.c.b16 %v130, %v129
  %v152 = vpack.c.b16 %v132, %v131
  %v153 = vpack.c.b16 %v134, %v133
  %v154 = vpack.c.b16 %v136, %v135
  %v155 = vpack.c.b16 %v138, %v137
  %v156 = vpack.c.b16 %v140, %v139
  %173 = vmatpush.bf16.msra.mxu0 %v148
  %174 = vmatpush.bf16.msra.mxu0 %v147
  %175 = vmatpush.bf16.msra.mxu0 %v146
  %176 = vmatpush.bf16.msra.mxu0 %v145
  %177 = vmatpush.bf16.msra.mxu0 %v144
  %178 = vmatpush.bf16.msra.mxu0 %v143
  %179 = vmatpush.bf16.msra.mxu0 %v142
  %180 = vmatpush.bf16.msra.mxu0 %v141
  %181 = vmatmul.bf16.gmra.mxu0 %v69
  %v182 = vpop.f32.mrf.mxu0
  %v183 = vadd.f32 %v55, %v182
  %v184 = vpop.f32.mrf.mxu0
  %v185 = vadd.f32 %v55, %v184
  %186 = vmatmul.bf16.gmra.mxu0 %v71
  %v187 = vpop.f32.mrf.mxu0
  %v188 = vadd.f32 %v55, %v187
  %v189 = vpop.f32.mrf.mxu0
  %v190 = vadd.f32 %v55, %v189
  %191 = vdwg.mxu0
  %192 = vmatpush.bf16.msra.mxu0 %v156
  %193 = vmatpush.bf16.msra.mxu0 %v155
  %194 = vmatpush.bf16.msra.mxu0 %v154
  %195 = vmatpush.bf16.msra.mxu0 %v153
  %196 = vmatpush.bf16.msra.mxu0 %v152
  %197 = vmatpush.bf16.msra.mxu0 %v151
  %198 = vmatpush.bf16.msra.mxu0 %v150
  %199 = vmatpush.bf16.msra.mxu0 %v149
  %200 = vmatmul.bf16.gmra.mxu0 %v70
  %v201 = vpop.f32.mrf.mxu0
  %v202 = vadd.f32 %v183, %v201
  %v203 = vpop.f32.mrf.mxu0
  %v204 = vadd.f32 %v185, %v203
  %205 = vmatmul.bf16.gmra.mxu0 %v72
  %v206 = vpop.f32.mrf.mxu0
  %v207 = vadd.f32 %v188, %v206
  %v208 = vpop.f32.mrf.mxu0
  %v209 = vadd.f32 %v190, %v208
  %210 = vdwg.mxu0
  %v211 = vld [vmem:[%s3] sm:$0xff]
  %v212 = vld [vmem:[%s3 + $0x8] sm:$0xff]
  %v213 = vld [vmem:[%s3 + $0x10] sm:$0xff]
  %v214 = vld [vmem:[%s3 + $0x18] sm:$0xff]
  %v215 = vadd.f32 %v202, %v211
  %v216 = vadd.f32 %v204, %v212
  %v217 = vadd.f32 %v207, %v213
  %v218 = vadd.f32 %v209, %v214
  %vm219 = vcmask 523264
  %220 = vst.msk [vmem:[%s4] sm:$0xff] %vm219, %v215
  %221 = vst.msk [vmem:[%s4 + $0x8] sm:$0xff] %vm219, %v216
  %222 = vst.msk [vmem:[%s4 + $0x10] sm:$0xff] %vm219, %v217
  %223 = vst.msk [vmem:[%s4 + $0x18] sm:$0xff] %vm219, %v218
  // Predicated region
  $region18: #{cross_layer_cross_scale_projector.67} parent=0 // pred_check
    _
  $region19: #{cross_layer_cross_scale_projector.67} parent=0 // pred_check_branch
    %225 = sbr.rel (0) target = $region21
  $region20: #{cross_layer_cross_scale_projector.67} parent=0 // pred_region
    _
  $region21: #{cross_layer_cross_scale_projector.67} parent=0 // pred_fallthru
    _
  // Predicated region
  $region22: #{cross_layer_cross_scale_projector.67} parent=0 // pred_check
    _
  $region23: #{cross_layer_cross_scale_projector.67} parent=0 // pred_check_branch
    %227 = sbr.rel (0) target = $region25
  $region24: #{cross_layer_cross_scale_projector.67} parent=0 // pred_region
    _
  $region25: #{cross_layer_cross_scale_projector.67} parent=0 // pred_fallthru
    _

// kernel: cross_layer_cross_scale_projector.66
$region0: #{cross_layer_cross_scale_projector.66}
  #allocation0 [shape = 'u32[]', space=smem, size = 0x4, offset = 0x4, fixed_abs, tag = 'smem constant byte address 0x4 - core index']
  #allocation1 [shape = 'u32[72,128]{1,0:T(1,128)}', space=vmem, size = 0x9000, scoped, tag = 'internal scratch']
  #allocation2 [shape = 'bf16[32,64]{1,0:T(8,128)(2,1)}', space=vmem, size = 0x2000, scoped, tag = 'scratch operand']
  %s0 = inlined_call_operand.vmem [shape: f32[32,64], index: 0, kind: input, shape index: {}]
  %s1 = inlined_call_operand.vmem [shape: f32[1,64], index: 1, kind: input, shape index: {}]
  %s2 = inlined_call_operand.vmem [shape: f32[1,64], index: 2, kind: input, shape index: {}]
  %s3 = inlined_call_operand.vmem [shape: bf16[64,256], index: 3, kind: input, shape index: {}]
  %s4 = inlined_call_operand.vmem [shape: f32[1,256], index: 4, kind: input, shape index: {}]
  %s5 = inlined_call_operand.vmem [shape: bf16[32,256], index: 5, kind: output, shape index: {}]
  %s6 = sld [smem:[#allocation0]]
  $region34: #{cross_layer_cross_scale_projector.66} parent=0
    _
  %s8 = ssub.s32 1, %s6
  %s9 = scalar_select 0, %s8, %s6
  // Predicated region
  $region2: #{cross_layer_cross_scale_projector.66} parent=0 // pred_check
    _
  $region3: #{cross_layer_cross_scale_projector.66} parent=0 // pred_check_branch
    %11 = sbr.rel (0) target = $region5
  $region4: #{cross_layer_cross_scale_projector.66} parent=0 // pred_region
    _
  $region5: #{cross_layer_cross_scale_projector.66} parent=0 // pred_fallthru
    _
  // Predicated region
  $region6: #{cross_layer_cross_scale_projector.66} parent=0 // pred_check
    _
  $region7: #{cross_layer_cross_scale_projector.66} parent=0 // pred_check_branch
    %13 = sbr.rel (0) target = $region9
  $region8: #{cross_layer_cross_scale_projector.66} parent=0 // pred_region
    _
  $region9: #{cross_layer_cross_scale_projector.66} parent=0 // pred_fallthru
    _
  // Predicated region
  $region10: #{cross_layer_cross_scale_projector.66} parent=0 // pred_check
    _
  $region11: #{cross_layer_cross_scale_projector.66} parent=0 // pred_check_branch
    %15 = sbr.rel (0) target = $region13
  $region12: #{cross_layer_cross_scale_projector.66} parent=0 // pred_region
    _
  $region13: #{cross_layer_cross_scale_projector.66} parent=0 // pred_fallthru
    _
  // Predicated region
  $region14: #{cross_layer_cross_scale_projector.66} parent=0 // pred_check
    _
  $region15: #{cross_layer_cross_scale_projector.66} parent=0 // pred_check_branch
    %17 = sbr.rel (0) target = $region17
  $region16: #{cross_layer_cross_scale_projector.66} parent=0 // pred_region
    _
  $region17: #{cross_layer_cross_scale_projector.66} parent=0 // pred_fallthru
    _
  // Predicated region
  $region18: #{cross_layer_cross_scale_projector.66} parent=0 // pred_check
    _
  $region19: #{cross_layer_cross_scale_projector.66} parent=0 // pred_check_branch
    %19 = sbr.rel (0) target = $region21
  $region20: #{cross_layer_cross_scale_projector.66} parent=0 // pred_region
    _
  $region21: #{cross_layer_cross_scale_projector.66} parent=0 // pred_fallthru
    _
  %p21 = scmp.eq.s32.totalorder 0, 0
  // Predicated region
  $region22: #{cross_layer_cross_scale_projector.66} parent=0 // pred_check
    %p22 = pneg %p21
  $region23: #{cross_layer_cross_scale_projector.66} parent=0 // pred_check_branch
    %24 = sbr.rel (%p22) target = $region25
  $region24: #{cross_layer_cross_scale_projector.66} parent=0 // pred_region
    %v25 = vld [vmem:[%s0] sm:$0xff]
    %v26 = vld [vmem:[%s0 + $0x8] sm:$0xff]
    %v27 = vld [vmem:[%s0 + $0x10] sm:$0xff]
    %v28 = vld [vmem:[%s0 + $0x18] sm:$0xff]
    %vm29 = vcmask 523264
    %v30 = vsel %vm29, %v25, 0.0
    %31 = vadd.xlane.f32.xlu0 %v30
    %v32 = vpop.xlane.xlu0 %31
    %v33 = vsel %vm29, %v26, 0.0
    %34 = vadd.xlane.f32.xlu0 %v33
    %v35 = vpop.xlane.xlu0 %34
    %v36 = vsel %vm29, %v27, 0.0
    %37 = vadd.xlane.f32.xlu0 %v36
    %v38 = vpop.xlane.xlu0 %37
    %v39 = vsel %vm29, %v28, 0.0
    %40 = vadd.xlane.f32.xlu0 %v39
    %v41 = vpop.xlane.xlu0 %40
    %v42 = vrcp.pop 64.0
    %v43 = vmul.f32 64.0, %v42
    %v44 = vsub.f32 1.0, %v43
    %v45 = vmul.f32 %v42, %v44
    %v46 = vadd.f32 %v42, %v45
    %vm47 = vweird.f32 %v42
    %v48 = vsel %vm47, %v42, %v46
    %v49 = vmul.f32 %v32, %v48
    %v50 = vmul.f32 %v35, %v48
    %v51 = vmul.f32 %v38, %v48
    %v52 = vmul.f32 %v41, %v48
    %v53 = vsub.f32 %v25, %v49
    %v54 = vsub.f32 %v26, %v50
    %v55 = vsub.f32 %v27, %v51
    %v56 = vsub.f32 %v28, %v52
    %v57 = vmul.f32 %v53, %v53
    %v58 = vmul.f32 %v54, %v54
    %v59 = vmul.f32 %v55, %v55
    %v60 = vmul.f32 %v56, %v56
    %v61 = vsel %vm29, %v57, 0.0
    %62 = vadd.xlane.f32.xlu0 %v61
    %v63 = vpop.xlane.xlu0 %62
    %v64 = vsel %vm29, %v58, 0.0
    %65 = vadd.xlane.f32.xlu0 %v64
    %v66 = vpop.xlane.xlu0 %65
    %v67 = vsel %vm29, %v59, 0.0
    %68 = vadd.xlane.f32.xlu0 %v67
    %v69 = vpop.xlane.xlu0 %68
    %v70 = vsel %vm29, %v60, 0.0
    %71 = vadd.xlane.f32.xlu0 %v70
    %v72 = vpop.xlane.xlu0 %71
    %v73 = vmul.f32 %v63, %v48
    %v74 = vmul.f32 %v66, %v48
    %v75 = vmul.f32 %v69, %v48
    %v76 = vmul.f32 %v72, %v48
    %v77 = vadd.f32 %v73, 1e-05
    %v78 = vadd.f32 %v74, 1e-05
    %v79 = vadd.f32 %v75, 1e-05
    %v80 = vadd.f32 %v76, 1e-05
    %v81 = vrsqrt.pop %v77
    %v82 = vmul.f32 %v81, %v77
    %v83 = vmul.f32 %v82, %v81
    %v84 = vmul.f32 0.5, %v83
    %v85 = vsub.f32 1.5, %v84
    %v86 = vmul.f32 %v81, %v85
    %vm87 = vweird.f32 %v77
    %vm88 = vweird.f32 %v81
    %vm89 = vmor %vm87, %vm88
    %v90 = vsel %vm89, %v81, %v86
    %v91 = vrsqrt.pop %v78
    %v92 = vmul.f32 %v91, %v78
    %v93 = vmul.f32 %v92, %v91
    %v94 = vmul.f32 0.5, %v93
    %v95 = vsub.f32 1.5, %v94
    %v96 = vmul.f32 %v91, %v95
    %vm97 = vweird.f32 %v78
    %vm98 = vweird.f32 %v91
    %vm99 = vmor %vm97, %vm98
    %v100 = vsel %vm99, %v91, %v96
    %v101 = vrsqrt.pop %v79
    %v102 = vmul.f32 %v101, %v79
    %v103 = vmul.f32 %v102, %v101
    %v104 = vmul.f32 0.5, %v103
    %v105 = vsub.f32 1.5, %v104
    %v106 = vmul.f32 %v101, %v105
    %vm107 = vweird.f32 %v79
    %vm108 = vweird.f32 %v101
    %vm109 = vmor %vm107, %vm108
    %v110 = vsel %vm109, %v101, %v106
    %v111 = vrsqrt.pop %v80
    %v112 = vmul.f32 %v111, %v80
    %v113 = vmul.f32 %v112, %v111
    %v114 = vmul.f32 0.5, %v113
    %v115 = vsub.f32 1.5, %v114
    %v116 = vmul.f32 %v111, %v115
    %vm117 = vweird.f32 %v80
    %vm118 = vweird.f32 %v111
    %vm119 = vmor %vm117, %vm118
    %v120 = vsel %vm119, %v111, %v116
    %v121 = vmul.f32 %v53, %v90
    %v122 = vmul.f32 %v54, %v100
    %v123 = vmul.f32 %v55, %v110
    %v124 = vmul.f32 %v56, %v120
    %v125 = vld [vmem:[%s1] sm:$0x1]
    %v127 = vperm.slane %v125, 0
    %v129 = vmul.f32 %v121, %v127
    %v130 = vmul.f32 %v122, %v127
    %v131 = vmul.f32 %v123, %v127
    %v132 = vmul.f32 %v124, %v127
    %v133 = vld [vmem:[%s2] sm:$0x1]
    %v135 = vperm.slane %v133, 0
    %v137 = vadd.f32 %v129, %v135
    %v138 = vadd.f32 %v130, %v135
    %v139 = vadd.f32 %v131, %v135
    %v140 = vadd.f32 %v132, %v135
    %v141 = vpack.c.bf16 %v137, %v137
    %v142 = vpack.c.bf16 %v138, %v138
    %v143 = vpack.c.bf16 %v139, %v139
    %v144 = vpack.c.bf16 %v140, %v140
    %vm145 = vcmask 519168
    %146 = vst.msk [vmem:[#allocation2] sm:$0xf] %vm145, %v141
    %147 = vst.msk [vmem:[#allocation2 + $0x4] sm:$0xf] %vm145, %v142
    %148 = vst.msk [vmem:[#allocation2 + $0x8] sm:$0xf] %vm145, %v143
    %149 = vst.msk [vmem:[#allocation2 + $0xc] sm:$0xf] %vm145, %v144
  $region25: #{cross_layer_cross_scale_projector.66} parent=0 // pred_fallthru
    _
  %v150 = vld [vmem:[#allocation2] sm:$0xf]
  %v151 = vld [vmem:[#allocation2 + $0x4] sm:$0xf]
  %v152 = vld [vmem:[#allocation2 + $0x8] sm:$0xf]
  %v153 = vld [vmem:[#allocation2 + $0xc] sm:$0xf]
  %v154 = vld [vmem:[%s3] sm:$0xff]
  %v155 = vld [vmem:[%s3 + $0x8] sm:$0xff]
  %v156 = vld [vmem:[%s3 + $0x10] sm:$0xff]
  %v157 = vld [vmem:[%s3 + $0x18] sm:$0xff]
  %v158 = vld [vmem:[%s3 + $0x20] sm:$0xff]
  %v159 = vld [vmem:[%s3 + $0x28] sm:$0xff]
  %v160 = vld [vmem:[%s3 + $0x30] sm:$0xff]
  %v161 = vld [vmem:[%s3 + $0x38] sm:$0xff]
  %v162 = vld [vmem:[%s4] sm:$0x3]
  %v164 = vperm.slane %v162, 0
  %v165 = vperm.slane %v162, 1
  %v172 = vunpack.c.l.b16 %v150
  %v173 = vunpack.c.l.b16 %v151
  %v174 = vunpack.c.l.b16 %v152
  %v175 = vunpack.c.l.b16 %v153
  %v176 = vpack.c.b16 %v173, %v172
  %v177 = vpack.c.b16 %v175, %v174
  %v186 = vunpack.c.l.b16 %v154
  %v187 = vunpack.c.h.b16 %v154
  %v188 = vunpack.c.l.b16 %v155
  %v189 = vunpack.c.h.b16 %v155
  %v190 = vunpack.c.l.b16 %v156
  %v191 = vunpack.c.h.b16 %v156
  %v192 = vunpack.c.l.b16 %v157
  %v193 = vunpack.c.h.b16 %v157
  %v194 = vunpack.c.l.b16 %v158
  %v195 = vunpack.c.h.b16 %v158
  %v196 = vunpack.c.l.b16 %v159
  %v197 = vunpack.c.h.b16 %v159
  %v198 = vunpack.c.l.b16 %v160
  %v199 = vunpack.c.h.b16 %v160
  %v200 = vunpack.c.l.b16 %v161
  %v201 = vunpack.c.h.b16 %v161
  %v202 = vpack.c.b16 %v188, %v186
  %v203 = vpack.c.b16 %v189, %v187
  %v204 = vpack.c.b16 %v192, %v190
  %v205 = vpack.c.b16 %v193, %v191
  %v206 = vpack.c.b16 %v196, %v194
  %v207 = vpack.c.b16 %v197, %v195
  %v208 = vpack.c.b16 %v200, %v198
  %v209 = vpack.c.b16 %v201, %v199
  %vm218 = vcmask 523264
  %v220 = vsel %vm218, %v176, 0
  %v223 = vsel %vm218, %v177, 0
  %225 = vmatpush.bf16.msra.mxu0 0
  %226 = vmatpush.bf16.msra.mxu0 0
  %227 = vmatpush.bf16.msra.mxu0 0
  %228 = vmatpush.bf16.msra.mxu0 0
  %229 = vmatpush.bf16.msra.mxu0 %v208
  %230 = vmatpush.bf16.msra.mxu0 %v206
  %231 = vmatpush.bf16.msra.mxu0 %v204
  %232 = vmatpush.bf16.msra.mxu0 %v202
  %233 = vmatmul.bf16.gmra.mxu0 %v220
  %v234 = vpop.f32.mrf.mxu0
  %v235 = vadd.f32 %v164, %v234
  %v236 = vpop.f32.mrf.mxu0
  %v237 = vadd.f32 %v164, %v236
  %238 = vmatmul.bf16.gmra.mxu0 %v223
  %v239 = vpop.f32.mrf.mxu0
  %v240 = vadd.f32 %v164, %v239
  %v241 = vpop.f32.mrf.mxu0
  %v242 = vadd.f32 %v164, %v241
  %243 = vdwg.mxu0
  %244 = vmatpush.bf16.msra.mxu0 0
  %245 = vmatpush.bf16.msra.mxu0 0
  %246 = vmatpush.bf16.msra.mxu0 0
  %247 = vmatpush.bf16.msra.mxu0 0
  %248 = vmatpush.bf16.msra.mxu0 %v209
  %249 = vmatpush.bf16.msra.mxu0 %v207
  %250 = vmatpush.bf16.msra.mxu0 %v205
  %251 = vmatpush.bf16.msra.mxu0 %v203
  %252 = vmatmul.bf16.gmra.mxu0 %v220
  %v253 = vpop.f32.mrf.mxu0
  %v254 = vadd.f32 %v165, %v253
  %v255 = vpop.f32.mrf.mxu0
  %v256 = vadd.f32 %v165, %v255
  %257 = vmatmul.bf16.gmra.mxu0 %v223
  %v258 = vpop.f32.mrf.mxu0
  %v259 = vadd.f32 %v165, %v258
  %v260 = vpop.f32.mrf.mxu0
  %v261 = vadd.f32 %v165, %v260
  %262 = vdwg.mxu0
  %v263 = vmul.f32 %v235, 0.5
  %v264 = vmul.f32 %v254, 0.5
  %v265 = vmul.f32 %v237, 0.5
  %v266 = vmul.f32 %v256, 0.5
  %v267 = vmul.f32 %v240, 0.5
  %v268 = vmul.f32 %v259, 0.5
  %v269 = vmul.f32 %v242, 0.5
  %v270 = vmul.f32 %v261, 0.5
  %v271 = vmul.f32 %v235, 0.044715
  %v272 = vmul.f32 %v254, 0.044715
  %v273 = vmul.f32 %v237, 0.044715
  %v274 = vmul.f32 %v256, 0.044715
  %v275 = vmul.f32 %v240, 0.044715
  %v276 = vmul.f32 %v259, 0.044715
  %v277 = vmul.f32 %v242, 0.044715
  %v278 = vmul.f32 %v261, 0.044715
  %v279 = vmul.f32 %v271, %v235
  %v280 = vmul.f32 %v272, %v254
  %v281 = vmul.f32 %v273, %v237
  %v282 = vmul.f32 %v274, %v256
  %v283 = vmul.f32 %v275, %v240
  %v284 = vmul.f32 %v276, %v259
  %v285 = vmul.f32 %v277, %v242
  %v286 = vmul.f32 %v278, %v261
  %v287 = vmul.f32 %v279, %v235
  %v288 = vmul.f32 %v280, %v254
  %v289 = vmul.f32 %v281, %v237
  %v290 = vmul.f32 %v282, %v256
  %v291 = vmul.f32 %v283, %v240
  %v292 = vmul.f32 %v284, %v259
  %v293 = vmul.f32 %v285, %v242
  %v294 = vmul.f32 %v286, %v261
  %v295 = vadd.f32 %v235, %v287
  %v296 = vadd.f32 %v254, %v288
  %v297 = vadd.f32 %v237, %v289
  %v298 = vadd.f32 %v256, %v290
  %v299 = vadd.f32 %v240, %v291
  %v300 = vadd.f32 %v259, %v292
  %v301 = vadd.f32 %v242, %v293
  %v302 = vadd.f32 %v261, %v294
  %v303 = vmul.f32 %v295, 0.7978846
  %v304 = vmul.f32 %v296, 0.7978846
  %v305 = vmul.f32 %v297, 0.7978846
  %v306 = vmul.f32 %v298, 0.7978846
  %v307 = vmul.f32 %v299, 0.7978846
  %v308 = vmul.f32 %v300, 0.7978846
  %v309 = vmul.f32 %v301, 0.7978846
  %v310 = vmul.f32 %v302, 0.7978846
  %v311 = vtanh.pop %v303
  %v312 = vtanh.pop %v304
  %v313 = vtanh.pop %v305
  %v314 = vtanh.pop %v306
  %v315 = vtanh.pop %v307
  %v316 = vtanh.pop %v308
  %v317 = vtanh.pop %v309
  %v318 = vtanh.pop %v310
  %v319 = vadd.f32 %v311, 1.0
  %v320 = vadd.f32 %v312, 1.0
  %v321 = vadd.f32 %v313, 1.0
  %v322 = vadd.f32 %v314, 1.0
  %v323 = vadd.f32 %v315, 1.0
  %v324 = vadd.f32 %v316, 1.0
  %v325 = vadd.f32 %v317, 1.0
  %v326 = vadd.f32 %v318, 1.0
  %v327 = vmul.f32 %v263, %v319
  %v328 = vmul.f32 %v264, %v320
  %v329 = vmul.f32 %v265, %v321
  %v330 = vmul.f32 %v266, %v322
  %v331 = vmul.f32 %v267, %v323
  %v332 = vmul.f32 %v268, %v324
  %v333 = vmul.f32 %v269, %v325
  %v334 = vmul.f32 %v270, %v326
  %v335 = vpack.c.bf16 %v328, %v327
  %v336 = vpack.c.bf16 %v330, %v329
  %v337 = vpack.c.bf16 %v332, %v331
  %v338 = vpack.c.bf16 %v334, %v333
  %339 = vst [vmem:[%s5] sm:$0xff] %v335
  %340 = vst [vmem:[%s5 + $0x8] sm:$0xff] %v336
  %341 = vst [vmem:[%s5 + $0x10] sm:$0xff] %v337
  %342 = vst [vmem:[%s5 + $0x18] sm:$0xff] %v338
  // Predicated region
  $region26: #{cross_layer_cross_scale_projector.66} parent=0 // pred_check
    _
  $region27: #{cross_layer_cross_scale_projector.66} parent=0 // pred_check_branch
    %344 = sbr.rel (0) target = $region29
  $region28: #{cross_layer_cross_scale_projector.66} parent=0 // pred_region
    _
  $region29: #{cross_layer_cross_scale_projector.66} parent=0 // pred_fallthru
    _
  // Predicated region
  $region30: #{cross_layer_cross_scale_projector.66} parent=0 // pred_check
    _
  $region31: #{cross_layer_cross_scale_projector.66} parent=0 // pred_check_branch
    %346 = sbr.rel (0) target = $region33
  $region32: #{cross_layer_cross_scale_projector.66} parent=0 // pred_region
    _
  $region33: #{cross_layer_cross_scale_projector.66} parent=0 // pred_fallthru
    _

// kernel: cross_layer_cross_scale_projector.68
$region0: #{cross_layer_cross_scale_projector.68}
  #allocation0 [shape = 'u32[]', space=smem, size = 0x4, offset = 0x4, fixed_abs, tag = 'smem constant byte address 0x4 - core index']
  #allocation1 [shape = 'u32[72,128]{1,0:T(1,128)}', space=vmem, size = 0x9000, scoped, tag = 'internal scratch']
  #allocation2 [shape = 'bf16[32,64]{1,0:T(8,128)(2,1)}', space=vmem, size = 0x2000, scoped, tag = 'scratch operand']
  %s0 = inlined_call_operand.vmem [shape: f32[32,64], index: 0, kind: input, shape index: {}]
  %s1 = inlined_call_operand.vmem [shape: f32[1,64], index: 1, kind: input, shape index: {}]
  %s2 = inlined_call_operand.vmem [shape: f32[1,64], index: 2, kind: input, shape index: {}]
  %s3 = inlined_call_operand.vmem [shape: bf16[64,64], index: 3, kind: input, shape index: {}]
  %s4 = inlined_call_operand.vmem [shape: f32[1,64], index: 4, kind: input, shape index: {}]
  %s5 = inlined_call_operand.vmem [shape: bf16[32,64], index: 5, kind: output, shape index: {}]
  %s6 = sld [smem:[#allocation0]]
  $region34: #{cross_layer_cross_scale_projector.68} parent=0
    _
  %s8 = ssub.s32 1, %s6
  %s9 = scalar_select 0, %s8, %s6
  // Predicated region
  $region2: #{cross_layer_cross_scale_projector.68} parent=0 // pred_check
    _
  $region3: #{cross_layer_cross_scale_projector.68} parent=0 // pred_check_branch
    %11 = sbr.rel (0) target = $region5
  $region4: #{cross_layer_cross_scale_projector.68} parent=0 // pred_region
    _
  $region5: #{cross_layer_cross_scale_projector.68} parent=0 // pred_fallthru
    _
  // Predicated region
  $region6: #{cross_layer_cross_scale_projector.68} parent=0 // pred_check
    _
  $region7: #{cross_layer_cross_scale_projector.68} parent=0 // pred_check_branch
    %13 = sbr.rel (0) target = $region9
  $region8: #{cross_layer_cross_scale_projector.68} parent=0 // pred_region
    _
  $region9: #{cross_layer_cross_scale_projector.68} parent=0 // pred_fallthru
    _
  // Predicated region
  $region10: #{cross_layer_cross_scale_projector.68} parent=0 // pred_check
    _
  $region11: #{cross_layer_cross_scale_projector.68} parent=0 // pred_check_branch
    %15 = sbr.rel (0) target = $region13
  $region12: #{cross_layer_cross_scale_projector.68} parent=0 // pred_region
    _
  $region13: #{cross_layer_cross_scale_projector.68} parent=0 // pred_fallthru
    _
  // Predicated region
  $region14: #{cross_layer_cross_scale_projector.68} parent=0 // pred_check
    _
  $region15: #{cross_layer_cross_scale_projector.68} parent=0 // pred_check_branch
    %17 = sbr.rel (0) target = $region17
  $region16: #{cross_layer_cross_scale_projector.68} parent=0 // pred_region
    _
  $region17: #{cross_layer_cross_scale_projector.68} parent=0 // pred_fallthru
    _
  // Predicated region
  $region18: #{cross_layer_cross_scale_projector.68} parent=0 // pred_check
    _
  $region19: #{cross_layer_cross_scale_projector.68} parent=0 // pred_check_branch
    %19 = sbr.rel (0) target = $region21
  $region20: #{cross_layer_cross_scale_projector.68} parent=0 // pred_region
    _
  $region21: #{cross_layer_cross_scale_projector.68} parent=0 // pred_fallthru
    _
  %p21 = scmp.eq.s32.totalorder 0, 0
  // Predicated region
  $region22: #{cross_layer_cross_scale_projector.68} parent=0 // pred_check
    %p22 = pneg %p21
  $region23: #{cross_layer_cross_scale_projector.68} parent=0 // pred_check_branch
    %24 = sbr.rel (%p22) target = $region25
  $region24: #{cross_layer_cross_scale_projector.68} parent=0 // pred_region
    %v25 = vld [vmem:[%s0] sm:$0xff]
    %v26 = vld [vmem:[%s0 + $0x8] sm:$0xff]
    %v27 = vld [vmem:[%s0 + $0x10] sm:$0xff]
    %v28 = vld [vmem:[%s0 + $0x18] sm:$0xff]
    %vm29 = vcmask 523264
    %v30 = vsel %vm29, %v25, 0.0
    %31 = vadd.xlane.f32.xlu0 %v30
    %v32 = vpop.xlane.xlu0 %31
    %v33 = vsel %vm29, %v26, 0.0
    %34 = vadd.xlane.f32.xlu0 %v33
    %v35 = vpop.xlane.xlu0 %34
    %v36 = vsel %vm29, %v27, 0.0
    %37 = vadd.xlane.f32.xlu0 %v36
    %v38 = vpop.xlane.xlu0 %37
    %v39 = vsel %vm29, %v28, 0.0
    %40 = vadd.xlane.f32.xlu0 %v39
    %v41 = vpop.xlane.xlu0 %40
    %v42 = vrcp.pop 64.0
    %v43 = vmul.f32 64.0, %v42
    %v44 = vsub.f32 1.0, %v43
    %v45 = vmul.f32 %v42, %v44
    %v46 = vadd.f32 %v42, %v45
    %vm47 = vweird.f32 %v42
    %v48 = vsel %vm47, %v42, %v46
    %v49 = vmul.f32 %v32, %v48
    %v50 = vmul.f32 %v35, %v48
    %v51 = vmul.f32 %v38, %v48
    %v52 = vmul.f32 %v41, %v48
    %v53 = vsub.f32 %v25, %v49
    %v54 = vsub.f32 %v26, %v50
    %v55 = vsub.f32 %v27, %v51
    %v56 = vsub.f32 %v28, %v52
    %v57 = vmul.f32 %v53, %v53
    %v58 = vmul.f32 %v54, %v54
    %v59 = vmul.f32 %v55, %v55
    %v60 = vmul.f32 %v56, %v56
    %v61 = vsel %vm29, %v57, 0.0
    %62 = vadd.xlane.f32.xlu0 %v61
    %v63 = vpop.xlane.xlu0 %62
    %v64 = vsel %vm29, %v58, 0.0
    %65 = vadd.xlane.f32.xlu0 %v64
    %v66 = vpop.xlane.xlu0 %65
    %v67 = vsel %vm29, %v59, 0.0
    %68 = vadd.xlane.f32.xlu0 %v67
    %v69 = vpop.xlane.xlu0 %68
    %v70 = vsel %vm29, %v60, 0.0
    %71 = vadd.xlane.f32.xlu0 %v70
    %v72 = vpop.xlane.xlu0 %71
    %v73 = vmul.f32 %v63, %v48
    %v74 = vmul.f32 %v66, %v48
    %v75 = vmul.f32 %v69, %v48
    %v76 = vmul.f32 %v72, %v48
    %v77 = vadd.f32 %v73, 1e-05
    %v78 = vadd.f32 %v74, 1e-05
    %v79 = vadd.f32 %v75, 1e-05
    %v80 = vadd.f32 %v76, 1e-05
    %v81 = vrsqrt.pop %v77
    %v82 = vmul.f32 %v81, %v77
    %v83 = vmul.f32 %v82, %v81
    %v84 = vmul.f32 0.5, %v83
    %v85 = vsub.f32 1.5, %v84
    %v86 = vmul.f32 %v81, %v85
    %vm87 = vweird.f32 %v77
    %vm88 = vweird.f32 %v81
    %vm89 = vmor %vm87, %vm88
    %v90 = vsel %vm89, %v81, %v86
    %v91 = vrsqrt.pop %v78
    %v92 = vmul.f32 %v91, %v78
    %v93 = vmul.f32 %v92, %v91
    %v94 = vmul.f32 0.5, %v93
    %v95 = vsub.f32 1.5, %v94
    %v96 = vmul.f32 %v91, %v95
    %vm97 = vweird.f32 %v78
    %vm98 = vweird.f32 %v91
    %vm99 = vmor %vm97, %vm98
    %v100 = vsel %vm99, %v91, %v96
    %v101 = vrsqrt.pop %v79
    %v102 = vmul.f32 %v101, %v79
    %v103 = vmul.f32 %v102, %v101
    %v104 = vmul.f32 0.5, %v103
    %v105 = vsub.f32 1.5, %v104
    %v106 = vmul.f32 %v101, %v105
    %vm107 = vweird.f32 %v79
    %vm108 = vweird.f32 %v101
    %vm109 = vmor %vm107, %vm108
    %v110 = vsel %vm109, %v101, %v106
    %v111 = vrsqrt.pop %v80
    %v112 = vmul.f32 %v111, %v80
    %v113 = vmul.f32 %v112, %v111
    %v114 = vmul.f32 0.5, %v113
    %v115 = vsub.f32 1.5, %v114
    %v116 = vmul.f32 %v111, %v115
    %vm117 = vweird.f32 %v80
    %vm118 = vweird.f32 %v111
    %vm119 = vmor %vm117, %vm118
    %v120 = vsel %vm119, %v111, %v116
    %v121 = vmul.f32 %v53, %v90
    %v122 = vmul.f32 %v54, %v100
    %v123 = vmul.f32 %v55, %v110
    %v124 = vmul.f32 %v56, %v120
    %v125 = vld [vmem:[%s1] sm:$0x1]
    %v127 = vperm.slane %v125, 0
    %v129 = vmul.f32 %v121, %v127
    %v130 = vmul.f32 %v122, %v127
    %v131 = vmul.f32 %v123, %v127
    %v132 = vmul.f32 %v124, %v127
    %v133 = vld [vmem:[%s2] sm:$0x1]
    %v135 = vperm.slane %v133, 0
    %v137 = vadd.f32 %v129, %v135
    %v138 = vadd.f32 %v130, %v135
    %v139 = vadd.f32 %v131, %v135
    %v140 = vadd.f32 %v132, %v135
    %v141 = vpack.c.bf16 %v137, %v137
    %v142 = vpack.c.bf16 %v138, %v138
    %v143 = vpack.c.bf16 %v139, %v139
    %v144 = vpack.c.bf16 %v140, %v140
    %vm145 = vcmask 519168
    %146 = vst.msk [vmem:[#allocation2] sm:$0xf] %vm145, %v141
    %147 = vst.msk [vmem:[#allocation2 + $0x4] sm:$0xf] %vm145, %v142
    %148 = vst.msk [vmem:[#allocation2 + $0x8] sm:$0xf] %vm145, %v143
    %149 = vst.msk [vmem:[#allocation2 + $0xc] sm:$0xf] %vm145, %v144
  $region25: #{cross_layer_cross_scale_projector.68} parent=0 // pred_fallthru
    _
  %v150 = vld [vmem:[#allocation2] sm:$0xf]
  %v151 = vld [vmem:[#allocation2 + $0x4] sm:$0xf]
  %v152 = vld [vmem:[#allocation2 + $0x8] sm:$0xf]
  %v153 = vld [vmem:[#allocation2 + $0xc] sm:$0xf]
  %v154 = vld [vmem:[%s3] sm:$0xf]
  %v155 = vld [vmem:[%s3 + $0x4] sm:$0xf]
  %v156 = vld [vmem:[%s3 + $0x8] sm:$0xf]
  %v157 = vld [vmem:[%s3 + $0xc] sm:$0xf]
  %v158 = vld [vmem:[%s3 + $0x10] sm:$0xf]
  %v159 = vld [vmem:[%s3 + $0x14] sm:$0xf]
  %v160 = vld [vmem:[%s3 + $0x18] sm:$0xf]
  %v161 = vld [vmem:[%s3 + $0x1c] sm:$0xf]
  %v162 = vld [vmem:[%s4] sm:$0x1]
  %v164 = vperm.slane %v162, 0
  %v170 = vunpack.c.l.b16 %v150
  %v171 = vunpack.c.l.b16 %v151
  %v172 = vunpack.c.l.b16 %v152
  %v173 = vunpack.c.l.b16 %v153
  %v174 = vpack.c.b16 %v171, %v170
  %v175 = vpack.c.b16 %v173, %v172
  %v184 = vunpack.c.l.b16 %v154
  %v185 = vunpack.c.l.b16 %v155
  %v186 = vunpack.c.l.b16 %v156
  %v187 = vunpack.c.l.b16 %v157
  %v188 = vunpack.c.l.b16 %v158
  %v189 = vunpack.c.l.b16 %v159
  %v190 = vunpack.c.l.b16 %v160
  %v191 = vunpack.c.l.b16 %v161
  %v192 = vpack.c.b16 %v185, %v184
  %v193 = vpack.c.b16 %v187, %v186
  %v194 = vpack.c.b16 %v189, %v188
  %v195 = vpack.c.b16 %v191, %v190
  %vm200 = vcmask 523264
  %v202 = vsel %vm200, %v174, 0
  %v205 = vsel %vm200, %v175, 0
  %207 = vmatpush.bf16.msra.mxu0 0
  %208 = vmatpush.bf16.msra.mxu0 0
  %209 = vmatpush.bf16.msra.mxu0 0
  %210 = vmatpush.bf16.msra.mxu0 0
  %211 = vmatpush.bf16.msra.mxu0 %v195
  %212 = vmatpush.bf16.msra.mxu0 %v194
  %213 = vmatpush.bf16.msra.mxu0 %v193
  %214 = vmatpush.bf16.msra.mxu0 %v192
  %215 = vmatmul.bf16.gmra.mxu0 %v202
  %v216 = vpop.f32.mrf.mxu0
  %v217 = vadd.f32 %v164, %v216
  %v218 = vpop.f32.mrf.mxu0
  %v219 = vadd.f32 %v164, %v218
  %220 = vmatmul.bf16.gmra.mxu0 %v205
  %v221 = vpop.f32.mrf.mxu0
  %v222 = vadd.f32 %v164, %v221
  %v223 = vpop.f32.mrf.mxu0
  %v224 = vadd.f32 %v164, %v223
  %225 = vdwg.mxu0
  %v226 = vpack.c.bf16 %v217, %v217
  %v227 = vpack.c.bf16 %v219, %v219
  %v228 = vpack.c.bf16 %v222, %v222
  %v229 = vpack.c.bf16 %v224, %v224
  %vm230 = vcmask 519168
  %231 = vst.msk [vmem:[%s5] sm:$0xf] %vm230, %v226
  %232 = vst.msk [vmem:[%s5 + $0x4] sm:$0xf] %vm230, %v227
  %233 = vst.msk [vmem:[%s5 + $0x8] sm:$0xf] %vm230, %v228
  %234 = vst.msk [vmem:[%s5 + $0xc] sm:$0xf] %vm230, %v229
  // Predicated region
  $region26: #{cross_layer_cross_scale_projector.68} parent=0 // pred_check
    _
  $region27: #{cross_layer_cross_scale_projector.68} parent=0 // pred_check_branch
    %236 = sbr.rel (0) target = $region29
  $region28: #{cross_layer_cross_scale_projector.68} parent=0 // pred_region
    _
  $region29: #{cross_layer_cross_scale_projector.68} parent=0 // pred_fallthru
    _
  // Predicated region
  $region30: #{cross_layer_cross_scale_projector.68} parent=0 // pred_check
    _
  $region31: #{cross_layer_cross_scale_projector.68} parent=0 // pred_check_branch
    %238 = sbr.rel (0) target = $region33
  $region32: #{cross_layer_cross_scale_projector.68} parent=0 // pred_region
    _
  $region33: #{cross_layer_cross_scale_projector.68} parent=0 // pred_fallthru
    _

// kernel: cross_layer_cross_scale_projector.71
$region0: #{cross_layer_cross_scale_projector.71}
  #allocation0 [shape = 'u32[]', space=smem, size = 0x4, offset = 0x4, fixed_abs, tag = 'smem constant byte address 0x4 - core index']
  #allocation1 [shape = 'u32[72,128]{1,0:T(1,128)}', space=vmem, size = 0x9000, scoped, tag = 'internal scratch']
  %s0 = inlined_call_operand.vmem [shape: bf16[32,64], index: 0, kind: input, shape index: {}]
  %s1 = inlined_call_operand.vmem [shape: bf16[64,64], index: 1, kind: input, shape index: {}]
  %s2 = inlined_call_operand.vmem [shape: f32[1,64], index: 2, kind: input, shape index: {}]
  %s3 = inlined_call_operand.vmem [shape: f32[32,64], index: 3, kind: input, shape index: {}]
  %s4 = inlined_call_operand.vmem [shape: f32[32,64], index: 4, kind: output, shape index: {}]
  %s5 = sld [smem:[#allocation0]]
  $region26: #{cross_layer_cross_scale_projector.71} parent=0
    _
  %s7 = ssub.s32 1, %s5
  %s8 = scalar_select 0, %s7, %s5
  // Predicated region
  $region2: #{cross_layer_cross_scale_projector.71} parent=0 // pred_check
    _
  $region3: #{cross_layer_cross_scale_projector.71} parent=0 // pred_check_branch
    %10 = sbr.rel (0) target = $region5
  $region4: #{cross_layer_cross_scale_projector.71} parent=0 // pred_region
    _
  $region5: #{cross_layer_cross_scale_projector.71} parent=0 // pred_fallthru
    _
  // Predicated region
  $region6: #{cross_layer_cross_scale_projector.71} parent=0 // pred_check
    _
  $region7: #{cross_layer_cross_scale_projector.71} parent=0 // pred_check_branch
    %12 = sbr.rel (0) target = $region9
  $region8: #{cross_layer_cross_scale_projector.71} parent=0 // pred_region
    _
  $region9: #{cross_layer_cross_scale_projector.71} parent=0 // pred_fallthru
    _
  // Predicated region
  $region10: #{cross_layer_cross_scale_projector.71} parent=0 // pred_check
    _
  $region11: #{cross_layer_cross_scale_projector.71} parent=0 // pred_check_branch
    %14 = sbr.rel (0) target = $region13
  $region12: #{cross_layer_cross_scale_projector.71} parent=0 // pred_region
    _
  $region13: #{cross_layer_cross_scale_projector.71} parent=0 // pred_fallthru
    _
  // Predicated region
  $region14: #{cross_layer_cross_scale_projector.71} parent=0 // pred_check
    _
  $region15: #{cross_layer_cross_scale_projector.71} parent=0 // pred_check_branch
    %16 = sbr.rel (0) target = $region17
  $region16: #{cross_layer_cross_scale_projector.71} parent=0 // pred_region
    _
  $region17: #{cross_layer_cross_scale_projector.71} parent=0 // pred_fallthru
    _
  %v18 = vld [vmem:[%s0] sm:$0xf]
  %v19 = vld [vmem:[%s0 + $0x4] sm:$0xf]
  %v20 = vld [vmem:[%s0 + $0x8] sm:$0xf]
  %v21 = vld [vmem:[%s0 + $0xc] sm:$0xf]
  %v22 = vld [vmem:[%s1] sm:$0xf]
  %v23 = vld [vmem:[%s1 + $0x4] sm:$0xf]
  %v24 = vld [vmem:[%s1 + $0x8] sm:$0xf]
  %v25 = vld [vmem:[%s1 + $0xc] sm:$0xf]
  %v26 = vld [vmem:[%s1 + $0x10] sm:$0xf]
  %v27 = vld [vmem:[%s1 + $0x14] sm:$0xf]
  %v28 = vld [vmem:[%s1 + $0x18] sm:$0xf]
  %v29 = vld [vmem:[%s1 + $0x1c] sm:$0xf]
  %v30 = vld [vmem:[%s2] sm:$0x1]
  %v32 = vperm.slane %v30, 0
  %v38 = vunpack.c.l.b16 %v18
  %v39 = vunpack.c.l.b16 %v19
  %v40 = vunpack.c.l.b16 %v20
  %v41 = vunpack.c.l.b16 %v21
  %v42 = vpack.c.b16 %v39, %v38
  %v43 = vpack.c.b16 %v41, %v40
  %v52 = vunpack.c.l.b16 %v22
  %v53 = vunpack.c.l.b16 %v23
  %v54 = vunpack.c.l.b16 %v24
  %v55 = vunpack.c.l.b16 %v25
  %v56 = vunpack.c.l.b16 %v26
  %v57 = vunpack.c.l.b16 %v27
  %v58 = vunpack.c.l.b16 %v28
  %v59 = vunpack.c.l.b16 %v29
  %v60 = vpack.c.b16 %v53, %v52
  %v61 = vpack.c.b16 %v55, %v54
  %v62 = vpack.c.b16 %v57, %v56
  %v63 = vpack.c.b16 %v59, %v58
  %vm68 = vcmask 523264
  %v70 = vsel %vm68, %v42, 0
  %v73 = vsel %vm68, %v43, 0
  %75 = vmatpush.bf16.msra.mxu0 0
  %76 = vmatpush.bf16.msra.mxu0 0
  %77 = vmatpush.bf16.msra.mxu0 0
  %78 = vmatpush.bf16.msra.mxu0 0
  %79 = vmatpush.bf16.msra.mxu0 %v63
  %80 = vmatpush.bf16.msra.mxu0 %v62
  %81 = vmatpush.bf16.msra.mxu0 %v61
  %82 = vmatpush.bf16.msra.mxu0 %v60
  %83 = vmatmul.bf16.gmra.mxu0 %v70
  %v84 = vpop.f32.mrf.mxu0
  %v85 = vadd.f32 %v32, %v84
  %v86 = vpop.f32.mrf.mxu0
  %v87 = vadd.f32 %v32, %v86
  %88 = vmatmul.bf16.gmra.mxu0 %v73
  %v89 = vpop.f32.mrf.mxu0
  %v90 = vadd.f32 %v32, %v89
  %v91 = vpop.f32.mrf.mxu0
  %v92 = vadd.f32 %v32, %v91
  %93 = vdwg.mxu0
  %v94 = vld [vmem:[%s3] sm:$0xff]
  %v95 = vld [vmem:[%s3 + $0x8] sm:$0xff]
  %v96 = vld [vmem:[%s3 + $0x10] sm:$0xff]
  %v97 = vld [vmem:[%s3 + $0x18] sm:$0xff]
  %v98 = vadd.f32 %v85, %v94
  %v99 = vadd.f32 %v87, %v95
  %v100 = vadd.f32 %v90, %v96
  %v101 = vadd.f32 %v92, %v97
  %102 = vst.msk [vmem:[%s4] sm:$0xff] %vm68, %v98
  %103 = vst.msk [vmem:[%s4 + $0x8] sm:$0xff] %vm68, %v99
  %104 = vst.msk [vmem:[%s4 + $0x10] sm:$0xff] %vm68, %v100
  %105 = vst.msk [vmem:[%s4 + $0x18] sm:$0xff] %vm68, %v101
  // Predicated region
  $region18: #{cross_layer_cross_scale_projector.71} parent=0 // pred_check
    _
  $region19: #{cross_layer_cross_scale_projector.71} parent=0 // pred_check_branch
    %107 = sbr.rel (0) target = $region21
  $region20: #{cross_layer_cross_scale_projector.71} parent=0 // pred_region
    _
  $region21: #{cross_layer_cross_scale_projector.71} parent=0 // pred_fallthru
    _
  // Predicated region
  $region22: #{cross_layer_cross_scale_projector.71} parent=0 // pred_check
    _
  $region23: #{cross_layer_cross_scale_projector.71} parent=0 // pred_check_branch
    %109 = sbr.rel (0) target = $region25
  $region24: #{cross_layer_cross_scale_projector.71} parent=0 // pred_region
    _
  $region25: #{cross_layer_cross_scale_projector.71} parent=0 // pred_fallthru
    _

// kernel: cross_layer_cross_scale_projector.69
$region0: #{cross_layer_cross_scale_projector.69}
  #allocation0 [shape = 'u32[]', space=smem, size = 0x4, offset = 0x4, fixed_abs, tag = 'smem constant byte address 0x4 - core index']
  #allocation1 [shape = 'u32[72,128]{1,0:T(1,128)}', space=vmem, size = 0x9000, scoped, tag = 'internal scratch']
  #allocation2 [shape = 'bf16[64,64]{1,0:T(8,128)(2,1)}', space=vmem, size = 0x4000, scoped, tag = 'scratch operand']
  %s0 = inlined_call_operand.vmem [shape: f32[64,64], index: 0, kind: input, shape index: {}]
  %s1 = inlined_call_operand.vmem [shape: f32[1,64], index: 1, kind: input, shape index: {}]
  %s2 = inlined_call_operand.vmem [shape: f32[1,64], index: 2, kind: input, shape index: {}]
  %s3 = inlined_call_operand.vmem [shape: bf16[64,128], index: 3, kind: input, shape index: {}]
  %s4 = inlined_call_operand.vmem [shape: f32[1,128], index: 4, kind: input, shape index: {}]
  %s5 = inlined_call_operand.vmem [shape: bf16[64,128], index: 5, kind: output, shape index: {}]
  %s6 = sld [smem:[#allocation0]]
  $region34: #{cross_layer_cross_scale_projector.69} parent=0
    _
  %s8 = ssub.s32 1, %s6
  %s9 = scalar_select 0, %s8, %s6
  // Predicated region
  $region2: #{cross_layer_cross_scale_projector.69} parent=0 // pred_check
    _
  $region3: #{cross_layer_cross_scale_projector.69} parent=0 // pred_check_branch
    %11 = sbr.rel (0) target = $region5
  $region4: #{cross_layer_cross_scale_projector.69} parent=0 // pred_region
    _
  $region5: #{cross_layer_cross_scale_projector.69} parent=0 // pred_fallthru
    _
  // Predicated region
  $region6: #{cross_layer_cross_scale_projector.69} parent=0 // pred_check
    _
  $region7: #{cross_layer_cross_scale_projector.69} parent=0 // pred_check_branch
    %13 = sbr.rel (0) target = $region9
  $region8: #{cross_layer_cross_scale_projector.69} parent=0 // pred_region
    _
  $region9: #{cross_layer_cross_scale_projector.69} parent=0 // pred_fallthru
    _
  // Predicated region
  $region10: #{cross_layer_cross_scale_projector.69} parent=0 // pred_check
    _
  $region11: #{cross_layer_cross_scale_projector.69} parent=0 // pred_check_branch
    %15 = sbr.rel (0) target = $region13
  $region12: #{cross_layer_cross_scale_projector.69} parent=0 // pred_region
    _
  $region13: #{cross_layer_cross_scale_projector.69} parent=0 // pred_fallthru
    _
  // Predicated region
  $region14: #{cross_layer_cross_scale_projector.69} parent=0 // pred_check
    _
  $region15: #{cross_layer_cross_scale_projector.69} parent=0 // pred_check_branch
    %17 = sbr.rel (0) target = $region17
  $region16: #{cross_layer_cross_scale_projector.69} parent=0 // pred_region
    _
  $region17: #{cross_layer_cross_scale_projector.69} parent=0 // pred_fallthru
    _
  // Predicated region
  $region18: #{cross_layer_cross_scale_projector.69} parent=0 // pred_check
    _
  $region19: #{cross_layer_cross_scale_projector.69} parent=0 // pred_check_branch
    %19 = sbr.rel (0) target = $region21
  $region20: #{cross_layer_cross_scale_projector.69} parent=0 // pred_region
    _
  $region21: #{cross_layer_cross_scale_projector.69} parent=0 // pred_fallthru
    _
  %p21 = scmp.eq.s32.totalorder 0, 0
  // Predicated region
  $region22: #{cross_layer_cross_scale_projector.69} parent=0 // pred_check
    %p22 = pneg %p21
  $region23: #{cross_layer_cross_scale_projector.69} parent=0 // pred_check_branch
    %24 = sbr.rel (%p22) target = $region25
  $region24: #{cross_layer_cross_scale_projector.69} parent=0 // pred_region
    %v25 = vld [vmem:[%s0] sm:$0xff]
    %v26 = vld [vmem:[%s0 + $0x8] sm:$0xff]
    %v27 = vld [vmem:[%s0 + $0x10] sm:$0xff]
    %v28 = vld [vmem:[%s0 + $0x18] sm:$0xff]
    %v29 = vld [vmem:[%s0 + $0x20] sm:$0xff]
    %v30 = vld [vmem:[%s0 + $0x28] sm:$0xff]
    %v31 = vld [vmem:[%s0 + $0x30] sm:$0xff]
    %v32 = vld [vmem:[%s0 + $0x38] sm:$0xff]
    %vm33 = vcmask 523264
    %v34 = vsel %vm33, %v25, 0.0
    %35 = vadd.xlane.f32.xlu0 %v34
    %v36 = vpop.xlane.xlu0 %35
    %v37 = vsel %vm33, %v26, 0.0
    %38 = vadd.xlane.f32.xlu0 %v37
    %v39 = vpop.xlane.xlu0 %38
    %v40 = vsel %vm33, %v27, 0.0
    %41 = vadd.xlane.f32.xlu0 %v40
    %v42 = vpop.xlane.xlu0 %41
    %v43 = vsel %vm33, %v28, 0.0
    %44 = vadd.xlane.f32.xlu0 %v43
    %v45 = vpop.xlane.xlu0 %44
    %v46 = vsel %vm33, %v29, 0.0
    %47 = vadd.xlane.f32.xlu0 %v46
    %v48 = vpop.xlane.xlu0 %47
    %v49 = vsel %vm33, %v30, 0.0
    %50 = vadd.xlane.f32.xlu0 %v49
    %v51 = vpop.xlane.xlu0 %50
    %v52 = vsel %vm33, %v31, 0.0
    %53 = vadd.xlane.f32.xlu0 %v52
    %v54 = vpop.xlane.xlu0 %53
    %v55 = vsel %vm33, %v32, 0.0
    %56 = vadd.xlane.f32.xlu0 %v55
    %v57 = vpop.xlane.xlu0 %56
    %v58 = vrcp.pop 64.0
    %v59 = vmul.f32 64.0, %v58
    %v60 = vsub.f32 1.0, %v59
    %v61 = vmul.f32 %v58, %v60
    %v62 = vadd.f32 %v58, %v61
    %vm63 = vweird.f32 %v58
    %v64 = vsel %vm63, %v58, %v62
    %v65 = vmul.f32 %v36, %v64
    %v66 = vmul.f32 %v39, %v64
    %v67 = vmul.f32 %v42, %v64
    %v68 = vmul.f32 %v45, %v64
    %v69 = vmul.f32 %v48, %v64
    %v70 = vmul.f32 %v51, %v64
    %v71 = vmul.f32 %v54, %v64
    %v72 = vmul.f32 %v57, %v64
    %v73 = vsub.f32 %v25, %v65
    %v74 = vsub.f32 %v26, %v66
    %v75 = vsub.f32 %v27, %v67
    %v76 = vsub.f32 %v28, %v68
    %v77 = vsub.f32 %v29, %v69
    %v78 = vsub.f32 %v30, %v70
    %v79 = vsub.f32 %v31, %v71
    %v80 = vsub.f32 %v32, %v72
    %v81 = vmul.f32 %v73, %v73
    %v82 = vmul.f32 %v74, %v74
    %v83 = vmul.f32 %v75, %v75
    %v84 = vmul.f32 %v76, %v76
    %v85 = vmul.f32 %v77, %v77
    %v86 = vmul.f32 %v78, %v78
    %v87 = vmul.f32 %v79, %v79
    %v88 = vmul.f32 %v80, %v80
    %v89 = vsel %vm33, %v81, 0.0
    %90 = vadd.xlane.f32.xlu0 %v89
    %v91 = vpop.xlane.xlu0 %90
    %v92 = vsel %vm33, %v82, 0.0
    %93 = vadd.xlane.f32.xlu0 %v92
    %v94 = vpop.xlane.xlu0 %93
    %v95 = vsel %vm33, %v83, 0.0
    %96 = vadd.xlane.f32.xlu0 %v95
    %v97 = vpop.xlane.xlu0 %96
    %v98 = vsel %vm33, %v84, 0.0
    %99 = vadd.xlane.f32.xlu0 %v98
    %v100 = vpop.xlane.xlu0 %99
    %v101 = vsel %vm33, %v85, 0.0
    %102 = vadd.xlane.f32.xlu0 %v101
    %v103 = vpop.xlane.xlu0 %102
    %v104 = vsel %vm33, %v86, 0.0
    %105 = vadd.xlane.f32.xlu0 %v104
    %v106 = vpop.xlane.xlu0 %105
    %v107 = vsel %vm33, %v87, 0.0
    %108 = vadd.xlane.f32.xlu0 %v107
    %v109 = vpop.xlane.xlu0 %108
    %v110 = vsel %vm33, %v88, 0.0
    %111 = vadd.xlane.f32.xlu0 %v110
    %v112 = vpop.xlane.xlu0 %111
    %v113 = vmul.f32 %v91, %v64
    %v114 = vmul.f32 %v94, %v64
    %v115 = vmul.f32 %v97, %v64
    %v116 = vmul.f32 %v100, %v64
    %v117 = vmul.f32 %v103, %v64
    %v118 = vmul.f32 %v106, %v64
    %v119 = vmul.f32 %v109, %v64
    %v120 = vmul.f32 %v112, %v64
    %v121 = vadd.f32 %v113, 1e-05
    %v122 = vadd.f32 %v114, 1e-05
    %v123 = vadd.f32 %v115, 1e-05
    %v124 = vadd.f32 %v116, 1e-05
    %v125 = vadd.f32 %v117, 1e-05
    %v126 = vadd.f32 %v118, 1e-05
    %v127 = vadd.f32 %v119, 1e-05
    %v128 = vadd.f32 %v120, 1e-05
    %v129 = vrsqrt.pop %v121
    %v130 = vmul.f32 %v129, %v121
    %v131 = vmul.f32 %v130, %v129
    %v132 = vmul.f32 0.5, %v131
    %v133 = vsub.f32 1.5, %v132
    %v134 = vmul.f32 %v129, %v133
    %vm135 = vweird.f32 %v121
    %vm136 = vweird.f32 %v129
    %vm137 = vmor %vm135, %vm136
    %v138 = vsel %vm137, %v129, %v134
    %v139 = vrsqrt.pop %v122
    %v140 = vmul.f32 %v139, %v122
    %v141 = vmul.f32 %v140, %v139
    %v142 = vmul.f32 0.5, %v141
    %v143 = vsub.f32 1.5, %v142
    %v144 = vmul.f32 %v139, %v143
    %vm145 = vweird.f32 %v122
    %vm146 = vweird.f32 %v139
    %vm147 = vmor %vm145, %vm146
    %v148 = vsel %vm147, %v139, %v144
    %v149 = vrsqrt.pop %v123
    %v150 = vmul.f32 %v149, %v123
    %v151 = vmul.f32 %v150, %v149
    %v152 = vmul.f32 0.5, %v151
    %v153 = vsub.f32 1.5, %v152
    %v154 = vmul.f32 %v149, %v153
    %vm155 = vweird.f32 %v123
    %vm156 = vweird.f32 %v149
    %vm157 = vmor %vm155, %vm156
    %v158 = vsel %vm157, %v149, %v154
    %v159 = vrsqrt.pop %v124
    %v160 = vmul.f32 %v159, %v124
    %v161 = vmul.f32 %v160, %v159
    %v162 = vmul.f32 0.5, %v161
    %v163 = vsub.f32 1.5, %v162
    %v164 = vmul.f32 %v159, %v163
    %vm165 = vweird.f32 %v124
    %vm166 = vweird.f32 %v159
    %vm167 = vmor %vm165, %vm166
    %v168 = vsel %vm167, %v159, %v164
    %v169 = vrsqrt.pop %v125
    %v170 = vmul.f32 %v169, %v125
    %v171 = vmul.f32 %v170, %v169
    %v172 = vmul.f32 0.5, %v171
    %v173 = vsub.f32 1.5, %v172
    %v174 = vmul.f32 %v169, %v173
    %vm175 = vweird.f32 %v125
    %vm176 = vweird.f32 %v169
    %vm177 = vmor %vm175, %vm176
    %v178 = vsel %vm177, %v169, %v174
    %v179 = vrsqrt.pop %v126
    %v180 = vmul.f32 %v179, %v126
    %v181 = vmul.f32 %v180, %v179
    %v182 = vmul.f32 0.5, %v181
    %v183 = vsub.f32 1.5, %v182
    %v184 = vmul.f32 %v179, %v183
    %vm185 = vweird.f32 %v126
    %vm186 = vweird.f32 %v179
    %vm187 = vmor %vm185, %vm186
    %v188 = vsel %vm187, %v179, %v184
    %v189 = vrsqrt.pop %v127
    %v190 = vmul.f32 %v189, %v127
    %v191 = vmul.f32 %v190, %v189
    %v192 = vmul.f32 0.5, %v191
    %v193 = vsub.f32 1.5, %v192
    %v194 = vmul.f32 %v189, %v193
    %vm195 = vweird.f32 %v127
    %vm196 = vweird.f32 %v189
    %vm197 = vmor %vm195, %vm196
    %v198 = vsel %vm197, %v189, %v194
    %v199 = vrsqrt.pop %v128
    %v200 = vmul.f32 %v199, %v128
    %v201 = vmul.f32 %v200, %v199
    %v202 = vmul.f32 0.5, %v201
    %v203 = vsub.f32 1.5, %v202
    %v204 = vmul.f32 %v199, %v203
    %vm205 = vweird.f32 %v128
    %vm206 = vweird.f32 %v199
    %vm207 = vmor %vm205, %vm206
    %v208 = vsel %vm207, %v199, %v204
    %v209 = vmul.f32 %v73, %v138
    %v210 = vmul.f32 %v74, %v148
    %v211 = vmul.f32 %v75, %v158
    %v212 = vmul.f32 %v76, %v168
    %v213 = vmul.f32 %v77, %v178
    %v214 = vmul.f32 %v78, %v188
    %v215 = vmul.f32 %v79, %v198
    %v216 = vmul.f32 %v80, %v208
    %v217 = vld [vmem:[%s1] sm:$0x1]
    %v219 = vperm.slane %v217, 0
    %v221 = vmul.f32 %v209, %v219
    %v222 = vmul.f32 %v210, %v219
    %v223 = vmul.f32 %v211, %v219
    %v224 = vmul.f32 %v212, %v219
    %v225 = vmul.f32 %v213, %v219
    %v226 = vmul.f32 %v214, %v219
    %v227 = vmul.f32 %v215, %v219
    %v228 = vmul.f32 %v216, %v219
    %v229 = vld [vmem:[%s2] sm:$0x1]
    %v231 = vperm.slane %v229, 0
    %v233 = vadd.f32 %v221, %v231
    %v234 = vadd.f32 %v222, %v231
    %v235 = vadd.f32 %v223, %v231
    %v236 = vadd.f32 %v224, %v231
    %v237 = vadd.f32 %v225, %v231
    %v238 = vadd.f32 %v226, %v231
    %v239 = vadd.f32 %v227, %v231
    %v240 = vadd.f32 %v228, %v231
    %v241 = vpack.c.bf16 %v233, %v233
    %v242 = vpack.c.bf16 %v234, %v234
    %v243 = vpack.c.bf16 %v235, %v235
    %v244 = vpack.c.bf16 %v236, %v236
    %v245 = vpack.c.bf16 %v237, %v237
    %v246 = vpack.c.bf16 %v238, %v238
    %v247 = vpack.c.bf16 %v239, %v239
    %v248 = vpack.c.bf16 %v240, %v240
    %vm249 = vcmask 519168
    %250 = vst.msk [vmem:[#allocation2] sm:$0xf] %vm249, %v241
    %251 = vst.msk [vmem:[#allocation2 + $0x4] sm:$0xf] %vm249, %v242
    %252 = vst.msk [vmem:[#allocation2 + $0x8] sm:$0xf] %vm249, %v243
    %253 = vst.msk [vmem:[#allocation2 + $0xc] sm:$0xf] %vm249, %v244
    %254 = vst.msk [vmem:[#allocation2 + $0x10] sm:$0xf] %vm249, %v245
    %255 = vst.msk [vmem:[#allocation2 + $0x14] sm:$0xf] %vm249, %v246
    %256 = vst.msk [vmem:[#allocation2 + $0x18] sm:$0xf] %vm249, %v247
    %257 = vst.msk [vmem:[#allocation2 + $0x1c] sm:$0xf] %vm249, %v248
  $region25: #{cross_layer_cross_scale_projector.69} parent=0 // pred_fallthru
    _
  %v258 = vld [vmem:[#allocation2] sm:$0xf]
  %v259 = vld [vmem:[#allocation2 + $0x4] sm:$0xf]
  %v260 = vld [vmem:[#allocation2 + $0x8] sm:$0xf]
  %v261 = vld [vmem:[#allocation2 + $0xc] sm:$0xf]
  %v262 = vld [vmem:[#allocation2 + $0x10] sm:$0xf]
  %v263 = vld [vmem:[#allocation2 + $0x14] sm:$0xf]
  %v264 = vld [vmem:[#allocation2 + $0x18] sm:$0xf]
  %v265 = vld [vmem:[#allocation2 + $0x1c] sm:$0xf]
  %v266 = vld [vmem:[%s3] sm:$0xf]
  %v267 = vld [vmem:[%s3 + $0x4] sm:$0xf]
  %v268 = vld [vmem:[%s3 + $0x8] sm:$0xf]
  %v269 = vld [vmem:[%s3 + $0xc] sm:$0xf]
  %v270 = vld [vmem:[%s3 + $0x10] sm:$0xf]
  %v271 = vld [vmem:[%s3 + $0x14] sm:$0xf]
  %v272 = vld [vmem:[%s3 + $0x18] sm:$0xf]
  %v273 = vld [vmem:[%s3 + $0x1c] sm:$0xf]
  %v274 = vld [vmem:[%s4] sm:$0x1]
  %v276 = vperm.slane %v274, 0
  %v286 = vunpack.c.l.b16 %v258
  %v287 = vunpack.c.l.b16 %v259
  %v288 = vunpack.c.l.b16 %v260
  %v289 = vunpack.c.l.b16 %v261
  %v290 = vunpack.c.l.b16 %v262
  %v291 = vunpack.c.l.b16 %v263
  %v292 = vunpack.c.l.b16 %v264
  %v293 = vunpack.c.l.b16 %v265
  %v294 = vpack.c.b16 %v287, %v286
  %v295 = vpack.c.b16 %v289, %v288
  %v296 = vpack.c.b16 %v291, %v290
  %v297 = vpack.c.b16 %v293, %v292
  %v306 = vunpack.c.l.b16 %v266
  %v307 = vunpack.c.l.b16 %v267
  %v308 = vunpack.c.l.b16 %v268
  %v309 = vunpack.c.l.b16 %v269
  %v310 = vunpack.c.l.b16 %v270
  %v311 = vunpack.c.l.b16 %v271
  %v312 = vunpack.c.l.b16 %v272
  %v313 = vunpack.c.l.b16 %v273
  %v314 = vpack.c.b16 %v307, %v306
  %v315 = vpack.c.b16 %v309, %v308
  %v316 = vpack.c.b16 %v311, %v310
  %v317 = vpack.c.b16 %v313, %v312
  %vm322 = vcmask 523264
  %v324 = vsel %vm322, %v294, 0
  %v327 = vsel %vm322, %v295, 0
  %v330 = vsel %vm322, %v296, 0
  %v333 = vsel %vm322, %v297, 0
  %335 = vmatpush.bf16.msra.mxu0 0
  %336 = vmatpush.bf16.msra.mxu0 0
  %337 = vmatpush.bf16.msra.mxu0 0
  %338 = vmatpush.bf16.msra.mxu0 0
  %339 = vmatpush.bf16.msra.mxu0 %v317
  %340 = vmatpush.bf16.msra.mxu0 %v316
  %341 = vmatpush.bf16.msra.mxu0 %v315
  %342 = vmatpush.bf16.msra.mxu0 %v314
  %343 = vmatmul.bf16.gmra.mxu0 %v324
  %v344 = vpop.f32.mrf.mxu0
  %v345 = vadd.f32 %v276, %v344
  %v346 = vpop.f32.mrf.mxu0
  %v347 = vadd.f32 %v276, %v346
  %348 = vmatmul.bf16.gmra.mxu0 %v327
  %v349 = vpop.f32.mrf.mxu0
  %v350 = vadd.f32 %v276, %v349
  %v351 = vpop.f32.mrf.mxu0
  %v352 = vadd.f32 %v276, %v351
  %353 = vmatmul.bf16.gmra.mxu0 %v330
  %v354 = vpop.f32.mrf.mxu0
  %v355 = vadd.f32 %v276, %v354
  %v356 = vpop.f32.mrf.mxu0
  %v357 = vadd.f32 %v276, %v356
  %358 = vmatmul.bf16.gmra.mxu0 %v333
  %v359 = vpop.f32.mrf.mxu0
  %v360 = vadd.f32 %v276, %v359
  %v361 = vpop.f32.mrf.mxu0
  %v362 = vadd.f32 %v276, %v361
  %363 = vdwg.mxu0
  %v364 = vpack.c.bf16 %v345, %v345
  %v365 = vpack.c.bf16 %v347, %v347
  %v366 = vpack.c.bf16 %v350, %v350
  %v367 = vpack.c.bf16 %v352, %v352
  %v368 = vpack.c.bf16 %v355, %v355
  %v369 = vpack.c.bf16 %v357, %v357
  %v370 = vpack.c.bf16 %v360, %v360
  %v371 = vpack.c.bf16 %v362, %v362
  %372 = vst [vmem:[%s5] sm:$0xf] %v364
  %373 = vst [vmem:[%s5 + $0x4] sm:$0xf] %v365
  %374 = vst [vmem:[%s5 + $0x8] sm:$0xf] %v366
  %375 = vst [vmem:[%s5 + $0xc] sm:$0xf] %v367
  %376 = vst [vmem:[%s5 + $0x10] sm:$0xf] %v368
  %377 = vst [vmem:[%s5 + $0x14] sm:$0xf] %v369
  %378 = vst [vmem:[%s5 + $0x18] sm:$0xf] %v370
  %379 = vst [vmem:[%s5 + $0x1c] sm:$0xf] %v371
  // Predicated region
  $region26: #{cross_layer_cross_scale_projector.69} parent=0 // pred_check
    _
  $region27: #{cross_layer_cross_scale_projector.69} parent=0 // pred_check_branch
    %381 = sbr.rel (0) target = $region29
  $region28: #{cross_layer_cross_scale_projector.69} parent=0 // pred_region
    _
  $region29: #{cross_layer_cross_scale_projector.69} parent=0 // pred_fallthru
    _
  // Predicated region
  $region30: #{cross_layer_cross_scale_projector.69} parent=0 // pred_check
    _
  $region31: #{cross_layer_cross_scale_projector.69} parent=0 // pred_check_branch
    %383 = sbr.rel (0) target = $region33
  $region32: #{cross_layer_cross_scale_projector.69} parent=0 // pred_region
    _
  $region33: #{cross_layer_cross_scale_projector.69} parent=0 // pred_fallthru
    _

// kernel: cross_layer_cross_scale_projector.74
$region0: #{cross_layer_cross_scale_projector.74}
  #allocation0 [shape = 'u32[]', space=smem, size = 0x4, offset = 0x4, fixed_abs, tag = 'smem constant byte address 0x4 - core index']
  #allocation1 [shape = 'u32[72,128]{1,0:T(1,128)}', space=vmem, size = 0x9000, scoped, tag = 'internal scratch']
  %s0 = inlined_call_operand.vmem [shape: f32[32,64], index: 0, kind: input, shape index: {}]
  %s1 = inlined_call_operand.vmem [shape: bf16[64,128], index: 1, kind: input, shape index: {}]
  %s2 = inlined_call_operand.vmem [shape: f32[1,128], index: 2, kind: input, shape index: {}]
  %s3 = inlined_call_operand.vmem [shape: bf16[32,128], index: 3, kind: output, shape index: {}]
  %s4 = sld [smem:[#allocation0]]
  $region22: #{cross_layer_cross_scale_projector.74} parent=0
    _
  %s6 = ssub.s32 1, %s4
  %s7 = scalar_select 0, %s6, %s4
  // Predicated region
  $region2: #{cross_layer_cross_scale_projector.74} parent=0 // pred_check
    _
  $region3: #{cross_layer_cross_scale_projector.74} parent=0 // pred_check_branch
    %9 = sbr.rel (0) target = $region5
  $region4: #{cross_layer_cross_scale_projector.74} parent=0 // pred_region
    _
  $region5: #{cross_layer_cross_scale_projector.74} parent=0 // pred_fallthru
    _
  // Predicated region
  $region6: #{cross_layer_cross_scale_projector.74} parent=0 // pred_check
    _
  $region7: #{cross_layer_cross_scale_projector.74} parent=0 // pred_check_branch
    %11 = sbr.rel (0) target = $region9
  $region8: #{cross_layer_cross_scale_projector.74} parent=0 // pred_region
    _
  $region9: #{cross_layer_cross_scale_projector.74} parent=0 // pred_fallthru
    _
  // Predicated region
  $region10: #{cross_layer_cross_scale_projector.74} parent=0 // pred_check
    _
  $region11: #{cross_layer_cross_scale_projector.74} parent=0 // pred_check_branch
    %13 = sbr.rel (0) target = $region13
  $region12: #{cross_layer_cross_scale_projector.74} parent=0 // pred_region
    _
  $region13: #{cross_layer_cross_scale_projector.74} parent=0 // pred_fallthru
    _
  %v15 = vld [vmem:[%s0] sm:$0xff]
  %v16 = vld [vmem:[%s0 + $0x8] sm:$0xff]
  %v17 = vld [vmem:[%s0 + $0x10] sm:$0xff]
  %v18 = vld [vmem:[%s0 + $0x18] sm:$0xff]
  %v19 = vpack.c.bf16 %v16, %v15
  %v20 = vpack.c.bf16 %v18, %v17
  %v21 = vld [vmem:[%s1] sm:$0xf]
  %v22 = vld [vmem:[%s1 + $0x4] sm:$0xf]
  %v23 = vld [vmem:[%s1 + $0x8] sm:$0xf]
  %v24 = vld [vmem:[%s1 + $0xc] sm:$0xf]
  %v25 = vld [vmem:[%s1 + $0x10] sm:$0xf]
  %v26 = vld [vmem:[%s1 + $0x14] sm:$0xf]
  %v27 = vld [vmem:[%s1 + $0x18] sm:$0xf]
  %v28 = vld [vmem:[%s1 + $0x1c] sm:$0xf]
  %v29 = vld [vmem:[%s2] sm:$0x1]
  %v31 = vperm.slane %v29, 0
  %v41 = vunpack.c.l.b16 %v21
  %v42 = vunpack.c.l.b16 %v22
  %v43 = vunpack.c.l.b16 %v23
  %v44 = vunpack.c.l.b16 %v24
  %v45 = vunpack.c.l.b16 %v25
  %v46 = vunpack.c.l.b16 %v26
  %v47 = vunpack.c.l.b16 %v27
  %v48 = vunpack.c.l.b16 %v28
  %v49 = vpack.c.b16 %v42, %v41
  %v50 = vpack.c.b16 %v44, %v43
  %v51 = vpack.c.b16 %v46, %v45
  %v52 = vpack.c.b16 %v48, %v47
  %vm57 = vcmask 523264
  %v59 = vsel %vm57, %v19, 0
  %v62 = vsel %vm57, %v20, 0
  %64 = vmatpush.bf16.msra.mxu0 0
  %65 = vmatpush.bf16.msra.mxu0 0
  %66 = vmatpush.bf16.msra.mxu0 0
  %67 = vmatpush.bf16.msra.mxu0 0
  %68 = vmatpush.bf16.msra.mxu0 %v52
  %69 = vmatpush.bf16.msra.mxu0 %v51
  %70 = vmatpush.bf16.msra.mxu0 %v50
  %71 = vmatpush.bf16.msra.mxu0 %v49
  %72 = vmatmul.bf16.gmra.mxu0 %v59
  %v73 = vpop.f32.mrf.mxu0
  %v74 = vadd.f32 %v31, %v73
  %v75 = vpop.f32.mrf.mxu0
  %v76 = vadd.f32 %v31, %v75
  %77 = vmatmul.bf16.gmra.mxu0 %v62
  %v78 = vpop.f32.mrf.mxu0
  %v79 = vadd.f32 %v31, %v78
  %v80 = vpop.f32.mrf.mxu0
  %v81 = vadd.f32 %v31, %v80
  %82 = vdwg.mxu0
  %v83 = vmul.f32 %v74, 0.5
  %v84 = vmul.f32 %v76, 0.5
  %v85 = vmul.f32 %v79, 0.5
  %v86 = vmul.f32 %v81, 0.5
  %v87 = vmul.f32 %v74, 0.044715
  %v88 = vmul.f32 %v76, 0.044715
  %v89 = vmul.f32 %v79, 0.044715
  %v90 = vmul.f32 %v81, 0.044715
  %v91 = vmul.f32 %v87, %v74
  %v92 = vmul.f32 %v88, %v76
  %v93 = vmul.f32 %v89, %v79
  %v94 = vmul.f32 %v90, %v81
  %v95 = vmul.f32 %v91, %v74
  %v96 = vmul.f32 %v92, %v76
  %v97 = vmul.f32 %v93, %v79
  %v98 = vmul.f32 %v94, %v81
  %v99 = vadd.f32 %v74, %v95
  %v100 = vadd.f32 %v76, %v96
  %v101 = vadd.f32 %v79, %v97
  %v102 = vadd.f32 %v81, %v98
  %v103 = vmul.f32 %v99, 0.7978846
  %v104 = vmul.f32 %v100, 0.7978846
  %v105 = vmul.f32 %v101, 0.7978846
  %v106 = vmul.f32 %v102, 0.7978846
  %v107 = vtanh.pop %v103
  %v108 = vtanh.pop %v104
  %v109 = vtanh.pop %v105
  %v110 = vtanh.pop %v106
  %v111 = vadd.f32 %v107, 1.0
  %v112 = vadd.f32 %v108, 1.0
  %v113 = vadd.f32 %v109, 1.0
  %v114 = vadd.f32 %v110, 1.0
  %v115 = vmul.f32 %v83, %v111
  %v116 = vmul.f32 %v84, %v112
  %v117 = vmul.f32 %v85, %v113
  %v118 = vmul.f32 %v86, %v114
  %v119 = vpack.c.bf16 %v115, %v115
  %v120 = vpack.c.bf16 %v116, %v116
  %v121 = vpack.c.bf16 %v117, %v117
  %v122 = vpack.c.bf16 %v118, %v118
  %123 = vst [vmem:[%s3] sm:$0xf] %v119
  %124 = vst [vmem:[%s3 + $0x4] sm:$0xf] %v120
  %125 = vst [vmem:[%s3 + $0x8] sm:$0xf] %v121
  %126 = vst [vmem:[%s3 + $0xc] sm:$0xf] %v122
  // Predicated region
  $region14: #{cross_layer_cross_scale_projector.74} parent=0 // pred_check
    _
  $region15: #{cross_layer_cross_scale_projector.74} parent=0 // pred_check_branch
    %128 = sbr.rel (0) target = $region17
  $region16: #{cross_layer_cross_scale_projector.74} parent=0 // pred_region
    _
  $region17: #{cross_layer_cross_scale_projector.74} parent=0 // pred_fallthru
    _
  // Predicated region
  $region18: #{cross_layer_cross_scale_projector.74} parent=0 // pred_check
    _
  $region19: #{cross_layer_cross_scale_projector.74} parent=0 // pred_check_branch
    %130 = sbr.rel (0) target = $region21
  $region20: #{cross_layer_cross_scale_projector.74} parent=0 // pred_region
    _
  $region21: #{cross_layer_cross_scale_projector.74} parent=0 // pred_fallthru
    _

// kernel: cross_layer_cross_scale_projector.75
$region0: #{cross_layer_cross_scale_projector.75}
  #allocation0 [shape = 'u32[]', space=smem, size = 0x4, offset = 0x4, fixed_abs, tag = 'smem constant byte address 0x4 - core index']
  #allocation1 [shape = 'u32[72,128]{1,0:T(1,128)}', space=vmem, size = 0x9000, scoped, tag = 'internal scratch']
  %s0 = inlined_call_operand.vmem [shape: bf16[32,128], index: 0, kind: input, shape index: {}]
  %s1 = inlined_call_operand.vmem [shape: bf16[128,64], index: 1, kind: input, shape index: {}]
  %s2 = inlined_call_operand.vmem [shape: f32[1,64], index: 2, kind: input, shape index: {}]
  %s3 = inlined_call_operand.vmem [shape: f32[32,64], index: 3, kind: output, shape index: {}]
  %s4 = sld [smem:[#allocation0]]
  $region22: #{cross_layer_cross_scale_projector.75} parent=0
    _
  %s6 = ssub.s32 1, %s4
  %s7 = scalar_select 0, %s6, %s4
  // Predicated region
  $region2: #{cross_layer_cross_scale_projector.75} parent=0 // pred_check
    _
  $region3: #{cross_layer_cross_scale_projector.75} parent=0 // pred_check_branch
    %9 = sbr.rel (0) target = $region5
  $region4: #{cross_layer_cross_scale_projector.75} parent=0 // pred_region
    _
  $region5: #{cross_layer_cross_scale_projector.75} parent=0 // pred_fallthru
    _
  // Predicated region
  $region6: #{cross_layer_cross_scale_projector.75} parent=0 // pred_check
    _
  $region7: #{cross_layer_cross_scale_projector.75} parent=0 // pred_check_branch
    %11 = sbr.rel (0) target = $region9
  $region8: #{cross_layer_cross_scale_projector.75} parent=0 // pred_region
    _
  $region9: #{cross_layer_cross_scale_projector.75} parent=0 // pred_fallthru
    _
  // Predicated region
  $region10: #{cross_layer_cross_scale_projector.75} parent=0 // pred_check
    _
  $region11: #{cross_layer_cross_scale_projector.75} parent=0 // pred_check_branch
    %13 = sbr.rel (0) target = $region13
  $region12: #{cross_layer_cross_scale_projector.75} parent=0 // pred_region
    _
  $region13: #{cross_layer_cross_scale_projector.75} parent=0 // pred_fallthru
    _
  %v14 = vld [vmem:[%s0] sm:$0xf]
  %v15 = vld [vmem:[%s0 + $0x4] sm:$0xf]
  %v16 = vld [vmem:[%s0 + $0x8] sm:$0xf]
  %v17 = vld [vmem:[%s0 + $0xc] sm:$0xf]
  %v18 = vld [vmem:[%s1] sm:$0xf]
  %v19 = vld [vmem:[%s1 + $0x4] sm:$0xf]
  %v20 = vld [vmem:[%s1 + $0x8] sm:$0xf]
  %v21 = vld [vmem:[%s1 + $0xc] sm:$0xf]
  %v22 = vld [vmem:[%s1 + $0x10] sm:$0xf]
  %v23 = vld [vmem:[%s1 + $0x14] sm:$0xf]
  %v24 = vld [vmem:[%s1 + $0x18] sm:$0xf]
  %v25 = vld [vmem:[%s1 + $0x1c] sm:$0xf]
  %v26 = vld [vmem:[%s1 + $0x20] sm:$0xf]
  %v27 = vld [vmem:[%s1 + $0x24] sm:$0xf]
  %v28 = vld [vmem:[%s1 + $0x28] sm:$0xf]
  %v29 = vld [vmem:[%s1 + $0x2c] sm:$0xf]
  %v30 = vld [vmem:[%s1 + $0x30] sm:$0xf]
  %v31 = vld [vmem:[%s1 + $0x34] sm:$0xf]
  %v32 = vld [vmem:[%s1 + $0x38] sm:$0xf]
  %v33 = vld [vmem:[%s1 + $0x3c] sm:$0xf]
  %v34 = vld [vmem:[%s2] sm:$0x1]
  %v36 = vperm.slane %v34, 0
  %v42 = vunpack.c.l.b16 %v14
  %v43 = vunpack.c.l.b16 %v15
  %v44 = vunpack.c.l.b16 %v16
  %v45 = vunpack.c.l.b16 %v17
  %v46 = vpack.c.b16 %v43, %v42
  %v47 = vpack.c.b16 %v45, %v44
  %v66 = vunpack.c.l.b16 %v18
  %v67 = vunpack.c.l.b16 %v19
  %v68 = vunpack.c.l.b16 %v20
  %v69 = vunpack.c.l.b16 %v21
  %v70 = vunpack.c.l.b16 %v22
  %v71 = vunpack.c.l.b16 %v23
  %v72 = vunpack.c.l.b16 %v24
  %v73 = vunpack.c.l.b16 %v25
  %v74 = vunpack.c.l.b16 %v26
  %v75 = vunpack.c.l.b16 %v27
  %v76 = vunpack.c.l.b16 %v28
  %v77 = vunpack.c.l.b16 %v29
  %v78 = vunpack.c.l.b16 %v30
  %v79 = vunpack.c.l.b16 %v31
  %v80 = vunpack.c.l.b16 %v32
  %v81 = vunpack.c.l.b16 %v33
  %v82 = vpack.c.b16 %v67, %v66
  %v83 = vpack.c.b16 %v69, %v68
  %v84 = vpack.c.b16 %v71, %v70
  %v85 = vpack.c.b16 %v73, %v72
  %v86 = vpack.c.b16 %v75, %v74
  %v87 = vpack.c.b16 %v77, %v76
  %v88 = vpack.c.b16 %v79, %v78
  %v89 = vpack.c.b16 %v81, %v80
  %98 = vmatpush.bf16.msra.mxu0 %v89
  %99 = vmatpush.bf16.msra.mxu0 %v88
  %100 = vmatpush.bf16.msra.mxu0 %v87
  %101 = vmatpush.bf16.msra.mxu0 %v86
  %102 = vmatpush.bf16.msra.mxu0 %v85
  %103 = vmatpush.bf16.msra.mxu0 %v84
  %104 = vmatpush.bf16.msra.mxu0 %v83
  %105 = vmatpush.bf16.msra.mxu0 %v82
  %106 = vmatmul.bf16.gmra.mxu0 %v46
  %v107 = vpop.f32.mrf.mxu0
  %v108 = vadd.f32 %v36, %v107
  %v109 = vpop.f32.mrf.mxu0
  %v110 = vadd.f32 %v36, %v109
  %111 = vmatmul.bf16.gmra.mxu0 %v47
  %v112 = vpop.f32.mrf.mxu0
  %v113 = vadd.f32 %v36, %v112
  %v114 = vpop.f32.mrf.mxu0
  %v115 = vadd.f32 %v36, %v114
  %116 = vdwg.mxu0
  %vm117 = vcmask 523264
  %118 = vst.msk [vmem:[%s3] sm:$0xff] %vm117, %v108
  %119 = vst.msk [vmem:[%s3 + $0x8] sm:$0xff] %vm117, %v110
  %120 = vst.msk [vmem:[%s3 + $0x10] sm:$0xff] %vm117, %v113
  %121 = vst.msk [vmem:[%s3 + $0x18] sm:$0xff] %vm117, %v115
  // Predicated region
  $region14: #{cross_layer_cross_scale_projector.75} parent=0 // pred_check
    _
  $region15: #{cross_layer_cross_scale_projector.75} parent=0 // pred_check_branch
    %123 = sbr.rel (0) target = $region17
  $region16: #{cross_layer_cross_scale_projector.75} parent=0 // pred_region
    _
  $region17: #{cross_layer_cross_scale_projector.75} parent=0 // pred_fallthru
    _
  // Predicated region
  $region18: #{cross_layer_cross_scale_projector.75} parent=0 // pred_check
    _
  $region19: #{cross_layer_cross_scale_projector.75} parent=0 // pred_check_branch
    %125 = sbr.rel (0) target = $region21
  $region20: #{cross_layer_cross_scale_projector.75} parent=0 // pred_region
    _
  $region21: #{cross_layer_cross_scale_projector.75} parent=0 // pred_fallthru
    _

// kernel: cross_layer_cross_scale_projector.77
$region0: #{cross_layer_cross_scale_projector.77}
  #allocation0 [shape = 'u32[]', space=smem, size = 0x4, offset = 0x4, fixed_abs, tag = 'smem constant byte address 0x4 - core index']
  #allocation1 [shape = 'u32[72,128]{1,0:T(1,128)}', space=vmem, size = 0x9000, scoped, tag = 'internal scratch']
  %s0 = inlined_call_operand.vmem [shape: bf16[32,128], index: 0, kind: input, shape index: {}]
  %s1 = inlined_call_operand.vmem [shape: bf16[128,64], index: 1, kind: input, shape index: {}]
  %s2 = inlined_call_operand.vmem [shape: f32[1,64], index: 2, kind: input, shape index: {}]
  %s3 = inlined_call_operand.vmem [shape: f32[32,64], index: 3, kind: input, shape index: {}]
  %s4 = inlined_call_operand.vmem [shape: f32[32,64], index: 4, kind: output, shape index: {}]
  %s5 = sld [smem:[#allocation0]]
  $region26: #{cross_layer_cross_scale_projector.77} parent=0
    _
  %s7 = ssub.s32 1, %s5
  %s8 = scalar_select 0, %s7, %s5
  // Predicated region
  $region2: #{cross_layer_cross_scale_projector.77} parent=0 // pred_check
    _
  $region3: #{cross_layer_cross_scale_projector.77} parent=0 // pred_check_branch
    %10 = sbr.rel (0) target = $region5
  $region4: #{cross_layer_cross_scale_projector.77} parent=0 // pred_region
    _
  $region5: #{cross_layer_cross_scale_projector.77} parent=0 // pred_fallthru
    _
  // Predicated region
  $region6: #{cross_layer_cross_scale_projector.77} parent=0 // pred_check
    _
  $region7: #{cross_layer_cross_scale_projector.77} parent=0 // pred_check_branch
    %12 = sbr.rel (0) target = $region9
  $region8: #{cross_layer_cross_scale_projector.77} parent=0 // pred_region
    _
  $region9: #{cross_layer_cross_scale_projector.77} parent=0 // pred_fallthru
    _
  // Predicated region
  $region10: #{cross_layer_cross_scale_projector.77} parent=0 // pred_check
    _
  $region11: #{cross_layer_cross_scale_projector.77} parent=0 // pred_check_branch
    %14 = sbr.rel (0) target = $region13
  $region12: #{cross_layer_cross_scale_projector.77} parent=0 // pred_region
    _
  $region13: #{cross_layer_cross_scale_projector.77} parent=0 // pred_fallthru
    _
  // Predicated region
  $region14: #{cross_layer_cross_scale_projector.77} parent=0 // pred_check
    _
  $region15: #{cross_layer_cross_scale_projector.77} parent=0 // pred_check_branch
    %16 = sbr.rel (0) target = $region17
  $region16: #{cross_layer_cross_scale_projector.77} parent=0 // pred_region
    _
  $region17: #{cross_layer_cross_scale_projector.77} parent=0 // pred_fallthru
    _
  %v17 = vld [vmem:[%s0] sm:$0xf]
  %v18 = vld [vmem:[%s0 + $0x4] sm:$0xf]
  %v19 = vld [vmem:[%s0 + $0x8] sm:$0xf]
  %v20 = vld [vmem:[%s0 + $0xc] sm:$0xf]
  %v21 = vld [vmem:[%s1] sm:$0xf]
  %v22 = vld [vmem:[%s1 + $0x4] sm:$0xf]
  %v23 = vld [vmem:[%s1 + $0x8] sm:$0xf]
  %v24 = vld [vmem:[%s1 + $0xc] sm:$0xf]
  %v25 = vld [vmem:[%s1 + $0x10] sm:$0xf]
  %v26 = vld [vmem:[%s1 + $0x14] sm:$0xf]
  %v27 = vld [vmem:[%s1 + $0x18] sm:$0xf]
  %v28 = vld [vmem:[%s1 + $0x1c] sm:$0xf]
  %v29 = vld [vmem:[%s1 + $0x20] sm:$0xf]
  %v30 = vld [vmem:[%s1 + $0x24] sm:$0xf]
  %v31 = vld [vmem:[%s1 + $0x28] sm:$0xf]
  %v32 = vld [vmem:[%s1 + $0x2c] sm:$0xf]
  %v33 = vld [vmem:[%s1 + $0x30] sm:$0xf]
  %v34 = vld [vmem:[%s1 + $0x34] sm:$0xf]
  %v35 = vld [vmem:[%s1 + $0x38] sm:$0xf]
  %v36 = vld [vmem:[%s1 + $0x3c] sm:$0xf]
  %v37 = vld [vmem:[%s2] sm:$0x1]
  %v39 = vperm.slane %v37, 0
  %v45 = vunpack.c.l.b16 %v17
  %v46 = vunpack.c.l.b16 %v18
  %v47 = vunpack.c.l.b16 %v19
  %v48 = vunpack.c.l.b16 %v20
  %v49 = vpack.c.b16 %v46, %v45
  %v50 = vpack.c.b16 %v48, %v47
  %v69 = vunpack.c.l.b16 %v21
  %v70 = vunpack.c.l.b16 %v22
  %v71 = vunpack.c.l.b16 %v23
  %v72 = vunpack.c.l.b16 %v24
  %v73 = vunpack.c.l.b16 %v25
  %v74 = vunpack.c.l.b16 %v26
  %v75 = vunpack.c.l.b16 %v27
  %v76 = vunpack.c.l.b16 %v28
  %v77 = vunpack.c.l.b16 %v29
  %v78 = vunpack.c.l.b16 %v30
  %v79 = vunpack.c.l.b16 %v31
  %v80 = vunpack.c.l.b16 %v32
  %v81 = vunpack.c.l.b16 %v33
  %v82 = vunpack.c.l.b16 %v34
  %v83 = vunpack.c.l.b16 %v35
  %v84 = vunpack.c.l.b16 %v36
  %v85 = vpack.c.b16 %v70, %v69
  %v86 = vpack.c.b16 %v72, %v71
  %v87 = vpack.c.b16 %v74, %v73
  %v88 = vpack.c.b16 %v76, %v75
  %v89 = vpack.c.b16 %v78, %v77
  %v90 = vpack.c.b16 %v80, %v79
  %v91 = vpack.c.b16 %v82, %v81
  %v92 = vpack.c.b16 %v84, %v83
  %101 = vmatpush.bf16.msra.mxu0 %v92
  %102 = vmatpush.bf16.msra.mxu0 %v91
  %103 = vmatpush.bf16.msra.mxu0 %v90
  %104 = vmatpush.bf16.msra.mxu0 %v89
  %105 = vmatpush.bf16.msra.mxu0 %v88
  %106 = vmatpush.bf16.msra.mxu0 %v87
  %107 = vmatpush.bf16.msra.mxu0 %v86
  %108 = vmatpush.bf16.msra.mxu0 %v85
  %109 = vmatmul.bf16.gmra.mxu0 %v49
  %v110 = vpop.f32.mrf.mxu0
  %v111 = vadd.f32 %v39, %v110
  %v112 = vpop.f32.mrf.mxu0
  %v113 = vadd.f32 %v39, %v112
  %114 = vmatmul.bf16.gmra.mxu0 %v50
  %v115 = vpop.f32.mrf.mxu0
  %v116 = vadd.f32 %v39, %v115
  %v117 = vpop.f32.mrf.mxu0
  %v118 = vadd.f32 %v39, %v117
  %119 = vdwg.mxu0
  %v120 = vld [vmem:[%s3] sm:$0xff]
  %v121 = vld [vmem:[%s3 + $0x8] sm:$0xff]
  %v122 = vld [vmem:[%s3 + $0x10] sm:$0xff]
  %v123 = vld [vmem:[%s3 + $0x18] sm:$0xff]
  %v124 = vadd.f32 %v111, %v120
  %v125 = vadd.f32 %v113, %v121
  %v126 = vadd.f32 %v116, %v122
  %v127 = vadd.f32 %v118, %v123
  %vm128 = vcmask 523264
  %129 = vst.msk [vmem:[%s4] sm:$0xff] %vm128, %v124
  %130 = vst.msk [vmem:[%s4 + $0x8] sm:$0xff] %vm128, %v125
  %131 = vst.msk [vmem:[%s4 + $0x10] sm:$0xff] %vm128, %v126
  %132 = vst.msk [vmem:[%s4 + $0x18] sm:$0xff] %vm128, %v127
  // Predicated region
  $region18: #{cross_layer_cross_scale_projector.77} parent=0 // pred_check
    _
  $region19: #{cross_layer_cross_scale_projector.77} parent=0 // pred_check_branch
    %134 = sbr.rel (0) target = $region21
  $region20: #{cross_layer_cross_scale_projector.77} parent=0 // pred_region
    _
  $region21: #{cross_layer_cross_scale_projector.77} parent=0 // pred_fallthru
    _
  // Predicated region
  $region22: #{cross_layer_cross_scale_projector.77} parent=0 // pred_check
    _
  $region23: #{cross_layer_cross_scale_projector.77} parent=0 // pred_check_branch
    %136 = sbr.rel (0) target = $region25
  $region24: #{cross_layer_cross_scale_projector.77} parent=0 // pred_region
    _
  $region25: #{cross_layer_cross_scale_projector.77} parent=0 // pred_fallthru
    _

// kernel: cross_layer_cross_scale_projector.78
$region0: #{cross_layer_cross_scale_projector.78}
  #allocation0 [shape = 'u32[]', space=smem, size = 0x4, offset = 0x4, fixed_abs, tag = 'smem constant byte address 0x4 - core index']
  #allocation1 [shape = 'u32[72,128]{1,0:T(1,128)}', space=vmem, size = 0x9000, scoped, tag = 'internal scratch']
  %s0 = inlined_call_operand.vmem [shape: f32[64,64], index: 0, kind: input, shape index: {}]
  %s1 = inlined_call_operand.vmem [shape: bf16[64,64], index: 1, kind: input, shape index: {}]
  %s2 = inlined_call_operand.vmem [shape: f32[1,64], index: 2, kind: input, shape index: {}]
  %s3 = inlined_call_operand.vmem [shape: f32[64,64], index: 3, kind: output, shape index: {}]
  %s4 = sld [smem:[#allocation0]]
  $region22: #{cross_layer_cross_scale_projector.78} parent=0
    _
  %s6 = ssub.s32 1, %s4
  %s7 = scalar_select 0, %s6, %s4
  // Predicated region
  $region2: #{cross_layer_cross_scale_projector.78} parent=0 // pred_check
    _
  $region3: #{cross_layer_cross_scale_projector.78} parent=0 // pred_check_branch
    %9 = sbr.rel (0) target = $region5
  $region4: #{cross_layer_cross_scale_projector.78} parent=0 // pred_region
    _
  $region5: #{cross_layer_cross_scale_projector.78} parent=0 // pred_fallthru
    _
  // Predicated region
  $region6: #{cross_layer_cross_scale_projector.78} parent=0 // pred_check
    _
  $region7: #{cross_layer_cross_scale_projector.78} parent=0 // pred_check_branch
    %11 = sbr.rel (0) target = $region9
  $region8: #{cross_layer_cross_scale_projector.78} parent=0 // pred_region
    _
  $region9: #{cross_layer_cross_scale_projector.78} parent=0 // pred_fallthru
    _
  // Predicated region
  $region10: #{cross_layer_cross_scale_projector.78} parent=0 // pred_check
    _
  $region11: #{cross_layer_cross_scale_projector.78} parent=0 // pred_check_branch
    %13 = sbr.rel (0) target = $region13
  $region12: #{cross_layer_cross_scale_projector.78} parent=0 // pred_region
    _
  $region13: #{cross_layer_cross_scale_projector.78} parent=0 // pred_fallthru
    _
  %v15 = vld [vmem:[%s0] sm:$0xff]
  %v16 = vld [vmem:[%s0 + $0x8] sm:$0xff]
  %v17 = vld [vmem:[%s0 + $0x10] sm:$0xff]
  %v18 = vld [vmem:[%s0 + $0x18] sm:$0xff]
  %v19 = vld [vmem:[%s0 + $0x20] sm:$0xff]
  %v20 = vld [vmem:[%s0 + $0x28] sm:$0xff]
  %v21 = vld [vmem:[%s0 + $0x30] sm:$0xff]
  %v22 = vld [vmem:[%s0 + $0x38] sm:$0xff]
  %v23 = vpack.c.bf16 %v16, %v15
  %v24 = vpack.c.bf16 %v18, %v17
  %v25 = vpack.c.bf16 %v20, %v19
  %v26 = vpack.c.bf16 %v22, %v21
  %v27 = vld [vmem:[%s1] sm:$0xf]
  %v28 = vld [vmem:[%s1 + $0x4] sm:$0xf]
  %v29 = vld [vmem:[%s1 + $0x8] sm:$0xf]
  %v30 = vld [vmem:[%s1 + $0xc] sm:$0xf]
  %v31 = vld [vmem:[%s1 + $0x10] sm:$0xf]
  %v32 = vld [vmem:[%s1 + $0x14] sm:$0xf]
  %v33 = vld [vmem:[%s1 + $0x18] sm:$0xf]
  %v34 = vld [vmem:[%s1 + $0x1c] sm:$0xf]
  %v35 = vld [vmem:[%s2] sm:$0x1]
  %v37 = vperm.slane %v35, 0
  %v47 = vunpack.c.l.b16 %v27
  %v48 = vunpack.c.l.b16 %v28
  %v49 = vunpack.c.l.b16 %v29
  %v50 = vunpack.c.l.b16 %v30
  %v51 = vunpack.c.l.b16 %v31
  %v52 = vunpack.c.l.b16 %v32
  %v53 = vunpack.c.l.b16 %v33
  %v54 = vunpack.c.l.b16 %v34
  %v55 = vpack.c.b16 %v48, %v47
  %v56 = vpack.c.b16 %v50, %v49
  %v57 = vpack.c.b16 %v52, %v51
  %v58 = vpack.c.b16 %v54, %v53
  %vm63 = vcmask 523264
  %v65 = vsel %vm63, %v23, 0
  %v68 = vsel %vm63, %v24, 0
  %v71 = vsel %vm63, %v25, 0
  %v74 = vsel %vm63, %v26, 0
  %76 = vmatpush.bf16.msra.mxu0 0
  %77 = vmatpush.bf16.msra.mxu0 0
  %78 = vmatpush.bf16.msra.mxu0 0
  %79 = vmatpush.bf16.msra.mxu0 0
  %80 = vmatpush.bf16.msra.mxu0 %v58
  %81 = vmatpush.bf16.msra.mxu0 %v57
  %82 = vmatpush.bf16.msra.mxu0 %v56
  %83 = vmatpush.bf16.msra.mxu0 %v55
  %84 = vmatmul.bf16.gmra.mxu0 %v65
  %v85 = vpop.f32.mrf.mxu0
  %v86 = vadd.f32 %v37, %v85
  %v87 = vpop.f32.mrf.mxu0
  %v88 = vadd.f32 %v37, %v87
  %89 = vmatmul.bf16.gmra.mxu0 %v68
  %v90 = vpop.f32.mrf.mxu0
  %v91 = vadd.f32 %v37, %v90
  %v92 = vpop.f32.mrf.mxu0
  %v93 = vadd.f32 %v37, %v92
  %94 = vmatmul.bf16.gmra.mxu0 %v71
  %v95 = vpop.f32.mrf.mxu0
  %v96 = vadd.f32 %v37, %v95
  %v97 = vpop.f32.mrf.mxu0
  %v98 = vadd.f32 %v37, %v97
  %99 = vmatmul.bf16.gmra.mxu0 %v74
  %v100 = vpop.f32.mrf.mxu0
  %v101 = vadd.f32 %v37, %v100
  %v102 = vpop.f32.mrf.mxu0
  %v103 = vadd.f32 %v37, %v102
  %104 = vdwg.mxu0
  %105 = vst.msk [vmem:[%s3] sm:$0xff] %vm63, %v86
  %106 = vst.msk [vmem:[%s3 + $0x8] sm:$0xff] %vm63, %v88
  %107 = vst.msk [vmem:[%s3 + $0x10] sm:$0xff] %vm63, %v91
  %108 = vst.msk [vmem:[%s3 + $0x18] sm:$0xff] %vm63, %v93
  %109 = vst.msk [vmem:[%s3 + $0x20] sm:$0xff] %vm63, %v96
  %110 = vst.msk [vmem:[%s3 + $0x28] sm:$0xff] %vm63, %v98
  %111 = vst.msk [vmem:[%s3 + $0x30] sm:$0xff] %vm63, %v101
  %112 = vst.msk [vmem:[%s3 + $0x38] sm:$0xff] %vm63, %v103
  // Predicated region
  $region14: #{cross_layer_cross_scale_projector.78} parent=0 // pred_check
    _
  $region15: #{cross_layer_cross_scale_projector.78} parent=0 // pred_check_branch
    %114 = sbr.rel (0) target = $region17
  $region16: #{cross_layer_cross_scale_projector.78} parent=0 // pred_region
    _
  $region17: #{cross_layer_cross_scale_projector.78} parent=0 // pred_fallthru
    _
  // Predicated region
  $region18: #{cross_layer_cross_scale_projector.78} parent=0 // pred_check
    _
  $region19: #{cross_layer_cross_scale_projector.78} parent=0 // pred_check_branch
    %116 = sbr.rel (0) target = $region21
  $region20: #{cross_layer_cross_scale_projector.78} parent=0 // pred_region
    _
  $region21: #{cross_layer_cross_scale_projector.78} parent=0 // pred_fallthru
    _

// kernel: cross_layer_cross_scale_projector.82
$region0: #{cross_layer_cross_scale_projector.82}
  #allocation0 [shape = 'u32[]', space=smem, size = 0x4, offset = 0x4, fixed_abs, tag = 'smem constant byte address 0x4 - core index']
  #allocation1 [shape = 'u32[72,128]{1,0:T(1,128)}', space=vmem, size = 0x9000, scoped, tag = 'internal scratch']
  #allocation2 [shape = 'bf16[64,64]{1,0:T(8,128)(2,1)}', space=vmem, size = 0x4000, scoped, tag = 'scratch operand']
  %s0 = inlined_call_operand.vmem [shape: f32[64,64], index: 0, kind: input, shape index: {}]
  %s1 = inlined_call_operand.vmem [shape: f32[1,64], index: 1, kind: input, shape index: {}]
  %s2 = inlined_call_operand.vmem [shape: f32[1,64], index: 2, kind: input, shape index: {}]
  %s3 = inlined_call_operand.vmem [shape: bf16[64,128], index: 3, kind: input, shape index: {}]
  %s4 = inlined_call_operand.vmem [shape: bf16[64,128], index: 4, kind: output, shape index: {}]
  %s5 = sld [smem:[#allocation0]]
  $region30: #{cross_layer_cross_scale_projector.82} parent=0
    _
  %s7 = ssub.s32 1, %s5
  %s8 = scalar_select 0, %s7, %s5
  // Predicated region
  $region2: #{cross_layer_cross_scale_projector.82} parent=0 // pred_check
    _
  $region3: #{cross_layer_cross_scale_projector.82} parent=0 // pred_check_branch
    %10 = sbr.rel (0) target = $region5
  $region4: #{cross_layer_cross_scale_projector.82} parent=0 // pred_region
    _
  $region5: #{cross_layer_cross_scale_projector.82} parent=0 // pred_fallthru
    _
  // Predicated region
  $region6: #{cross_layer_cross_scale_projector.82} parent=0 // pred_check
    _
  $region7: #{cross_layer_cross_scale_projector.82} parent=0 // pred_check_branch
    %12 = sbr.rel (0) target = $region9
  $region8: #{cross_layer_cross_scale_projector.82} parent=0 // pred_region
    _
  $region9: #{cross_layer_cross_scale_projector.82} parent=0 // pred_fallthru
    _
  // Predicated region
  $region10: #{cross_layer_cross_scale_projector.82} parent=0 // pred_check
    _
  $region11: #{cross_layer_cross_scale_projector.82} parent=0 // pred_check_branch
    %14 = sbr.rel (0) target = $region13
  $region12: #{cross_layer_cross_scale_projector.82} parent=0 // pred_region
    _
  $region13: #{cross_layer_cross_scale_projector.82} parent=0 // pred_fallthru
    _
  // Predicated region
  $region14: #{cross_layer_cross_scale_projector.82} parent=0 // pred_check
    _
  $region15: #{cross_layer_cross_scale_projector.82} parent=0 // pred_check_branch
    %16 = sbr.rel (0) target = $region17
  $region16: #{cross_layer_cross_scale_projector.82} parent=0 // pred_region
    _
  $region17: #{cross_layer_cross_scale_projector.82} parent=0 // pred_fallthru
    _
  %p18 = scmp.eq.s32.totalorder 0, 0
  // Predicated region
  $region18: #{cross_layer_cross_scale_projector.82} parent=0 // pred_check
    %p19 = pneg %p18
  $region19: #{cross_layer_cross_scale_projector.82} parent=0 // pred_check_branch
    %21 = sbr.rel (%p19) target = $region21
  $region20: #{cross_layer_cross_scale_projector.82} parent=0 // pred_region
    %v22 = vld [vmem:[%s0] sm:$0xff]
    %v23 = vld [vmem:[%s0 + $0x8] sm:$0xff]
    %v24 = vld [vmem:[%s0 + $0x10] sm:$0xff]
    %v25 = vld [vmem:[%s0 + $0x18] sm:$0xff]
    %v26 = vld [vmem:[%s0 + $0x20] sm:$0xff]
    %v27 = vld [vmem:[%s0 + $0x28] sm:$0xff]
    %v28 = vld [vmem:[%s0 + $0x30] sm:$0xff]
    %v29 = vld [vmem:[%s0 + $0x38] sm:$0xff]
    %vm30 = vcmask 523264
    %v31 = vsel %vm30, %v22, 0.0
    %32 = vadd.xlane.f32.xlu0 %v31
    %v33 = vpop.xlane.xlu0 %32
    %v34 = vsel %vm30, %v23, 0.0
    %35 = vadd.xlane.f32.xlu0 %v34
    %v36 = vpop.xlane.xlu0 %35
    %v37 = vsel %vm30, %v24, 0.0
    %38 = vadd.xlane.f32.xlu0 %v37
    %v39 = vpop.xlane.xlu0 %38
    %v40 = vsel %vm30, %v25, 0.0
    %41 = vadd.xlane.f32.xlu0 %v40
    %v42 = vpop.xlane.xlu0 %41
    %v43 = vsel %vm30, %v26, 0.0
    %44 = vadd.xlane.f32.xlu0 %v43
    %v45 = vpop.xlane.xlu0 %44
    %v46 = vsel %vm30, %v27, 0.0
    %47 = vadd.xlane.f32.xlu0 %v46
    %v48 = vpop.xlane.xlu0 %47
    %v49 = vsel %vm30, %v28, 0.0
    %50 = vadd.xlane.f32.xlu0 %v49
    %v51 = vpop.xlane.xlu0 %50
    %v52 = vsel %vm30, %v29, 0.0
    %53 = vadd.xlane.f32.xlu0 %v52
    %v54 = vpop.xlane.xlu0 %53
    %v55 = vrcp.pop 64.0
    %v56 = vmul.f32 64.0, %v55
    %v57 = vsub.f32 1.0, %v56
    %v58 = vmul.f32 %v55, %v57
    %v59 = vadd.f32 %v55, %v58
    %vm60 = vweird.f32 %v55
    %v61 = vsel %vm60, %v55, %v59
    %v62 = vmul.f32 %v33, %v61
    %v63 = vmul.f32 %v36, %v61
    %v64 = vmul.f32 %v39, %v61
    %v65 = vmul.f32 %v42, %v61
    %v66 = vmul.f32 %v45, %v61
    %v67 = vmul.f32 %v48, %v61
    %v68 = vmul.f32 %v51, %v61
    %v69 = vmul.f32 %v54, %v61
    %v70 = vsub.f32 %v22, %v62
    %v71 = vsub.f32 %v23, %v63
    %v72 = vsub.f32 %v24, %v64
    %v73 = vsub.f32 %v25, %v65
    %v74 = vsub.f32 %v26, %v66
    %v75 = vsub.f32 %v27, %v67
    %v76 = vsub.f32 %v28, %v68
    %v77 = vsub.f32 %v29, %v69
    %v78 = vmul.f32 %v70, %v70
    %v79 = vmul.f32 %v71, %v71
    %v80 = vmul.f32 %v72, %v72
    %v81 = vmul.f32 %v73, %v73
    %v82 = vmul.f32 %v74, %v74
    %v83 = vmul.f32 %v75, %v75
    %v84 = vmul.f32 %v76, %v76
    %v85 = vmul.f32 %v77, %v77
    %v86 = vsel %vm30, %v78, 0.0
    %87 = vadd.xlane.f32.xlu0 %v86
    %v88 = vpop.xlane.xlu0 %87
    %v89 = vsel %vm30, %v79, 0.0
    %90 = vadd.xlane.f32.xlu0 %v89
    %v91 = vpop.xlane.xlu0 %90
    %v92 = vsel %vm30, %v80, 0.0
    %93 = vadd.xlane.f32.xlu0 %v92
    %v94 = vpop.xlane.xlu0 %93
    %v95 = vsel %vm30, %v81, 0.0
    %96 = vadd.xlane.f32.xlu0 %v95
    %v97 = vpop.xlane.xlu0 %96
    %v98 = vsel %vm30, %v82, 0.0
    %99 = vadd.xlane.f32.xlu0 %v98
    %v100 = vpop.xlane.xlu0 %99
    %v101 = vsel %vm30, %v83, 0.0
    %102 = vadd.xlane.f32.xlu0 %v101
    %v103 = vpop.xlane.xlu0 %102
    %v104 = vsel %vm30, %v84, 0.0
    %105 = vadd.xlane.f32.xlu0 %v104
    %v106 = vpop.xlane.xlu0 %105
    %v107 = vsel %vm30, %v85, 0.0
    %108 = vadd.xlane.f32.xlu0 %v107
    %v109 = vpop.xlane.xlu0 %108
    %v110 = vmul.f32 %v88, %v61
    %v111 = vmul.f32 %v91, %v61
    %v112 = vmul.f32 %v94, %v61
    %v113 = vmul.f32 %v97, %v61
    %v114 = vmul.f32 %v100, %v61
    %v115 = vmul.f32 %v103, %v61
    %v116 = vmul.f32 %v106, %v61
    %v117 = vmul.f32 %v109, %v61
    %v118 = vadd.f32 %v110, 1e-05
    %v119 = vadd.f32 %v111, 1e-05
    %v120 = vadd.f32 %v112, 1e-05
    %v121 = vadd.f32 %v113, 1e-05
    %v122 = vadd.f32 %v114, 1e-05
    %v123 = vadd.f32 %v115, 1e-05
    %v124 = vadd.f32 %v116, 1e-05
    %v125 = vadd.f32 %v117, 1e-05
    %v126 = vrsqrt.pop %v118
    %v127 = vmul.f32 %v126, %v118
    %v128 = vmul.f32 %v127, %v126
    %v129 = vmul.f32 0.5, %v128
    %v130 = vsub.f32 1.5, %v129
    %v131 = vmul.f32 %v126, %v130
    %vm132 = vweird.f32 %v118
    %vm133 = vweird.f32 %v126
    %vm134 = vmor %vm132, %vm133
    %v135 = vsel %vm134, %v126, %v131
    %v136 = vrsqrt.pop %v119
    %v137 = vmul.f32 %v136, %v119
    %v138 = vmul.f32 %v137, %v136
    %v139 = vmul.f32 0.5, %v138
    %v140 = vsub.f32 1.5, %v139
    %v141 = vmul.f32 %v136, %v140
    %vm142 = vweird.f32 %v119
    %vm143 = vweird.f32 %v136
    %vm144 = vmor %vm142, %vm143
    %v145 = vsel %vm144, %v136, %v141
    %v146 = vrsqrt.pop %v120
    %v147 = vmul.f32 %v146, %v120
    %v148 = vmul.f32 %v147, %v146
    %v149 = vmul.f32 0.5, %v148
    %v150 = vsub.f32 1.5, %v149
    %v151 = vmul.f32 %v146, %v150
    %vm152 = vweird.f32 %v120
    %vm153 = vweird.f32 %v146
    %vm154 = vmor %vm152, %vm153
    %v155 = vsel %vm154, %v146, %v151
    %v156 = vrsqrt.pop %v121
    %v157 = vmul.f32 %v156, %v121
    %v158 = vmul.f32 %v157, %v156
    %v159 = vmul.f32 0.5, %v158
    %v160 = vsub.f32 1.5, %v159
    %v161 = vmul.f32 %v156, %v160
    %vm162 = vweird.f32 %v121
    %vm163 = vweird.f32 %v156
    %vm164 = vmor %vm162, %vm163
    %v165 = vsel %vm164, %v156, %v161
    %v166 = vrsqrt.pop %v122
    %v167 = vmul.f32 %v166, %v122
    %v168 = vmul.f32 %v167, %v166
    %v169 = vmul.f32 0.5, %v168
    %v170 = vsub.f32 1.5, %v169
    %v171 = vmul.f32 %v166, %v170
    %vm172 = vweird.f32 %v122
    %vm173 = vweird.f32 %v166
    %vm174 = vmor %vm172, %vm173
    %v175 = vsel %vm174, %v166, %v171
    %v176 = vrsqrt.pop %v123
    %v177 = vmul.f32 %v176, %v123
    %v178 = vmul.f32 %v177, %v176
    %v179 = vmul.f32 0.5, %v178
    %v180 = vsub.f32 1.5, %v179
    %v181 = vmul.f32 %v176, %v180
    %vm182 = vweird.f32 %v123
    %vm183 = vweird.f32 %v176
    %vm184 = vmor %vm182, %vm183
    %v185 = vsel %vm184, %v176, %v181
    %v186 = vrsqrt.pop %v124
    %v187 = vmul.f32 %v186, %v124
    %v188 = vmul.f32 %v187, %v186
    %v189 = vmul.f32 0.5, %v188
    %v190 = vsub.f32 1.5, %v189
    %v191 = vmul.f32 %v186, %v190
    %vm192 = vweird.f32 %v124
    %vm193 = vweird.f32 %v186
    %vm194 = vmor %vm192, %vm193
    %v195 = vsel %vm194, %v186, %v191
    %v196 = vrsqrt.pop %v125
    %v197 = vmul.f32 %v196, %v125
    %v198 = vmul.f32 %v197, %v196
    %v199 = vmul.f32 0.5, %v198
    %v200 = vsub.f32 1.5, %v199
    %v201 = vmul.f32 %v196, %v200
    %vm202 = vweird.f32 %v125
    %vm203 = vweird.f32 %v196
    %vm204 = vmor %vm202, %vm203
    %v205 = vsel %vm204, %v196, %v201
    %v206 = vmul.f32 %v70, %v135
    %v207 = vmul.f32 %v71, %v145
    %v208 = vmul.f32 %v72, %v155
    %v209 = vmul.f32 %v73, %v165
    %v210 = vmul.f32 %v74, %v175
    %v211 = vmul.f32 %v75, %v185
    %v212 = vmul.f32 %v76, %v195
    %v213 = vmul.f32 %v77, %v205
    %v214 = vld [vmem:[%s1] sm:$0x1]
    %v216 = vperm.slane %v214, 0
    %v218 = vmul.f32 %v206, %v216
    %v219 = vmul.f32 %v207, %v216
    %v220 = vmul.f32 %v208, %v216
    %v221 = vmul.f32 %v209, %v216
    %v222 = vmul.f32 %v210, %v216
    %v223 = vmul.f32 %v211, %v216
    %v224 = vmul.f32 %v212, %v216
    %v225 = vmul.f32 %v213, %v216
    %v226 = vld [vmem:[%s2] sm:$0x1]
    %v228 = vperm.slane %v226, 0
    %v230 = vadd.f32 %v218, %v228
    %v231 = vadd.f32 %v219, %v228
    %v232 = vadd.f32 %v220, %v228
    %v233 = vadd.f32 %v221, %v228
    %v234 = vadd.f32 %v222, %v228
    %v235 = vadd.f32 %v223, %v228
    %v236 = vadd.f32 %v224, %v228
    %v237 = vadd.f32 %v225, %v228
    %v238 = vpack.c.bf16 %v230, %v230
    %v239 = vpack.c.bf16 %v231, %v231
    %v240 = vpack.c.bf16 %v232, %v232
    %v241 = vpack.c.bf16 %v233, %v233
    %v242 = vpack.c.bf16 %v234, %v234
    %v243 = vpack.c.bf16 %v235, %v235
    %v244 = vpack.c.bf16 %v236, %v236
    %v245 = vpack.c.bf16 %v237, %v237
    %vm246 = vcmask 519168
    %247 = vst.msk [vmem:[#allocation2] sm:$0xf] %vm246, %v238
    %248 = vst.msk [vmem:[#allocation2 + $0x4] sm:$0xf] %vm246, %v239
    %249 = vst.msk [vmem:[#allocation2 + $0x8] sm:$0xf] %vm246, %v240
    %250 = vst.msk [vmem:[#allocation2 + $0xc] sm:$0xf] %vm246, %v241
    %251 = vst.msk [vmem:[#allocation2 + $0x10] sm:$0xf] %vm246, %v242
    %252 = vst.msk [vmem:[#allocation2 + $0x14] sm:$0xf] %vm246, %v243
    %253 = vst.msk [vmem:[#allocation2 + $0x18] sm:$0xf] %vm246, %v244
    %254 = vst.msk [vmem:[#allocation2 + $0x1c] sm:$0xf] %vm246, %v245
  $region21: #{cross_layer_cross_scale_projector.82} parent=0 // pred_fallthru
    _
  %v255 = vld [vmem:[#allocation2] sm:$0xf]
  %v256 = vld [vmem:[#allocation2 + $0x4] sm:$0xf]
  %v257 = vld [vmem:[#allocation2 + $0x8] sm:$0xf]
  %v258 = vld [vmem:[#allocation2 + $0xc] sm:$0xf]
  %v259 = vld [vmem:[#allocation2 + $0x10] sm:$0xf]
  %v260 = vld [vmem:[#allocation2 + $0x14] sm:$0xf]
  %v261 = vld [vmem:[#allocation2 + $0x18] sm:$0xf]
  %v262 = vld [vmem:[#allocation2 + $0x1c] sm:$0xf]
  %v263 = vld [vmem:[%s3] sm:$0xf]
  %v264 = vld [vmem:[%s3 + $0x4] sm:$0xf]
  %v265 = vld [vmem:[%s3 + $0x8] sm:$0xf]
  %v266 = vld [vmem:[%s3 + $0xc] sm:$0xf]
  %v267 = vld [vmem:[%s3 + $0x10] sm:$0xf]
  %v268 = vld [vmem:[%s3 + $0x14] sm:$0xf]
  %v269 = vld [vmem:[%s3 + $0x18] sm:$0xf]
  %v270 = vld [vmem:[%s3 + $0x1c] sm:$0xf]
  %v279 = vunpack.c.l.b16 %v255
  %v280 = vunpack.c.l.b16 %v256
  %v281 = vunpack.c.l.b16 %v257
  %v282 = vunpack.c.l.b16 %v258
  %v283 = vunpack.c.l.b16 %v259
  %v284 = vunpack.c.l.b16 %v260
  %v285 = vunpack.c.l.b16 %v261
  %v286 = vunpack.c.l.b16 %v262
  %v287 = vpack.c.b16 %v280, %v279
  %v288 = vpack.c.b16 %v282, %v281
  %v289 = vpack.c.b16 %v284, %v283
  %v290 = vpack.c.b16 %v286, %v285
  %v299 = vunpack.c.l.b16 %v263
  %v300 = vunpack.c.l.b16 %v264
  %v301 = vunpack.c.l.b16 %v265
  %v302 = vunpack.c.l.b16 %v266
  %v303 = vunpack.c.l.b16 %v267
  %v304 = vunpack.c.l.b16 %v268
  %v305 = vunpack.c.l.b16 %v269
  %v306 = vunpack.c.l.b16 %v270
  %v307 = vpack.c.b16 %v300, %v299
  %v308 = vpack.c.b16 %v302, %v301
  %v309 = vpack.c.b16 %v304, %v303
  %v310 = vpack.c.b16 %v306, %v305
  %vm315 = vcmask 523264
  %v317 = vsel %vm315, %v287, 0
  %v320 = vsel %vm315, %v288, 0
  %v323 = vsel %vm315, %v289, 0
  %v326 = vsel %vm315, %v290, 0
  %328 = vmatpush.bf16.msra.mxu0 0
  %329 = vmatpush.bf16.msra.mxu0 0
  %330 = vmatpush.bf16.msra.mxu0 0
  %331 = vmatpush.bf16.msra.mxu0 0
  %332 = vmatpush.bf16.msra.mxu0 %v310
  %333 = vmatpush.bf16.msra.mxu0 %v309
  %334 = vmatpush.bf16.msra.mxu0 %v308
  %335 = vmatpush.bf16.msra.mxu0 %v307
  %336 = vmatmul.bf16.gmra.mxu0 %v317
  %v337 = vpop.f32.mrf.mxu0
  %v338 = vadd.f32 0.0, %v337
  %v339 = vpop.f32.mrf.mxu0
  %v340 = vadd.f32 0.0, %v339
  %341 = vmatmul.bf16.gmra.mxu0 %v320
  %v342 = vpop.f32.mrf.mxu0
  %v343 = vadd.f32 0.0, %v342
  %v344 = vpop.f32.mrf.mxu0
  %v345 = vadd.f32 0.0, %v344
  %346 = vmatmul.bf16.gmra.mxu0 %v323
  %v347 = vpop.f32.mrf.mxu0
  %v348 = vadd.f32 0.0, %v347
  %v349 = vpop.f32.mrf.mxu0
  %v350 = vadd.f32 0.0, %v349
  %351 = vmatmul.bf16.gmra.mxu0 %v326
  %v352 = vpop.f32.mrf.mxu0
  %v353 = vadd.f32 0.0, %v352
  %v354 = vpop.f32.mrf.mxu0
  %v355 = vadd.f32 0.0, %v354
  %356 = vdwg.mxu0
  %v357 = vpack.c.bf16 %v338, %v338
  %v358 = vpack.c.bf16 %v340, %v340
  %v359 = vpack.c.bf16 %v343, %v343
  %v360 = vpack.c.bf16 %v345, %v345
  %v361 = vpack.c.bf16 %v348, %v348
  %v362 = vpack.c.bf16 %v350, %v350
  %v363 = vpack.c.bf16 %v353, %v353
  %v364 = vpack.c.bf16 %v355, %v355
  %365 = vst [vmem:[%s4] sm:$0xf] %v357
  %366 = vst [vmem:[%s4 + $0x4] sm:$0xf] %v358
  %367 = vst [vmem:[%s4 + $0x8] sm:$0xf] %v359
  %368 = vst [vmem:[%s4 + $0xc] sm:$0xf] %v360
  %369 = vst [vmem:[%s4 + $0x10] sm:$0xf] %v361
  %370 = vst [vmem:[%s4 + $0x14] sm:$0xf] %v362
  %371 = vst [vmem:[%s4 + $0x18] sm:$0xf] %v363
  %372 = vst [vmem:[%s4 + $0x1c] sm:$0xf] %v364
  // Predicated region
  $region22: #{cross_layer_cross_scale_projector.82} parent=0 // pred_check
    _
  $region23: #{cross_layer_cross_scale_projector.82} parent=0 // pred_check_branch
    %374 = sbr.rel (0) target = $region25
  $region24: #{cross_layer_cross_scale_projector.82} parent=0 // pred_region
    _
  $region25: #{cross_layer_cross_scale_projector.82} parent=0 // pred_fallthru
    _
  // Predicated region
  $region26: #{cross_layer_cross_scale_projector.82} parent=0 // pred_check
    _
  $region27: #{cross_layer_cross_scale_projector.82} parent=0 // pred_check_branch
    %376 = sbr.rel (0) target = $region29
  $region28: #{cross_layer_cross_scale_projector.82} parent=0 // pred_region
    _
  $region29: #{cross_layer_cross_scale_projector.82} parent=0 // pred_fallthru
    _

// kernel: cross_layer_cross_scale_projector.83
$region0: #{cross_layer_cross_scale_projector.83}
  #allocation0 [shape = 'u32[]', space=smem, size = 0x4, offset = 0x4, fixed_abs, tag = 'smem constant byte address 0x4 - core index']
  #allocation1 [shape = 'u32[72,128]{1,0:T(1,128)}', space=vmem, size = 0x9000, scoped, tag = 'internal scratch']
  #allocation2 [shape = 'bf16[16,64]{1,0:T(8,128)(2,1)}', space=vmem, size = 0x1000, scoped, tag = 'scratch operand']
  %s0 = inlined_call_operand.vmem [shape: f32[16,64], index: 0, kind: input, shape index: {}]
  %s1 = inlined_call_operand.vmem [shape: f32[1,64], index: 1, kind: input, shape index: {}]
  %s2 = inlined_call_operand.vmem [shape: f32[1,64], index: 2, kind: input, shape index: {}]
  %s3 = inlined_call_operand.vmem [shape: bf16[64,128], index: 3, kind: input, shape index: {}]
  %s4 = inlined_call_operand.vmem [shape: bf16[16,128], index: 4, kind: output, shape index: {}]
  %s5 = sld [smem:[#allocation0]]
  $region30: #{cross_layer_cross_scale_projector.83} parent=0
    _
  %s7 = ssub.s32 1, %s5
  %s8 = scalar_select 0, %s7, %s5
  // Predicated region
  $region2: #{cross_layer_cross_scale_projector.83} parent=0 // pred_check
    _
  $region3: #{cross_layer_cross_scale_projector.83} parent=0 // pred_check_branch
    %10 = sbr.rel (0) target = $region5
  $region4: #{cross_layer_cross_scale_projector.83} parent=0 // pred_region
    _
  $region5: #{cross_layer_cross_scale_projector.83} parent=0 // pred_fallthru
    _
  // Predicated region
  $region6: #{cross_layer_cross_scale_projector.83} parent=0 // pred_check
    _
  $region7: #{cross_layer_cross_scale_projector.83} parent=0 // pred_check_branch
    %12 = sbr.rel (0) target = $region9
  $region8: #{cross_layer_cross_scale_projector.83} parent=0 // pred_region
    _
  $region9: #{cross_layer_cross_scale_projector.83} parent=0 // pred_fallthru
    _
  // Predicated region
  $region10: #{cross_layer_cross_scale_projector.83} parent=0 // pred_check
    _
  $region11: #{cross_layer_cross_scale_projector.83} parent=0 // pred_check_branch
    %14 = sbr.rel (0) target = $region13
  $region12: #{cross_layer_cross_scale_projector.83} parent=0 // pred_region
    _
  $region13: #{cross_layer_cross_scale_projector.83} parent=0 // pred_fallthru
    _
  // Predicated region
  $region14: #{cross_layer_cross_scale_projector.83} parent=0 // pred_check
    _
  $region15: #{cross_layer_cross_scale_projector.83} parent=0 // pred_check_branch
    %16 = sbr.rel (0) target = $region17
  $region16: #{cross_layer_cross_scale_projector.83} parent=0 // pred_region
    _
  $region17: #{cross_layer_cross_scale_projector.83} parent=0 // pred_fallthru
    _
  %p18 = scmp.eq.s32.totalorder 0, 0
  // Predicated region
  $region18: #{cross_layer_cross_scale_projector.83} parent=0 // pred_check
    %p19 = pneg %p18
  $region19: #{cross_layer_cross_scale_projector.83} parent=0 // pred_check_branch
    %21 = sbr.rel (%p19) target = $region21
  $region20: #{cross_layer_cross_scale_projector.83} parent=0 // pred_region
    %v22 = vld [vmem:[%s0] sm:$0xff]
    %v23 = vld [vmem:[%s0 + $0x8] sm:$0xff]
    %vm24 = vcmask 523264
    %v25 = vsel %vm24, %v22, 0.0
    %26 = vadd.xlane.f32.xlu0 %v25
    %v27 = vpop.xlane.xlu0 %26
    %v28 = vsel %vm24, %v23, 0.0
    %29 = vadd.xlane.f32.xlu0 %v28
    %v30 = vpop.xlane.xlu0 %29
    %v31 = vrcp.pop 64.0
    %v32 = vmul.f32 64.0, %v31
    %v33 = vsub.f32 1.0, %v32
    %v34 = vmul.f32 %v31, %v33
    %v35 = vadd.f32 %v31, %v34
    %vm36 = vweird.f32 %v31
    %v37 = vsel %vm36, %v31, %v35
    %v38 = vmul.f32 %v27, %v37
    %v39 = vmul.f32 %v30, %v37
    %v40 = vsub.f32 %v22, %v38
    %v41 = vsub.f32 %v23, %v39
    %v42 = vmul.f32 %v40, %v40
    %v43 = vmul.f32 %v41, %v41
    %v44 = vsel %vm24, %v42, 0.0
    %45 = vadd.xlane.f32.xlu0 %v44
    %v46 = vpop.xlane.xlu0 %45
    %v47 = vsel %vm24, %v43, 0.0
    %48 = vadd.xlane.f32.xlu0 %v47
    %v49 = vpop.xlane.xlu0 %48
    %v50 = vmul.f32 %v46, %v37
    %v51 = vmul.f32 %v49, %v37
    %v52 = vadd.f32 %v50, 1e-05
    %v53 = vadd.f32 %v51, 1e-05
    %v54 = vrsqrt.pop %v52
    %v55 = vmul.f32 %v54, %v52
    %v56 = vmul.f32 %v55, %v54
    %v57 = vmul.f32 0.5, %v56
    %v58 = vsub.f32 1.5, %v57
    %v59 = vmul.f32 %v54, %v58
    %vm60 = vweird.f32 %v52
    %vm61 = vweird.f32 %v54
    %vm62 = vmor %vm60, %vm61
    %v63 = vsel %vm62, %v54, %v59
    %v64 = vrsqrt.pop %v53
    %v65 = vmul.f32 %v64, %v53
    %v66 = vmul.f32 %v65, %v64
    %v67 = vmul.f32 0.5, %v66
    %v68 = vsub.f32 1.5, %v67
    %v69 = vmul.f32 %v64, %v68
    %vm70 = vweird.f32 %v53
    %vm71 = vweird.f32 %v64
    %vm72 = vmor %vm70, %vm71
    %v73 = vsel %vm72, %v64, %v69
    %v74 = vmul.f32 %v40, %v63
    %v75 = vmul.f32 %v41, %v73
    %v76 = vld [vmem:[%s1] sm:$0x1]
    %v78 = vperm.slane %v76, 0
    %v80 = vmul.f32 %v74, %v78
    %v81 = vmul.f32 %v75, %v78
    %v82 = vld [vmem:[%s2] sm:$0x1]
    %v84 = vperm.slane %v82, 0
    %v86 = vadd.f32 %v80, %v84
    %v87 = vadd.f32 %v81, %v84
    %v88 = vpack.c.bf16 %v86, %v86
    %v89 = vpack.c.bf16 %v87, %v87
    %vm90 = vcmask 519168
    %91 = vst.msk [vmem:[#allocation2] sm:$0xf] %vm90, %v88
    %92 = vst.msk [vmem:[#allocation2 + $0x4] sm:$0xf] %vm90, %v89
  $region21: #{cross_layer_cross_scale_projector.83} parent=0 // pred_fallthru
    _
  %v93 = vld [vmem:[#allocation2] sm:$0xf]
  %v94 = vld [vmem:[#allocation2 + $0x4] sm:$0xf]
  %v95 = vld [vmem:[%s3] sm:$0xf]
  %v96 = vld [vmem:[%s3 + $0x4] sm:$0xf]
  %v97 = vld [vmem:[%s3 + $0x8] sm:$0xf]
  %v98 = vld [vmem:[%s3 + $0xc] sm:$0xf]
  %v99 = vld [vmem:[%s3 + $0x10] sm:$0xf]
  %v100 = vld [vmem:[%s3 + $0x14] sm:$0xf]
  %v101 = vld [vmem:[%s3 + $0x18] sm:$0xf]
  %v102 = vld [vmem:[%s3 + $0x1c] sm:$0xf]
  %v105 = vunpack.c.l.b16 %v93
  %v106 = vunpack.c.l.b16 %v94
  %v107 = vpack.c.b16 %v106, %v105
  %v116 = vunpack.c.l.b16 %v95
  %v117 = vunpack.c.l.b16 %v96
  %v118 = vunpack.c.l.b16 %v97
  %v119 = vunpack.c.l.b16 %v98
  %v120 = vunpack.c.l.b16 %v99
  %v121 = vunpack.c.l.b16 %v100
  %v122 = vunpack.c.l.b16 %v101
  %v123 = vunpack.c.l.b16 %v102
  %v124 = vpack.c.b16 %v117, %v116
  %v125 = vpack.c.b16 %v119, %v118
  %v126 = vpack.c.b16 %v121, %v120
  %v127 = vpack.c.b16 %v123, %v122
  %vm132 = vcmask 523264
  %v134 = vsel %vm132, %v107, 0
  %136 = vmatpush.bf16.msra.mxu0 0
  %137 = vmatpush.bf16.msra.mxu0 0
  %138 = vmatpush.bf16.msra.mxu0 0
  %139 = vmatpush.bf16.msra.mxu0 0
  %140 = vmatpush.bf16.msra.mxu0 %v127
  %141 = vmatpush.bf16.msra.mxu0 %v126
  %142 = vmatpush.bf16.msra.mxu0 %v125
  %143 = vmatpush.bf16.msra.mxu0 %v124
  %144 = vmatmul.bf16.gmra.mxu0 %v134
  %v145 = vpop.f32.mrf.mxu0
  %v146 = vadd.f32 0.0, %v145
  %v147 = vpop.f32.mrf.mxu0
  %v148 = vadd.f32 0.0, %v147
  %149 = vdwg.mxu0
  %v150 = vpack.c.bf16 %v146, %v146
  %v151 = vpack.c.bf16 %v148, %v148
  %152 = vst [vmem:[%s4] sm:$0xf] %v150
  %153 = vst [vmem:[%s4 + $0x4] sm:$0xf] %v151
  // Predicated region
  $region22: #{cross_layer_cross_scale_projector.83} parent=0 // pred_check
    _
  $region23: #{cross_layer_cross_scale_projector.83} parent=0 // pred_check_branch
    %155 = sbr.rel (0) target = $region25
  $region24: #{cross_layer_cross_scale_projector.83} parent=0 // pred_region
    _
  $region25: #{cross_layer_cross_scale_projector.83} parent=0 // pred_fallthru
    _
  // Predicated region
  $region26: #{cross_layer_cross_scale_projector.83} parent=0 // pred_check
    _
  $region27: #{cross_layer_cross_scale_projector.83} parent=0 // pred_check_branch
    %157 = sbr.rel (0) target = $region29
  $region28: #{cross_layer_cross_scale_projector.83} parent=0 // pred_region
    _
  $region29: #{cross_layer_cross_scale_projector.83} parent=0 // pred_fallthru
    _

// kernel: cross_layer_cross_scale_projector.81
$region0: #{cross_layer_cross_scale_projector.81}
  #allocation0 [shape = 'u32[]', space=smem, size = 0x4, offset = 0x4, fixed_abs, tag = 'smem constant byte address 0x4 - core index']
  #allocation1 [shape = 'u32[72,128]{1,0:T(1,128)}', space=vmem, size = 0x9000, scoped, tag = 'internal scratch']
  #allocation2 [shape = 'bf16[16,64]{1,0:T(8,128)(2,1)}', space=vmem, size = 0x1000, scoped, tag = 'scratch operand']
  %s0 = inlined_call_operand.vmem [shape: f32[16,64], index: 0, kind: input, shape index: {}]
  %s1 = inlined_call_operand.vmem [shape: f32[1,64], index: 1, kind: input, shape index: {}]
  %s2 = inlined_call_operand.vmem [shape: f32[1,64], index: 2, kind: input, shape index: {}]
  %s3 = inlined_call_operand.vmem [shape: bf16[64,64], index: 3, kind: input, shape index: {}]
  %s4 = inlined_call_operand.vmem [shape: bf16[16,64], index: 4, kind: output, shape index: {}]
  %s5 = sld [smem:[#allocation0]]
  $region30: #{cross_layer_cross_scale_projector.81} parent=0
    _
  %s7 = ssub.s32 1, %s5
  %s8 = scalar_select 0, %s7, %s5
  // Predicated region
  $region2: #{cross_layer_cross_scale_projector.81} parent=0 // pred_check
    _
  $region3: #{cross_layer_cross_scale_projector.81} parent=0 // pred_check_branch
    %10 = sbr.rel (0) target = $region5
  $region4: #{cross_layer_cross_scale_projector.81} parent=0 // pred_region
    _
  $region5: #{cross_layer_cross_scale_projector.81} parent=0 // pred_fallthru
    _
  // Predicated region
  $region6: #{cross_layer_cross_scale_projector.81} parent=0 // pred_check
    _
  $region7: #{cross_layer_cross_scale_projector.81} parent=0 // pred_check_branch
    %12 = sbr.rel (0) target = $region9
  $region8: #{cross_layer_cross_scale_projector.81} parent=0 // pred_region
    _
  $region9: #{cross_layer_cross_scale_projector.81} parent=0 // pred_fallthru
    _
  // Predicated region
  $region10: #{cross_layer_cross_scale_projector.81} parent=0 // pred_check
    _
  $region11: #{cross_layer_cross_scale_projector.81} parent=0 // pred_check_branch
    %14 = sbr.rel (0) target = $region13
  $region12: #{cross_layer_cross_scale_projector.81} parent=0 // pred_region
    _
  $region13: #{cross_layer_cross_scale_projector.81} parent=0 // pred_fallthru
    _
  // Predicated region
  $region14: #{cross_layer_cross_scale_projector.81} parent=0 // pred_check
    _
  $region15: #{cross_layer_cross_scale_projector.81} parent=0 // pred_check_branch
    %16 = sbr.rel (0) target = $region17
  $region16: #{cross_layer_cross_scale_projector.81} parent=0 // pred_region
    _
  $region17: #{cross_layer_cross_scale_projector.81} parent=0 // pred_fallthru
    _
  %p18 = scmp.eq.s32.totalorder 0, 0
  // Predicated region
  $region18: #{cross_layer_cross_scale_projector.81} parent=0 // pred_check
    %p19 = pneg %p18
  $region19: #{cross_layer_cross_scale_projector.81} parent=0 // pred_check_branch
    %21 = sbr.rel (%p19) target = $region21
  $region20: #{cross_layer_cross_scale_projector.81} parent=0 // pred_region
    %v22 = vld [vmem:[%s0] sm:$0xff]
    %v23 = vld [vmem:[%s0 + $0x8] sm:$0xff]
    %vm24 = vcmask 523264
    %v25 = vsel %vm24, %v22, 0.0
    %26 = vadd.xlane.f32.xlu0 %v25
    %v27 = vpop.xlane.xlu0 %26
    %v28 = vsel %vm24, %v23, 0.0
    %29 = vadd.xlane.f32.xlu0 %v28
    %v30 = vpop.xlane.xlu0 %29
    %v31 = vrcp.pop 64.0
    %v32 = vmul.f32 64.0, %v31
    %v33 = vsub.f32 1.0, %v32
    %v34 = vmul.f32 %v31, %v33
    %v35 = vadd.f32 %v31, %v34
    %vm36 = vweird.f32 %v31
    %v37 = vsel %vm36, %v31, %v35
    %v38 = vmul.f32 %v27, %v37
    %v39 = vmul.f32 %v30, %v37
    %v40 = vsub.f32 %v22, %v38
    %v41 = vsub.f32 %v23, %v39
    %v42 = vmul.f32 %v40, %v40
    %v43 = vmul.f32 %v41, %v41
    %v44 = vsel %vm24, %v42, 0.0
    %45 = vadd.xlane.f32.xlu0 %v44
    %v46 = vpop.xlane.xlu0 %45
    %v47 = vsel %vm24, %v43, 0.0
    %48 = vadd.xlane.f32.xlu0 %v47
    %v49 = vpop.xlane.xlu0 %48
    %v50 = vmul.f32 %v46, %v37
    %v51 = vmul.f32 %v49, %v37
    %v52 = vadd.f32 %v50, 1e-05
    %v53 = vadd.f32 %v51, 1e-05
    %v54 = vrsqrt.pop %v52
    %v55 = vmul.f32 %v54, %v52
    %v56 = vmul.f32 %v55, %v54
    %v57 = vmul.f32 0.5, %v56
    %v58 = vsub.f32 1.5, %v57
    %v59 = vmul.f32 %v54, %v58
    %vm60 = vweird.f32 %v52
    %vm61 = vweird.f32 %v54
    %vm62 = vmor %vm60, %vm61
    %v63 = vsel %vm62, %v54, %v59
    %v64 = vrsqrt.pop %v53
    %v65 = vmul.f32 %v64, %v53
    %v66 = vmul.f32 %v65, %v64
    %v67 = vmul.f32 0.5, %v66
    %v68 = vsub.f32 1.5, %v67
    %v69 = vmul.f32 %v64, %v68
    %vm70 = vweird.f32 %v53
    %vm71 = vweird.f32 %v64
    %vm72 = vmor %vm70, %vm71
    %v73 = vsel %vm72, %v64, %v69
    %v74 = vmul.f32 %v40, %v63
    %v75 = vmul.f32 %v41, %v73
    %v76 = vld [vmem:[%s1] sm:$0x1]
    %v78 = vperm.slane %v76, 0
    %v80 = vmul.f32 %v74, %v78
    %v81 = vmul.f32 %v75, %v78
    %v82 = vld [vmem:[%s2] sm:$0x1]
    %v84 = vperm.slane %v82, 0
    %v86 = vadd.f32 %v80, %v84
    %v87 = vadd.f32 %v81, %v84
    %v88 = vpack.c.bf16 %v86, %v86
    %v89 = vpack.c.bf16 %v87, %v87
    %vm90 = vcmask 519168
    %91 = vst.msk [vmem:[#allocation2] sm:$0xf] %vm90, %v88
    %92 = vst.msk [vmem:[#allocation2 + $0x4] sm:$0xf] %vm90, %v89
  $region21: #{cross_layer_cross_scale_projector.81} parent=0 // pred_fallthru
    _
  %v93 = vld [vmem:[#allocation2] sm:$0xf]
  %v94 = vld [vmem:[#allocation2 + $0x4] sm:$0xf]
  %v95 = vld [vmem:[%s3] sm:$0xf]
  %v96 = vld [vmem:[%s3 + $0x4] sm:$0xf]
  %v97 = vld [vmem:[%s3 + $0x8] sm:$0xf]
  %v98 = vld [vmem:[%s3 + $0xc] sm:$0xf]
  %v99 = vld [vmem:[%s3 + $0x10] sm:$0xf]
  %v100 = vld [vmem:[%s3 + $0x14] sm:$0xf]
  %v101 = vld [vmem:[%s3 + $0x18] sm:$0xf]
  %v102 = vld [vmem:[%s3 + $0x1c] sm:$0xf]
  %v105 = vunpack.c.l.b16 %v93
  %v106 = vunpack.c.l.b16 %v94
  %v107 = vpack.c.b16 %v106, %v105
  %v116 = vunpack.c.l.b16 %v95
  %v117 = vunpack.c.l.b16 %v96
  %v118 = vunpack.c.l.b16 %v97
  %v119 = vunpack.c.l.b16 %v98
  %v120 = vunpack.c.l.b16 %v99
  %v121 = vunpack.c.l.b16 %v100
  %v122 = vunpack.c.l.b16 %v101
  %v123 = vunpack.c.l.b16 %v102
  %v124 = vpack.c.b16 %v117, %v116
  %v125 = vpack.c.b16 %v119, %v118
  %v126 = vpack.c.b16 %v121, %v120
  %v127 = vpack.c.b16 %v123, %v122
  %vm132 = vcmask 523264
  %v134 = vsel %vm132, %v107, 0
  %136 = vmatpush.bf16.msra.mxu0 0
  %137 = vmatpush.bf16.msra.mxu0 0
  %138 = vmatpush.bf16.msra.mxu0 0
  %139 = vmatpush.bf16.msra.mxu0 0
  %140 = vmatpush.bf16.msra.mxu0 %v127
  %141 = vmatpush.bf16.msra.mxu0 %v126
  %142 = vmatpush.bf16.msra.mxu0 %v125
  %143 = vmatpush.bf16.msra.mxu0 %v124
  %144 = vmatmul.bf16.gmra.mxu0 %v134
  %v145 = vpop.f32.mrf.mxu0
  %v146 = vadd.f32 0.0, %v145
  %v147 = vpop.f32.mrf.mxu0
  %v148 = vadd.f32 0.0, %v147
  %149 = vdwg.mxu0
  %v150 = vpack.c.bf16 %v146, %v146
  %v151 = vpack.c.bf16 %v148, %v148
  %vm152 = vcmask 519168
  %153 = vst.msk [vmem:[%s4] sm:$0xf] %vm152, %v150
  %154 = vst.msk [vmem:[%s4 + $0x4] sm:$0xf] %vm152, %v151
  // Predicated region
  $region22: #{cross_layer_cross_scale_projector.81} parent=0 // pred_check
    _
  $region23: #{cross_layer_cross_scale_projector.81} parent=0 // pred_check_branch
    %156 = sbr.rel (0) target = $region25
  $region24: #{cross_layer_cross_scale_projector.81} parent=0 // pred_region
    _
  $region25: #{cross_layer_cross_scale_projector.81} parent=0 // pred_fallthru
    _
  // Predicated region
  $region26: #{cross_layer_cross_scale_projector.81} parent=0 // pred_check
    _
  $region27: #{cross_layer_cross_scale_projector.81} parent=0 // pred_check_branch
    %158 = sbr.rel (0) target = $region29
  $region28: #{cross_layer_cross_scale_projector.81} parent=0 // pred_region
    _
  $region29: #{cross_layer_cross_scale_projector.81} parent=0 // pred_fallthru
    _

// kernel: cross_layer_cross_scale_projector.85
$region0: #{cross_layer_cross_scale_projector.85}
  #allocation0 [shape = 'u32[]', space=smem, size = 0x4, offset = 0x4, fixed_abs, tag = 'smem constant byte address 0x4 - core index']
  #allocation1 [shape = 'u32[72,128]{1,0:T(1,128)}', space=vmem, size = 0x9000, scoped, tag = 'internal scratch']
  %s0 = inlined_call_operand.vmem [shape: bf16[16,64], index: 0, kind: input, shape index: {}]
  %s1 = inlined_call_operand.vmem [shape: bf16[64,64], index: 1, kind: input, shape index: {}]
  %s2 = inlined_call_operand.vmem [shape: f32[16,64], index: 2, kind: input, shape index: {}]
  %s3 = inlined_call_operand.vmem [shape: f32[16,64], index: 3, kind: output, shape index: {}]
  %s4 = sld [smem:[#allocation0]]
  $region22: #{cross_layer_cross_scale_projector.85} parent=0
    _
  %s6 = ssub.s32 1, %s4
  %s7 = scalar_select 0, %s6, %s4
  // Predicated region
  $region2: #{cross_layer_cross_scale_projector.85} parent=0 // pred_check
    _
  $region3: #{cross_layer_cross_scale_projector.85} parent=0 // pred_check_branch
    %9 = sbr.rel (0) target = $region5
  $region4: #{cross_layer_cross_scale_projector.85} parent=0 // pred_region
    _
  $region5: #{cross_layer_cross_scale_projector.85} parent=0 // pred_fallthru
    _
  // Predicated region
  $region6: #{cross_layer_cross_scale_projector.85} parent=0 // pred_check
    _
  $region7: #{cross_layer_cross_scale_projector.85} parent=0 // pred_check_branch
    %11 = sbr.rel (0) target = $region9
  $region8: #{cross_layer_cross_scale_projector.85} parent=0 // pred_region
    _
  $region9: #{cross_layer_cross_scale_projector.85} parent=0 // pred_fallthru
    _
  // Predicated region
  $region10: #{cross_layer_cross_scale_projector.85} parent=0 // pred_check
    _
  $region11: #{cross_layer_cross_scale_projector.85} parent=0 // pred_check_branch
    %13 = sbr.rel (0) target = $region13
  $region12: #{cross_layer_cross_scale_projector.85} parent=0 // pred_region
    _
  $region13: #{cross_layer_cross_scale_projector.85} parent=0 // pred_fallthru
    _
  %v15 = vld [vmem:[%s0] sm:$0xf]
  %v16 = vld [vmem:[%s0 + $0x4] sm:$0xf]
  %v17 = vld [vmem:[%s1] sm:$0xf]
  %v18 = vld [vmem:[%s1 + $0x4] sm:$0xf]
  %v19 = vld [vmem:[%s1 + $0x8] sm:$0xf]
  %v20 = vld [vmem:[%s1 + $0xc] sm:$0xf]
  %v21 = vld [vmem:[%s1 + $0x10] sm:$0xf]
  %v22 = vld [vmem:[%s1 + $0x14] sm:$0xf]
  %v23 = vld [vmem:[%s1 + $0x18] sm:$0xf]
  %v24 = vld [vmem:[%s1 + $0x1c] sm:$0xf]
  %v25 = vld [vmem:[%s2] sm:$0xff]
  %v26 = vld [vmem:[%s2 + $0x8] sm:$0xff]
  %v29 = vunpack.c.l.b16 %v15
  %v30 = vunpack.c.l.b16 %v16
  %v31 = vpack.c.b16 %v30, %v29
  %v40 = vunpack.c.l.b16 %v17
  %v41 = vunpack.c.l.b16 %v18
  %v42 = vunpack.c.l.b16 %v19
  %v43 = vunpack.c.l.b16 %v20
  %v44 = vunpack.c.l.b16 %v21
  %v45 = vunpack.c.l.b16 %v22
  %v46 = vunpack.c.l.b16 %v23
  %v47 = vunpack.c.l.b16 %v24
  %v48 = vpack.c.b16 %v41, %v40
  %v49 = vpack.c.b16 %v43, %v42
  %v50 = vpack.c.b16 %v45, %v44
  %v51 = vpack.c.b16 %v47, %v46
  %vm56 = vcmask 523264
  %v58 = vsel %vm56, %v31, 0
  %60 = vmatpush.bf16.msra.mxu0 0
  %61 = vmatpush.bf16.msra.mxu0 0
  %62 = vmatpush.bf16.msra.mxu0 0
  %63 = vmatpush.bf16.msra.mxu0 0
  %64 = vmatpush.bf16.msra.mxu0 %v51
  %65 = vmatpush.bf16.msra.mxu0 %v50
  %66 = vmatpush.bf16.msra.mxu0 %v49
  %67 = vmatpush.bf16.msra.mxu0 %v48
  %68 = vmatmul.bf16.gmra.mxu0 %v58
  %v69 = vpop.f32.mrf.mxu0
  %v70 = vadd.f32 %v25, %v69
  %v71 = vpop.f32.mrf.mxu0
  %v72 = vadd.f32 %v26, %v71
  %73 = vdwg.mxu0
  %74 = vst.msk [vmem:[%s3] sm:$0xff] %vm56, %v70
  %75 = vst.msk [vmem:[%s3 + $0x8] sm:$0xff] %vm56, %v72
  // Predicated region
  $region14: #{cross_layer_cross_scale_projector.85} parent=0 // pred_check
    _
  $region15: #{cross_layer_cross_scale_projector.85} parent=0 // pred_check_branch
    %77 = sbr.rel (0) target = $region17
  $region16: #{cross_layer_cross_scale_projector.85} parent=0 // pred_region
    _
  $region17: #{cross_layer_cross_scale_projector.85} parent=0 // pred_fallthru
    _
  // Predicated region
  $region18: #{cross_layer_cross_scale_projector.85} parent=0 // pred_check
    _
  $region19: #{cross_layer_cross_scale_projector.85} parent=0 // pred_check_branch
    %79 = sbr.rel (0) target = $region21
  $region20: #{cross_layer_cross_scale_projector.85} parent=0 // pred_region
    _
  $region21: #{cross_layer_cross_scale_projector.85} parent=0 // pred_fallthru
    _

// kernel: cross_layer_cross_scale_projector.84
$region0: #{cross_layer_cross_scale_projector.84}
  #allocation0 [shape = 'u32[]', space=smem, size = 0x4, offset = 0x4, fixed_abs, tag = 'smem constant byte address 0x4 - core index']
  #allocation1 [shape = 'u32[72,128]{1,0:T(1,128)}', space=vmem, size = 0x9000, scoped, tag = 'internal scratch']
  #allocation2 [shape = 'f32[8,4]{1,0:T(8,128)}', space=vmem, size = 0x1000, scoped, tag = 'scratch operand']
  #allocation3 [shape = 'f32[8,64]{1,0:T(8,128)}', space=vmem, size = 0x1000, scoped, tag = 'scratch operand']
  #allocation4 [shape = 'f32[8,64]{1,0:T(8,128)}', space=vmem, size = 0x1000, scoped, tag = 'scratch operand']
  %s0 = inlined_call_operand.vmem [shape: bf16[2,8,64], index: 0, kind: input, shape index: {}]
  %s1 = inlined_call_operand.vmem [shape: bf16[2,40,64], index: 1, kind: input, shape index: {}]
  %s2 = inlined_call_operand.vmem [shape: bf16[2,40,64], index: 2, kind: input, shape index: {}]
  %s3 = inlined_call_operand.vmem [shape: bf16[2,8,64], index: 3, kind: output, shape index: {}]
  %s4 = sld [smem:[#allocation0]]
  $region53: #{cross_layer_cross_scale_projector.84} parent=0
    _
  %s6 = ssub.s32 1, %s4
  %s7 = scalar_select 0, %s6, %s4
  loop: start=0, step=1, limit=4
  $region2: #{cross_layer_cross_scale_projector.84} parent=0 // loop_pre_header
    _
  $region3: #{cross_layer_cross_scale_projector.84} parent=0 // loop_header
    %s9 = sphi 0, %s13
    %p10 = scmp.ge.s32.totalorder %s9, 4
    %s16 = sphi 0, %s35
    %s17 = sphi 0, %s31
    %s18 = sphi 0, %s27
    %s19 = sphi 0, %s16
    %s20 = sphi 0, %s17
    %s21 = sphi 0, %s18
    %s22 = sphi 0, %s19
    %s23 = sphi 0, %s20
    %s24 = sphi 0, %s21
    %s40 = sphi 0, %s42
    %s43 = sphi 0, %s40
    %s44 = sphi 0, %s43
    %s60 = sphi 0, %s44
    %s70 = sphi 0, %s72
    %s73 = sphi 0, %s70
    %s74 = sphi 0, %s73
    %s90 = sphi 0, %s74
    %s100 = sphi 0, %s102
    %s103 = sphi 0, %s100
    %s104 = sphi 0, %s103
    %s120 = sphi 0, %s104
    %s128 = sphi 0, %s130
    %s131 = sphi 0, %s128
    %s132 = sphi 0, %s131
    %s148 = sphi 0, %s132
  $region4: #{cross_layer_cross_scale_projector.84} parent=0 // loop_header_branch
    %12 = sbr.rel (%p10) target = $region8
  $region5: #{cross_layer_cross_scale_projector.84} parent=0 // loop_body
    %s14 = ssub.s32 %s9, 1
    %s15 = ssub.s32 %s9, 2
    %s25 = sadd.s32 1, %s18
    %p26 = scmp.ge.s32.totalorder %s25, 1
    %s27 = scalar_select %p26, 0, %s25
    %s28 = sadd.s32 1, %s17
    %s29 = scalar_select %p26, %s28, %s17
    %p30 = scmp.ge.s32.totalorder %s29, 1
    %s31 = scalar_select %p30, 0, %s29
    %s32 = sadd.s32 1, %s16
    %s33 = scalar_select %p30, %s32, %s16
    %p34 = scmp.ge.s32.totalorder %s33, 2
    %s35 = scalar_select %p34, 0, %s33
    %s36 = ssub.s32 %s16, %s35
    %s37 = ssub.s32 %s17, %s31
    %s38 = sor.u32 %s36, %s37
    %p39 = scmp.eq.s32.totalorder %s38, 0
    %s41 = sadd.s32 %s40, 1
    %s42 = scalar_select %p39, %s40, %s41
    %p45 = pneg %p39
    %p46 = scmp.eq.s32.totalorder %s9, 1
    %p47 = por %p45, %p46
    %p48 = scmp.ne.s32.totalorder %s40, %s43
    %p49 = scmp.eq.s32.totalorder %s9, 0
    %p50 = por %p48, %p49
    %p51 = scmp.ne.s32.totalorder %s40, %s43
    %p52 = scmp.eq.s32.totalorder %s14, 1
    %p53 = por %p51, %p52
    %p54 = scmp.ne.s32.totalorder %s43, %s44
    %p55 = scmp.eq.s32.totalorder %s14, 0
    %p56 = por %p54, %p55
    %p57 = scmp.ne.s32.totalorder %s43, %s44
    %p58 = scmp.eq.s32.totalorder %s15, 1
    %p59 = por %p57, %p58
    %p61 = scmp.ne.s32.totalorder %s44, %s60
    %p62 = scmp.eq.s32.totalorder %s15, 0
    %p63 = por %p61, %p62
    %s64 = ssub.s32 %s16, %s35
    %s65 = ssub.s32 %s18, %s27
    %s66 = sor.u32 %s64, %s65
    %s67 = ssub.s32 %s17, %s31
    %s68 = sor.u32 %s66, %s67
    %p69 = scmp.eq.s32.totalorder %s68, 0
    %s71 = sadd.s32 %s70, 1
    %s72 = scalar_select %p69, %s70, %s71
    %p75 = pneg %p69
    %p76 = scmp.eq.s32.totalorder %s9, 1
    %p77 = por %p75, %p76
    %p78 = scmp.ne.s32.totalorder %s70, %s73
    %p79 = scmp.eq.s32.totalorder %s9, 0
    %p80 = por %p78, %p79
    %p81 = scmp.ne.s32.totalorder %s70, %s73
    %p82 = scmp.eq.s32.totalorder %s14, 1
    %p83 = por %p81, %p82
    %p84 = scmp.ne.s32.totalorder %s73, %s74
    %p85 = scmp.eq.s32.totalorder %s14, 0
    %p86 = por %p84, %p85
    %p87 = scmp.ne.s32.totalorder %s73, %s74
    %p88 = scmp.eq.s32.totalorder %s15, 1
    %p89 = por %p87, %p88
    %p91 = scmp.ne.s32.totalorder %s74, %s90
    %p92 = scmp.eq.s32.totalorder %s15, 0
    %p93 = por %p91, %p92
    %s94 = ssub.s32 %s16, %s35
    %s95 = ssub.s32 %s18, %s27
    %s96 = sor.u32 %s94, %s95
    %s97 = ssub.s32 %s17, %s31
    %s98 = sor.u32 %s96, %s97
    %p99 = scmp.eq.s32.totalorder %s98, 0
    %s101 = sadd.s32 %s100, 1
    %s102 = scalar_select %p99, %s100, %s101
    %p105 = pneg %p99
    %p106 = scmp.eq.s32.totalorder %s9, 1
    %p107 = por %p105, %p106
    %p108 = scmp.ne.s32.totalorder %s100, %s103
    %p109 = scmp.eq.s32.totalorder %s9, 0
    %p110 = por %p108, %p109
    %p111 = scmp.ne.s32.totalorder %s100, %s103
    %p112 = scmp.eq.s32.totalorder %s14, 1
    %p113 = por %p111, %p112
    %p114 = scmp.ne.s32.totalorder %s103, %s104
    %p115 = scmp.eq.s32.totalorder %s14, 0
    %p116 = por %p114, %p115
    %p117 = scmp.ne.s32.totalorder %s103, %s104
    %p118 = scmp.eq.s32.totalorder %s15, 1
    %p119 = por %p117, %p118
    %p121 = scmp.ne.s32.totalorder %s104, %s120
    %p122 = scmp.eq.s32.totalorder %s15, 0
    %p123 = por %p121, %p122
    %s124 = ssub.s32 %s16, %s35
    %s125 = ssub.s32 %s17, %s31
    %s126 = sor.u32 %s124, %s125
    %p127 = scmp.eq.s32.totalorder %s126, 0
    %s129 = sadd.s32 %s128, 1
    %s130 = scalar_select %p127, %s128, %s129
    %p133 = pneg %p127
    %p134 = scmp.eq.s32.totalorder %s9, 1
    %p135 = por %p133, %p134
    %p136 = scmp.ne.s32.totalorder %s128, %s131
    %p137 = scmp.eq.s32.totalorder %s9, 0
    %p138 = por %p136, %p137
    %p139 = scmp.ne.s32.totalorder %s128, %s131
    %p140 = scmp.eq.s32.totalorder %s14, 1
    %p141 = por %p139, %p140
    %p142 = scmp.ne.s32.totalorder %s131, %s132
    %p143 = scmp.eq.s32.totalorder %s14, 0
    %p144 = por %p142, %p143
    %p145 = scmp.ne.s32.totalorder %s131, %s132
    %p146 = scmp.eq.s32.totalorder %s15, 1
    %p147 = por %p145, %p146
    %p149 = scmp.ne.s32.totalorder %s132, %s148
    %p150 = scmp.eq.s32.totalorder %s15, 0
    %p151 = por %p149, %p150
    %p152 = scmp.le.s32.totalorder 1, %s9
    %p153 = scmp.lt.s32.totalorder %s9, 3
    %p154 = pnand %p152, %p153
    %p155 = pneg %p154
    // Predicated region
    $region9: #{cross_layer_cross_scale_projector.84} parent=5 // pred_check
      _
    $region10: #{cross_layer_cross_scale_projector.84} parent=5 // pred_check_branch
      %157 = sbr.rel (%p154) target = $region12
    $region11: #{cross_layer_cross_scale_projector.84} parent=5 // pred_region
      %s158 = ssub.s32 %s9, 1
    $region12: #{cross_layer_cross_scale_projector.84} parent=5 // pred_fallthru
      _
    %p159 = scmp.lt.s32.totalorder %s9, 2
    // Predicated region
    $region13: #{cross_layer_cross_scale_projector.84} parent=5 // pred_check
      %p160 = pneg %p159
    $region14: #{cross_layer_cross_scale_projector.84} parent=5 // pred_check_branch
      %162 = sbr.rel (%p160) target = $region16
    $region15: #{cross_layer_cross_scale_projector.84} parent=5 // pred_region
      // Predicated region
      $region17: #{cross_layer_cross_scale_projector.84} parent=15 // pred_check
        %p163 = pneg %p50
      $region18: #{cross_layer_cross_scale_projector.84} parent=15 // pred_check_branch
        %165 = sbr.rel (%p163) target = $region20
      $region19: #{cross_layer_cross_scale_projector.84} parent=15 // pred_region
        %p166 = scmp.lt.s32.totalorder %s16, 1
        %s167 = scalar_select %p166, %s16, 1
        %p168 = scmp.lt.s32.totalorder %s17, 0
        %s169 = scalar_select %p168, %s17, 0
        %s170 = sadd.s32 %s169, %s167
        %s171 = smul.addr %s170, 4
        %s172 = scalar_lea.vmem %s0, %s171
      $region20: #{cross_layer_cross_scale_projector.84} parent=15 // pred_fallthru
        _
      // Predicated region
      $region21: #{cross_layer_cross_scale_projector.84} parent=15 // pred_check
        %p173 = pneg %p80
      $region22: #{cross_layer_cross_scale_projector.84} parent=15 // pred_check_branch
        %175 = sbr.rel (%p173) target = $region24
      $region23: #{cross_layer_cross_scale_projector.84} parent=15 // pred_region
        %s176 = smul.u32 5, %s18
        %p177 = scmp.lt.s32.totalorder %s16, 1
        %s178 = scalar_select %p177, %s16, 1
        %p179 = scmp.lt.s32.totalorder %s176, 4
        %s180 = scalar_select %p179, %s176, 4
        %p181 = scmp.lt.s32.totalorder %s17, 0
        %s182 = scalar_select %p181, %s17, 0
        %s183 = sadd.s32 %s182, %s180
        %s184 = smul.addr %s178, 5
        %s185 = sadd.s32 %s183, %s184
        %s186 = smul.addr %s185, 4
        %s187 = scalar_lea.vmem %s1, %s186
        %s188 = smul.u32 5, %s18
      $region24: #{cross_layer_cross_scale_projector.84} parent=15 // pred_fallthru
        _
      // Predicated region
      $region25: #{cross_layer_cross_scale_projector.84} parent=15 // pred_check
        %p189 = pneg %p110
      $region26: #{cross_layer_cross_scale_projector.84} parent=15 // pred_check_branch
        %191 = sbr.rel (%p189) target = $region28
      $region27: #{cross_layer_cross_scale_projector.84} parent=15 // pred_region
        %s192 = smul.u32 5, %s18
        %p193 = scmp.lt.s32.totalorder %s16, 1
        %s194 = scalar_select %p193, %s16, 1
        %p195 = scmp.lt.s32.totalorder %s192, 4
        %s196 = scalar_select %p195, %s192, 4
        %p197 = scmp.lt.s32.totalorder %s17, 0
        %s198 = scalar_select %p197, %s17, 0
        %s199 = sadd.s32 %s198, %s196
        %s200 = smul.addr %s194, 5
        %s201 = sadd.s32 %s199, %s200
        %s202 = smul.addr %s201, 4
        %s203 = scalar_lea.vmem %s2, %s202
        %s204 = smul.u32 5, %s18
      $region28: #{cross_layer_cross_scale_projector.84} parent=15 // pred_fallthru
        _
    $region16: #{cross_layer_cross_scale_projector.84} parent=5 // pred_fallthru
      _
    %p205 = scmp.le.s32.totalorder 1, %s9
    %p206 = scmp.lt.s32.totalorder %s9, 3
    %p207 = pnand %p205, %p206
    %p208 = pneg %p207
    // Predicated region
    $region29: #{cross_layer_cross_scale_projector.84} parent=5 // pred_check
      _
    $region30: #{cross_layer_cross_scale_projector.84} parent=5 // pred_check_branch
      %210 = sbr.rel (%p207) target = $region32
    $region31: #{cross_layer_cross_scale_projector.84} parent=5 // pred_region
      %s211 = ssub.s32 %s9, 1
      %p212 = scmp.lt.s32.totalorder %s19, 1
      %s213 = scalar_select %p212, %s19, 1
      %p214 = scmp.lt.s32.totalorder %s20, 0
      %s215 = scalar_select %p214, %s20, 0
      %s216 = sadd.s32 %s215, %s213
      %s217 = smul.addr %s216, 4
      %s218 = scalar_lea.vmem %s0, %s217
      %p219 = pneg %p56
      %p220 = pneg %p53
      %s221 = smul.u32 5, %s21
      %p222 = scmp.lt.s32.totalorder %s19, 1
      %s223 = scalar_select %p222, %s19, 1
      %p224 = scmp.lt.s32.totalorder %s221, 4
      %s225 = scalar_select %p224, %s221, 4
      %p226 = scmp.lt.s32.totalorder %s20, 0
      %s227 = scalar_select %p226, %s20, 0
      %s228 = sadd.s32 %s227, %s225
      %s229 = smul.addr %s223, 5
      %s230 = sadd.s32 %s228, %s229
      %s231 = smul.addr %s230, 4
      %s232 = scalar_lea.vmem %s1, %s231
      %p233 = pneg %p86
      %p234 = pneg %p83
      %s235 = smul.u32 5, %s21
      %p236 = scmp.lt.s32.totalorder %s19, 1
      %s237 = scalar_select %p236, %s19, 1
      %p238 = scmp.lt.s32.totalorder %s235, 4
      %s239 = scalar_select %p238, %s235, 4
      %p240 = scmp.lt.s32.totalorder %s20, 0
      %s241 = scalar_select %p240, %s20, 0
      %s242 = sadd.s32 %s241, %s239
      %s243 = smul.addr %s237, 5
      %s244 = sadd.s32 %s242, %s243
      %s245 = smul.addr %s244, 4
      %s246 = scalar_lea.vmem %s2, %s245
      %p247 = pneg %p116
      %p248 = pneg %p113
      %p249 = pneg %p144
      %p250 = pneg %p141
      %p251 = scmp.lt.s32.totalorder %s19, 1
      %s252 = scalar_select %p251, %s19, 1
      %p253 = scmp.lt.s32.totalorder %s20, 0
      %s254 = scalar_select %p253, %s20, 0
      %s255 = sadd.s32 %s254, %s252
      %s256 = smul.addr %s255, 4
      %s257 = scalar_lea.vmem %s3, %s256
      %p258 = scmp.lt.s32.totalorder %s19, 1
      %s259 = scalar_select %p258, %s19, 1
      %p260 = scmp.lt.s32.totalorder %s20, 0
      %s261 = scalar_select %p260, %s20, 0
      %s262 = sadd.s32 %s261, %s259
      %s263 = smul.addr %s262, 4
      %s264 = scalar_lea.vmem %s0, %s263
      %s265 = smul.u32 5, %s21
      %p266 = scmp.lt.s32.totalorder %s19, 1
      %s267 = scalar_select %p266, %s19, 1
      %p268 = scmp.lt.s32.totalorder %s265, 4
      %s269 = scalar_select %p268, %s265, 4
      %p270 = scmp.lt.s32.totalorder %s20, 0
      %s271 = scalar_select %p270, %s20, 0
      %s272 = sadd.s32 %s271, %s269
      %s273 = smul.addr %s267, 5
      %s274 = sadd.s32 %s272, %s273
      %s275 = smul.addr %s274, 4
      %s276 = scalar_lea.vmem %s1, %s275
      %s277 = smul.u32 5, %s21
      %s278 = smul.u32 5, %s21
      %p279 = scmp.lt.s32.totalorder %s19, 1
      %s280 = scalar_select %p279, %s19, 1
      %p281 = scmp.lt.s32.totalorder %s278, 4
      %s282 = scalar_select %p281, %s278, 4
      %p283 = scmp.lt.s32.totalorder %s20, 0
      %s284 = scalar_select %p283, %s20, 0
      %s285 = sadd.s32 %s284, %s282
      %s286 = smul.addr %s280, 5
      %s287 = sadd.s32 %s285, %s286
      %s288 = smul.addr %s287, 4
      %s289 = scalar_lea.vmem %s2, %s288
      %s290 = smul.u32 5, %s21
      %p291 = scmp.lt.s32.totalorder %s19, 1
      %s292 = scalar_select %p291, %s19, 1
      %p293 = scmp.lt.s32.totalorder %s20, 0
      %s294 = scalar_select %p293, %s20, 0
      %s295 = sadd.s32 %s294, %s292
      %s296 = smul.addr %s295, 4
      %s297 = scalar_lea.vmem %s3, %s296
      %p299 = scmp.eq.s32.totalorder %s21, 0
      // Predicated region
      $region33: #{cross_layer_cross_scale_projector.84} parent=31 // pred_check
        %p300 = pneg %p299
      $region34: #{cross_layer_cross_scale_projector.84} parent=31 // pred_check_branch
        %302 = sbr.rel (%p300) target = $region36
      $region35: #{cross_layer_cross_scale_projector.84} parent=31 // pred_region
        %vm303 = vcmask 31744
        %304 = vst.msk [vmem:[#allocation2] sm:$0xff] %vm303, -1e+30
        %vm305 = vcmask 523264
        %306 = vst.msk [vmem:[#allocation3] sm:$0xff] %vm305, 0.0
        %307 = vst.msk [vmem:[#allocation4] sm:$0xff] %vm305, 0.0
      $region36: #{cross_layer_cross_scale_projector.84} parent=31 // pred_fallthru
        _
      %v308 = vld [vmem:[%s264] sm:$0xf]
      %v309 = vld [vmem:[%s276] sm:$0xf]
      %v310 = vld [vmem:[%s276 + $0x4] sm:$0xf]
      %v311 = vld [vmem:[%s276 + $0x8] sm:$0xf]
      %v312 = vld [vmem:[%s276 + $0xc] sm:$0xf]
      %v313 = vld [vmem:[%s276 + $0x10] sm:$0xf]
      %v319 = vunpack.c.l.b16 %v309
      %v320 = vunpack.c.l.b16 %v310
      %v321 = vunpack.c.l.b16 %v311
      %v322 = vunpack.c.l.b16 %v312
      %v323 = vunpack.c.l.b16 %v313
      %v324 = vpack.c.b16 %v320, %v319
      %v325 = vpack.c.b16 %v322, %v321
      %v326 = vpack.c.b16 %v323, %v323
      %vm327 = vcmask 130048
      %v329 = vsel %vm327, %v308, 0
      %v332 = vsel %vm327, %v324, 0
      %v335 = vsel %vm327, %v325, 0
      %v338 = vsel %vm327, %v326, 0
      %340 = vmatpush.bf16.xpose.msra.mxu0 0
      %341 = vmatpush.bf16.xpose.msra.mxu0 0
      %342 = vmatpush.bf16.xpose.msra.mxu0 0
      %343 = vmatpush.bf16.xpose.msra.mxu0 0
      %344 = vmatpush.bf16.xpose.msra.mxu0 0
      %345 = vmatpush.bf16.xpose.msra.mxu0 %v338
      %346 = vmatpush.bf16.xpose.msra.mxu0 %v335
      %347 = vmatpush.bf16.xpose.msra.mxu0 %v332
      %348 = vmatmul.bf16.gmra.mxu0 %v329
      %v349 = vpop.f32.mrf.mxu0
      %v350 = vadd.f32 0.0, %v349
      %v351 = vpop.f32.mrf.mxu0
      %352 = vdwg.mxu0
      %v353 = vld [vmem:[#allocation2] sm:$0xff]
      %vm354 = vcmask 326656
      %v355 = vsel %vm354, %v350, -inf
      %356 = vmax.xlane.f32.xlu0 %v355
      %v357 = vpop.xlane.xlu0 %356
      %v358 = vmax.f32 %v353, %v357
      %v359 = vsub.f32 %v353, %v358
      %v360 = vmul.f32 %v359, 1.442695
      %v361 = vpow.pop %v360
      %363 = vset.pattern.permute.xlu0 0
      %364 = vperm.xlu0 %363, %v358
      %v365 = vpop.permute.xlu0 %364
      %v367 = vsub.f32 %v350, %v365
      %v368 = vmul.f32 %v367, 1.442695
      %v369 = vpow.pop %v368
      %v370 = vld [vmem:[#allocation3] sm:$0xff]
      %372 = vset.pattern.permute.xlu0 0
      %373 = vperm.xlu0 %372, %v361
      %v374 = vpop.permute.xlu0 %373
      %v376 = vmul.f32 %v374, %v370
      %v377 = vsel %vm354, %v369, 0.0
      %378 = vadd.xlane.f32.xlu0 %v377
      %v379 = vpop.xlane.xlu0 %378
      %v380 = vadd.f32 %v376, %v379
      %381 = vst.msk [vmem:[#allocation3] sm:$0xff] %vm327, %v380
      %v382 = vld [vmem:[#allocation4] sm:$0xff]
      %v383 = vmul.f32 %v374, %v382
      %v384 = vpack.c.bf16 %v369, %v369
      %v385 = vld [vmem:[%s289] sm:$0xf]
      %v386 = vld [vmem:[%s289 + $0x4] sm:$0xf]
      %v387 = vld [vmem:[%s289 + $0x8] sm:$0xf]
      %v388 = vld [vmem:[%s289 + $0xc] sm:$0xf]
      %v389 = vld [vmem:[%s289 + $0x10] sm:$0xf]
      %v395 = vunpack.c.l.b16 %v385
      %v396 = vunpack.c.l.b16 %v386
      %v397 = vunpack.c.l.b16 %v387
      %v398 = vunpack.c.l.b16 %v388
      %v399 = vunpack.c.l.b16 %v389
      %v400 = vpack.c.b16 %v396, %v395
      %v401 = vpack.c.b16 %v398, %v397
      %v402 = vpack.c.b16 %v399, %v399
      %v406 = vsel %vm354, %v384, 0
      %vm408 = vcmask 1043456
      %v410 = vsel %vm408, %v402, 0
      %412 = vmatpush.bf16.msra.mxu0 0
      %413 = vmatpush.bf16.msra.mxu0 0
      %414 = vmatpush.bf16.msra.mxu0 0
      %415 = vmatpush.bf16.msra.mxu0 0
      %416 = vmatpush.bf16.msra.mxu0 0
      %417 = vmatpush.bf16.msra.mxu0 %v410
      %418 = vmatpush.bf16.msra.mxu0 %v401
      %419 = vmatpush.bf16.msra.mxu0 %v400
      %420 = vmatmul.bf16.gmra.mxu0 %v406
      %v421 = vpop.f32.mrf.mxu0
      %v422 = vadd.f32 0.0, %v421
      %v423 = vpop.f32.mrf.mxu0
      %424 = vdwg.mxu0
      %v425 = vadd.f32 %v383, %v422
      %426 = vst.msk [vmem:[#allocation4] sm:$0xff] %vm327, %v425
      %vm427 = vcmask 7168
      %428 = vst.msk [vmem:[#allocation2] sm:$0xff] %vm427, %v358
      %v429 = vld [vmem:[%s264] sm:$0xf]
      %v430 = vld [vmem:[%s276] sm:$0xf]
      %v431 = vld [vmem:[%s276 + $0x4] sm:$0xf]
      %v432 = vld [vmem:[%s276 + $0x8] sm:$0xf]
      %v433 = vld [vmem:[%s276 + $0xc] sm:$0xf]
      %v434 = vld [vmem:[%s276 + $0x10] sm:$0xf]
      %v436 = vunpack.c.l.b16 %v429
      %v437 = vpack.c.b16 %v436, %v436
      %438 = vrot.lane.b32.xlu0 %v437, 112
      %v439 = vpop.permute.xlu0 %438
      %v445 = vunpack.c.l.b16 %v430
      %v446 = vunpack.c.l.b16 %v431
      %v447 = vunpack.c.l.b16 %v432
      %v448 = vunpack.c.l.b16 %v433
      %v449 = vunpack.c.l.b16 %v434
      %v450 = vpack.c.b16 %v446, %v445
      %v451 = vpack.c.b16 %v448, %v447
      %v452 = vpack.c.b16 %v449, %v449
      %453 = vrot.lane.b32.xlu0 %v450, 112
      %v454 = vpop.permute.xlu0 %453
      %455 = vrot.lane.b32.xlu0 %v451, 112
      %v456 = vpop.permute.xlu0 %455
      %457 = vrot.lane.b32.xlu0 %v452, 112
      %v458 = vpop.permute.xlu0 %457
      %v460 = vsel %vm327, %v439, 0
      %v463 = vsel %vm327, %v454, 0
      %v466 = vsel %vm327, %v456, 0
      %v469 = vsel %vm327, %v458, 0
      %471 = vmatpush.bf16.xpose.msra.mxu0 0
      %472 = vmatpush.bf16.xpose.msra.mxu0 0
      %473 = vmatpush.bf16.xpose.msra.mxu0 0
      %474 = vmatpush.bf16.xpose.msra.mxu0 0
      %475 = vmatpush.bf16.xpose.msra.mxu0 0
      %476 = vmatpush.bf16.xpose.msra.mxu0 %v469
      %477 = vmatpush.bf16.xpose.msra.mxu0 %v466
      %478 = vmatpush.bf16.xpose.msra.mxu0 %v463
      %479 = vmatmul.bf16.gmra.mxu0 %v460
      %v480 = vpop.f32.mrf.mxu0
      %v481 = vadd.f32 0.0, %v480
      %v482 = vpop.f32.mrf.mxu0
      %483 = vdwg.mxu0
      %v484 = vld [vmem:[#allocation2] sm:$0xff]
      %v485 = vsel %vm354, %v481, -inf
      %486 = vmax.xlane.f32.xlu0 %v485
      %v487 = vpop.xlane.xlu0 %486
      %v488 = vmax.f32 %v484, %v487
      %v489 = vsub.f32 %v484, %v488
      %v490 = vmul.f32 %v489, 1.442695
      %v491 = vpow.pop %v490
      %493 = vset.pattern.permute.xlu0 1
      %494 = vperm.xlu0 %493, %v488
      %v495 = vpop.permute.xlu0 %494
      %v497 = vsub.f32 %v481, %v495
      %v498 = vmul.f32 %v497, 1.442695
      %v499 = vpow.pop %v498
      %v500 = vld [vmem:[#allocation3] sm:$0xff]
      %502 = vset.pattern.permute.xlu0 1
      %503 = vperm.xlu0 %502, %v491
      %v504 = vpop.permute.xlu0 %503
      %v506 = vmul.f32 %v504, %v500
      %v507 = vsel %vm354, %v499, 0.0
      %508 = vadd.xlane.f32.xlu0 %v507
      %v509 = vpop.xlane.xlu0 %508
      %v510 = vadd.f32 %v506, %v509
      %vm511 = vcmask 261248
      %512 = vst.msk [vmem:[#allocation3] sm:$0xff] %vm511, %v510
      %v513 = vld [vmem:[#allocation4] sm:$0xff]
      %v514 = vmul.f32 %v504, %v513
      %v515 = vpack.c.bf16 %v499, %v499
      %v516 = vld [vmem:[%s289] sm:$0xf]
      %v517 = vld [vmem:[%s289 + $0x4] sm:$0xf]
      %v518 = vld [vmem:[%s289 + $0x8] sm:$0xf]
      %v519 = vld [vmem:[%s289 + $0xc] sm:$0xf]
      %v520 = vld [vmem:[%s289 + $0x10] sm:$0xf]
      %v526 = vunpack.c.l.b16 %v516
      %v527 = vunpack.c.l.b16 %v517
      %v528 = vunpack.c.l.b16 %v518
      %v529 = vunpack.c.l.b16 %v519
      %v530 = vunpack.c.l.b16 %v520
      %v531 = vpack.c.b16 %v527, %v526
      %v532 = vpack.c.b16 %v529, %v528
      %v533 = vpack.c.b16 %v530, %v530
      %534 = vrot.lane.b32.xlu0 %v531, 112
      %v535 = vpop.permute.xlu0 %534
      %536 = vrot.lane.b32.xlu0 %v532, 112
      %v537 = vpop.permute.xlu0 %536
      %538 = vrot.lane.b32.xlu0 %v533, 112
      %v539 = vpop.permute.xlu0 %538
      %v543 = vsel %vm354, %v515, 0
      %v546 = vsel %vm408, %v539, 0
      %548 = vmatpush.bf16.msra.mxu0 0
      %549 = vmatpush.bf16.msra.mxu0 0
      %550 = vmatpush.bf16.msra.mxu0 0
      %551 = vmatpush.bf16.msra.mxu0 0
      %552 = vmatpush.bf16.msra.mxu0 0
      %553 = vmatpush.bf16.msra.mxu0 %v546
      %554 = vmatpush.bf16.msra.mxu0 %v537
      %555 = vmatpush.bf16.msra.mxu0 %v535
      %556 = vmatmul.bf16.gmra.mxu0 %v543
      %v557 = vpop.f32.mrf.mxu0
      %v558 = vadd.f32 0.0, %v557
      %v559 = vpop.f32.mrf.mxu0
      %560 = vdwg.mxu0
      %562 = vrot.lane.b32.xlu0 %v558, 16
      %v563 = vpop.permute.xlu0 %562
      %v565 = vadd.f32 %v514, %v563
      %566 = vst.msk [vmem:[#allocation4] sm:$0xff] %vm511, %v565
      %vm567 = vcmask 15368
      %568 = vst.msk [vmem:[#allocation2] sm:$0xff] %vm567, %v488
      %v569 = vld [vmem:[%s264] sm:$0xf]
      %v570 = vld [vmem:[%s276] sm:$0xf]
      %v571 = vld [vmem:[%s276 + $0x4] sm:$0xf]
      %v572 = vld [vmem:[%s276 + $0x8] sm:$0xf]
      %v573 = vld [vmem:[%s276 + $0xc] sm:$0xf]
      %v574 = vld [vmem:[%s276 + $0x10] sm:$0xf]
      %v576 = vunpack.c.l.b16 %v569
      %v577 = vpack.c.b16 %v576, %v576
      %578 = vrot.lane.b32.xlu0 %v577, 96
      %v579 = vpop.permute.xlu0 %578
      %v585 = vunpack.c.l.b16 %v570
      %v586 = vunpack.c.l.b16 %v571
      %v587 = vunpack.c.l.b16 %v572
      %v588 = vunpack.c.l.b16 %v573
      %v589 = vunpack.c.l.b16 %v574
      %v590 = vpack.c.b16 %v586, %v585
      %v591 = vpack.c.b16 %v588, %v587
      %v592 = vpack.c.b16 %v589, %v589
      %593 = vrot.lane.b32.xlu0 %v590, 96
      %v594 = vpop.permute.xlu0 %593
      %595 = vrot.lane.b32.xlu0 %v591, 96
      %v596 = vpop.permute.xlu0 %595
      %597 = vrot.lane.b32.xlu0 %v592, 96
      %v598 = vpop.permute.xlu0 %597
      %v600 = vsel %vm327, %v579, 0
      %v603 = vsel %vm327, %v594, 0
      %v606 = vsel %vm327, %v596, 0
      %v609 = vsel %vm327, %v598, 0
      %611 = vmatpush.bf16.xpose.msra.mxu0 0
      %612 = vmatpush.bf16.xpose.msra.mxu0 0
      %613 = vmatpush.bf16.xpose.msra.mxu0 0
      %614 = vmatpush.bf16.xpose.msra.mxu0 0
      %615 = vmatpush.bf16.xpose.msra.mxu0 0
      %616 = vmatpush.bf16.xpose.msra.mxu0 %v609
      %617 = vmatpush.bf16.xpose.msra.mxu0 %v606
      %618 = vmatpush.bf16.xpose.msra.mxu0 %v603
      %619 = vmatmul.bf16.gmra.mxu0 %v600
      %v620 = vpop.f32.mrf.mxu0
      %v621 = vadd.f32 0.0, %v620
      %v622 = vpop.f32.mrf.mxu0
      %623 = vdwg.mxu0
      %v624 = vld [vmem:[#allocation2] sm:$0xff]
      %v625 = vsel %vm354, %v621, -inf
      %626 = vmax.xlane.f32.xlu0 %v625
      %v627 = vpop.xlane.xlu0 %626
      %v628 = vmax.f32 %v624, %v627
      %v629 = vsub.f32 %v624, %v628
      %v630 = vmul.f32 %v629, 1.442695
      %v631 = vpow.pop %v630
      %633 = vset.pattern.permute.xlu0 2
      %634 = vperm.xlu0 %633, %v628
      %v635 = vpop.permute.xlu0 %634
      %v637 = vsub.f32 %v621, %v635
      %v638 = vmul.f32 %v637, 1.442695
      %v639 = vpow.pop %v638
      %v640 = vld [vmem:[#allocation3] sm:$0xff]
      %642 = vset.pattern.permute.xlu0 2
      %643 = vperm.xlu0 %642, %v631
      %v644 = vpop.permute.xlu0 %643
      %v646 = vmul.f32 %v644, %v640
      %v647 = vsel %vm354, %v639, 0.0
      %648 = vadd.xlane.f32.xlu0 %v647
      %v649 = vpop.xlane.xlu0 %648
      %v650 = vadd.f32 %v646, %v649
      %vm651 = vcmask 392448
      %652 = vst.msk [vmem:[#allocation3] sm:$0xff] %vm651, %v650
      %v653 = vld [vmem:[#allocation4] sm:$0xff]
      %v654 = vmul.f32 %v644, %v653
      %v655 = vpack.c.bf16 %v639, %v639
      %v656 = vld [vmem:[%s289] sm:$0xf]
      %v657 = vld [vmem:[%s289 + $0x4] sm:$0xf]
      %v658 = vld [vmem:[%s289 + $0x8] sm:$0xf]
      %v659 = vld [vmem:[%s289 + $0xc] sm:$0xf]
      %v660 = vld [vmem:[%s289 + $0x10] sm:$0xf]
      %v666 = vunpack.c.l.b16 %v656
      %v667 = vunpack.c.l.b16 %v657
      %v668 = vunpack.c.l.b16 %v658
      %v669 = vunpack.c.l.b16 %v659
      %v670 = vunpack.c.l.b16 %v660
      %v671 = vpack.c.b16 %v667, %v666
      %v672 = vpack.c.b16 %v669, %v668
      %v673 = vpack.c.b16 %v670, %v670
      %674 = vrot.lane.b32.xlu0 %v671, 96
      %v675 = vpop.permute.xlu0 %674
      %676 = vrot.lane.b32.xlu0 %v672, 96
      %v677 = vpop.permute.xlu0 %676
      %678 = vrot.lane.b32.xlu0 %v673, 96
      %v679 = vpop.permute.xlu0 %678
      %v683 = vsel %vm354, %v655, 0
      %v686 = vsel %vm408, %v679, 0
      %688 = vmatpush.bf16.msra.mxu0 0
      %689 = vmatpush.bf16.msra.mxu0 0
      %690 = vmatpush.bf16.msra.mxu0 0
      %691 = vmatpush.bf16.msra.mxu0 0
      %692 = vmatpush.bf16.msra.mxu0 0
      %693 = vmatpush.bf16.msra.mxu0 %v686
      %694 = vmatpush.bf16.msra.mxu0 %v677
      %695 = vmatpush.bf16.msra.mxu0 %v675
      %696 = vmatmul.bf16.gmra.mxu0 %v683
      %v697 = vpop.f32.mrf.mxu0
      %v698 = vadd.f32 0.0, %v697
      %v699 = vpop.f32.mrf.mxu0
      %700 = vdwg.mxu0
      %702 = vrot.lane.b32.xlu0 %v698, 32
      %v703 = vpop.permute.xlu0 %702
      %v705 = vadd.f32 %v654, %v703
      %706 = vst.msk [vmem:[#allocation4] sm:$0xff] %vm651, %v705
      %vm707 = vcmask 23568
      %708 = vst.msk [vmem:[#allocation2] sm:$0xff] %vm707, %v628
      %v709 = vld [vmem:[%s264] sm:$0xf]
      %v710 = vld [vmem:[%s276] sm:$0xf]
      %v711 = vld [vmem:[%s276 + $0x4] sm:$0xf]
      %v712 = vld [vmem:[%s276 + $0x8] sm:$0xf]
      %v713 = vld [vmem:[%s276 + $0xc] sm:$0xf]
      %v714 = vld [vmem:[%s276 + $0x10] sm:$0xf]
      %v716 = vunpack.c.l.b16 %v709
      %v717 = vpack.c.b16 %v716, %v716
      %718 = vrot.lane.b32.xlu0 %v717, 80
      %v719 = vpop.permute.xlu0 %718
      %v725 = vunpack.c.l.b16 %v710
      %v726 = vunpack.c.l.b16 %v711
      %v727 = vunpack.c.l.b16 %v712
      %v728 = vunpack.c.l.b16 %v713
      %v729 = vunpack.c.l.b16 %v714
      %v730 = vpack.c.b16 %v726, %v725
      %v731 = vpack.c.b16 %v728, %v727
      %v732 = vpack.c.b16 %v729, %v729
      %733 = vrot.lane.b32.xlu0 %v730, 80
      %v734 = vpop.permute.xlu0 %733
      %735 = vrot.lane.b32.xlu0 %v731, 80
      %v736 = vpop.permute.xlu0 %735
      %737 = vrot.lane.b32.xlu0 %v732, 80
      %v738 = vpop.permute.xlu0 %737
      %v740 = vsel %vm327, %v719, 0
      %v743 = vsel %vm327, %v734, 0
      %v746 = vsel %vm327, %v736, 0
      %v749 = vsel %vm327, %v738, 0
      %751 = vmatpush.bf16.xpose.msra.mxu0 0
      %752 = vmatpush.bf16.xpose.msra.mxu0 0
      %753 = vmatpush.bf16.xpose.msra.mxu0 0
      %754 = vmatpush.bf16.xpose.msra.mxu0 0
      %755 = vmatpush.bf16.xpose.msra.mxu0 0
      %756 = vmatpush.bf16.xpose.msra.mxu0 %v749
      %757 = vmatpush.bf16.xpose.msra.mxu0 %v746
      %758 = vmatpush.bf16.xpose.msra.mxu0 %v743
      %759 = vmatmul.bf16.gmra.mxu0 %v740
      %v760 = vpop.f32.mrf.mxu0
      %v761 = vadd.f32 0.0, %v760
      %v762 = vpop.f32.mrf.mxu0
      %763 = vdwg.mxu0
      %v764 = vld [vmem:[#allocation2] sm:$0xff]
      %v765 = vsel %vm354, %v761, -inf
      %766 = vmax.xlane.f32.xlu0 %v765
      %v767 = vpop.xlane.xlu0 %766
      %v768 = vmax.f32 %v764, %v767
      %v769 = vsub.f32 %v764, %v768
      %v770 = vmul.f32 %v769, 1.442695
      %v771 = vpow.pop %v770
      %773 = vset.pattern.permute.xlu0 3
      %774 = vperm.xlu0 %773, %v768
      %v775 = vpop.permute.xlu0 %774
      %v777 = vsub.f32 %v761, %v775
      %v778 = vmul.f32 %v777, 1.442695
      %v779 = vpow.pop %v778
      %v780 = vld [vmem:[#allocation3] sm:$0xff]
      %782 = vset.pattern.permute.xlu0 3
      %783 = vperm.xlu0 %782, %v771
      %v784 = vpop.permute.xlu0 %783
      %v786 = vmul.f32 %v784, %v780
      %v787 = vsel %vm354, %v779, 0.0
      %788 = vadd.xlane.f32.xlu0 %v787
      %v789 = vpop.xlane.xlu0 %788
      %v790 = vadd.f32 %v786, %v789
      %vm791 = vcmask 523648
      %792 = vst.msk [vmem:[#allocation3] sm:$0xff] %vm791, %v790
      %v793 = vld [vmem:[#allocation4] sm:$0xff]
      %v794 = vmul.f32 %v784, %v793
      %v795 = vpack.c.bf16 %v779, %v779
      %v796 = vld [vmem:[%s289] sm:$0xf]
      %v797 = vld [vmem:[%s289 + $0x4] sm:$0xf]
      %v798 = vld [vmem:[%s289 + $0x8] sm:$0xf]
      %v799 = vld [vmem:[%s289 + $0xc] sm:$0xf]
      %v800 = vld [vmem:[%s289 + $0x10] sm:$0xf]
      %v806 = vunpack.c.l.b16 %v796
      %v807 = vunpack.c.l.b16 %v797
      %v808 = vunpack.c.l.b16 %v798
      %v809 = vunpack.c.l.b16 %v799
      %v810 = vunpack.c.l.b16 %v800
      %v811 = vpack.c.b16 %v807, %v806
      %v812 = vpack.c.b16 %v809, %v808
      %v813 = vpack.c.b16 %v810, %v810
      %814 = vrot.lane.b32.xlu0 %v811, 80
      %v815 = vpop.permute.xlu0 %814
      %816 = vrot.lane.b32.xlu0 %v812, 80
      %v817 = vpop.permute.xlu0 %816
      %818 = vrot.lane.b32.xlu0 %v813, 80
      %v819 = vpop.permute.xlu0 %818
      %v823 = vsel %vm354, %v795, 0
      %v826 = vsel %vm408, %v819, 0
      %828 = vmatpush.bf16.msra.mxu0 0
      %829 = vmatpush.bf16.msra.mxu0 0
      %830 = vmatpush.bf16.msra.mxu0 0
      %831 = vmatpush.bf16.msra.mxu0 0
      %832 = vmatpush.bf16.msra.mxu0 0
      %833 = vmatpush.bf16.msra.mxu0 %v826
      %834 = vmatpush.bf16.msra.mxu0 %v817
      %835 = vmatpush.bf16.msra.mxu0 %v815
      %836 = vmatmul.bf16.gmra.mxu0 %v823
      %v837 = vpop.f32.mrf.mxu0
      %v838 = vadd.f32 0.0, %v837
      %v839 = vpop.f32.mrf.mxu0
      %840 = vdwg.mxu0
      %842 = vrot.lane.b32.xlu0 %v838, 48
      %v843 = vpop.permute.xlu0 %842
      %v845 = vadd.f32 %v794, %v843
      %846 = vst.msk [vmem:[#allocation4] sm:$0xff] %vm791, %v845
      %vm847 = vcmask 31768
      %848 = vst.msk [vmem:[#allocation2] sm:$0xff] %vm847, %v768
      // Predicated region
      $region37: #{cross_layer_cross_scale_projector.84} parent=31 // pred_check
        %p849 = pneg %p299
      $region38: #{cross_layer_cross_scale_projector.84} parent=31 // pred_check_branch
        %851 = sbr.rel (%p849) target = $region40
      $region39: #{cross_layer_cross_scale_projector.84} parent=31 // pred_region
        %v852 = vld [vmem:[#allocation4] sm:$0xff]
        %v853 = vld [vmem:[#allocation3] sm:$0xff]
        %v854 = vrcp.pop %v853
        %v855 = vmul.f32 %v852, %v854
        %v856 = vpack.c.bf16 %v855, %v855
        %vm857 = vcmask 519168
        %858 = vst.msk [vmem:[%s297] sm:$0xf] %vm857, %v856
      $region40: #{cross_layer_cross_scale_projector.84} parent=31 // pred_fallthru
        _
      %p859 = scmp.lt.s32.totalorder %s19, 1
      %s860 = scalar_select %p859, %s19, 1
      %p861 = scmp.lt.s32.totalorder %s20, 0
      %s862 = scalar_select %p861, %s20, 0
      %s863 = sadd.s32 %s862, %s860
      %s864 = smul.addr %s863, 4
      %s865 = scalar_lea.vmem %s3, %s864
      // Predicated region
      $region41: #{cross_layer_cross_scale_projector.84} parent=31 // pred_check
        %p866 = pneg %p141
      $region42: #{cross_layer_cross_scale_projector.84} parent=31 // pred_check_branch
        %868 = sbr.rel (%p866) target = $region44
      $region43: #{cross_layer_cross_scale_projector.84} parent=31 // pred_region
        _
      $region44: #{cross_layer_cross_scale_projector.84} parent=31 // pred_fallthru
        _
    $region32: #{cross_layer_cross_scale_projector.84} parent=5 // pred_fallthru
      _
    %p869 = scmp.le.s32.totalorder 2, %s9
    // Predicated region
    $region45: #{cross_layer_cross_scale_projector.84} parent=5 // pred_check
      %p870 = pneg %p869
    $region46: #{cross_layer_cross_scale_projector.84} parent=5 // pred_check_branch
      %872 = sbr.rel (%p870) target = $region48
    $region47: #{cross_layer_cross_scale_projector.84} parent=5 // pred_region
      %s873 = ssub.s32 %s9, 2
      // Predicated region
      $region49: #{cross_layer_cross_scale_projector.84} parent=47 // pred_check
        %p874 = pneg %p147
      $region50: #{cross_layer_cross_scale_projector.84} parent=47 // pred_check_branch
        %876 = sbr.rel (%p874) target = $region52
      $region51: #{cross_layer_cross_scale_projector.84} parent=47 // pred_region
        %p877 = scmp.lt.s32.totalorder %s22, 1
        %s878 = scalar_select %p877, %s22, 1
        %p879 = scmp.lt.s32.totalorder %s23, 0
        %s880 = scalar_select %p879, %s23, 0
        %s881 = sadd.s32 %s880, %s878
        %s882 = smul.addr %s881, 4
        %s883 = scalar_lea.vmem %s3, %s882
      $region52: #{cross_layer_cross_scale_projector.84} parent=47 // pred_fallthru
        _
    $region48: #{cross_layer_cross_scale_projector.84} parent=5 // pred_fallthru
      _
  $region6: #{cross_layer_cross_scale_projector.84} parent=0 // loop_footer
    %s13 = sadd.s32 1, %s9
  $region7: #{cross_layer_cross_scale_projector.84} parent=0 // loop_footer_branch
    %8 = sbr.rel target = $region3
  $region8: #{cross_layer_cross_scale_projector.84} parent=0 // loop_exit
    _

// kernel: cross_layer_cross_scale_projector.86
$region0: #{cross_layer_cross_scale_projector.86}
  #allocation0 [shape = 'u32[]', space=smem, size = 0x4, offset = 0x4, fixed_abs, tag = 'smem constant byte address 0x4 - core index']
  #allocation1 [shape = 'u32[72,128]{1,0:T(1,128)}', space=vmem, size = 0x9000, scoped, tag = 'internal scratch']
  #allocation2 [shape = 'bf16[16,64]{1,0:T(8,128)(2,1)}', space=vmem, size = 0x1000, scoped, tag = 'scratch operand']
  %s0 = inlined_call_operand.vmem [shape: f32[16,64], index: 0, kind: input, shape index: {}]
  %s1 = inlined_call_operand.vmem [shape: f32[1,64], index: 1, kind: input, shape index: {}]
  %s2 = inlined_call_operand.vmem [shape: f32[1,64], index: 2, kind: input, shape index: {}]
  %s3 = inlined_call_operand.vmem [shape: bf16[64,256], index: 3, kind: input, shape index: {}]
  %s4 = inlined_call_operand.vmem [shape: bf16[16,256], index: 4, kind: output, shape index: {}]
  %s5 = sld [smem:[#allocation0]]
  $region30: #{cross_layer_cross_scale_projector.86} parent=0
    _
  %s7 = ssub.s32 1, %s5
  %s8 = scalar_select 0, %s7, %s5
  // Predicated region
  $region2: #{cross_layer_cross_scale_projector.86} parent=0 // pred_check
    _
  $region3: #{cross_layer_cross_scale_projector.86} parent=0 // pred_check_branch
    %10 = sbr.rel (0) target = $region5
  $region4: #{cross_layer_cross_scale_projector.86} parent=0 // pred_region
    _
  $region5: #{cross_layer_cross_scale_projector.86} parent=0 // pred_fallthru
    _
  // Predicated region
  $region6: #{cross_layer_cross_scale_projector.86} parent=0 // pred_check
    _
  $region7: #{cross_layer_cross_scale_projector.86} parent=0 // pred_check_branch
    %12 = sbr.rel (0) target = $region9
  $region8: #{cross_layer_cross_scale_projector.86} parent=0 // pred_region
    _
  $region9: #{cross_layer_cross_scale_projector.86} parent=0 // pred_fallthru
    _
  // Predicated region
  $region10: #{cross_layer_cross_scale_projector.86} parent=0 // pred_check
    _
  $region11: #{cross_layer_cross_scale_projector.86} parent=0 // pred_check_branch
    %14 = sbr.rel (0) target = $region13
  $region12: #{cross_layer_cross_scale_projector.86} parent=0 // pred_region
    _
  $region13: #{cross_layer_cross_scale_projector.86} parent=0 // pred_fallthru
    _
  // Predicated region
  $region14: #{cross_layer_cross_scale_projector.86} parent=0 // pred_check
    _
  $region15: #{cross_layer_cross_scale_projector.86} parent=0 // pred_check_branch
    %16 = sbr.rel (0) target = $region17
  $region16: #{cross_layer_cross_scale_projector.86} parent=0 // pred_region
    _
  $region17: #{cross_layer_cross_scale_projector.86} parent=0 // pred_fallthru
    _
  %p18 = scmp.eq.s32.totalorder 0, 0
  // Predicated region
  $region18: #{cross_layer_cross_scale_projector.86} parent=0 // pred_check
    %p19 = pneg %p18
  $region19: #{cross_layer_cross_scale_projector.86} parent=0 // pred_check_branch
    %21 = sbr.rel (%p19) target = $region21
  $region20: #{cross_layer_cross_scale_projector.86} parent=0 // pred_region
    %v22 = vld [vmem:[%s0] sm:$0xff]
    %v23 = vld [vmem:[%s0 + $0x8] sm:$0xff]
    %vm24 = vcmask 523264
    %v25 = vsel %vm24, %v22, 0.0
    %26 = vadd.xlane.f32.xlu0 %v25
    %v27 = vpop.xlane.xlu0 %26
    %v28 = vsel %vm24, %v23, 0.0
    %29 = vadd.xlane.f32.xlu0 %v28
    %v30 = vpop.xlane.xlu0 %29
    %v31 = vrcp.pop 64.0
    %v32 = vmul.f32 64.0, %v31
    %v33 = vsub.f32 1.0, %v32
    %v34 = vmul.f32 %v31, %v33
    %v35 = vadd.f32 %v31, %v34
    %vm36 = vweird.f32 %v31
    %v37 = vsel %vm36, %v31, %v35
    %v38 = vmul.f32 %v27, %v37
    %v39 = vmul.f32 %v30, %v37
    %v40 = vsub.f32 %v22, %v38
    %v41 = vsub.f32 %v23, %v39
    %v42 = vmul.f32 %v40, %v40
    %v43 = vmul.f32 %v41, %v41
    %v44 = vsel %vm24, %v42, 0.0
    %45 = vadd.xlane.f32.xlu0 %v44
    %v46 = vpop.xlane.xlu0 %45
    %v47 = vsel %vm24, %v43, 0.0
    %48 = vadd.xlane.f32.xlu0 %v47
    %v49 = vpop.xlane.xlu0 %48
    %v50 = vmul.f32 %v46, %v37
    %v51 = vmul.f32 %v49, %v37
    %v52 = vadd.f32 %v50, 1e-05
    %v53 = vadd.f32 %v51, 1e-05
    %v54 = vrsqrt.pop %v52
    %v55 = vmul.f32 %v54, %v52
    %v56 = vmul.f32 %v55, %v54
    %v57 = vmul.f32 0.5, %v56
    %v58 = vsub.f32 1.5, %v57
    %v59 = vmul.f32 %v54, %v58
    %vm60 = vweird.f32 %v52
    %vm61 = vweird.f32 %v54
    %vm62 = vmor %vm60, %vm61
    %v63 = vsel %vm62, %v54, %v59
    %v64 = vrsqrt.pop %v53
    %v65 = vmul.f32 %v64, %v53
    %v66 = vmul.f32 %v65, %v64
    %v67 = vmul.f32 0.5, %v66
    %v68 = vsub.f32 1.5, %v67
    %v69 = vmul.f32 %v64, %v68
    %vm70 = vweird.f32 %v53
    %vm71 = vweird.f32 %v64
    %vm72 = vmor %vm70, %vm71
    %v73 = vsel %vm72, %v64, %v69
    %v74 = vmul.f32 %v40, %v63
    %v75 = vmul.f32 %v41, %v73
    %v76 = vld [vmem:[%s1] sm:$0x1]
    %v78 = vperm.slane %v76, 0
    %v80 = vmul.f32 %v74, %v78
    %v81 = vmul.f32 %v75, %v78
    %v82 = vld [vmem:[%s2] sm:$0x1]
    %v84 = vperm.slane %v82, 0
    %v86 = vadd.f32 %v80, %v84
    %v87 = vadd.f32 %v81, %v84
    %v88 = vpack.c.bf16 %v86, %v86
    %v89 = vpack.c.bf16 %v87, %v87
    %vm90 = vcmask 519168
    %91 = vst.msk [vmem:[#allocation2] sm:$0xf] %vm90, %v88
    %92 = vst.msk [vmem:[#allocation2 + $0x4] sm:$0xf] %vm90, %v89
  $region21: #{cross_layer_cross_scale_projector.86} parent=0 // pred_fallthru
    _
  %v93 = vld [vmem:[#allocation2] sm:$0xf]
  %v94 = vld [vmem:[#allocation2 + $0x4] sm:$0xf]
  %v95 = vld [vmem:[%s3] sm:$0xff]
  %v96 = vld [vmem:[%s3 + $0x8] sm:$0xff]
  %v97 = vld [vmem:[%s3 + $0x10] sm:$0xff]
  %v98 = vld [vmem:[%s3 + $0x18] sm:$0xff]
  %v99 = vld [vmem:[%s3 + $0x20] sm:$0xff]
  %v100 = vld [vmem:[%s3 + $0x28] sm:$0xff]
  %v101 = vld [vmem:[%s3 + $0x30] sm:$0xff]
  %v102 = vld [vmem:[%s3 + $0x38] sm:$0xff]
  %v105 = vunpack.c.l.b16 %v93
  %v106 = vunpack.c.l.b16 %v94
  %v107 = vpack.c.b16 %v106, %v105
  %v116 = vunpack.c.l.b16 %v95
  %v117 = vunpack.c.h.b16 %v95
  %v118 = vunpack.c.l.b16 %v96
  %v119 = vunpack.c.h.b16 %v96
  %v120 = vunpack.c.l.b16 %v97
  %v121 = vunpack.c.h.b16 %v97
  %v122 = vunpack.c.l.b16 %v98
  %v123 = vunpack.c.h.b16 %v98
  %v124 = vunpack.c.l.b16 %v99
  %v125 = vunpack.c.h.b16 %v99
  %v126 = vunpack.c.l.b16 %v100
  %v127 = vunpack.c.h.b16 %v100
  %v128 = vunpack.c.l.b16 %v101
  %v129 = vunpack.c.h.b16 %v101
  %v130 = vunpack.c.l.b16 %v102
  %v131 = vunpack.c.h.b16 %v102
  %v132 = vpack.c.b16 %v118, %v116
  %v133 = vpack.c.b16 %v119, %v117
  %v134 = vpack.c.b16 %v122, %v120
  %v135 = vpack.c.b16 %v123, %v121
  %v136 = vpack.c.b16 %v126, %v124
  %v137 = vpack.c.b16 %v127, %v125
  %v138 = vpack.c.b16 %v130, %v128
  %v139 = vpack.c.b16 %v131, %v129
  %vm148 = vcmask 523264
  %v150 = vsel %vm148, %v107, 0
  %152 = vmatpush.bf16.msra.mxu0 0
  %153 = vmatpush.bf16.msra.mxu0 0
  %154 = vmatpush.bf16.msra.mxu0 0
  %155 = vmatpush.bf16.msra.mxu0 0
  %156 = vmatpush.bf16.msra.mxu0 %v138
  %157 = vmatpush.bf16.msra.mxu0 %v136
  %158 = vmatpush.bf16.msra.mxu0 %v134
  %159 = vmatpush.bf16.msra.mxu0 %v132
  %160 = vmatmul.bf16.gmra.mxu0 %v150
  %v161 = vpop.f32.mrf.mxu0
  %v162 = vadd.f32 0.0, %v161
  %v163 = vpop.f32.mrf.mxu0
  %v164 = vadd.f32 0.0, %v163
  %165 = vdwg.mxu0
  %166 = vmatpush.bf16.msra.mxu0 0
  %167 = vmatpush.bf16.msra.mxu0 0
  %168 = vmatpush.bf16.msra.mxu0 0
  %169 = vmatpush.bf16.msra.mxu0 0
  %170 = vmatpush.bf16.msra.mxu0 %v139
  %171 = vmatpush.bf16.msra.mxu0 %v137
  %172 = vmatpush.bf16.msra.mxu0 %v135
  %173 = vmatpush.bf16.msra.mxu0 %v133
  %174 = vmatmul.bf16.gmra.mxu0 %v150
  %v175 = vpop.f32.mrf.mxu0
  %v176 = vadd.f32 0.0, %v175
  %v177 = vpop.f32.mrf.mxu0
  %v178 = vadd.f32 0.0, %v177
  %179 = vdwg.mxu0
  %v180 = vmul.f32 %v162, 0.5
  %v181 = vmul.f32 %v176, 0.5
  %v182 = vmul.f32 %v164, 0.5
  %v183 = vmul.f32 %v178, 0.5
  %v184 = vmul.f32 %v162, 0.044715
  %v185 = vmul.f32 %v176, 0.044715
  %v186 = vmul.f32 %v164, 0.044715
  %v187 = vmul.f32 %v178, 0.044715
  %v188 = vmul.f32 %v184, %v162
  %v189 = vmul.f32 %v185, %v176
  %v190 = vmul.f32 %v186, %v164
  %v191 = vmul.f32 %v187, %v178
  %v192 = vmul.f32 %v188, %v162
  %v193 = vmul.f32 %v189, %v176
  %v194 = vmul.f32 %v190, %v164
  %v195 = vmul.f32 %v191, %v178
  %v196 = vadd.f32 %v162, %v192
  %v197 = vadd.f32 %v176, %v193
  %v198 = vadd.f32 %v164, %v194
  %v199 = vadd.f32 %v178, %v195
  %v200 = vmul.f32 %v196, 0.7978846
  %v201 = vmul.f32 %v197, 0.7978846
  %v202 = vmul.f32 %v198, 0.7978846
  %v203 = vmul.f32 %v199, 0.7978846
  %v204 = vtanh.pop %v200
  %v205 = vtanh.pop %v201
  %v206 = vtanh.pop %v202
  %v207 = vtanh.pop %v203
  %v208 = vadd.f32 %v204, 1.0
  %v209 = vadd.f32 %v205, 1.0
  %v210 = vadd.f32 %v206, 1.0
  %v211 = vadd.f32 %v207, 1.0
  %v212 = vmul.f32 %v180, %v208
  %v213 = vmul.f32 %v181, %v209
  %v214 = vmul.f32 %v182, %v210
  %v215 = vmul.f32 %v183, %v211
  %v216 = vpack.c.bf16 %v213, %v212
  %v217 = vpack.c.bf16 %v215, %v214
  %218 = vst [vmem:[%s4] sm:$0xff] %v216
  %219 = vst [vmem:[%s4 + $0x8] sm:$0xff] %v217
  // Predicated region
  $region22: #{cross_layer_cross_scale_projector.86} parent=0 // pred_check
    _
  $region23: #{cross_layer_cross_scale_projector.86} parent=0 // pred_check_branch
    %221 = sbr.rel (0) target = $region25
  $region24: #{cross_layer_cross_scale_projector.86} parent=0 // pred_region
    _
  $region25: #{cross_layer_cross_scale_projector.86} parent=0 // pred_fallthru
    _
  // Predicated region
  $region26: #{cross_layer_cross_scale_projector.86} parent=0 // pred_check
    _
  $region27: #{cross_layer_cross_scale_projector.86} parent=0 // pred_check_branch
    %223 = sbr.rel (0) target = $region29
  $region28: #{cross_layer_cross_scale_projector.86} parent=0 // pred_region
    _
  $region29: #{cross_layer_cross_scale_projector.86} parent=0 // pred_fallthru
    _

// kernel: cross_layer_cross_scale_projector.87
$region0: #{cross_layer_cross_scale_projector.87}
  #allocation0 [shape = 'u32[]', space=smem, size = 0x4, offset = 0x4, fixed_abs, tag = 'smem constant byte address 0x4 - core index']
  #allocation1 [shape = 'u32[72,128]{1,0:T(1,128)}', space=vmem, size = 0x9000, scoped, tag = 'internal scratch']
  %s0 = inlined_call_operand.vmem [shape: bf16[16,256], index: 0, kind: input, shape index: {}]
  %s1 = inlined_call_operand.vmem [shape: bf16[256,64], index: 1, kind: input, shape index: {}]
  %s2 = inlined_call_operand.vmem [shape: f32[16,64], index: 2, kind: input, shape index: {}]
  %s3 = inlined_call_operand.vmem [shape: f32[16,64], index: 3, kind: output, shape index: {}]
  %s4 = sld [smem:[#allocation0]]
  $region22: #{cross_layer_cross_scale_projector.87} parent=0
    _
  %s6 = ssub.s32 1, %s4
  %s7 = scalar_select 0, %s6, %s4
  // Predicated region
  $region2: #{cross_layer_cross_scale_projector.87} parent=0 // pred_check
    _
  $region3: #{cross_layer_cross_scale_projector.87} parent=0 // pred_check_branch
    %9 = sbr.rel (0) target = $region5
  $region4: #{cross_layer_cross_scale_projector.87} parent=0 // pred_region
    _
  $region5: #{cross_layer_cross_scale_projector.87} parent=0 // pred_fallthru
    _
  // Predicated region
  $region6: #{cross_layer_cross_scale_projector.87} parent=0 // pred_check
    _
  $region7: #{cross_layer_cross_scale_projector.87} parent=0 // pred_check_branch
    %11 = sbr.rel (0) target = $region9
  $region8: #{cross_layer_cross_scale_projector.87} parent=0 // pred_region
    _
  $region9: #{cross_layer_cross_scale_projector.87} parent=0 // pred_fallthru
    _
  // Predicated region
  $region10: #{cross_layer_cross_scale_projector.87} parent=0 // pred_check
    _
  $region11: #{cross_layer_cross_scale_projector.87} parent=0 // pred_check_branch
    %13 = sbr.rel (0) target = $region13
  $region12: #{cross_layer_cross_scale_projector.87} parent=0 // pred_region
    _
  $region13: #{cross_layer_cross_scale_projector.87} parent=0 // pred_fallthru
    _
  %v14 = vld [vmem:[%s0] sm:$0xff]
  %v15 = vld [vmem:[%s0 + $0x8] sm:$0xff]
  %v16 = vld [vmem:[%s1] sm:$0xf]
  %v17 = vld [vmem:[%s1 + $0x4] sm:$0xf]
  %v18 = vld [vmem:[%s1 + $0x8] sm:$0xf]
  %v19 = vld [vmem:[%s1 + $0xc] sm:$0xf]
  %v20 = vld [vmem:[%s1 + $0x10] sm:$0xf]
  %v21 = vld [vmem:[%s1 + $0x14] sm:$0xf]
  %v22 = vld [vmem:[%s1 + $0x18] sm:$0xf]
  %v23 = vld [vmem:[%s1 + $0x1c] sm:$0xf]
  %v24 = vld [vmem:[%s1 + $0x20] sm:$0xf]
  %v25 = vld [vmem:[%s1 + $0x24] sm:$0xf]
  %v26 = vld [vmem:[%s1 + $0x28] sm:$0xf]
  %v27 = vld [vmem:[%s1 + $0x2c] sm:$0xf]
  %v28 = vld [vmem:[%s1 + $0x30] sm:$0xf]
  %v29 = vld [vmem:[%s1 + $0x34] sm:$0xf]
  %v30 = vld [vmem:[%s1 + $0x38] sm:$0xf]
  %v31 = vld [vmem:[%s1 + $0x3c] sm:$0xf]
  %v32 = vld [vmem:[%s1 + $0x40] sm:$0xf]
  %v33 = vld [vmem:[%s1 + $0x44] sm:$0xf]
  %v34 = vld [vmem:[%s1 + $0x48] sm:$0xf]
  %v35 = vld [vmem:[%s1 + $0x4c] sm:$0xf]
  %v36 = vld [vmem:[%s1 + $0x50] sm:$0xf]
  %v37 = vld [vmem:[%s1 + $0x54] sm:$0xf]
  %v38 = vld [vmem:[%s1 + $0x58] sm:$0xf]
  %v39 = vld [vmem:[%s1 + $0x5c] sm:$0xf]
  %v40 = vld [vmem:[%s1 + $0x60] sm:$0xf]
  %v41 = vld [vmem:[%s1 + $0x64] sm:$0xf]
  %v42 = vld [vmem:[%s1 + $0x68] sm:$0xf]
  %v43 = vld [vmem:[%s1 + $0x6c] sm:$0xf]
  %v44 = vld [vmem:[%s1 + $0x70] sm:$0xf]
  %v45 = vld [vmem:[%s1 + $0x74] sm:$0xf]
  %v46 = vld [vmem:[%s1 + $0x78] sm:$0xf]
  %v47 = vld [vmem:[%s1 + $0x7c] sm:$0xf]
  %v48 = vld [vmem:[%s2] sm:$0xff]
  %v49 = vld [vmem:[%s2 + $0x8] sm:$0xff]
  %v52 = vunpack.c.l.b16 %v14
  %v53 = vunpack.c.h.b16 %v14
  %v54 = vunpack.c.l.b16 %v15
  %v55 = vunpack.c.h.b16 %v15
  %v56 = vpack.c.b16 %v54, %v52
  %v57 = vpack.c.b16 %v55, %v53
  %v92 = vunpack.c.l.b16 %v16
  %v93 = vunpack.c.l.b16 %v17
  %v94 = vunpack.c.l.b16 %v18
  %v95 = vunpack.c.l.b16 %v19
  %v96 = vunpack.c.l.b16 %v20
  %v97 = vunpack.c.l.b16 %v21
  %v98 = vunpack.c.l.b16 %v22
  %v99 = vunpack.c.l.b16 %v23
  %v100 = vunpack.c.l.b16 %v24
  %v101 = vunpack.c.l.b16 %v25
  %v102 = vunpack.c.l.b16 %v26
  %v103 = vunpack.c.l.b16 %v27
  %v104 = vunpack.c.l.b16 %v28
  %v105 = vunpack.c.l.b16 %v29
  %v106 = vunpack.c.l.b16 %v30
  %v107 = vunpack.c.l.b16 %v31
  %v108 = vunpack.c.l.b16 %v32
  %v109 = vunpack.c.l.b16 %v33
  %v110 = vunpack.c.l.b16 %v34
  %v111 = vunpack.c.l.b16 %v35
  %v112 = vunpack.c.l.b16 %v36
  %v113 = vunpack.c.l.b16 %v37
  %v114 = vunpack.c.l.b16 %v38
  %v115 = vunpack.c.l.b16 %v39
  %v116 = vunpack.c.l.b16 %v40
  %v117 = vunpack.c.l.b16 %v41
  %v118 = vunpack.c.l.b16 %v42
  %v119 = vunpack.c.l.b16 %v43
  %v120 = vunpack.c.l.b16 %v44
  %v121 = vunpack.c.l.b16 %v45
  %v122 = vunpack.c.l.b16 %v46
  %v123 = vunpack.c.l.b16 %v47
  %v124 = vpack.c.b16 %v93, %v92
  %v125 = vpack.c.b16 %v95, %v94
  %v126 = vpack.c.b16 %v97, %v96
  %v127 = vpack.c.b16 %v99, %v98
  %v128 = vpack.c.b16 %v101, %v100
  %v129 = vpack.c.b16 %v103, %v102
  %v130 = vpack.c.b16 %v105, %v104
  %v131 = vpack.c.b16 %v107, %v106
  %v132 = vpack.c.b16 %v109, %v108
  %v133 = vpack.c.b16 %v111, %v110
  %v134 = vpack.c.b16 %v113, %v112
  %v135 = vpack.c.b16 %v115, %v114
  %v136 = vpack.c.b16 %v117, %v116
  %v137 = vpack.c.b16 %v119, %v118
  %v138 = vpack.c.b16 %v121, %v120
  %v139 = vpack.c.b16 %v123, %v122
  %156 = vmatpush.bf16.msra.mxu0 %v131
  %157 = vmatpush.bf16.msra.mxu0 %v130
  %158 = vmatpush.bf16.msra.mxu0 %v129
  %159 = vmatpush.bf16.msra.mxu0 %v128
  %160 = vmatpush.bf16.msra.mxu0 %v127
  %161 = vmatpush.bf16.msra.mxu0 %v126
  %162 = vmatpush.bf16.msra.mxu0 %v125
  %163 = vmatpush.bf16.msra.mxu0 %v124
  %164 = vmatmul.bf16.gmra.mxu0 %v56
  %v165 = vpop.f32.mrf.mxu0
  %v166 = vadd.f32 %v48, %v165
  %v167 = vpop.f32.mrf.mxu0
  %v168 = vadd.f32 %v49, %v167
  %169 = vdwg.mxu0
  %170 = vmatpush.bf16.msra.mxu0 %v139
  %171 = vmatpush.bf16.msra.mxu0 %v138
  %172 = vmatpush.bf16.msra.mxu0 %v137
  %173 = vmatpush.bf16.msra.mxu0 %v136
  %174 = vmatpush.bf16.msra.mxu0 %v135
  %175 = vmatpush.bf16.msra.mxu0 %v134
  %176 = vmatpush.bf16.msra.mxu0 %v133
  %177 = vmatpush.bf16.msra.mxu0 %v132
  %178 = vmatmul.bf16.gmra.mxu0 %v57
  %v179 = vpop.f32.mrf.mxu0
  %v180 = vadd.f32 %v166, %v179
  %v181 = vpop.f32.mrf.mxu0
  %v182 = vadd.f32 %v168, %v181
  %183 = vdwg.mxu0
  %vm184 = vcmask 523264
  %185 = vst.msk [vmem:[%s3] sm:$0xff] %vm184, %v180
  %186 = vst.msk [vmem:[%s3 + $0x8] sm:$0xff] %vm184, %v182
  // Predicated region
  $region14: #{cross_layer_cross_scale_projector.87} parent=0 // pred_check
    _
  $region15: #{cross_layer_cross_scale_projector.87} parent=0 // pred_check_branch
    %188 = sbr.rel (0) target = $region17
  $region16: #{cross_layer_cross_scale_projector.87} parent=0 // pred_region
    _
  $region17: #{cross_layer_cross_scale_projector.87} parent=0 // pred_fallthru
    _
  // Predicated region
  $region18: #{cross_layer_cross_scale_projector.87} parent=0 // pred_check
    _
  $region19: #{cross_layer_cross_scale_projector.87} parent=0 // pred_check_branch
    %190 = sbr.rel (0) target = $region21
  $region20: #{cross_layer_cross_scale_projector.87} parent=0 // pred_region
    _
  $region21: #{cross_layer_cross_scale_projector.87} parent=0 // pred_fallthru
    _

// kernel: cross_layer_cross_scale_projector.95
$region0: #{cross_layer_cross_scale_projector.95}
  #allocation0 [shape = 'u32[]', space=smem, size = 0x4, offset = 0x4, fixed_abs, tag = 'smem constant byte address 0x4 - core index']
  #allocation1 [shape = 'u32[72,128]{1,0:T(1,128)}', space=vmem, size = 0x9000, scoped, tag = 'internal scratch']
  #allocation2 [shape = 'bf16[16,64]{1,0:T(8,128)(2,1)}', space=vmem, size = 0x1000, scoped, tag = 'scratch operand']
  %s0 = inlined_call_operand.vmem [shape: f32[16,64], index: 0, kind: input, shape index: {}]
  %s1 = inlined_call_operand.vmem [shape: f32[1,64], index: 1, kind: input, shape index: {}]
  %s2 = inlined_call_operand.vmem [shape: f32[1,64], index: 2, kind: input, shape index: {}]
  %s3 = inlined_call_operand.vmem [shape: bf16[64,32], index: 3, kind: input, shape index: {}]
  %s4 = inlined_call_operand.vmem [shape: f32[1,32], index: 4, kind: input, shape index: {}]
  %s5 = inlined_call_operand.hbm [shape: f32[16,32], index: 5, kind: output, shape index: {}]
  %s6 = sld [smem:[#allocation0]]
  $region34: #{cross_layer_cross_scale_projector.95} parent=0
    _
  %s8 = ssub.s32 1, %s6
  %s9 = scalar_select 0, %s8, %s6
  $region1: #{cross_layer_cross_scale_projector.95} parent=0
    #allocation3 [shape = 'u8[8192]{0}', space=vmem, size = 0x2000, scoped, tag = 'output window, operand 0, single buffered']
    #allocation4 [shape = 's32[1]{0}', space=sflag, size = 0x4, scoped, tag = 'scoped memory for cross_layer_cross_scale_projector.95']
    %10 = vsyncpa [#allocation4], 0
    // Predicated region
    $region2: #{cross_layer_cross_scale_projector.95} parent=1 // pred_check
      _
    $region3: #{cross_layer_cross_scale_projector.95} parent=1 // pred_check_branch
      %12 = sbr.rel (0) target = $region5
    $region4: #{cross_layer_cross_scale_projector.95} parent=1 // pred_region
      _
    $region5: #{cross_layer_cross_scale_projector.95} parent=1 // pred_fallthru
      _
    // Predicated region
    $region6: #{cross_layer_cross_scale_projector.95} parent=1 // pred_check
      _
    $region7: #{cross_layer_cross_scale_projector.95} parent=1 // pred_check_branch
      %14 = sbr.rel (0) target = $region9
    $region8: #{cross_layer_cross_scale_projector.95} parent=1 // pred_region
      _
    $region9: #{cross_layer_cross_scale_projector.95} parent=1 // pred_fallthru
      _
    // Predicated region
    $region10: #{cross_layer_cross_scale_projector.95} parent=1 // pred_check
      _
    $region11: #{cross_layer_cross_scale_projector.95} parent=1 // pred_check_branch
      %16 = sbr.rel (0) target = $region13
    $region12: #{cross_layer_cross_scale_projector.95} parent=1 // pred_region
      _
    $region13: #{cross_layer_cross_scale_projector.95} parent=1 // pred_fallthru
      _
    // Predicated region
    $region14: #{cross_layer_cross_scale_projector.95} parent=1 // pred_check
      _
    $region15: #{cross_layer_cross_scale_projector.95} parent=1 // pred_check_branch
      %18 = sbr.rel (0) target = $region17
    $region16: #{cross_layer_cross_scale_projector.95} parent=1 // pred_region
      _
    $region17: #{cross_layer_cross_scale_projector.95} parent=1 // pred_fallthru
      _
    // Predicated region
    $region18: #{cross_layer_cross_scale_projector.95} parent=1 // pred_check
      _
    $region19: #{cross_layer_cross_scale_projector.95} parent=1 // pred_check_branch
      %20 = sbr.rel (0) target = $region21
    $region20: #{cross_layer_cross_scale_projector.95} parent=1 // pred_region
      _
    $region21: #{cross_layer_cross_scale_projector.95} parent=1 // pred_fallthru
      _
    %p22 = scmp.eq.s32.totalorder 0, 0
    // Predicated region
    $region22: #{cross_layer_cross_scale_projector.95} parent=1 // pred_check
      %p23 = pneg %p22
    $region23: #{cross_layer_cross_scale_projector.95} parent=1 // pred_check_branch
      %25 = sbr.rel (%p23) target = $region25
    $region24: #{cross_layer_cross_scale_projector.95} parent=1 // pred_region
      %v26 = vld [vmem:[%s0] sm:$0xff]
      %v27 = vld [vmem:[%s0 + $0x8] sm:$0xff]
      %vm28 = vcmask 523264
      %v29 = vsel %vm28, %v26, 0.0
      %30 = vadd.xlane.f32.xlu0 %v29
      %v31 = vpop.xlane.xlu0 %30
      %v32 = vsel %vm28, %v27, 0.0
      %33 = vadd.xlane.f32.xlu0 %v32
      %v34 = vpop.xlane.xlu0 %33
      %v35 = vrcp.pop 64.0
      %v36 = vmul.f32 64.0, %v35
      %v37 = vsub.f32 1.0, %v36
      %v38 = vmul.f32 %v35, %v37
      %v39 = vadd.f32 %v35, %v38
      %vm40 = vweird.f32 %v35
      %v41 = vsel %vm40, %v35, %v39
      %v42 = vmul.f32 %v31, %v41
      %v43 = vmul.f32 %v34, %v41
      %v44 = vsub.f32 %v26, %v42
      %v45 = vsub.f32 %v27, %v43
      %v46 = vmul.f32 %v44, %v44
      %v47 = vmul.f32 %v45, %v45
      %v48 = vsel %vm28, %v46, 0.0
      %49 = vadd.xlane.f32.xlu0 %v48
      %v50 = vpop.xlane.xlu0 %49
      %v51 = vsel %vm28, %v47, 0.0
      %52 = vadd.xlane.f32.xlu0 %v51
      %v53 = vpop.xlane.xlu0 %52
      %v54 = vmul.f32 %v50, %v41
      %v55 = vmul.f32 %v53, %v41
      %v56 = vadd.f32 %v54, 1e-05
      %v57 = vadd.f32 %v55, 1e-05
      %v58 = vrsqrt.pop %v56
      %v59 = vmul.f32 %v58, %v56
      %v60 = vmul.f32 %v59, %v58
      %v61 = vmul.f32 0.5, %v60
      %v62 = vsub.f32 1.5, %v61
      %v63 = vmul.f32 %v58, %v62
      %vm64 = vweird.f32 %v56
      %vm65 = vweird.f32 %v58
      %vm66 = vmor %vm64, %vm65
      %v67 = vsel %vm66, %v58, %v63
      %v68 = vrsqrt.pop %v57
      %v69 = vmul.f32 %v68, %v57
      %v70 = vmul.f32 %v69, %v68
      %v71 = vmul.f32 0.5, %v70
      %v72 = vsub.f32 1.5, %v71
      %v73 = vmul.f32 %v68, %v72
      %vm74 = vweird.f32 %v57
      %vm75 = vweird.f32 %v68
      %vm76 = vmor %vm74, %vm75
      %v77 = vsel %vm76, %v68, %v73
      %v78 = vmul.f32 %v44, %v67
      %v79 = vmul.f32 %v45, %v77
      %v80 = vld [vmem:[%s1] sm:$0x1]
      %v82 = vperm.slane %v80, 0
      %v84 = vmul.f32 %v78, %v82
      %v85 = vmul.f32 %v79, %v82
      %v86 = vld [vmem:[%s2] sm:$0x1]
      %v88 = vperm.slane %v86, 0
      %v90 = vadd.f32 %v84, %v88
      %v91 = vadd.f32 %v85, %v88
      %v92 = vpack.c.bf16 %v90, %v90
      %v93 = vpack.c.bf16 %v91, %v91
      %vm94 = vcmask 519168
      %95 = vst.msk [vmem:[#allocation2] sm:$0xf] %vm94, %v92
      %96 = vst.msk [vmem:[#allocation2 + $0x4] sm:$0xf] %vm94, %v93
    $region25: #{cross_layer_cross_scale_projector.95} parent=1 // pred_fallthru
      _
    %v97 = vld [vmem:[#allocation2] sm:$0xf]
    %v98 = vld [vmem:[#allocation2 + $0x4] sm:$0xf]
    %v99 = vld [vmem:[%s3] sm:$0xf]
    %v100 = vld [vmem:[%s3 + $0x4] sm:$0xf]
    %v101 = vld [vmem:[%s3 + $0x8] sm:$0xf]
    %v102 = vld [vmem:[%s3 + $0xc] sm:$0xf]
    %v103 = vld [vmem:[%s3 + $0x10] sm:$0xf]
    %v104 = vld [vmem:[%s3 + $0x14] sm:$0xf]
    %v105 = vld [vmem:[%s3 + $0x18] sm:$0xf]
    %v106 = vld [vmem:[%s3 + $0x1c] sm:$0xf]
    %v107 = vld [vmem:[%s4] sm:$0x1]
    %v109 = vperm.slane %v107, 0
    %v113 = vunpack.c.l.b16 %v97
    %v114 = vunpack.c.l.b16 %v98
    %v115 = vpack.c.b16 %v114, %v113
    %v124 = vunpack.c.l.b16 %v99
    %v125 = vunpack.c.l.b16 %v100
    %v126 = vunpack.c.l.b16 %v101
    %v127 = vunpack.c.l.b16 %v102
    %v128 = vunpack.c.l.b16 %v103
    %v129 = vunpack.c.l.b16 %v104
    %v130 = vunpack.c.l.b16 %v105
    %v131 = vunpack.c.l.b16 %v106
    %v132 = vpack.c.b16 %v125, %v124
    %v133 = vpack.c.b16 %v127, %v126
    %v134 = vpack.c.b16 %v129, %v128
    %v135 = vpack.c.b16 %v131, %v130
    %vm140 = vcmask 523264
    %v142 = vsel %vm140, %v115, 0
    %144 = vmatpush.bf16.msra.mxu0 0
    %145 = vmatpush.bf16.msra.mxu0 0
    %146 = vmatpush.bf16.msra.mxu0 0
    %147 = vmatpush.bf16.msra.mxu0 0
    %148 = vmatpush.bf16.msra.mxu0 %v135
    %149 = vmatpush.bf16.msra.mxu0 %v134
    %150 = vmatpush.bf16.msra.mxu0 %v133
    %151 = vmatpush.bf16.msra.mxu0 %v132
    %152 = vmatmul.bf16.gmra.mxu0 %v142
    %v153 = vpop.f32.mrf.mxu0
    %v154 = vadd.f32 %v109, %v153
    %v155 = vpop.f32.mrf.mxu0
    %v156 = vadd.f32 %v109, %v155
    %157 = vdwg.mxu0
    %vm158 = vcmask 261120
    %159 = vst.msk [vmem:[#allocation3] sm:$0xff] %vm158, %v154
    %160 = vst.msk [vmem:[#allocation3 + $0x8] sm:$0xff] %vm158, %v156
    // Predicated region
    $region26: #{cross_layer_cross_scale_projector.95} parent=1 // pred_check
      _
    $region27: #{cross_layer_cross_scale_projector.95} parent=1 // pred_check_branch
      %162 = sbr.rel (0) target = $region29
    $region28: #{cross_layer_cross_scale_projector.95} parent=1 // pred_region
      %164 = vsyncadd [#allocation4], 0
      %s165 = sshll.u32 [#allocation3], 4
      %s166 = int_to_ptr.vmem [resolvable:$true] %s165
      %s167 = sshll.u32 %s5, 4
      %s168 = int_to_ptr.hbm [resolvable:$true] %s167
      %173 = dma.vmem_to_hbm [thread:$0]  %s166, 256, %s168, [#allocation4], 128, 128, 8
    $region29: #{cross_layer_cross_scale_projector.95} parent=1 // pred_fallthru
      _
    // Predicated region
    $region30: #{cross_layer_cross_scale_projector.95} parent=1 // pred_check
      _
    $region31: #{cross_layer_cross_scale_projector.95} parent=1 // pred_check_branch
      %175 = sbr.rel (0) target = $region33
    $region32: #{cross_layer_cross_scale_projector.95} parent=1 // pred_region
      %177 = dma.done [#allocation4], 256
    $region33: #{cross_layer_cross_scale_projector.95} parent=1 // pred_fallthru
      _
    %178 = vsyncpa [#allocation4], 1

// kernel: cross_layer_cross_scale_projector.79
$region0: #{cross_layer_cross_scale_projector.79}
  #allocation0 [shape = 'u32[]', space=smem, size = 0x4, offset = 0x4, fixed_abs, tag = 'smem constant byte address 0x4 - core index']
  #allocation1 [shape = 'u32[72,128]{1,0:T(1,128)}', space=vmem, size = 0x9000, scoped, tag = 'internal scratch']
  %s0 = inlined_call_operand.vmem [shape: f32[8,32], index: 0, kind: input, shape index: {}]
  %s1 = inlined_call_operand.vmem [shape: bf16[32,64], index: 1, kind: input, shape index: {}]
  %s2 = inlined_call_operand.vmem [shape: f32[1,64], index: 2, kind: input, shape index: {}]
  %s3 = inlined_call_operand.vmem [shape: f32[8,64], index: 3, kind: output, shape index: {}]
  %s4 = sld [smem:[#allocation0]]
  $region22: #{cross_layer_cross_scale_projector.79} parent=0
    _
  %s6 = ssub.s32 1, %s4
  %s7 = scalar_select 0, %s6, %s4
  // Predicated region
  $region2: #{cross_layer_cross_scale_projector.79} parent=0 // pred_check
    _
  $region3: #{cross_layer_cross_scale_projector.79} parent=0 // pred_check_branch
    %9 = sbr.rel (0) target = $region5
  $region4: #{cross_layer_cross_scale_projector.79} parent=0 // pred_region
    _
  $region5: #{cross_layer_cross_scale_projector.79} parent=0 // pred_fallthru
    _
  // Predicated region
  $region6: #{cross_layer_cross_scale_projector.79} parent=0 // pred_check
    _
  $region7: #{cross_layer_cross_scale_projector.79} parent=0 // pred_check_branch
    %11 = sbr.rel (0) target = $region9
  $region8: #{cross_layer_cross_scale_projector.79} parent=0 // pred_region
    _
  $region9: #{cross_layer_cross_scale_projector.79} parent=0 // pred_fallthru
    _
  // Predicated region
  $region10: #{cross_layer_cross_scale_projector.79} parent=0 // pred_check
    _
  $region11: #{cross_layer_cross_scale_projector.79} parent=0 // pred_check_branch
    %13 = sbr.rel (0) target = $region13
  $region12: #{cross_layer_cross_scale_projector.79} parent=0 // pred_region
    _
  $region13: #{cross_layer_cross_scale_projector.79} parent=0 // pred_fallthru
    _
  %v15 = vld [vmem:[%s0] sm:$0xff]
  %v16 = vpack.c.bf16 %v15, %v15
  %v17 = vld [vmem:[%s1] sm:$0xf]
  %v18 = vld [vmem:[%s1 + $0x4] sm:$0xf]
  %v19 = vld [vmem:[%s1 + $0x8] sm:$0xf]
  %v20 = vld [vmem:[%s1 + $0xc] sm:$0xf]
  %v21 = vld [vmem:[%s2] sm:$0x1]
  %v23 = vperm.slane %v21, 0
  %v29 = vunpack.c.l.b16 %v17
  %v30 = vunpack.c.l.b16 %v18
  %v31 = vunpack.c.l.b16 %v19
  %v32 = vunpack.c.l.b16 %v20
  %v33 = vpack.c.b16 %v30, %v29
  %v34 = vpack.c.b16 %v32, %v31
  %vm37 = vcmask 261120
  %v39 = vsel %vm37, %v16, 0
  %41 = vmatpush.bf16.msra.mxu0 0
  %42 = vmatpush.bf16.msra.mxu0 0
  %43 = vmatpush.bf16.msra.mxu0 0
  %44 = vmatpush.bf16.msra.mxu0 0
  %45 = vmatpush.bf16.msra.mxu0 0
  %46 = vmatpush.bf16.msra.mxu0 0
  %47 = vmatpush.bf16.msra.mxu0 %v34
  %48 = vmatpush.bf16.msra.mxu0 %v33
  %49 = vmatmul.bf16.gmra.mxu0 %v39
  %v50 = vpop.f32.mrf.mxu0
  %v51 = vadd.f32 %v23, %v50
  %v52 = vpop.f32.mrf.mxu0
  %53 = vdwg.mxu0
  %v54 = vxor.u32 %v51, 2147483648
  %v55 = vmul.f32 %v54, 1.442695
  %v56 = vpow.pop %v55
  %v57 = vadd.f32 %v56, 1.0
  %v58 = vrcp.pop %v57
  %v59 = vmul.f32 %v57, %v58
  %v60 = vsub.f32 1.0, %v59
  %v61 = vmul.f32 %v58, %v60
  %v62 = vadd.f32 %v58, %v61
  %vm63 = vweird.f32 %v57
  %vm64 = vweird.f32 %v58
  %vm65 = vmor %vm63, %vm64
  %v66 = vsel %vm65, %v58, %v62
  %v67 = vand.u32 2147483647, %v57
  %vm68 = vcmp.eq.f32.partialorder %v67, 8.507059e+37
  %v69 = vand.u32 %v57, 2147483648
  %v70 = vor.u32 1.1754944e-38, %v69
  %v71 = vsel %vm68, %v70, %v66
  %v72 = vmul.f32 1.0, %v71
  %v73 = vmul.f32 %v51, %v72
  %vm74 = vcmask 523264
  %75 = vst.msk [vmem:[%s3] sm:$0xff] %vm74, %v73
  // Predicated region
  $region14: #{cross_layer_cross_scale_projector.79} parent=0 // pred_check
    _
  $region15: #{cross_layer_cross_scale_projector.79} parent=0 // pred_check_branch
    %77 = sbr.rel (0) target = $region17
  $region16: #{cross_layer_cross_scale_projector.79} parent=0 // pred_region
    _
  $region17: #{cross_layer_cross_scale_projector.79} parent=0 // pred_fallthru
    _
  // Predicated region
  $region18: #{cross_layer_cross_scale_projector.79} parent=0 // pred_check
    _
  $region19: #{cross_layer_cross_scale_projector.79} parent=0 // pred_check_branch
    %79 = sbr.rel (0) target = $region21
  $region20: #{cross_layer_cross_scale_projector.79} parent=0 // pred_region
    _
  $region21: #{cross_layer_cross_scale_projector.79} parent=0 // pred_fallthru
    _

// kernel: cross_layer_cross_scale_projector.80
$region0: #{cross_layer_cross_scale_projector.80}
  #allocation0 [shape = 'u32[]', space=smem, size = 0x4, offset = 0x4, fixed_abs, tag = 'smem constant byte address 0x4 - core index']
  #allocation1 [shape = 'u32[72,128]{1,0:T(1,128)}', space=vmem, size = 0x9000, scoped, tag = 'internal scratch']
  %s0 = inlined_call_operand.vmem [shape: f32[8,64], index: 0, kind: input, shape index: {}]
  %s1 = inlined_call_operand.vmem [shape: bf16[64,64], index: 1, kind: input, shape index: {}]
  %s2 = inlined_call_operand.vmem [shape: f32[1,64], index: 2, kind: input, shape index: {}]
  %s3 = inlined_call_operand.vmem [shape: f32[8,64], index: 3, kind: output, shape index: {}]
  %s4 = sld [smem:[#allocation0]]
  $region22: #{cross_layer_cross_scale_projector.80} parent=0
    _
  %s6 = ssub.s32 1, %s4
  %s7 = scalar_select 0, %s6, %s4
  // Predicated region
  $region2: #{cross_layer_cross_scale_projector.80} parent=0 // pred_check
    _
  $region3: #{cross_layer_cross_scale_projector.80} parent=0 // pred_check_branch
    %9 = sbr.rel (0) target = $region5
  $region4: #{cross_layer_cross_scale_projector.80} parent=0 // pred_region
    _
  $region5: #{cross_layer_cross_scale_projector.80} parent=0 // pred_fallthru
    _
  // Predicated region
  $region6: #{cross_layer_cross_scale_projector.80} parent=0 // pred_check
    _
  $region7: #{cross_layer_cross_scale_projector.80} parent=0 // pred_check_branch
    %11 = sbr.rel (0) target = $region9
  $region8: #{cross_layer_cross_scale_projector.80} parent=0 // pred_region
    _
  $region9: #{cross_layer_cross_scale_projector.80} parent=0 // pred_fallthru
    _
  // Predicated region
  $region10: #{cross_layer_cross_scale_projector.80} parent=0 // pred_check
    _
  $region11: #{cross_layer_cross_scale_projector.80} parent=0 // pred_check_branch
    %13 = sbr.rel (0) target = $region13
  $region12: #{cross_layer_cross_scale_projector.80} parent=0 // pred_region
    _
  $region13: #{cross_layer_cross_scale_projector.80} parent=0 // pred_fallthru
    _
  %v15 = vld [vmem:[%s0] sm:$0xff]
  %v16 = vpack.c.bf16 %v15, %v15
  %v17 = vld [vmem:[%s1] sm:$0xf]
  %v18 = vld [vmem:[%s1 + $0x4] sm:$0xf]
  %v19 = vld [vmem:[%s1 + $0x8] sm:$0xf]
  %v20 = vld [vmem:[%s1 + $0xc] sm:$0xf]
  %v21 = vld [vmem:[%s1 + $0x10] sm:$0xf]
  %v22 = vld [vmem:[%s1 + $0x14] sm:$0xf]
  %v23 = vld [vmem:[%s1 + $0x18] sm:$0xf]
  %v24 = vld [vmem:[%s1 + $0x1c] sm:$0xf]
  %v25 = vld [vmem:[%s2] sm:$0x1]
  %v27 = vperm.slane %v25, 0
  %v37 = vunpack.c.l.b16 %v17
  %v38 = vunpack.c.l.b16 %v18
  %v39 = vunpack.c.l.b16 %v19
  %v40 = vunpack.c.l.b16 %v20
  %v41 = vunpack.c.l.b16 %v21
  %v42 = vunpack.c.l.b16 %v22
  %v43 = vunpack.c.l.b16 %v23
  %v44 = vunpack.c.l.b16 %v24
  %v45 = vpack.c.b16 %v38, %v37
  %v46 = vpack.c.b16 %v40, %v39
  %v47 = vpack.c.b16 %v42, %v41
  %v48 = vpack.c.b16 %v44, %v43
  %vm53 = vcmask 523264
  %v55 = vsel %vm53, %v16, 0
  %57 = vmatpush.bf16.msra.mxu0 0
  %58 = vmatpush.bf16.msra.mxu0 0
  %59 = vmatpush.bf16.msra.mxu0 0
  %60 = vmatpush.bf16.msra.mxu0 0
  %61 = vmatpush.bf16.msra.mxu0 %v48
  %62 = vmatpush.bf16.msra.mxu0 %v47
  %63 = vmatpush.bf16.msra.mxu0 %v46
  %64 = vmatpush.bf16.msra.mxu0 %v45
  %65 = vmatmul.bf16.gmra.mxu0 %v55
  %v66 = vpop.f32.mrf.mxu0
  %v67 = vadd.f32 %v27, %v66
  %v68 = vpop.f32.mrf.mxu0
  %69 = vdwg.mxu0
  %70 = vst.msk [vmem:[%s3] sm:$0xff] %vm53, %v67
  // Predicated region
  $region14: #{cross_layer_cross_scale_projector.80} parent=0 // pred_check
    _
  $region15: #{cross_layer_cross_scale_projector.80} parent=0 // pred_check_branch
    %72 = sbr.rel (0) target = $region17
  $region16: #{cross_layer_cross_scale_projector.80} parent=0 // pred_region
    _
  $region17: #{cross_layer_cross_scale_projector.80} parent=0 // pred_fallthru
    _
  // Predicated region
  $region18: #{cross_layer_cross_scale_projector.80} parent=0 // pred_check
    _
  $region19: #{cross_layer_cross_scale_projector.80} parent=0 // pred_check_branch
    %74 = sbr.rel (0) target = $region21
  $region20: #{cross_layer_cross_scale_projector.80} parent=0 // pred_region
    _
  $region21: #{cross_layer_cross_scale_projector.80} parent=0 // pred_fallthru
    _

</llo_original>
